<compile_context>
chip_gen: v6e
topology: v6e:2x2x1
jax: 0.10.0
libtpu: 0.0.40
codegen_flags: <defaults>
</compile_context>

<pallas_src>
import jax
import jax.numpy as jnp
from jax import lax
from jax.experimental import pallas as pl
from jax.experimental.pallas import tpu as pltpu


# ----------------------------- Pallas kernel --------------------------------

def _bottleneck_kernel(x_ref, w1_ref, b1_ref, w2_ref, b2_ref, w3_ref, b3_ref,
                       o_ref, pad_ref, col_ref):
    """One grid step processes `Bt` images, fully resident in VMEM.

    x_ref  : (Bt, H*W, Cin)     bf16  input slab (also the residual)
    w1_ref : (Cin, P)           bf16  conv1 weight, BN1 scale folded in
    b1_ref : (1, P)             f32   BN1 shift
    w2_ref : (9*P, P)           bf16  conv2 weight, rows = (tap, cin), BN2 folded
    b2_ref : (1, P)             f32   BN2 shift
    w3_ref : (P, Cout)          bf16  conv3 weight, BN3 scale folded in
    b3_ref : (1, Cout)          f32   BN3 shift
    o_ref  : (Bt, H*W, Cout)    bf16  block output
    pad_ref: (Bt, H+2, W+2, P)  bf16  scratch: zero-padded conv1 output
    col_ref: (Bt*H*W, 9*P)      bf16  scratch: im2col buffer for conv2
    """
    Bt, HW, Cin = x_ref.shape
    P = w1_ref.shape[1]
    Cout = w3_ref.shape[1]
    H = pad_ref.shape[1] - 2
    W = pad_ref.shape[2] - 2
    M = Bt * HW

    # Input slab flattened to (M, Cin); reused later as the residual.
    x2d = x_ref[...].reshape(M, Cin)                                   # bf16

    # ---- conv1 (1x1) + bn1 + relu -------------------------------------------
    y1 = jnp.dot(x2d, w1_ref[...], preferred_element_type=jnp.float32)
    y1 = jnp.maximum(y1 + b1_ref[...], 0.0)

    # Zero only the 1-pixel halo; the interior is fully overwritten below.
    pad_ref[:, 0:1, :, :] = jnp.zeros((Bt, 1, W + 2, P), pad_ref.dtype)
    pad_ref[:, H + 1:H + 2, :, :] = jnp.zeros((Bt, 1, W + 2, P), pad_ref.dtype)
    pad_ref[:, :, 0:1, :] = jnp.zeros((Bt, H + 2, 1, P), pad_ref.dtype)
    pad_ref[:, :, W + 1:W + 2, :] = jnp.zeros((Bt, H + 2, 1, P), pad_ref.dtype)
    pad_ref[:, 1:H + 1, 1:W + 1, :] = (
        y1.reshape(Bt, H, W, P).astype(pad_ref.dtype))

    # ---- conv2 (3x3, stride=1, pad=1) + bn2 + relu ---------------------------
    # Pack the 9 shifted views into a VMEM im2col slab, then run ONE K=9P
    # matmul (fills the MXU depth instead of 9 short-K pushes + 8 f32 adds).
    for dh in range(3):
        for dw in range(3):
            t = dh * 3 + dw
            col_ref[:, t * P:(t + 1) * P] = (
                pad_ref[:, dh:dh + H, dw:dw + W, :].reshape(M, P))
    y2 = jnp.dot(col_ref[...], w2_ref[...], preferred_element_type=jnp.float32)
    y2 = jnp.maximum(y2 + b2_ref[...], 0.0).astype(jnp.bfloat16)

    # ---- conv3 (1x1) + bn3 + residual add + relu -----------------------------
    y3 = jnp.dot(y2, w3_ref[...], preferred_element_type=jnp.float32)
    y3 = y3 + b3_ref[...] + x2d.astype(jnp.float32)
    o_ref[...] = jnp.maximum(y3, 0.0).reshape(Bt, HW, Cout).astype(o_ref.dtype)


# ------------------------------- wrapper -------------------------------------

def _fold_bn(gamma, beta, mean, var, eps=1e-5):
    scale = gamma / jnp.sqrt(var + eps)
    shift = beta - mean * scale
    return scale, shift


def _pick_batch_tile(n, hw):
    """Fold several images per step at small spatial sizes (7x7 / 14x14);
    56x56-class stages stay at 1 image per step."""
    bt = max(1, min(n, 2048 // max(hw, 1)))
    while n % bt:
        bt -= 1
    return bt


def bottleneck_forward(x_nchw, params, stride=1):
    """Bottleneck forward with downsample=None (identity residual).
    Input/output are NCHW f32, matching the PyTorch module."""
    assert stride == 1, "downsample=None => stride must be 1"

    # TODO(synk): NCHW<->NHWC transposes kept only for PyTorch layout parity;
    # a production integration should accept/return NHWC (N, H*W, C) slabs.
    x = jnp.transpose(x_nchw, (0, 2, 3, 1)).astype(jnp.float32)       # NHWC
    N, H, W, Cin = x.shape
    P = params["w1"].shape[0]
    Cout = params["w3"].shape[0]
    assert Cout == Cin, "identity residual requires inplanes == 4*planes"

    s1, b1 = _fold_bn(*params["bn1"])
    s2, b2 = _fold_bn(*params["bn2"])
    s3, b3 = _fold_bn(*params["bn3"])

    # Fold BN scale into conv weights (f32), then cast operands to bf16.
    w1 = (params["w1"][:, :, 0, 0].T * s1[None, :]).astype(jnp.bfloat16)
    # (kh, kw, Cin, Cout) -> rows ordered (tap, cin) to match the im2col slab.
    w2 = jnp.transpose(params["w2"], (2, 3, 1, 0)) * s2[None, None, None, :]
    w2 = w2.reshape(9 * P, P).astype(jnp.bfloat16)
    w3 = (params["w3"][:, :, 0, 0].T * s3[None, :]).astype(jnp.bfloat16)

    b1 = b1.reshape(1, P).astype(jnp.float32)
    b2 = b2.reshape(1, P).astype(jnp.float32)
    b3 = b3.reshape(1, Cout).astype(jnp.float32)

    HW = H * W
    Bt = _pick_batch_tile(N, HW)

    # Pre-flattened (N, H*W, C) bf16 slab: lane-dense 2-D blocks in the kernel.
    x_bf = x.reshape(N, HW, Cin).astype(jnp.bfloat16)
    # TODO(synk): residual is added from the bf16-rounded input; read x twice
    # (bf16 for the matmul, f32 for the residual) if PyTorch bit-parity matters.

    out = pl.pallas_call(
        _bottleneck_kernel,
        grid_spec=pltpu.PrefetchScalarGridSpec(
            num_scalar_prefetch=0,
            grid=(N // Bt,),
            in_specs=[
                pl.BlockSpec((Bt, HW, Cin), lambda n: (n, 0, 0)),
                pl.BlockSpec((Cin, P), lambda n: (0, 0)),        # resident
                pl.BlockSpec((1, P), lambda n: (0, 0)),
                pl.BlockSpec((9 * P, P), lambda n: (0, 0)),      # resident
                pl.BlockSpec((1, P), lambda n: (0, 0)),
                pl.BlockSpec((P, Cout), lambda n: (0, 0)),       # resident
                pl.BlockSpec((1, Cout), lambda n: (0, 0)),
            ],
            out_specs=pl.BlockSpec((Bt, HW, Cout), lambda n: (n, 0, 0)),
            scratch_shapes=[
                pltpu.VMEM((Bt, H + 2, W + 2, P), jnp.bfloat16),   # padded conv1 out
                pltpu.VMEM((Bt * HW, 9 * P), jnp.bfloat16),        # im2col slab
            ],
        ),
        out_shape=jax.ShapeDtypeStruct((N, HW, Cout), jnp.bfloat16),
        compiler_params=pltpu.CompilerParams(
            dimension_semantics=("parallel",),
            vmem_limit_bytes=48 * 1024 * 1024),
    )(x_bf, w1, b1, w2, b2, w3, b3)

    out = out.reshape(N, H, W, Cout).astype(jnp.float32)
    return jnp.transpose(out, (0, 3, 1, 2))                           # NCHW


# ------------------------- parameters & reference ----------------------------

def init_bottleneck_params(key, inplanes, planes):
    """Deterministic synthetic parameters, PyTorch layouts for conv weights."""
    expansion = 4
    ks = jax.random.split(key, 6)

    def bn(k, c):
        kg, kb, km, kv = jax.random.split(k, 4)
        gamma = jax.random.uniform(kg, (c,), jnp.float32, 0.5, 1.5)
        beta = jax.random.normal(kb, (c,), jnp.float32) * 0.1
        mean = jax.random.normal(km, (c,), jnp.float32) * 0.1
        var = jax.random.uniform(kv, (c,), jnp.float32, 0.5, 1.5)
        return gamma, beta, mean, var

    return {
        # PyTorch conv weight layout: (Cout, Cin, kh, kw)
        "w1": jax.random.normal(ks[0], (planes, inplanes, 1, 1), jnp.float32) * 0.1,
        "w2": jax.random.normal(ks[1], (planes, planes, 3, 3), jnp.float32) * 0.1,
        "w3": jax.random.normal(ks[2], (planes * expansion, planes, 1, 1),
                                jnp.float32) * 0.1,
        "bn1": bn(ks[3], planes),
        "bn2": bn(ks[4], planes),
        "bn3": bn(ks[5], planes * expansion),
    }


def _ref_bottleneck(x_nchw, params, stride=1):
    """Pure-JAX f32 reference faithful to the PyTorch module (eval-mode BN)."""
    x = jnp.transpose(x_nchw, (0, 2, 3, 1)).astype(jnp.float32)
    dn = ("NHWC", "HWIO", "NHWC")

    def conv(v, w_torch, strides, pad):
        w = jnp.transpose(w_torch, (2, 3, 1, 0))                      # HWIO
        return lax.conv_general_dilated(v, w, strides, pad, dimension_numbers=dn)

    def bn(v, p):
        g, b, m, var = p
        return (v - m) / jnp.sqrt(var + 1e-5) * g + b

    out = jax.nn.relu(bn(conv(x, params["w1"], (1, 1), "VALID"), params["bn1"]))
    out = jax.nn.relu(bn(conv(out, params["w2"], (stride, stride),
                              [(1, 1), (1, 1)]), params["bn2"]))
    out = bn(conv(out, params["w3"], (1, 1), "VALID"), params["bn3"])
    out = jax.nn.relu(out + x)
    return jnp.transpose(out, (0, 3, 1, 2))


# --------------------------------- main ---------------------------------------

if __name__ == "__main__":
    key = jax.random.PRNGKey(0)
    k_x, k_p = jax.random.split(key)

    # inplanes = planes * expansion so the identity residual path is valid
    inplanes, planes, stride = 16, 4, 1
    N, H, W = 2, 16, 16

    x = jax.random.normal(k_x, (N, inplanes, H, W), jnp.float32)      # NCHW
    params = init_bottleneck_params(k_p, inplanes, planes)

    y = jax.block_until_ready(bottleneck_forward(x, params, stride=stride))

    # Reference gets the same bf16 rounding of x / conv weights that the
    # kernel applies (accumulation stays f32); the kernel additionally rounds
    # the final output to bf16, covered by the tolerances below.
    x_r = x.astype(jnp.bfloat16).astype(jnp.float32)
    params_r = dict(params)
    for kname in ("w1", "w2", "w3"):
        params_r[kname] = params[kname].astype(jnp.bfloat16).astype(jnp.float32)
    y_ref = jax.block_until_ready(_ref_bottleneck(x_r, params_r, stride=stride))

    assert y.shape == (N, inplanes, H, W), y.shape
    max_err = float(jnp.max(jnp.abs(y - y_ref)))
    assert jnp.allclose(y, y_ref, atol=3e-2, rtol=3e-2), max_err

    print("KERNEL_OK")
</pallas_src>

<mosaic_0001>
module attributes {stable_mosaic.version = 11 : i64} {
  func.func @_bottleneck_kernel(%arg0: i32, %arg1: memref<2x256x16xbf16, #tpu.memory_space<vmem>>, %arg2: memref<16x4xbf16, #tpu.memory_space<vmem>>, %arg3: memref<1x4xf32, #tpu.memory_space<vmem>>, %arg4: memref<36x4xbf16, #tpu.memory_space<vmem>>, %arg5: memref<1x4xf32, #tpu.memory_space<vmem>>, %arg6: memref<4x16xbf16, #tpu.memory_space<vmem>>, %arg7: memref<1x16xf32, #tpu.memory_space<vmem>>, %arg8: memref<2x256x16xbf16, #tpu.memory_space<vmem>>, %arg9: memref<2x18x18x4xbf16, #tpu.memory_space<vmem>>, %arg10: memref<512x36xbf16, #tpu.memory_space<vmem>>) attributes {dimension_semantics = [#tpu.dimension_semantics<parallel>], iteration_bounds = array<i64: 1>, scalar_prefetch = 0 : i64, scratch_operands = 2 : i64, tpu.core_type = #tpu.core_type<tc>, window_params = [{transform_indices = @transform_0, window_bounds = array<i64: 2, 256, 16>}, {pipeline_mode = #tpu.pipeline_mode<synchronous>, transform_indices = @transform_1, window_bounds = array<i64: 16, 4>}, {pipeline_mode = #tpu.pipeline_mode<synchronous>, transform_indices = @transform_2, window_bounds = array<i64: 1, 4>}, {pipeline_mode = #tpu.pipeline_mode<synchronous>, transform_indices = @transform_3, window_bounds = array<i64: 36, 4>}, {pipeline_mode = #tpu.pipeline_mode<synchronous>, transform_indices = @transform_4, window_bounds = array<i64: 1, 4>}, {pipeline_mode = #tpu.pipeline_mode<synchronous>, transform_indices = @transform_5, window_bounds = array<i64: 4, 16>}, {pipeline_mode = #tpu.pipeline_mode<synchronous>, transform_indices = @transform_6, window_bounds = array<i64: 1, 16>}, {transform_indices = @transform_7, window_bounds = array<i64: 2, 256, 16>}]} {
    %c0 = arith.constant 0 : index
    %c0_0 = arith.constant 0 : index
    %c0_1 = arith.constant 0 : index
    %0 = vector.load %arg1[%c0, %c0_0, %c0_1] : memref<2x256x16xbf16, #tpu.memory_space<vmem>>, vector<2x256x16xbf16>
    %1 = vector.shape_cast %0 : vector<2x256x16xbf16> to vector<512x16xbf16>
    %c0_2 = arith.constant 0 : index
    %c0_3 = arith.constant 0 : index
    %2 = vector.load %arg2[%c0_2, %c0_3] : memref<16x4xbf16, #tpu.memory_space<vmem>>, vector<16x4xbf16>
    %cst = arith.constant dense<0.000000e+00> : vector<512x4xf32>
    %3 = tpu.matmul %1, %2, %cst {dimension_numbers = #tpu.dot_dimension_numbers<[1], [0], [0], [1], [0, 0, 1, 1], [], []>} : vector<512x16xbf16>, vector<16x4xbf16>, vector<512x4xf32> -> vector<512x4xf32>
    %c0_4 = arith.constant 0 : index
    %c0_5 = arith.constant 0 : index
    %4 = vector.load %arg3[%c0_4, %c0_5] : memref<1x4xf32, #tpu.memory_space<vmem>>, vector<1x4xf32>
    %5 = vector.broadcast %4 : vector<1x4xf32> to vector<512x4xf32>
    %6 = arith.addf %3, %5 : vector<512x4xf32>
    %cst_6 = arith.constant 0.000000e+00 : f32
    %7 = vector.broadcast %cst_6 : f32 to vector<512x4xf32>
    %8 = arith.maximumf %6, %7 : vector<512x4xf32>
    %cst_7 = arith.constant 0.000000e+00 : bf16
    %9 = vector.broadcast %cst_7 : bf16 to vector<2x1x18x4xbf16>
    %c0_8 = arith.constant 0 : index
    %c0_9 = arith.constant 0 : index
    %c0_10 = arith.constant 0 : index
    %c0_11 = arith.constant 0 : index
    %10 = vector.load %arg9[%c0_8, %c0_9, %c0_10, %c0_11] : memref<2x18x18x4xbf16, #tpu.memory_space<vmem>>, vector<2x1x18x4xbf16>
    tpu.vector_store %arg9[%c0_8, %c0_9, %c0_10, %c0_11], %9 {strides = array<i32>} : memref<2x18x18x4xbf16, #tpu.memory_space<vmem>>, vector<2x1x18x4xbf16>,
    %cst_12 = arith.constant 0.000000e+00 : bf16
    %11 = vector.broadcast %cst_12 : bf16 to vector<2x1x18x4xbf16>
    %c0_13 = arith.constant 0 : index
    %c17 = arith.constant 17 : index
    %c0_14 = arith.constant 0 : index
    %c0_15 = arith.constant 0 : index
    %12 = vector.load %arg9[%c0_13, %c17, %c0_14, %c0_15] : memref<2x18x18x4xbf16, #tpu.memory_space<vmem>>, vector<2x1x18x4xbf16>
    tpu.vector_store %arg9[%c0_13, %c17, %c0_14, %c0_15], %11 {strides = array<i32>} : memref<2x18x18x4xbf16, #tpu.memory_space<vmem>>, vector<2x1x18x4xbf16>,
    %cst_16 = arith.constant 0.000000e+00 : bf16
    %13 = vector.broadcast %cst_16 : bf16 to vector<2x18x1x4xbf16>
    %c0_17 = arith.constant 0 : index
    %c0_18 = arith.constant 0 : index
    %c0_19 = arith.constant 0 : index
    %c0_20 = arith.constant 0 : index
    %14 = vector.load %arg9[%c0_17, %c0_18, %c0_19, %c0_20] : memref<2x18x18x4xbf16, #tpu.memory_space<vmem>>, vector<2x18x1x4xbf16>
    tpu.vector_store %arg9[%c0_17, %c0_18, %c0_19, %c0_20], %13 {strides = array<i32>} : memref<2x18x18x4xbf16, #tpu.memory_space<vmem>>, vector<2x18x1x4xbf16>,
    %cst_21 = arith.constant 0.000000e+00 : bf16
    %15 = vector.broadcast %cst_21 : bf16 to vector<2x18x1x4xbf16>
    %c0_22 = arith.constant 0 : index
    %c0_23 = arith.constant 0 : index
    %c17_24 = arith.constant 17 : index
    %c0_25 = arith.constant 0 : index
    %16 = vector.load %arg9[%c0_22, %c0_23, %c17_24, %c0_25] : memref<2x18x18x4xbf16, #tpu.memory_space<vmem>>, vector<2x18x1x4xbf16>
    tpu.vector_store %arg9[%c0_22, %c0_23, %c17_24, %c0_25], %15 {strides = array<i32>} : memref<2x18x18x4xbf16, #tpu.memory_space<vmem>>, vector<2x18x1x4xbf16>,
    %17 = vector.shape_cast %8 : vector<512x4xf32> to vector<2x16x16x4xf32>
    %18 = arith.truncf %17 : vector<2x16x16x4xf32> to vector<2x16x16x4xbf16>
    %c0_26 = arith.constant 0 : index
    %c1 = arith.constant 1 : index
    %c1_27 = arith.constant 1 : index
    %c0_28 = arith.constant 0 : index
    %19 = vector.load %arg9[%c0_26, %c1, %c1_27, %c0_28] : memref<2x18x18x4xbf16, #tpu.memory_space<vmem>>, vector<2x16x16x4xbf16>
    tpu.vector_store %arg9[%c0_26, %c1, %c1_27, %c0_28], %18 {strides = array<i32>} : memref<2x18x18x4xbf16, #tpu.memory_space<vmem>>, vector<2x16x16x4xbf16>,
    %c0_29 = arith.constant 0 : index
    %c0_30 = arith.constant 0 : index
    %c0_31 = arith.constant 0 : index
    %c0_32 = arith.constant 0 : index
    %20 = vector.load %arg9[%c0_29, %c0_30, %c0_31, %c0_32] : memref<2x18x18x4xbf16, #tpu.memory_space<vmem>>, vector<2x16x16x4xbf16>
    %21 = vector.shape_cast %20 : vector<2x16x16x4xbf16> to vector<512x4xbf16>
    %c0_33 = arith.constant 0 : index
    %c0_34 = arith.constant 0 : index
    %22 = vector.load %arg10[%c0_33, %c0_34] : memref<512x36xbf16, #tpu.memory_space<vmem>>, vector<512x4xbf16>
    tpu.vector_store %arg10[%c0_33, %c0_34], %21 {strides = array<i32>} : memref<512x36xbf16, #tpu.memory_space<vmem>>, vector<512x4xbf16>,
    %c0_35 = arith.constant 0 : index
    %c0_36 = arith.constant 0 : index
    %c1_37 = arith.constant 1 : index
    %c0_38 = arith.constant 0 : index
    %23 = vector.load %arg9[%c0_35, %c0_36, %c1_37, %c0_38] : memref<2x18x18x4xbf16, #tpu.memory_space<vmem>>, vector<2x16x16x4xbf16>
    %24 = vector.shape_cast %23 : vector<2x16x16x4xbf16> to vector<512x4xbf16>
    %c0_39 = arith.constant 0 : index
    %c4 = arith.constant 4 : index
    %25 = vector.load %arg10[%c0_39, %c4] : memref<512x36xbf16, #tpu.memory_space<vmem>>, vector<512x4xbf16>
    tpu.vector_store %arg10[%c0_39, %c4], %24 {strides = array<i32>} : memref<512x36xbf16, #tpu.memory_space<vmem>>, vector<512x4xbf16>,
    %c0_40 = arith.constant 0 : index
    %c0_41 = arith.constant 0 : index
    %c2 = arith.constant 2 : index
    %c0_42 = arith.constant 0 : index
    %26 = vector.load %arg9[%c0_40, %c0_41, %c2, %c0_42] : memref<2x18x18x4xbf16, #tpu.memory_space<vmem>>, vector<2x16x16x4xbf16>
    %27 = vector.shape_cast %26 : vector<2x16x16x4xbf16> to vector<512x4xbf16>
    %c0_43 = arith.constant 0 : index
    %c8 = arith.constant 8 : index
    %28 = vector.load %arg10[%c0_43, %c8] : memref<512x36xbf16, #tpu.memory_space<vmem>>, vector<512x4xbf16>
    tpu.vector_store %arg10[%c0_43, %c8], %27 {strides = array<i32>} : memref<512x36xbf16, #tpu.memory_space<vmem>>, vector<512x4xbf16>,
    %c0_44 = arith.constant 0 : index
    %c1_45 = arith.constant 1 : index
    %c0_46 = arith.constant 0 : index
    %c0_47 = arith.constant 0 : index
    %29 = vector.load %arg9[%c0_44, %c1_45, %c0_46, %c0_47] : memref<2x18x18x4xbf16, #tpu.memory_space<vmem>>, vector<2x16x16x4xbf16>
    %30 = vector.shape_cast %29 : vector<2x16x16x4xbf16> to vector<512x4xbf16>
    %c0_48 = arith.constant 0 : index
    %c12 = arith.constant 12 : index
    %31 = vector.load %arg10[%c0_48, %c12] : memref<512x36xbf16, #tpu.memory_space<vmem>>, vector<512x4xbf16>
    tpu.vector_store %arg10[%c0_48, %c12], %30 {strides = array<i32>} : memref<512x36xbf16, #tpu.memory_space<vmem>>, vector<512x4xbf16>,
    %c0_49 = arith.constant 0 : index
    %c1_50 = arith.constant 1 : index
    %c1_51 = arith.constant 1 : index
    %c0_52 = arith.constant 0 : index
    %32 = vector.load %arg9[%c0_49, %c1_50, %c1_51, %c0_52] : memref<2x18x18x4xbf16, #tpu.memory_space<vmem>>, vector<2x16x16x4xbf16>
    %33 = vector.shape_cast %32 : vector<2x16x16x4xbf16> to vector<512x4xbf16>
    %c0_53 = arith.constant 0 : index
    %c16 = arith.constant 16 : index
    %34 = vector.load %arg10[%c0_53, %c16] : memref<512x36xbf16, #tpu.memory_space<vmem>>, vector<512x4xbf16>
    tpu.vector_store %arg10[%c0_53, %c16], %33 {strides = array<i32>} : memref<512x36xbf16, #tpu.memory_space<vmem>>, vector<512x4xbf16>,
    %c0_54 = arith.constant 0 : index
    %c1_55 = arith.constant 1 : index
    %c2_56 = arith.constant 2 : index
    %c0_57 = arith.constant 0 : index
    %35 = vector.load %arg9[%c0_54, %c1_55, %c2_56, %c0_57] : memref<2x18x18x4xbf16, #tpu.memory_space<vmem>>, vector<2x16x16x4xbf16>
    %36 = vector.shape_cast %35 : vector<2x16x16x4xbf16> to vector<512x4xbf16>
    %c0_58 = arith.constant 0 : index
    %c20 = arith.constant 20 : index
    %37 = vector.load %arg10[%c0_58, %c20] : memref<512x36xbf16, #tpu.memory_space<vmem>>, vector<512x4xbf16>
    tpu.vector_store %arg10[%c0_58, %c20], %36 {strides = array<i32>} : memref<512x36xbf16, #tpu.memory_space<vmem>>, vector<512x4xbf16>,
    %c0_59 = arith.constant 0 : index
    %c2_60 = arith.constant 2 : index
    %c0_61 = arith.constant 0 : index
    %c0_62 = arith.constant 0 : index
    %38 = vector.load %arg9[%c0_59, %c2_60, %c0_61, %c0_62] : memref<2x18x18x4xbf16, #tpu.memory_space<vmem>>, vector<2x16x16x4xbf16>
    %39 = vector.shape_cast %38 : vector<2x16x16x4xbf16> to vector<512x4xbf16>
    %c0_63 = arith.constant 0 : index
    %c24 = arith.constant 24 : index
    %40 = vector.load %arg10[%c0_63, %c24] : memref<512x36xbf16, #tpu.memory_space<vmem>>, vector<512x4xbf16>
    tpu.vector_store %arg10[%c0_63, %c24], %39 {strides = array<i32>} : memref<512x36xbf16, #tpu.memory_space<vmem>>, vector<512x4xbf16>,
    %c0_64 = arith.constant 0 : index
    %c2_65 = arith.constant 2 : index
    %c1_66 = arith.constant 1 : index
    %c0_67 = arith.constant 0 : index
    %41 = vector.load %arg9[%c0_64, %c2_65, %c1_66, %c0_67] : memref<2x18x18x4xbf16, #tpu.memory_space<vmem>>, vector<2x16x16x4xbf16>
    %42 = vector.shape_cast %41 : vector<2x16x16x4xbf16> to vector<512x4xbf16>
    %c0_68 = arith.constant 0 : index
    %c28 = arith.constant 28 : index
    %43 = vector.load %arg10[%c0_68, %c28] : memref<512x36xbf16, #tpu.memory_space<vmem>>, vector<512x4xbf16>
    tpu.vector_store %arg10[%c0_68, %c28], %42 {strides = array<i32>} : memref<512x36xbf16, #tpu.memory_space<vmem>>, vector<512x4xbf16>,
    %c0_69 = arith.constant 0 : index
    %c2_70 = arith.constant 2 : index
    %c2_71 = arith.constant 2 : index
    %c0_72 = arith.constant 0 : index
    %44 = vector.load %arg9[%c0_69, %c2_70, %c2_71, %c0_72] : memref<2x18x18x4xbf16, #tpu.memory_space<vmem>>, vector<2x16x16x4xbf16>
    %45 = vector.shape_cast %44 : vector<2x16x16x4xbf16> to vector<512x4xbf16>
    %c0_73 = arith.constant 0 : index
    %c32 = arith.constant 32 : index
    %46 = vector.load %arg10[%c0_73, %c32] : memref<512x36xbf16, #tpu.memory_space<vmem>>, vector<512x4xbf16>
    tpu.vector_store %arg10[%c0_73, %c32], %45 {strides = array<i32>} : memref<512x36xbf16, #tpu.memory_space<vmem>>, vector<512x4xbf16>,
    %c0_74 = arith.constant 0 : index
    %c0_75 = arith.constant 0 : index
    %47 = vector.load %arg10[%c0_74, %c0_75] : memref<512x36xbf16, #tpu.memory_space<vmem>>, vector<512x36xbf16>
    %c0_76 = arith.constant 0 : index
    %c0_77 = arith.constant 0 : index
    %48 = vector.load %arg4[%c0_76, %c0_77] : memref<36x4xbf16, #tpu.memory_space<vmem>>, vector<36x4xbf16>
    %cst_78 = arith.constant dense<0.000000e+00> : vector<512x4xf32>
    %49 = tpu.matmul %47, %48, %cst_78 {dimension_numbers = #tpu.dot_dimension_numbers<[1], [0], [0], [1], [0, 0, 1, 1], [], []>} : vector<512x36xbf16>, vector<36x4xbf16>, vector<512x4xf32> -> vector<512x4xf32>
    %c0_79 = arith.constant 0 : index
    %c0_80 = arith.constant 0 : index
    %50 = vector.load %arg5[%c0_79, %c0_80] : memref<1x4xf32, #tpu.memory_space<vmem>>, vector<1x4xf32>
    %51 = vector.broadcast %50 : vector<1x4xf32> to vector<512x4xf32>
    %52 = arith.addf %49, %51 : vector<512x4xf32>
    %cst_81 = arith.constant 0.000000e+00 : f32
    %53 = vector.broadcast %cst_81 : f32 to vector<512x4xf32>
    %54 = arith.maximumf %52, %53 : vector<512x4xf32>
    %55 = arith.truncf %54 : vector<512x4xf32> to vector<512x4xbf16>
    %c0_82 = arith.constant 0 : index
    %c0_83 = arith.constant 0 : index
    %56 = vector.load %arg6[%c0_82, %c0_83] : memref<4x16xbf16, #tpu.memory_space<vmem>>, vector<4x16xbf16>
    %cst_84 = arith.constant dense<0.000000e+00> : vector<512x16xf32>
    %57 = tpu.matmul %55, %56, %cst_84 {dimension_numbers = #tpu.dot_dimension_numbers<[1], [0], [0], [1], [0, 0, 1, 1], [], []>} : vector<512x4xbf16>, vector<4x16xbf16>, vector<512x16xf32> -> vector<512x16xf32>
    %c0_85 = arith.constant 0 : index
    %c0_86 = arith.constant 0 : index
    %58 = vector.load %arg7[%c0_85, %c0_86] : memref<1x16xf32, #tpu.memory_space<vmem>>, vector<1x16xf32>
    %59 = vector.broadcast %58 : vector<1x16xf32> to vector<512x16xf32>
    %60 = arith.addf %57, %59 : vector<512x16xf32>
    %61 = arith.extf %1 : vector<512x16xbf16> to vector<512x16xf32>
    %62 = arith.addf %60, %61 : vector<512x16xf32>
    %cst_87 = arith.constant 0.000000e+00 : f32
    %63 = vector.broadcast %cst_87 : f32 to vector<512x16xf32>
    %64 = arith.maximumf %62, %63 : vector<512x16xf32>
    %65 = vector.shape_cast %64 : vector<512x16xf32> to vector<2x256x16xf32>
    %66 = arith.truncf %65 : vector<2x256x16xf32> to vector<2x256x16xbf16>
    %c0_88 = arith.constant 0 : index
    %c0_89 = arith.constant 0 : index
    %c0_90 = arith.constant 0 : index
    %67 = vector.load %arg8[%c0_88, %c0_89, %c0_90] : memref<2x256x16xbf16, #tpu.memory_space<vmem>>, vector<2x256x16xbf16>
    tpu.vector_store %arg8[%c0_88, %c0_89, %c0_90], %66 {strides = array<i32>} : memref<2x256x16xbf16, #tpu.memory_space<vmem>>, vector<2x256x16xbf16>,
    return
  }
  func.func @transform_0(%arg0: i32) -> (i32, i32, i32) {
    %c0_i32 = arith.constant 0 : i32
    %c0_i32_0 = arith.constant 0 : i32
    %c0_i32_1 = arith.constant 0 : i32
    return %arg0, %c0_i32, %c0_i32_0 : i32, i32, i32
  }
  func.func @transform_1(%arg0: i32) -> (i32, i32) {
    %c0_i32 = arith.constant 0 : i32
    %c0_i32_0 = arith.constant 0 : i32
    %c0_i32_1 = arith.constant 0 : i32
    return %c0_i32, %c0_i32_0 : i32, i32
  }
  func.func @transform_2(%arg0: i32) -> (i32, i32) {
    %c0_i32 = arith.constant 0 : i32
    %c0_i32_0 = arith.constant 0 : i32
    %c0_i32_1 = arith.constant 0 : i32
    return %c0_i32, %c0_i32_0 : i32, i32
  }
  func.func @transform_3(%arg0: i32) -> (i32, i32) {
    %c0_i32 = arith.constant 0 : i32
    %c0_i32_0 = arith.constant 0 : i32
    %c0_i32_1 = arith.constant 0 : i32
    return %c0_i32, %c0_i32_0 : i32, i32
  }
  func.func @transform_4(%arg0: i32) -> (i32, i32) {
    %c0_i32 = arith.constant 0 : i32
    %c0_i32_0 = arith.constant 0 : i32
    %c0_i32_1 = arith.constant 0 : i32
    return %c0_i32, %c0_i32_0 : i32, i32
  }
  func.func @transform_5(%arg0: i32) -> (i32, i32) {
    %c0_i32 = arith.constant 0 : i32
    %c0_i32_0 = arith.constant 0 : i32
    %c0_i32_1 = arith.constant 0 : i32
    return %c0_i32, %c0_i32_0 : i32, i32
  }
  func.func @transform_6(%arg0: i32) -> (i32, i32) {
    %c0_i32 = arith.constant 0 : i32
    %c0_i32_0 = arith.constant 0 : i32
    %c0_i32_1 = arith.constant 0 : i32
    return %c0_i32, %c0_i32_0 : i32, i32
  }
  func.func @transform_7(%arg0: i32) -> (i32, i32, i32) {
    %c0_i32 = arith.constant 0 : i32
    %c0_i32_0 = arith.constant 0 : i32
    %c0_i32_1 = arith.constant 0 : i32
    return %arg0, %c0_i32, %c0_i32_0 : i32, i32, i32
  }
}

</mosaic_0001>

<llo_original>
// kernel: tpu_custom_call.1
$region0: #{tpu_custom_call.1}
  #allocation0 [shape = 'u32[]', space=smem, size = 0x4, offset = 0x4, fixed_abs, tag = 'smem constant byte address 0x4 - core index']
  #allocation1 [shape = 'u32[144,128]{1,0:T(1,128)}', space=vmem, size = 0x12000, scoped, tag = 'internal scratch']
  #allocation2 [shape = 'bf16[2,18,18,4]{3,2,1,0:T(8,128)(2,1)}', space=vmem, size = 0x36000, scoped, tag = 'scratch operand']
  #allocation3 [shape = 'bf16[512,36]{1,0:T(8,128)(2,1)}', space=vmem, size = 0x20000, scoped, tag = 'scratch operand']
  %s0 = inlined_call_operand.vmem [shape: bf16[2,256,16], index: 0, kind: input, shape index: {}]
  %s1 = inlined_call_operand.vmem [shape: bf16[16,4], index: 1, kind: input, shape index: {}]
  %s2 = inlined_call_operand.vmem [shape: f32[1,4], index: 2, kind: input, shape index: {}]
  %s3 = inlined_call_operand.vmem [shape: bf16[36,4], index: 3, kind: input, shape index: {}]
  %s4 = inlined_call_operand.vmem [shape: f32[1,4], index: 4, kind: input, shape index: {}]
  %s5 = inlined_call_operand.vmem [shape: bf16[4,16], index: 5, kind: input, shape index: {}]
  %s6 = inlined_call_operand.vmem [shape: f32[1,16], index: 6, kind: input, shape index: {}]
  %s7 = inlined_call_operand.vmem [shape: bf16[2,256,16], index: 7, kind: output, shape index: {}]
  %s8 = sld [smem:[#allocation0]]
  $region38: #{tpu_custom_call.1} parent=0
    _
  %s10 = ssub.s32 1, %s8
  %s11 = scalar_select 0, %s10, %s8
  // Predicated region
  $region2: #{tpu_custom_call.1} parent=0 // pred_check
    _
  $region3: #{tpu_custom_call.1} parent=0 // pred_check_branch
    %13 = sbr.rel (0) target = $region5
  $region4: #{tpu_custom_call.1} parent=0 // pred_region
    _
  $region5: #{tpu_custom_call.1} parent=0 // pred_fallthru
    _
  // Predicated region
  $region6: #{tpu_custom_call.1} parent=0 // pred_check
    _
  $region7: #{tpu_custom_call.1} parent=0 // pred_check_branch
    %15 = sbr.rel (0) target = $region9
  $region8: #{tpu_custom_call.1} parent=0 // pred_region
    _
  $region9: #{tpu_custom_call.1} parent=0 // pred_fallthru
    _
  // Predicated region
  $region10: #{tpu_custom_call.1} parent=0 // pred_check
    _
  $region11: #{tpu_custom_call.1} parent=0 // pred_check_branch
    %17 = sbr.rel (0) target = $region13
  $region12: #{tpu_custom_call.1} parent=0 // pred_region
    _
  $region13: #{tpu_custom_call.1} parent=0 // pred_fallthru
    _
  // Predicated region
  $region14: #{tpu_custom_call.1} parent=0 // pred_check
    _
  $region15: #{tpu_custom_call.1} parent=0 // pred_check_branch
    %19 = sbr.rel (0) target = $region17
  $region16: #{tpu_custom_call.1} parent=0 // pred_region
    _
  $region17: #{tpu_custom_call.1} parent=0 // pred_fallthru
    _
  // Predicated region
  $region18: #{tpu_custom_call.1} parent=0 // pred_check
    _
  $region19: #{tpu_custom_call.1} parent=0 // pred_check_branch
    %21 = sbr.rel (0) target = $region21
  $region20: #{tpu_custom_call.1} parent=0 // pred_region
    _
  $region21: #{tpu_custom_call.1} parent=0 // pred_fallthru
    _
  // Predicated region
  $region22: #{tpu_custom_call.1} parent=0 // pred_check
    _
  $region23: #{tpu_custom_call.1} parent=0 // pred_check_branch
    %23 = sbr.rel (0) target = $region25
  $region24: #{tpu_custom_call.1} parent=0 // pred_region
    _
  $region25: #{tpu_custom_call.1} parent=0 // pred_fallthru
    _
  // Predicated region
  $region26: #{tpu_custom_call.1} parent=0 // pred_check
    _
  $region27: #{tpu_custom_call.1} parent=0 // pred_check_branch
    %25 = sbr.rel (0) target = $region29
  $region28: #{tpu_custom_call.1} parent=0 // pred_region
    _
  $region29: #{tpu_custom_call.1} parent=0 // pred_fallthru
    _
  %v27 = vld [vmem:[%s0] sm:$0xf]
  %v28 = vld [vmem:[%s0 + $0x4] sm:$0xf]
  %v29 = vld [vmem:[%s0 + $0x8] sm:$0xf]
  %v30 = vld [vmem:[%s0 + $0xc] sm:$0xf]
  %v31 = vld [vmem:[%s0 + $0x10] sm:$0xf]
  %v32 = vld [vmem:[%s0 + $0x14] sm:$0xf]
  %v33 = vld [vmem:[%s0 + $0x18] sm:$0xf]
  %v34 = vld [vmem:[%s0 + $0x1c] sm:$0xf]
  %v35 = vld [vmem:[%s0 + $0x20] sm:$0xf]
  %v36 = vld [vmem:[%s0 + $0x24] sm:$0xf]
  %v37 = vld [vmem:[%s0 + $0x28] sm:$0xf]
  %v38 = vld [vmem:[%s0 + $0x2c] sm:$0xf]
  %v39 = vld [vmem:[%s0 + $0x30] sm:$0xf]
  %v40 = vld [vmem:[%s0 + $0x34] sm:$0xf]
  %v41 = vld [vmem:[%s0 + $0x38] sm:$0xf]
  %v42 = vld [vmem:[%s0 + $0x3c] sm:$0xf]
  %v43 = vld [vmem:[%s0 + $0x40] sm:$0xf]
  %v44 = vld [vmem:[%s0 + $0x44] sm:$0xf]
  %v45 = vld [vmem:[%s0 + $0x48] sm:$0xf]
  %v46 = vld [vmem:[%s0 + $0x4c] sm:$0xf]
  %v47 = vld [vmem:[%s0 + $0x50] sm:$0xf]
  %v48 = vld [vmem:[%s0 + $0x54] sm:$0xf]
  %v49 = vld [vmem:[%s0 + $0x58] sm:$0xf]
  %v50 = vld [vmem:[%s0 + $0x5c] sm:$0xf]
  %v51 = vld [vmem:[%s0 + $0x60] sm:$0xf]
  %v52 = vld [vmem:[%s0 + $0x64] sm:$0xf]
  %v53 = vld [vmem:[%s0 + $0x68] sm:$0xf]
  %v54 = vld [vmem:[%s0 + $0x6c] sm:$0xf]
  %v55 = vld [vmem:[%s0 + $0x70] sm:$0xf]
  %v56 = vld [vmem:[%s0 + $0x74] sm:$0xf]
  %v57 = vld [vmem:[%s0 + $0x78] sm:$0xf]
  %v58 = vld [vmem:[%s0 + $0x7c] sm:$0xf]
  %v59 = vld [vmem:[%s0 + $0x80] sm:$0xf]
  %v60 = vld [vmem:[%s0 + $0x84] sm:$0xf]
  %v61 = vld [vmem:[%s0 + $0x88] sm:$0xf]
  %v62 = vld [vmem:[%s0 + $0x8c] sm:$0xf]
  %v63 = vld [vmem:[%s0 + $0x90] sm:$0xf]
  %v64 = vld [vmem:[%s0 + $0x94] sm:$0xf]
  %v65 = vld [vmem:[%s0 + $0x98] sm:$0xf]
  %v66 = vld [vmem:[%s0 + $0x9c] sm:$0xf]
  %v67 = vld [vmem:[%s0 + $0xa0] sm:$0xf]
  %v68 = vld [vmem:[%s0 + $0xa4] sm:$0xf]
  %v69 = vld [vmem:[%s0 + $0xa8] sm:$0xf]
  %v70 = vld [vmem:[%s0 + $0xac] sm:$0xf]
  %v71 = vld [vmem:[%s0 + $0xb0] sm:$0xf]
  %v72 = vld [vmem:[%s0 + $0xb4] sm:$0xf]
  %v73 = vld [vmem:[%s0 + $0xb8] sm:$0xf]
  %v74 = vld [vmem:[%s0 + $0xbc] sm:$0xf]
  %v75 = vld [vmem:[%s0 + $0xc0] sm:$0xf]
  %v76 = vld [vmem:[%s0 + $0xc4] sm:$0xf]
  %v77 = vld [vmem:[%s0 + $0xc8] sm:$0xf]
  %v78 = vld [vmem:[%s0 + $0xcc] sm:$0xf]
  %v79 = vld [vmem:[%s0 + $0xd0] sm:$0xf]
  %v80 = vld [vmem:[%s0 + $0xd4] sm:$0xf]
  %v81 = vld [vmem:[%s0 + $0xd8] sm:$0xf]
  %v82 = vld [vmem:[%s0 + $0xdc] sm:$0xf]
  %v83 = vld [vmem:[%s0 + $0xe0] sm:$0xf]
  %v84 = vld [vmem:[%s0 + $0xe4] sm:$0xf]
  %v85 = vld [vmem:[%s0 + $0xe8] sm:$0xf]
  %v86 = vld [vmem:[%s0 + $0xec] sm:$0xf]
  %v87 = vld [vmem:[%s0 + $0xf0] sm:$0xf]
  %v88 = vld [vmem:[%s0 + $0xf4] sm:$0xf]
  %v89 = vld [vmem:[%s0 + $0xf8] sm:$0xf]
  %v90 = vld [vmem:[%s0 + $0xfc] sm:$0xf]
  %v91 = vld [vmem:[%s1] sm:$0xf]
  %v92 = vld [vmem:[%s1 + $0x4] sm:$0xf]
  %v93 = vld [vmem:[%s2] sm:$0x1]
  %v95 = vlaneseq
  %v96 = vshrl.u32 %v95, 7
  %v97 = vsub.s32 0, %v96
  %v98 = vrot.slane %v93, %v97
  %v164 = vunpack.c.l.b16 %v27
  %v165 = vunpack.c.l.b16 %v28
  %v166 = vunpack.c.l.b16 %v29
  %v167 = vunpack.c.l.b16 %v30
  %v168 = vunpack.c.l.b16 %v31
  %v169 = vunpack.c.l.b16 %v32
  %v170 = vunpack.c.l.b16 %v33
  %v171 = vunpack.c.l.b16 %v34
  %v172 = vunpack.c.l.b16 %v35
  %v173 = vunpack.c.l.b16 %v36
  %v174 = vunpack.c.l.b16 %v37
  %v175 = vunpack.c.l.b16 %v38
  %v176 = vunpack.c.l.b16 %v39
  %v177 = vunpack.c.l.b16 %v40
  %v178 = vunpack.c.l.b16 %v41
  %v179 = vunpack.c.l.b16 %v42
  %v180 = vunpack.c.l.b16 %v43
  %v181 = vunpack.c.l.b16 %v44
  %v182 = vunpack.c.l.b16 %v45
  %v183 = vunpack.c.l.b16 %v46
  %v184 = vunpack.c.l.b16 %v47
  %v185 = vunpack.c.l.b16 %v48
  %v186 = vunpack.c.l.b16 %v49
  %v187 = vunpack.c.l.b16 %v50
  %v188 = vunpack.c.l.b16 %v51
  %v189 = vunpack.c.l.b16 %v52
  %v190 = vunpack.c.l.b16 %v53
  %v191 = vunpack.c.l.b16 %v54
  %v192 = vunpack.c.l.b16 %v55
  %v193 = vunpack.c.l.b16 %v56
  %v194 = vunpack.c.l.b16 %v57
  %v195 = vunpack.c.l.b16 %v58
  %v196 = vunpack.c.l.b16 %v59
  %v197 = vunpack.c.l.b16 %v60
  %v198 = vunpack.c.l.b16 %v61
  %v199 = vunpack.c.l.b16 %v62
  %v200 = vunpack.c.l.b16 %v63
  %v201 = vunpack.c.l.b16 %v64
  %v202 = vunpack.c.l.b16 %v65
  %v203 = vunpack.c.l.b16 %v66
  %v204 = vunpack.c.l.b16 %v67
  %v205 = vunpack.c.l.b16 %v68
  %v206 = vunpack.c.l.b16 %v69
  %v207 = vunpack.c.l.b16 %v70
  %v208 = vunpack.c.l.b16 %v71
  %v209 = vunpack.c.l.b16 %v72
  %v210 = vunpack.c.l.b16 %v73
  %v211 = vunpack.c.l.b16 %v74
  %v212 = vunpack.c.l.b16 %v75
  %v213 = vunpack.c.l.b16 %v76
  %v214 = vunpack.c.l.b16 %v77
  %v215 = vunpack.c.l.b16 %v78
  %v216 = vunpack.c.l.b16 %v79
  %v217 = vunpack.c.l.b16 %v80
  %v218 = vunpack.c.l.b16 %v81
  %v219 = vunpack.c.l.b16 %v82
  %v220 = vunpack.c.l.b16 %v83
  %v221 = vunpack.c.l.b16 %v84
  %v222 = vunpack.c.l.b16 %v85
  %v223 = vunpack.c.l.b16 %v86
  %v224 = vunpack.c.l.b16 %v87
  %v225 = vunpack.c.l.b16 %v88
  %v226 = vunpack.c.l.b16 %v89
  %v227 = vunpack.c.l.b16 %v90
  %v228 = vpack.c.b16 %v165, %v164
  %v229 = vpack.c.b16 %v167, %v166
  %v230 = vpack.c.b16 %v169, %v168
  %v231 = vpack.c.b16 %v171, %v170
  %v232 = vpack.c.b16 %v173, %v172
  %v233 = vpack.c.b16 %v175, %v174
  %v234 = vpack.c.b16 %v177, %v176
  %v235 = vpack.c.b16 %v179, %v178
  %v236 = vpack.c.b16 %v181, %v180
  %v237 = vpack.c.b16 %v183, %v182
  %v238 = vpack.c.b16 %v185, %v184
  %v239 = vpack.c.b16 %v187, %v186
  %v240 = vpack.c.b16 %v189, %v188
  %v241 = vpack.c.b16 %v191, %v190
  %v242 = vpack.c.b16 %v193, %v192
  %v243 = vpack.c.b16 %v195, %v194
  %v244 = vpack.c.b16 %v197, %v196
  %v245 = vpack.c.b16 %v199, %v198
  %v246 = vpack.c.b16 %v201, %v200
  %v247 = vpack.c.b16 %v203, %v202
  %v248 = vpack.c.b16 %v205, %v204
  %v249 = vpack.c.b16 %v207, %v206
  %v250 = vpack.c.b16 %v209, %v208
  %v251 = vpack.c.b16 %v211, %v210
  %v252 = vpack.c.b16 %v213, %v212
  %v253 = vpack.c.b16 %v215, %v214
  %v254 = vpack.c.b16 %v217, %v216
  %v255 = vpack.c.b16 %v219, %v218
  %v256 = vpack.c.b16 %v221, %v220
  %v257 = vpack.c.b16 %v223, %v222
  %v258 = vpack.c.b16 %v225, %v224
  %v259 = vpack.c.b16 %v227, %v226
  %v262 = vunpack.c.l.b16 %v91
  %v263 = vunpack.c.l.b16 %v92
  %v264 = vpack.c.b16 %v263, %v262
  %vm266 = vcmask 130048
  %v268 = vsel %vm266, %v228, 0
  %v271 = vsel %vm266, %v229, 0
  %v274 = vsel %vm266, %v230, 0
  %v277 = vsel %vm266, %v231, 0
  %v280 = vsel %vm266, %v232, 0
  %v283 = vsel %vm266, %v233, 0
  %v286 = vsel %vm266, %v234, 0
  %v289 = vsel %vm266, %v235, 0
  %v292 = vsel %vm266, %v236, 0
  %v295 = vsel %vm266, %v237, 0
  %v298 = vsel %vm266, %v238, 0
  %v301 = vsel %vm266, %v239, 0
  %v304 = vsel %vm266, %v240, 0
  %v307 = vsel %vm266, %v241, 0
  %v310 = vsel %vm266, %v242, 0
  %v313 = vsel %vm266, %v243, 0
  %v316 = vsel %vm266, %v244, 0
  %v319 = vsel %vm266, %v245, 0
  %v322 = vsel %vm266, %v246, 0
  %v325 = vsel %vm266, %v247, 0
  %v328 = vsel %vm266, %v248, 0
  %v331 = vsel %vm266, %v249, 0
  %v334 = vsel %vm266, %v250, 0
  %v337 = vsel %vm266, %v251, 0
  %v340 = vsel %vm266, %v252, 0
  %v343 = vsel %vm266, %v253, 0
  %v346 = vsel %vm266, %v254, 0
  %v349 = vsel %vm266, %v255, 0
  %v352 = vsel %vm266, %v256, 0
  %v355 = vsel %vm266, %v257, 0
  %v358 = vsel %vm266, %v258, 0
  %v361 = vsel %vm266, %v259, 0
  %363 = vmatprep.subr.bf16.mxu0 0
  %364 = vmatpush1.bf16.msra.mxu0 0
  %365 = vmatprep.subr.bf16.mxu0 0
  %366 = vmatpush1.bf16.msra.mxu0 0
  %367 = vmatprep.subr.bf16.mxu0 0
  %368 = vmatpush1.bf16.msra.mxu0 0
  %369 = vmatprep.subr.bf16.mxu0 0
  %370 = vmatpush1.bf16.msra.mxu0 0
  %371 = vmatprep.subr.bf16.mxu0 0
  %372 = vmatpush1.bf16.msra.mxu0 0
  %373 = vmatprep.subr.bf16.mxu0 0
  %374 = vmatpush1.bf16.msra.mxu0 0
  %375 = vmatprep.subr.bf16.mxu0 0
  %376 = vmatpush1.bf16.msra.mxu0 0
  %377 = vmatprep.subr.bf16.mxu0 0
  %378 = vmatpush1.bf16.msra.mxu0 %v264
  %379 = vmatprep.subr.bf16.mxu0 0
  %380 = vmatpush2.bf16.msra.mxu0 0
  %381 = vmatprep.subr.bf16.mxu0 0
  %382 = vmatpush2.bf16.msra.mxu0 0
  %383 = vmatprep.subr.bf16.mxu0 0
  %384 = vmatpush2.bf16.msra.mxu0 0
  %385 = vmatprep.subr.bf16.mxu0 0
  %386 = vmatpush2.bf16.msra.mxu0 0
  %387 = vmatprep.subr.bf16.mxu0 0
  %388 = vmatpush2.bf16.msra.mxu0 0
  %389 = vmatprep.subr.bf16.mxu0 0
  %390 = vmatpush2.bf16.msra.mxu0 0
  %391 = vmatprep.subr.bf16.mxu0 0
  %392 = vmatpush2.bf16.msra.mxu0 0
  %393 = vmatprep.subr.bf16.mxu0 0
  %394 = vmatpush2.bf16.msra.mxu0 0
  %395 = vmatprep.mubr.bf16.mxu0 0
  %396 = vmatmul.mubr.bf16.gmra.mxu0 %v268
  %v397 = vpop.f32.mrf.mxu0
  %v398 = vadd.f32 %v98, %v397
  %v399 = vpop.f32.mrf.mxu0
  %v400 = vpop.f32.mrf.mxu0
  %v401 = vadd.f32 %v98, %v400
  %v402 = vpop.f32.mrf.mxu0
  %403 = vmatprep.mubr.bf16.mxu0 0
  %404 = vmatmul.mubr.bf16.gmra.mxu0 %v271
  %v405 = vpop.f32.mrf.mxu0
  %v406 = vadd.f32 %v98, %v405
  %v407 = vpop.f32.mrf.mxu0
  %v408 = vpop.f32.mrf.mxu0
  %v409 = vadd.f32 %v98, %v408
  %v410 = vpop.f32.mrf.mxu0
  %411 = vmatprep.mubr.bf16.mxu0 0
  %412 = vmatmul.mubr.bf16.gmra.mxu0 %v274
  %v413 = vpop.f32.mrf.mxu0
  %v414 = vadd.f32 %v98, %v413
  %v415 = vpop.f32.mrf.mxu0
  %v416 = vpop.f32.mrf.mxu0
  %v417 = vadd.f32 %v98, %v416
  %v418 = vpop.f32.mrf.mxu0
  %419 = vmatprep.mubr.bf16.mxu0 0
  %420 = vmatmul.mubr.bf16.gmra.mxu0 %v277
  %v421 = vpop.f32.mrf.mxu0
  %v422 = vadd.f32 %v98, %v421
  %v423 = vpop.f32.mrf.mxu0
  %v424 = vpop.f32.mrf.mxu0
  %v425 = vadd.f32 %v98, %v424
  %v426 = vpop.f32.mrf.mxu0
  %427 = vmatprep.mubr.bf16.mxu0 0
  %428 = vmatmul.mubr.bf16.gmra.mxu0 %v280
  %v429 = vpop.f32.mrf.mxu0
  %v430 = vadd.f32 %v98, %v429
  %v431 = vpop.f32.mrf.mxu0
  %v432 = vpop.f32.mrf.mxu0
  %v433 = vadd.f32 %v98, %v432
  %v434 = vpop.f32.mrf.mxu0
  %435 = vmatprep.mubr.bf16.mxu0 0
  %436 = vmatmul.mubr.bf16.gmra.mxu0 %v283
  %v437 = vpop.f32.mrf.mxu0
  %v438 = vadd.f32 %v98, %v437
  %v439 = vpop.f32.mrf.mxu0
  %v440 = vpop.f32.mrf.mxu0
  %v441 = vadd.f32 %v98, %v440
  %v442 = vpop.f32.mrf.mxu0
  %443 = vmatprep.mubr.bf16.mxu0 0
  %444 = vmatmul.mubr.bf16.gmra.mxu0 %v286
  %v445 = vpop.f32.mrf.mxu0
  %v446 = vadd.f32 %v98, %v445
  %v447 = vpop.f32.mrf.mxu0
  %v448 = vpop.f32.mrf.mxu0
  %v449 = vadd.f32 %v98, %v448
  %v450 = vpop.f32.mrf.mxu0
  %451 = vmatprep.mubr.bf16.mxu0 0
  %452 = vmatmul.mubr.bf16.gmra.mxu0 %v289
  %v453 = vpop.f32.mrf.mxu0
  %v454 = vadd.f32 %v98, %v453
  %v455 = vpop.f32.mrf.mxu0
  %v456 = vpop.f32.mrf.mxu0
  %v457 = vadd.f32 %v98, %v456
  %v458 = vpop.f32.mrf.mxu0
  %459 = vmatprep.mubr.bf16.mxu0 0
  %460 = vmatmul.mubr.bf16.gmra.mxu0 %v292
  %v461 = vpop.f32.mrf.mxu0
  %v462 = vadd.f32 %v98, %v461
  %v463 = vpop.f32.mrf.mxu0
  %v464 = vpop.f32.mrf.mxu0
  %v465 = vadd.f32 %v98, %v464
  %v466 = vpop.f32.mrf.mxu0
  %467 = vmatprep.mubr.bf16.mxu0 0
  %468 = vmatmul.mubr.bf16.gmra.mxu0 %v295
  %v469 = vpop.f32.mrf.mxu0
  %v470 = vadd.f32 %v98, %v469
  %v471 = vpop.f32.mrf.mxu0
  %v472 = vpop.f32.mrf.mxu0
  %v473 = vadd.f32 %v98, %v472
  %v474 = vpop.f32.mrf.mxu0
  %475 = vmatprep.mubr.bf16.mxu0 0
  %476 = vmatmul.mubr.bf16.gmra.mxu0 %v298
  %v477 = vpop.f32.mrf.mxu0
  %v478 = vadd.f32 %v98, %v477
  %v479 = vpop.f32.mrf.mxu0
  %v480 = vpop.f32.mrf.mxu0
  %v481 = vadd.f32 %v98, %v480
  %v482 = vpop.f32.mrf.mxu0
  %483 = vmatprep.mubr.bf16.mxu0 0
  %484 = vmatmul.mubr.bf16.gmra.mxu0 %v301
  %v485 = vpop.f32.mrf.mxu0
  %v486 = vadd.f32 %v98, %v485
  %v487 = vpop.f32.mrf.mxu0
  %v488 = vpop.f32.mrf.mxu0
  %v489 = vadd.f32 %v98, %v488
  %v490 = vpop.f32.mrf.mxu0
  %491 = vmatprep.mubr.bf16.mxu0 0
  %492 = vmatmul.mubr.bf16.gmra.mxu0 %v304
  %v493 = vpop.f32.mrf.mxu0
  %v494 = vadd.f32 %v98, %v493
  %v495 = vpop.f32.mrf.mxu0
  %v496 = vpop.f32.mrf.mxu0
  %v497 = vadd.f32 %v98, %v496
  %v498 = vpop.f32.mrf.mxu0
  %499 = vmatprep.mubr.bf16.mxu0 0
  %500 = vmatmul.mubr.bf16.gmra.mxu0 %v307
  %v501 = vpop.f32.mrf.mxu0
  %v502 = vadd.f32 %v98, %v501
  %v503 = vpop.f32.mrf.mxu0
  %v504 = vpop.f32.mrf.mxu0
  %v505 = vadd.f32 %v98, %v504
  %v506 = vpop.f32.mrf.mxu0
  %507 = vmatprep.mubr.bf16.mxu0 0
  %508 = vmatmul.mubr.bf16.gmra.mxu0 %v310
  %v509 = vpop.f32.mrf.mxu0
  %v510 = vadd.f32 %v98, %v509
  %v511 = vpop.f32.mrf.mxu0
  %v512 = vpop.f32.mrf.mxu0
  %v513 = vadd.f32 %v98, %v512
  %v514 = vpop.f32.mrf.mxu0
  %515 = vmatprep.mubr.bf16.mxu0 0
  %516 = vmatmul.mubr.bf16.gmra.mxu0 %v313
  %v517 = vpop.f32.mrf.mxu0
  %v518 = vadd.f32 %v98, %v517
  %v519 = vpop.f32.mrf.mxu0
  %v520 = vpop.f32.mrf.mxu0
  %v521 = vadd.f32 %v98, %v520
  %v522 = vpop.f32.mrf.mxu0
  %523 = vmatprep.mubr.bf16.mxu0 0
  %524 = vmatmul.mubr.bf16.gmra.mxu0 %v316
  %v525 = vpop.f32.mrf.mxu0
  %v526 = vadd.f32 %v98, %v525
  %v527 = vpop.f32.mrf.mxu0
  %v528 = vpop.f32.mrf.mxu0
  %v529 = vadd.f32 %v98, %v528
  %v530 = vpop.f32.mrf.mxu0
  %531 = vmatprep.mubr.bf16.mxu0 0
  %532 = vmatmul.mubr.bf16.gmra.mxu0 %v319
  %v533 = vpop.f32.mrf.mxu0
  %v534 = vadd.f32 %v98, %v533
  %v535 = vpop.f32.mrf.mxu0
  %v536 = vpop.f32.mrf.mxu0
  %v537 = vadd.f32 %v98, %v536
  %v538 = vpop.f32.mrf.mxu0
  %539 = vmatprep.mubr.bf16.mxu0 0
  %540 = vmatmul.mubr.bf16.gmra.mxu0 %v322
  %v541 = vpop.f32.mrf.mxu0
  %v542 = vadd.f32 %v98, %v541
  %v543 = vpop.f32.mrf.mxu0
  %v544 = vpop.f32.mrf.mxu0
  %v545 = vadd.f32 %v98, %v544
  %v546 = vpop.f32.mrf.mxu0
  %547 = vmatprep.mubr.bf16.mxu0 0
  %548 = vmatmul.mubr.bf16.gmra.mxu0 %v325
  %v549 = vpop.f32.mrf.mxu0
  %v550 = vadd.f32 %v98, %v549
  %v551 = vpop.f32.mrf.mxu0
  %v552 = vpop.f32.mrf.mxu0
  %v553 = vadd.f32 %v98, %v552
  %v554 = vpop.f32.mrf.mxu0
  %555 = vmatprep.mubr.bf16.mxu0 0
  %556 = vmatmul.mubr.bf16.gmra.mxu0 %v328
  %v557 = vpop.f32.mrf.mxu0
  %v558 = vadd.f32 %v98, %v557
  %v559 = vpop.f32.mrf.mxu0
  %v560 = vpop.f32.mrf.mxu0
  %v561 = vadd.f32 %v98, %v560
  %v562 = vpop.f32.mrf.mxu0
  %563 = vmatprep.mubr.bf16.mxu0 0
  %564 = vmatmul.mubr.bf16.gmra.mxu0 %v331
  %v565 = vpop.f32.mrf.mxu0
  %v566 = vadd.f32 %v98, %v565
  %v567 = vpop.f32.mrf.mxu0
  %v568 = vpop.f32.mrf.mxu0
  %v569 = vadd.f32 %v98, %v568
  %v570 = vpop.f32.mrf.mxu0
  %571 = vmatprep.mubr.bf16.mxu0 0
  %572 = vmatmul.mubr.bf16.gmra.mxu0 %v334
  %v573 = vpop.f32.mrf.mxu0
  %v574 = vadd.f32 %v98, %v573
  %v575 = vpop.f32.mrf.mxu0
  %v576 = vpop.f32.mrf.mxu0
  %v577 = vadd.f32 %v98, %v576
  %v578 = vpop.f32.mrf.mxu0
  %579 = vmatprep.mubr.bf16.mxu0 0
  %580 = vmatmul.mubr.bf16.gmra.mxu0 %v337
  %v581 = vpop.f32.mrf.mxu0
  %v582 = vadd.f32 %v98, %v581
  %v583 = vpop.f32.mrf.mxu0
  %v584 = vpop.f32.mrf.mxu0
  %v585 = vadd.f32 %v98, %v584
  %v586 = vpop.f32.mrf.mxu0
  %587 = vmatprep.mubr.bf16.mxu0 0
  %588 = vmatmul.mubr.bf16.gmra.mxu0 %v340
  %v589 = vpop.f32.mrf.mxu0
  %v590 = vadd.f32 %v98, %v589
  %v591 = vpop.f32.mrf.mxu0
  %v592 = vpop.f32.mrf.mxu0
  %v593 = vadd.f32 %v98, %v592
  %v594 = vpop.f32.mrf.mxu0
  %595 = vmatprep.mubr.bf16.mxu0 0
  %596 = vmatmul.mubr.bf16.gmra.mxu0 %v343
  %v597 = vpop.f32.mrf.mxu0
  %v598 = vadd.f32 %v98, %v597
  %v599 = vpop.f32.mrf.mxu0
  %v600 = vpop.f32.mrf.mxu0
  %v601 = vadd.f32 %v98, %v600
  %v602 = vpop.f32.mrf.mxu0
  %603 = vmatprep.mubr.bf16.mxu0 0
  %604 = vmatmul.mubr.bf16.gmra.mxu0 %v346
  %v605 = vpop.f32.mrf.mxu0
  %v606 = vadd.f32 %v98, %v605
  %v607 = vpop.f32.mrf.mxu0
  %v608 = vpop.f32.mrf.mxu0
  %v609 = vadd.f32 %v98, %v608
  %v610 = vpop.f32.mrf.mxu0
  %611 = vmatprep.mubr.bf16.mxu0 0
  %612 = vmatmul.mubr.bf16.gmra.mxu0 %v349
  %v613 = vpop.f32.mrf.mxu0
  %v614 = vadd.f32 %v98, %v613
  %v615 = vpop.f32.mrf.mxu0
  %v616 = vpop.f32.mrf.mxu0
  %v617 = vadd.f32 %v98, %v616
  %v618 = vpop.f32.mrf.mxu0
  %619 = vmatprep.mubr.bf16.mxu0 0
  %620 = vmatmul.mubr.bf16.gmra.mxu0 %v352
  %v621 = vpop.f32.mrf.mxu0
  %v622 = vadd.f32 %v98, %v621
  %v623 = vpop.f32.mrf.mxu0
  %v624 = vpop.f32.mrf.mxu0
  %v625 = vadd.f32 %v98, %v624
  %v626 = vpop.f32.mrf.mxu0
  %627 = vmatprep.mubr.bf16.mxu0 0
  %628 = vmatmul.mubr.bf16.gmra.mxu0 %v355
  %v629 = vpop.f32.mrf.mxu0
  %v630 = vadd.f32 %v98, %v629
  %v631 = vpop.f32.mrf.mxu0
  %v632 = vpop.f32.mrf.mxu0
  %v633 = vadd.f32 %v98, %v632
  %v634 = vpop.f32.mrf.mxu0
  %635 = vmatprep.mubr.bf16.mxu0 0
  %636 = vmatmul.mubr.bf16.gmra.mxu0 %v358
  %v637 = vpop.f32.mrf.mxu0
  %v638 = vadd.f32 %v98, %v637
  %v639 = vpop.f32.mrf.mxu0
  %v640 = vpop.f32.mrf.mxu0
  %v641 = vadd.f32 %v98, %v640
  %v642 = vpop.f32.mrf.mxu0
  %643 = vmatprep.mubr.bf16.mxu0 0
  %644 = vmatmul.mubr.bf16.gmra.mxu0 %v361
  %v645 = vpop.f32.mrf.mxu0
  %v646 = vadd.f32 %v98, %v645
  %v647 = vpop.f32.mrf.mxu0
  %v648 = vpop.f32.mrf.mxu0
  %v649 = vadd.f32 %v98, %v648
  %v650 = vpop.f32.mrf.mxu0
  %651 = vdwg.mxu0
  %v652 = vmax.f32 %v398, 0.0
  %v653 = vmax.f32 %v401, 0.0
  %v654 = vmax.f32 %v406, 0.0
  %v655 = vmax.f32 %v409, 0.0
  %v656 = vmax.f32 %v414, 0.0
  %v657 = vmax.f32 %v417, 0.0
  %v658 = vmax.f32 %v422, 0.0
  %v659 = vmax.f32 %v425, 0.0
  %v660 = vmax.f32 %v430, 0.0
  %v661 = vmax.f32 %v433, 0.0
  %v662 = vmax.f32 %v438, 0.0
  %v663 = vmax.f32 %v441, 0.0
  %v664 = vmax.f32 %v446, 0.0
  %v665 = vmax.f32 %v449, 0.0
  %v666 = vmax.f32 %v454, 0.0
  %v667 = vmax.f32 %v457, 0.0
  %v668 = vmax.f32 %v462, 0.0
  %v669 = vmax.f32 %v465, 0.0
  %v670 = vmax.f32 %v470, 0.0
  %v671 = vmax.f32 %v473, 0.0
  %v672 = vmax.f32 %v478, 0.0
  %v673 = vmax.f32 %v481, 0.0
  %v674 = vmax.f32 %v486, 0.0
  %v675 = vmax.f32 %v489, 0.0
  %v676 = vmax.f32 %v494, 0.0
  %v677 = vmax.f32 %v497, 0.0
  %v678 = vmax.f32 %v502, 0.0
  %v679 = vmax.f32 %v505, 0.0
  %v680 = vmax.f32 %v510, 0.0
  %v681 = vmax.f32 %v513, 0.0
  %v682 = vmax.f32 %v518, 0.0
  %v683 = vmax.f32 %v521, 0.0
  %v684 = vmax.f32 %v526, 0.0
  %v685 = vmax.f32 %v529, 0.0
  %v686 = vmax.f32 %v534, 0.0
  %v687 = vmax.f32 %v537, 0.0
  %v688 = vmax.f32 %v542, 0.0
  %v689 = vmax.f32 %v545, 0.0
  %v690 = vmax.f32 %v550, 0.0
  %v691 = vmax.f32 %v553, 0.0
  %v692 = vmax.f32 %v558, 0.0
  %v693 = vmax.f32 %v561, 0.0
  %v694 = vmax.f32 %v566, 0.0
  %v695 = vmax.f32 %v569, 0.0
  %v696 = vmax.f32 %v574, 0.0
  %v697 = vmax.f32 %v577, 0.0
  %v698 = vmax.f32 %v582, 0.0
  %v699 = vmax.f32 %v585, 0.0
  %v700 = vmax.f32 %v590, 0.0
  %v701 = vmax.f32 %v593, 0.0
  %v702 = vmax.f32 %v598, 0.0
  %v703 = vmax.f32 %v601, 0.0
  %v704 = vmax.f32 %v606, 0.0
  %v705 = vmax.f32 %v609, 0.0
  %v706 = vmax.f32 %v614, 0.0
  %v707 = vmax.f32 %v617, 0.0
  %v708 = vmax.f32 %v622, 0.0
  %v709 = vmax.f32 %v625, 0.0
  %v710 = vmax.f32 %v630, 0.0
  %v711 = vmax.f32 %v633, 0.0
  %v712 = vmax.f32 %v638, 0.0
  %v713 = vmax.f32 %v641, 0.0
  %v714 = vmax.f32 %v646, 0.0
  %v715 = vmax.f32 %v649, 0.0
  %vm716 = vcmask 27648
  %717 = vst.msk [vmem:[#allocation2] sm:$0xf] %vm716, 0
  %718 = vst.msk [vmem:[#allocation2 + $0x4] sm:$0xf] %vm716, 0
  %vm719 = vcmask 24576
  %720 = vst.msk [vmem:[#allocation2 + $0x8] sm:$0x1] %vm719, 0
  %721 = vst.msk [vmem:[#allocation2 + $0xd8] sm:$0xf] %vm716, 0
  %722 = vst.msk [vmem:[#allocation2 + $0xdc] sm:$0xf] %vm716, 0
  %723 = vst.msk [vmem:[#allocation2 + $0xe0] sm:$0x1] %vm719, 0
  %s724 = scalar_lea.vmem [#allocation2], 204
  %725 = vst.msk [vmem:[%s724] sm:$0xf] %vm716, 0
  %726 = vst.msk [vmem:[%s724 + $0x4] sm:$0xf] %vm716, 0
  %727 = vst.msk [vmem:[%s724 + $0x8] sm:$0x1] %vm719, 0
  %728 = vst.msk [vmem:[%s724 + $0xd8] sm:$0xf] %vm716, 0
  %729 = vst.msk [vmem:[%s724 + $0xdc] sm:$0xf] %vm716, 0
  %730 = vst.msk [vmem:[%s724 + $0xe0] sm:$0x1] %vm719, 0
  %vm731 = vcmask 24576
  %vm732 = vsmask.f32 256
  %vm733 = vmand %vm731, %vm732
  %v734 = vld [vmem:[#allocation2] sm:$0x1]
  %v735 = vsel %vm733, 0, %v734
  %736 = vst [vmem:[#allocation2] sm:$0x1] %v735
  %v737 = vld [vmem:[#allocation2 + $0xc] sm:$0x1]
  %v738 = vsel %vm733, 0, %v737
  %739 = vst [vmem:[#allocation2 + $0xc] sm:$0x1] %v738
  %v740 = vld [vmem:[#allocation2 + $0x18] sm:$0x1]
  %v741 = vsel %vm733, 0, %v740
  %742 = vst [vmem:[#allocation2 + $0x18] sm:$0x1] %v741
  %v743 = vld [vmem:[#allocation2 + $0x24] sm:$0x1]
  %v744 = vsel %vm733, 0, %v743
  %745 = vst [vmem:[#allocation2 + $0x24] sm:$0x1] %v744
  %v746 = vld [vmem:[#allocation2 + $0x30] sm:$0x1]
  %v747 = vsel %vm733, 0, %v746
  %748 = vst [vmem:[#allocation2 + $0x30] sm:$0x1] %v747
  %v749 = vld [vmem:[#allocation2 + $0x3c] sm:$0x1]
  %v750 = vsel %vm733, 0, %v749
  %751 = vst [vmem:[#allocation2 + $0x3c] sm:$0x1] %v750
  %v752 = vld [vmem:[#allocation2 + $0x48] sm:$0x1]
  %v753 = vsel %vm733, 0, %v752
  %754 = vst [vmem:[#allocation2 + $0x48] sm:$0x1] %v753
  %v755 = vld [vmem:[#allocation2 + $0x54] sm:$0x1]
  %v756 = vsel %vm733, 0, %v755
  %757 = vst [vmem:[#allocation2 + $0x54] sm:$0x1] %v756
  %v758 = vld [vmem:[#allocation2 + $0x60] sm:$0x1]
  %v759 = vsel %vm733, 0, %v758
  %760 = vst [vmem:[#allocation2 + $0x60] sm:$0x1] %v759
  %v761 = vld [vmem:[#allocation2 + $0x6c] sm:$0x1]
  %v762 = vsel %vm733, 0, %v761
  %763 = vst [vmem:[#allocation2 + $0x6c] sm:$0x1] %v762
  %v764 = vld [vmem:[#allocation2 + $0x78] sm:$0x1]
  %v765 = vsel %vm733, 0, %v764
  %766 = vst [vmem:[#allocation2 + $0x78] sm:$0x1] %v765
  %v767 = vld [vmem:[#allocation2 + $0x84] sm:$0x1]
  %v768 = vsel %vm733, 0, %v767
  %769 = vst [vmem:[#allocation2 + $0x84] sm:$0x1] %v768
  %v770 = vld [vmem:[#allocation2 + $0x90] sm:$0x1]
  %v771 = vsel %vm733, 0, %v770
  %772 = vst [vmem:[#allocation2 + $0x90] sm:$0x1] %v771
  %v773 = vld [vmem:[#allocation2 + $0x9c] sm:$0x1]
  %v774 = vsel %vm733, 0, %v773
  %775 = vst [vmem:[#allocation2 + $0x9c] sm:$0x1] %v774
  %v776 = vld [vmem:[#allocation2 + $0xa8] sm:$0x1]
  %v777 = vsel %vm733, 0, %v776
  %778 = vst [vmem:[#allocation2 + $0xa8] sm:$0x1] %v777
  %v779 = vld [vmem:[#allocation2 + $0xb4] sm:$0x1]
  %v780 = vsel %vm733, 0, %v779
  %781 = vst [vmem:[#allocation2 + $0xb4] sm:$0x1] %v780
  %v782 = vld [vmem:[#allocation2 + $0xc0] sm:$0x1]
  %v783 = vsel %vm733, 0, %v782
  %784 = vst [vmem:[#allocation2 + $0xc0] sm:$0x1] %v783
  %v785 = vld [vmem:[#allocation2 + $0xcc] sm:$0x1]
  %v786 = vsel %vm733, 0, %v785
  %787 = vst [vmem:[#allocation2 + $0xcc] sm:$0x1] %v786
  %v788 = vld [vmem:[#allocation2 + $0xd8] sm:$0x1]
  %v789 = vsel %vm733, 0, %v788
  %790 = vst [vmem:[#allocation2 + $0xd8] sm:$0x1] %v789
  %v791 = vld [vmem:[#allocation2 + $0xe4] sm:$0x1]
  %v792 = vsel %vm733, 0, %v791
  %793 = vst [vmem:[#allocation2 + $0xe4] sm:$0x1] %v792
  %v794 = vld [vmem:[#allocation2 + $0xf0] sm:$0x1]
  %v795 = vsel %vm733, 0, %v794
  %796 = vst [vmem:[#allocation2 + $0xf0] sm:$0x1] %v795
  %v797 = vld [vmem:[#allocation2 + $0xfc] sm:$0x1]
  %v798 = vsel %vm733, 0, %v797
  %799 = vst [vmem:[#allocation2 + $0xfc] sm:$0x1] %v798
  %v800 = vld [vmem:[#allocation2 + $0x108] sm:$0x1]
  %v801 = vsel %vm733, 0, %v800
  %802 = vst [vmem:[#allocation2 + $0x108] sm:$0x1] %v801
  %v803 = vld [vmem:[#allocation2 + $0x114] sm:$0x1]
  %v804 = vsel %vm733, 0, %v803
  %805 = vst [vmem:[#allocation2 + $0x114] sm:$0x1] %v804
  %v806 = vld [vmem:[#allocation2 + $0x120] sm:$0x1]
  %v807 = vsel %vm733, 0, %v806
  %808 = vst [vmem:[#allocation2 + $0x120] sm:$0x1] %v807
  %v809 = vld [vmem:[#allocation2 + $0x12c] sm:$0x1]
  %v810 = vsel %vm733, 0, %v809
  %811 = vst [vmem:[#allocation2 + $0x12c] sm:$0x1] %v810
  %v812 = vld [vmem:[#allocation2 + $0x138] sm:$0x1]
  %v813 = vsel %vm733, 0, %v812
  %814 = vst [vmem:[#allocation2 + $0x138] sm:$0x1] %v813
  %v815 = vld [vmem:[#allocation2 + $0x144] sm:$0x1]
  %v816 = vsel %vm733, 0, %v815
  %817 = vst [vmem:[#allocation2 + $0x144] sm:$0x1] %v816
  %v818 = vld [vmem:[#allocation2 + $0x150] sm:$0x1]
  %v819 = vsel %vm733, 0, %v818
  %820 = vst [vmem:[#allocation2 + $0x150] sm:$0x1] %v819
  %v821 = vld [vmem:[#allocation2 + $0x15c] sm:$0x1]
  %v822 = vsel %vm733, 0, %v821
  %823 = vst [vmem:[#allocation2 + $0x15c] sm:$0x1] %v822
  %v824 = vld [vmem:[#allocation2 + $0x168] sm:$0x1]
  %v825 = vsel %vm733, 0, %v824
  %826 = vst [vmem:[#allocation2 + $0x168] sm:$0x1] %v825
  %v827 = vld [vmem:[#allocation2 + $0x174] sm:$0x1]
  %v828 = vsel %vm733, 0, %v827
  %829 = vst [vmem:[#allocation2 + $0x174] sm:$0x1] %v828
  %v830 = vld [vmem:[#allocation2 + $0x180] sm:$0x1]
  %v831 = vsel %vm733, 0, %v830
  %832 = vst [vmem:[#allocation2 + $0x180] sm:$0x1] %v831
  %v833 = vld [vmem:[#allocation2 + $0x18c] sm:$0x1]
  %v834 = vsel %vm733, 0, %v833
  %835 = vst [vmem:[#allocation2 + $0x18c] sm:$0x1] %v834
  %v836 = vld [vmem:[#allocation2 + $0x198] sm:$0x1]
  %v837 = vsel %vm733, 0, %v836
  %838 = vst [vmem:[#allocation2 + $0x198] sm:$0x1] %v837
  %v839 = vld [vmem:[#allocation2 + $0x1a4] sm:$0x1]
  %v840 = vsel %vm733, 0, %v839
  %841 = vst [vmem:[#allocation2 + $0x1a4] sm:$0x1] %v840
  %vm842 = vsmask.f32 7938
  %vm843 = vmand %vm731, %vm842
  %v844 = vld [vmem:[#allocation2 + $0x8] sm:$0x1]
  %v845 = vsel %vm843, 0, %v844
  %846 = vst [vmem:[#allocation2 + $0x8] sm:$0x1] %v845
  %v847 = vld [vmem:[#allocation2 + $0x14] sm:$0x1]
  %v848 = vsel %vm843, 0, %v847
  %849 = vst [vmem:[#allocation2 + $0x14] sm:$0x1] %v848
  %v850 = vld [vmem:[#allocation2 + $0x20] sm:$0x1]
  %v851 = vsel %vm843, 0, %v850
  %852 = vst [vmem:[#allocation2 + $0x20] sm:$0x1] %v851
  %v853 = vld [vmem:[#allocation2 + $0x2c] sm:$0x1]
  %v854 = vsel %vm843, 0, %v853
  %855 = vst [vmem:[#allocation2 + $0x2c] sm:$0x1] %v854
  %v856 = vld [vmem:[#allocation2 + $0x38] sm:$0x1]
  %v857 = vsel %vm843, 0, %v856
  %858 = vst [vmem:[#allocation2 + $0x38] sm:$0x1] %v857
  %v859 = vld [vmem:[#allocation2 + $0x44] sm:$0x1]
  %v860 = vsel %vm843, 0, %v859
  %861 = vst [vmem:[#allocation2 + $0x44] sm:$0x1] %v860
  %v862 = vld [vmem:[#allocation2 + $0x50] sm:$0x1]
  %v863 = vsel %vm843, 0, %v862
  %864 = vst [vmem:[#allocation2 + $0x50] sm:$0x1] %v863
  %v865 = vld [vmem:[#allocation2 + $0x5c] sm:$0x1]
  %v866 = vsel %vm843, 0, %v865
  %867 = vst [vmem:[#allocation2 + $0x5c] sm:$0x1] %v866
  %v868 = vld [vmem:[#allocation2 + $0x68] sm:$0x1]
  %v869 = vsel %vm843, 0, %v868
  %870 = vst [vmem:[#allocation2 + $0x68] sm:$0x1] %v869
  %v871 = vld [vmem:[#allocation2 + $0x74] sm:$0x1]
  %v872 = vsel %vm843, 0, %v871
  %873 = vst [vmem:[#allocation2 + $0x74] sm:$0x1] %v872
  %v874 = vld [vmem:[#allocation2 + $0x80] sm:$0x1]
  %v875 = vsel %vm843, 0, %v874
  %876 = vst [vmem:[#allocation2 + $0x80] sm:$0x1] %v875
  %v877 = vld [vmem:[#allocation2 + $0x8c] sm:$0x1]
  %v878 = vsel %vm843, 0, %v877
  %879 = vst [vmem:[#allocation2 + $0x8c] sm:$0x1] %v878
  %v880 = vld [vmem:[#allocation2 + $0x98] sm:$0x1]
  %v881 = vsel %vm843, 0, %v880
  %882 = vst [vmem:[#allocation2 + $0x98] sm:$0x1] %v881
  %v883 = vld [vmem:[#allocation2 + $0xa4] sm:$0x1]
  %v884 = vsel %vm843, 0, %v883
  %885 = vst [vmem:[#allocation2 + $0xa4] sm:$0x1] %v884
  %v886 = vld [vmem:[#allocation2 + $0xb0] sm:$0x1]
  %v887 = vsel %vm843, 0, %v886
  %888 = vst [vmem:[#allocation2 + $0xb0] sm:$0x1] %v887
  %v889 = vld [vmem:[#allocation2 + $0xbc] sm:$0x1]
  %v890 = vsel %vm843, 0, %v889
  %891 = vst [vmem:[#allocation2 + $0xbc] sm:$0x1] %v890
  %v892 = vld [vmem:[#allocation2 + $0xc8] sm:$0x1]
  %v893 = vsel %vm843, 0, %v892
  %894 = vst [vmem:[#allocation2 + $0xc8] sm:$0x1] %v893
  %v895 = vld [vmem:[#allocation2 + $0xd4] sm:$0x1]
  %v896 = vsel %vm843, 0, %v895
  %897 = vst [vmem:[#allocation2 + $0xd4] sm:$0x1] %v896
  %v898 = vld [vmem:[#allocation2 + $0xe0] sm:$0x1]
  %v899 = vsel %vm843, 0, %v898
  %900 = vst [vmem:[#allocation2 + $0xe0] sm:$0x1] %v899
  %v901 = vld [vmem:[#allocation2 + $0xec] sm:$0x1]
  %v902 = vsel %vm843, 0, %v901
  %903 = vst [vmem:[#allocation2 + $0xec] sm:$0x1] %v902
  %v904 = vld [vmem:[#allocation2 + $0xf8] sm:$0x1]
  %v905 = vsel %vm843, 0, %v904
  %906 = vst [vmem:[#allocation2 + $0xf8] sm:$0x1] %v905
  %v907 = vld [vmem:[#allocation2 + $0x104] sm:$0x1]
  %v908 = vsel %vm843, 0, %v907
  %909 = vst [vmem:[#allocation2 + $0x104] sm:$0x1] %v908
  %v910 = vld [vmem:[#allocation2 + $0x110] sm:$0x1]
  %v911 = vsel %vm843, 0, %v910
  %912 = vst [vmem:[#allocation2 + $0x110] sm:$0x1] %v911
  %v913 = vld [vmem:[#allocation2 + $0x11c] sm:$0x1]
  %v914 = vsel %vm843, 0, %v913
  %915 = vst [vmem:[#allocation2 + $0x11c] sm:$0x1] %v914
  %v916 = vld [vmem:[#allocation2 + $0x128] sm:$0x1]
  %v917 = vsel %vm843, 0, %v916
  %918 = vst [vmem:[#allocation2 + $0x128] sm:$0x1] %v917
  %v919 = vld [vmem:[#allocation2 + $0x134] sm:$0x1]
  %v920 = vsel %vm843, 0, %v919
  %921 = vst [vmem:[#allocation2 + $0x134] sm:$0x1] %v920
  %v922 = vld [vmem:[#allocation2 + $0x140] sm:$0x1]
  %v923 = vsel %vm843, 0, %v922
  %924 = vst [vmem:[#allocation2 + $0x140] sm:$0x1] %v923
  %v925 = vld [vmem:[#allocation2 + $0x14c] sm:$0x1]
  %v926 = vsel %vm843, 0, %v925
  %927 = vst [vmem:[#allocation2 + $0x14c] sm:$0x1] %v926
  %v928 = vld [vmem:[#allocation2 + $0x158] sm:$0x1]
  %v929 = vsel %vm843, 0, %v928
  %930 = vst [vmem:[#allocation2 + $0x158] sm:$0x1] %v929
  %v931 = vld [vmem:[#allocation2 + $0x164] sm:$0x1]
  %v932 = vsel %vm843, 0, %v931
  %933 = vst [vmem:[#allocation2 + $0x164] sm:$0x1] %v932
  %v934 = vld [vmem:[#allocation2 + $0x170] sm:$0x1]
  %v935 = vsel %vm843, 0, %v934
  %936 = vst [vmem:[#allocation2 + $0x170] sm:$0x1] %v935
  %v937 = vld [vmem:[#allocation2 + $0x17c] sm:$0x1]
  %v938 = vsel %vm843, 0, %v937
  %939 = vst [vmem:[#allocation2 + $0x17c] sm:$0x1] %v938
  %v940 = vld [vmem:[#allocation2 + $0x188] sm:$0x1]
  %v941 = vsel %vm843, 0, %v940
  %942 = vst [vmem:[#allocation2 + $0x188] sm:$0x1] %v941
  %v943 = vld [vmem:[#allocation2 + $0x194] sm:$0x1]
  %v944 = vsel %vm843, 0, %v943
  %945 = vst [vmem:[#allocation2 + $0x194] sm:$0x1] %v944
  %v946 = vld [vmem:[#allocation2 + $0x1a0] sm:$0x1]
  %v947 = vsel %vm843, 0, %v946
  %948 = vst [vmem:[#allocation2 + $0x1a0] sm:$0x1] %v947
  %v949 = vld [vmem:[#allocation2 + $0x1ac] sm:$0x1]
  %v950 = vsel %vm843, 0, %v949
  %951 = vst [vmem:[#allocation2 + $0x1ac] sm:$0x1] %v950
  %v952 = vpack.c.bf16 %v653, %v652
  %v953 = vpack.c.bf16 %v655, %v654
  %v954 = vpack.c.bf16 %v657, %v656
  %v955 = vpack.c.bf16 %v659, %v658
  %v956 = vpack.c.bf16 %v661, %v660
  %v957 = vpack.c.bf16 %v663, %v662
  %v958 = vpack.c.bf16 %v665, %v664
  %v959 = vpack.c.bf16 %v667, %v666
  %v960 = vpack.c.bf16 %v669, %v668
  %v961 = vpack.c.bf16 %v671, %v670
  %v962 = vpack.c.bf16 %v673, %v672
  %v963 = vpack.c.bf16 %v675, %v674
  %v964 = vpack.c.bf16 %v677, %v676
  %v965 = vpack.c.bf16 %v679, %v678
  %v966 = vpack.c.bf16 %v681, %v680
  %v967 = vpack.c.bf16 %v683, %v682
  %v968 = vpack.c.bf16 %v685, %v684
  %v969 = vpack.c.bf16 %v687, %v686
  %v970 = vpack.c.bf16 %v689, %v688
  %v971 = vpack.c.bf16 %v691, %v690
  %v972 = vpack.c.bf16 %v693, %v692
  %v973 = vpack.c.bf16 %v695, %v694
  %v974 = vpack.c.bf16 %v697, %v696
  %v975 = vpack.c.bf16 %v699, %v698
  %v976 = vpack.c.bf16 %v701, %v700
  %v977 = vpack.c.bf16 %v703, %v702
  %v978 = vpack.c.bf16 %v705, %v704
  %v979 = vpack.c.bf16 %v707, %v706
  %v980 = vpack.c.bf16 %v709, %v708
  %v981 = vpack.c.bf16 %v711, %v710
  %v982 = vpack.c.bf16 %v713, %v712
  %v983 = vpack.c.bf16 %v715, %v714
  %v1016 = vunpack.c.l.b16 %v952
  %v1017 = vunpack.c.h.b16 %v952
  %v1018 = vunpack.c.l.b16 %v953
  %v1019 = vunpack.c.h.b16 %v953
  %v1020 = vunpack.c.l.b16 %v954
  %v1021 = vunpack.c.h.b16 %v954
  %v1022 = vunpack.c.l.b16 %v955
  %v1023 = vunpack.c.h.b16 %v955
  %v1024 = vunpack.c.l.b16 %v956
  %v1025 = vunpack.c.h.b16 %v956
  %v1026 = vunpack.c.l.b16 %v957
  %v1027 = vunpack.c.h.b16 %v957
  %v1028 = vunpack.c.l.b16 %v958
  %v1029 = vunpack.c.h.b16 %v958
  %v1030 = vunpack.c.l.b16 %v959
  %v1031 = vunpack.c.h.b16 %v959
  %v1032 = vunpack.c.l.b16 %v960
  %v1033 = vunpack.c.h.b16 %v960
  %v1034 = vunpack.c.l.b16 %v961
  %v1035 = vunpack.c.h.b16 %v961
  %v1036 = vunpack.c.l.b16 %v962
  %v1037 = vunpack.c.h.b16 %v962
  %v1038 = vunpack.c.l.b16 %v963
  %v1039 = vunpack.c.h.b16 %v963
  %v1040 = vunpack.c.l.b16 %v964
  %v1041 = vunpack.c.h.b16 %v964
  %v1042 = vunpack.c.l.b16 %v965
  %v1043 = vunpack.c.h.b16 %v965
  %v1044 = vunpack.c.l.b16 %v966
  %v1045 = vunpack.c.h.b16 %v966
  %v1046 = vunpack.c.l.b16 %v967
  %v1047 = vunpack.c.h.b16 %v967
  %v1048 = vunpack.c.l.b16 %v968
  %v1049 = vunpack.c.h.b16 %v968
  %v1050 = vunpack.c.l.b16 %v969
  %v1051 = vunpack.c.h.b16 %v969
  %v1052 = vunpack.c.l.b16 %v970
  %v1053 = vunpack.c.h.b16 %v970
  %v1054 = vunpack.c.l.b16 %v971
  %v1055 = vunpack.c.h.b16 %v971
  %v1056 = vunpack.c.l.b16 %v972
  %v1057 = vunpack.c.h.b16 %v972
  %v1058 = vunpack.c.l.b16 %v973
  %v1059 = vunpack.c.h.b16 %v973
  %v1060 = vunpack.c.l.b16 %v974
  %v1061 = vunpack.c.h.b16 %v974
  %v1062 = vunpack.c.l.b16 %v975
  %v1063 = vunpack.c.h.b16 %v975
  %v1064 = vunpack.c.l.b16 %v976
  %v1065 = vunpack.c.h.b16 %v976
  %v1066 = vunpack.c.l.b16 %v977
  %v1067 = vunpack.c.h.b16 %v977
  %v1068 = vunpack.c.l.b16 %v978
  %v1069 = vunpack.c.h.b16 %v978
  %v1070 = vunpack.c.l.b16 %v979
  %v1071 = vunpack.c.h.b16 %v979
  %v1072 = vunpack.c.l.b16 %v980
  %v1073 = vunpack.c.h.b16 %v980
  %v1074 = vunpack.c.l.b16 %v981
  %v1075 = vunpack.c.h.b16 %v981
  %v1076 = vunpack.c.l.b16 %v982
  %v1077 = vunpack.c.h.b16 %v982
  %v1078 = vunpack.c.l.b16 %v983
  %v1079 = vunpack.c.h.b16 %v983
  %v1080 = vpack.c.b16 %v1016, %v1016
  %v1081 = vpack.c.b16 %v1017, %v1017
  %v1082 = vpack.c.b16 %v1018, %v1018
  %v1083 = vpack.c.b16 %v1019, %v1019
  %v1084 = vpack.c.b16 %v1020, %v1020
  %v1085 = vpack.c.b16 %v1021, %v1021
  %v1086 = vpack.c.b16 %v1022, %v1022
  %v1087 = vpack.c.b16 %v1023, %v1023
  %v1088 = vpack.c.b16 %v1024, %v1024
  %v1089 = vpack.c.b16 %v1025, %v1025
  %v1090 = vpack.c.b16 %v1026, %v1026
  %v1091 = vpack.c.b16 %v1027, %v1027
  %v1092 = vpack.c.b16 %v1028, %v1028
  %v1093 = vpack.c.b16 %v1029, %v1029
  %v1094 = vpack.c.b16 %v1030, %v1030
  %v1095 = vpack.c.b16 %v1031, %v1031
  %v1096 = vpack.c.b16 %v1032, %v1032
  %v1097 = vpack.c.b16 %v1033, %v1033
  %v1098 = vpack.c.b16 %v1034, %v1034
  %v1099 = vpack.c.b16 %v1035, %v1035
  %v1100 = vpack.c.b16 %v1036, %v1036
  %v1101 = vpack.c.b16 %v1037, %v1037
  %v1102 = vpack.c.b16 %v1038, %v1038
  %v1103 = vpack.c.b16 %v1039, %v1039
  %v1104 = vpack.c.b16 %v1040, %v1040
  %v1105 = vpack.c.b16 %v1041, %v1041
  %v1106 = vpack.c.b16 %v1042, %v1042
  %v1107 = vpack.c.b16 %v1043, %v1043
  %v1108 = vpack.c.b16 %v1044, %v1044
  %v1109 = vpack.c.b16 %v1045, %v1045
  %v1110 = vpack.c.b16 %v1046, %v1046
  %v1111 = vpack.c.b16 %v1047, %v1047
  %v1112 = vpack.c.b16 %v1048, %v1048
  %v1113 = vpack.c.b16 %v1049, %v1049
  %v1114 = vpack.c.b16 %v1050, %v1050
  %v1115 = vpack.c.b16 %v1051, %v1051
  %v1116 = vpack.c.b16 %v1052, %v1052
  %v1117 = vpack.c.b16 %v1053, %v1053
  %v1118 = vpack.c.b16 %v1054, %v1054
  %v1119 = vpack.c.b16 %v1055, %v1055
  %v1120 = vpack.c.b16 %v1056, %v1056
  %v1121 = vpack.c.b16 %v1057, %v1057
  %v1122 = vpack.c.b16 %v1058, %v1058
  %v1123 = vpack.c.b16 %v1059, %v1059
  %v1124 = vpack.c.b16 %v1060, %v1060
  %v1125 = vpack.c.b16 %v1061, %v1061
  %v1126 = vpack.c.b16 %v1062, %v1062
  %v1127 = vpack.c.b16 %v1063, %v1063
  %v1128 = vpack.c.b16 %v1064, %v1064
  %v1129 = vpack.c.b16 %v1065, %v1065
  %v1130 = vpack.c.b16 %v1066, %v1066
  %v1131 = vpack.c.b16 %v1067, %v1067
  %v1132 = vpack.c.b16 %v1068, %v1068
  %v1133 = vpack.c.b16 %v1069, %v1069
  %v1134 = vpack.c.b16 %v1070, %v1070
  %v1135 = vpack.c.b16 %v1071, %v1071
  %v1136 = vpack.c.b16 %v1072, %v1072
  %v1137 = vpack.c.b16 %v1073, %v1073
  %v1138 = vpack.c.b16 %v1074, %v1074
  %v1139 = vpack.c.b16 %v1075, %v1075
  %v1140 = vpack.c.b16 %v1076, %v1076
  %v1141 = vpack.c.b16 %v1077, %v1077
  %v1142 = vpack.c.b16 %v1078, %v1078
  %v1143 = vpack.c.b16 %v1079, %v1079
  %vm1144 = vsmask.f32 4368
  %vm1145 = vmor %vm732, %vm1144
  %v1147 = vshrl.u32 %v1080, 16
  %v1149 = vrot.slane %v1147, 7
  %v1150 = vshll.u32 %v1080, 16
  %v1152 = vor.u32 %v1149, %v1150
  %v1153 = vrot.slane %v1149, 4
  %v1155 = vshrl.u32 %v1081, 16
  %v1157 = vrot.slane %v1155, 7
  %v1158 = vshll.u32 %v1081, 16
  %v1160 = vor.u32 %v1157, %v1158
  %v1161 = vsel %vm1145, %v1153, %v1160
  %v1162 = vrot.slane %v1157, 4
  %v1164 = vshrl.u32 %v1082, 16
  %v1166 = vrot.slane %v1164, 7
  %v1167 = vshll.u32 %v1082, 16
  %v1169 = vor.u32 %v1166, %v1167
  %v1170 = vrot.slane %v1166, 4
  %v1172 = vshrl.u32 %v1083, 16
  %v1174 = vrot.slane %v1172, 7
  %v1175 = vshll.u32 %v1083, 16
  %v1177 = vor.u32 %v1174, %v1175
  %v1178 = vsel %vm1145, %v1170, %v1177
  %v1179 = vrot.slane %v1174, 4
  %v1181 = vshrl.u32 %v1084, 16
  %v1183 = vrot.slane %v1181, 7
  %v1184 = vshll.u32 %v1084, 16
  %v1186 = vor.u32 %v1183, %v1184
  %v1187 = vrot.slane %v1183, 4
  %v1189 = vshrl.u32 %v1085, 16
  %v1191 = vrot.slane %v1189, 7
  %v1192 = vshll.u32 %v1085, 16
  %v1194 = vor.u32 %v1191, %v1192
  %v1195 = vsel %vm1145, %v1187, %v1194
  %v1196 = vrot.slane %v1191, 4
  %v1198 = vshrl.u32 %v1086, 16
  %v1200 = vrot.slane %v1198, 7
  %v1201 = vshll.u32 %v1086, 16
  %v1203 = vor.u32 %v1200, %v1201
  %v1204 = vrot.slane %v1200, 4
  %v1206 = vshrl.u32 %v1087, 16
  %v1208 = vrot.slane %v1206, 7
  %v1209 = vshll.u32 %v1087, 16
  %v1211 = vor.u32 %v1208, %v1209
  %v1212 = vsel %vm1145, %v1204, %v1211
  %v1213 = vrot.slane %v1208, 4
  %v1215 = vshrl.u32 %v1088, 16
  %v1217 = vrot.slane %v1215, 7
  %v1218 = vshll.u32 %v1088, 16
  %v1220 = vor.u32 %v1217, %v1218
  %v1221 = vrot.slane %v1217, 4
  %v1223 = vshrl.u32 %v1089, 16
  %v1225 = vrot.slane %v1223, 7
  %v1226 = vshll.u32 %v1089, 16
  %v1228 = vor.u32 %v1225, %v1226
  %v1229 = vsel %vm1145, %v1221, %v1228
  %v1230 = vrot.slane %v1225, 4
  %v1232 = vshrl.u32 %v1090, 16
  %v1234 = vrot.slane %v1232, 7
  %v1235 = vshll.u32 %v1090, 16
  %v1237 = vor.u32 %v1234, %v1235
  %v1238 = vrot.slane %v1234, 4
  %v1240 = vshrl.u32 %v1091, 16
  %v1242 = vrot.slane %v1240, 7
  %v1243 = vshll.u32 %v1091, 16
  %v1245 = vor.u32 %v1242, %v1243
  %v1246 = vsel %vm1145, %v1238, %v1245
  %v1247 = vrot.slane %v1242, 4
  %v1249 = vshrl.u32 %v1092, 16
  %v1251 = vrot.slane %v1249, 7
  %v1252 = vshll.u32 %v1092, 16
  %v1254 = vor.u32 %v1251, %v1252
  %v1255 = vrot.slane %v1251, 4
  %v1257 = vshrl.u32 %v1093, 16
  %v1259 = vrot.slane %v1257, 7
  %v1260 = vshll.u32 %v1093, 16
  %v1262 = vor.u32 %v1259, %v1260
  %v1263 = vsel %vm1145, %v1255, %v1262
  %v1264 = vrot.slane %v1259, 4
  %v1266 = vshrl.u32 %v1094, 16
  %v1268 = vrot.slane %v1266, 7
  %v1269 = vshll.u32 %v1094, 16
  %v1271 = vor.u32 %v1268, %v1269
  %v1272 = vrot.slane %v1268, 4
  %v1274 = vshrl.u32 %v1095, 16
  %v1276 = vrot.slane %v1274, 7
  %v1277 = vshll.u32 %v1095, 16
  %v1279 = vor.u32 %v1276, %v1277
  %v1280 = vsel %vm1145, %v1272, %v1279
  %v1281 = vrot.slane %v1276, 4
  %v1283 = vshrl.u32 %v1096, 16
  %v1285 = vrot.slane %v1283, 7
  %v1286 = vshll.u32 %v1096, 16
  %v1288 = vor.u32 %v1285, %v1286
  %v1289 = vrot.slane %v1285, 4
  %v1291 = vshrl.u32 %v1097, 16
  %v1293 = vrot.slane %v1291, 7
  %v1294 = vshll.u32 %v1097, 16
  %v1296 = vor.u32 %v1293, %v1294
  %v1297 = vsel %vm1145, %v1289, %v1296
  %v1298 = vrot.slane %v1293, 4
  %v1300 = vshrl.u32 %v1098, 16
  %v1302 = vrot.slane %v1300, 7
  %v1303 = vshll.u32 %v1098, 16
  %v1305 = vor.u32 %v1302, %v1303
  %v1306 = vrot.slane %v1302, 4
  %v1308 = vshrl.u32 %v1099, 16
  %v1310 = vrot.slane %v1308, 7
  %v1311 = vshll.u32 %v1099, 16
  %v1313 = vor.u32 %v1310, %v1311
  %v1314 = vsel %vm1145, %v1306, %v1313
  %v1315 = vrot.slane %v1310, 4
  %v1317 = vshrl.u32 %v1100, 16
  %v1319 = vrot.slane %v1317, 7
  %v1320 = vshll.u32 %v1100, 16
  %v1322 = vor.u32 %v1319, %v1320
  %v1323 = vrot.slane %v1319, 4
  %v1325 = vshrl.u32 %v1101, 16
  %v1327 = vrot.slane %v1325, 7
  %v1328 = vshll.u32 %v1101, 16
  %v1330 = vor.u32 %v1327, %v1328
  %v1331 = vsel %vm1145, %v1323, %v1330
  %v1332 = vrot.slane %v1327, 4
  %v1334 = vshrl.u32 %v1102, 16
  %v1336 = vrot.slane %v1334, 7
  %v1337 = vshll.u32 %v1102, 16
  %v1339 = vor.u32 %v1336, %v1337
  %v1340 = vrot.slane %v1336, 4
  %v1342 = vshrl.u32 %v1103, 16
  %v1344 = vrot.slane %v1342, 7
  %v1345 = vshll.u32 %v1103, 16
  %v1347 = vor.u32 %v1344, %v1345
  %v1348 = vsel %vm1145, %v1340, %v1347
  %v1349 = vrot.slane %v1344, 4
  %v1351 = vshrl.u32 %v1104, 16
  %v1353 = vrot.slane %v1351, 7
  %v1354 = vshll.u32 %v1104, 16
  %v1356 = vor.u32 %v1353, %v1354
  %v1357 = vrot.slane %v1353, 4
  %v1359 = vshrl.u32 %v1105, 16
  %v1361 = vrot.slane %v1359, 7
  %v1362 = vshll.u32 %v1105, 16
  %v1364 = vor.u32 %v1361, %v1362
  %v1365 = vsel %vm1145, %v1357, %v1364
  %v1366 = vrot.slane %v1361, 4
  %v1368 = vshrl.u32 %v1106, 16
  %v1370 = vrot.slane %v1368, 7
  %v1371 = vshll.u32 %v1106, 16
  %v1373 = vor.u32 %v1370, %v1371
  %v1374 = vrot.slane %v1370, 4
  %v1376 = vshrl.u32 %v1107, 16
  %v1378 = vrot.slane %v1376, 7
  %v1379 = vshll.u32 %v1107, 16
  %v1381 = vor.u32 %v1378, %v1379
  %v1382 = vsel %vm1145, %v1374, %v1381
  %v1383 = vrot.slane %v1378, 4
  %v1385 = vshrl.u32 %v1108, 16
  %v1387 = vrot.slane %v1385, 7
  %v1388 = vshll.u32 %v1108, 16
  %v1390 = vor.u32 %v1387, %v1388
  %v1391 = vrot.slane %v1387, 4
  %v1393 = vshrl.u32 %v1109, 16
  %v1395 = vrot.slane %v1393, 7
  %v1396 = vshll.u32 %v1109, 16
  %v1398 = vor.u32 %v1395, %v1396
  %v1399 = vsel %vm1145, %v1391, %v1398
  %v1400 = vrot.slane %v1395, 4
  %v1402 = vshrl.u32 %v1110, 16
  %v1404 = vrot.slane %v1402, 7
  %v1405 = vshll.u32 %v1110, 16
  %v1407 = vor.u32 %v1404, %v1405
  %v1408 = vrot.slane %v1404, 4
  %v1410 = vshrl.u32 %v1111, 16
  %v1412 = vrot.slane %v1410, 7
  %v1413 = vshll.u32 %v1111, 16
  %v1415 = vor.u32 %v1412, %v1413
  %v1416 = vsel %vm1145, %v1408, %v1415
  %v1417 = vrot.slane %v1412, 4
  %v1419 = vshrl.u32 %v1112, 16
  %v1421 = vrot.slane %v1419, 7
  %v1422 = vshll.u32 %v1112, 16
  %v1424 = vor.u32 %v1421, %v1422
  %v1425 = vrot.slane %v1421, 4
  %v1427 = vshrl.u32 %v1113, 16
  %v1429 = vrot.slane %v1427, 7
  %v1430 = vshll.u32 %v1113, 16
  %v1432 = vor.u32 %v1429, %v1430
  %v1433 = vsel %vm1145, %v1425, %v1432
  %v1434 = vrot.slane %v1429, 4
  %v1436 = vshrl.u32 %v1114, 16
  %v1438 = vrot.slane %v1436, 7
  %v1439 = vshll.u32 %v1114, 16
  %v1441 = vor.u32 %v1438, %v1439
  %v1442 = vrot.slane %v1438, 4
  %v1444 = vshrl.u32 %v1115, 16
  %v1446 = vrot.slane %v1444, 7
  %v1447 = vshll.u32 %v1115, 16
  %v1449 = vor.u32 %v1446, %v1447
  %v1450 = vsel %vm1145, %v1442, %v1449
  %v1451 = vrot.slane %v1446, 4
  %v1453 = vshrl.u32 %v1116, 16
  %v1455 = vrot.slane %v1453, 7
  %v1456 = vshll.u32 %v1116, 16
  %v1458 = vor.u32 %v1455, %v1456
  %v1459 = vrot.slane %v1455, 4
  %v1461 = vshrl.u32 %v1117, 16
  %v1463 = vrot.slane %v1461, 7
  %v1464 = vshll.u32 %v1117, 16
  %v1466 = vor.u32 %v1463, %v1464
  %v1467 = vsel %vm1145, %v1459, %v1466
  %v1468 = vrot.slane %v1463, 4
  %v1470 = vshrl.u32 %v1118, 16
  %v1472 = vrot.slane %v1470, 7
  %v1473 = vshll.u32 %v1118, 16
  %v1475 = vor.u32 %v1472, %v1473
  %v1476 = vrot.slane %v1472, 4
  %v1478 = vshrl.u32 %v1119, 16
  %v1480 = vrot.slane %v1478, 7
  %v1481 = vshll.u32 %v1119, 16
  %v1483 = vor.u32 %v1480, %v1481
  %v1484 = vsel %vm1145, %v1476, %v1483
  %v1485 = vrot.slane %v1480, 4
  %v1487 = vshrl.u32 %v1120, 16
  %v1489 = vrot.slane %v1487, 7
  %v1490 = vshll.u32 %v1120, 16
  %v1492 = vor.u32 %v1489, %v1490
  %v1493 = vrot.slane %v1489, 4
  %v1495 = vshrl.u32 %v1121, 16
  %v1497 = vrot.slane %v1495, 7
  %v1498 = vshll.u32 %v1121, 16
  %v1500 = vor.u32 %v1497, %v1498
  %v1501 = vsel %vm1145, %v1493, %v1500
  %v1502 = vrot.slane %v1497, 4
  %v1504 = vshrl.u32 %v1122, 16
  %v1506 = vrot.slane %v1504, 7
  %v1507 = vshll.u32 %v1122, 16
  %v1509 = vor.u32 %v1506, %v1507
  %v1510 = vrot.slane %v1506, 4
  %v1512 = vshrl.u32 %v1123, 16
  %v1514 = vrot.slane %v1512, 7
  %v1515 = vshll.u32 %v1123, 16
  %v1517 = vor.u32 %v1514, %v1515
  %v1518 = vsel %vm1145, %v1510, %v1517
  %v1519 = vrot.slane %v1514, 4
  %v1521 = vshrl.u32 %v1124, 16
  %v1523 = vrot.slane %v1521, 7
  %v1524 = vshll.u32 %v1124, 16
  %v1526 = vor.u32 %v1523, %v1524
  %v1527 = vrot.slane %v1523, 4
  %v1529 = vshrl.u32 %v1125, 16
  %v1531 = vrot.slane %v1529, 7
  %v1532 = vshll.u32 %v1125, 16
  %v1534 = vor.u32 %v1531, %v1532
  %v1535 = vsel %vm1145, %v1527, %v1534
  %v1536 = vrot.slane %v1531, 4
  %v1538 = vshrl.u32 %v1126, 16
  %v1540 = vrot.slane %v1538, 7
  %v1541 = vshll.u32 %v1126, 16
  %v1543 = vor.u32 %v1540, %v1541
  %v1544 = vrot.slane %v1540, 4
  %v1546 = vshrl.u32 %v1127, 16
  %v1548 = vrot.slane %v1546, 7
  %v1549 = vshll.u32 %v1127, 16
  %v1551 = vor.u32 %v1548, %v1549
  %v1552 = vsel %vm1145, %v1544, %v1551
  %v1553 = vrot.slane %v1548, 4
  %v1555 = vshrl.u32 %v1128, 16
  %v1557 = vrot.slane %v1555, 7
  %v1558 = vshll.u32 %v1128, 16
  %v1560 = vor.u32 %v1557, %v1558
  %v1561 = vrot.slane %v1557, 4
  %v1563 = vshrl.u32 %v1129, 16
  %v1565 = vrot.slane %v1563, 7
  %v1566 = vshll.u32 %v1129, 16
  %v1568 = vor.u32 %v1565, %v1566
  %v1569 = vsel %vm1145, %v1561, %v1568
  %v1570 = vrot.slane %v1565, 4
  %v1572 = vshrl.u32 %v1130, 16
  %v1574 = vrot.slane %v1572, 7
  %v1575 = vshll.u32 %v1130, 16
  %v1577 = vor.u32 %v1574, %v1575
  %v1578 = vrot.slane %v1574, 4
  %v1580 = vshrl.u32 %v1131, 16
  %v1582 = vrot.slane %v1580, 7
  %v1583 = vshll.u32 %v1131, 16
  %v1585 = vor.u32 %v1582, %v1583
  %v1586 = vsel %vm1145, %v1578, %v1585
  %v1587 = vrot.slane %v1582, 4
  %v1589 = vshrl.u32 %v1132, 16
  %v1591 = vrot.slane %v1589, 7
  %v1592 = vshll.u32 %v1132, 16
  %v1594 = vor.u32 %v1591, %v1592
  %v1595 = vrot.slane %v1591, 4
  %v1597 = vshrl.u32 %v1133, 16
  %v1599 = vrot.slane %v1597, 7
  %v1600 = vshll.u32 %v1133, 16
  %v1602 = vor.u32 %v1599, %v1600
  %v1603 = vsel %vm1145, %v1595, %v1602
  %v1604 = vrot.slane %v1599, 4
  %v1606 = vshrl.u32 %v1134, 16
  %v1608 = vrot.slane %v1606, 7
  %v1609 = vshll.u32 %v1134, 16
  %v1611 = vor.u32 %v1608, %v1609
  %v1612 = vrot.slane %v1608, 4
  %v1614 = vshrl.u32 %v1135, 16
  %v1616 = vrot.slane %v1614, 7
  %v1617 = vshll.u32 %v1135, 16
  %v1619 = vor.u32 %v1616, %v1617
  %v1620 = vsel %vm1145, %v1612, %v1619
  %v1621 = vrot.slane %v1616, 4
  %v1623 = vshrl.u32 %v1136, 16
  %v1625 = vrot.slane %v1623, 7
  %v1626 = vshll.u32 %v1136, 16
  %v1628 = vor.u32 %v1625, %v1626
  %v1629 = vrot.slane %v1625, 4
  %v1631 = vshrl.u32 %v1137, 16
  %v1633 = vrot.slane %v1631, 7
  %v1634 = vshll.u32 %v1137, 16
  %v1636 = vor.u32 %v1633, %v1634
  %v1637 = vsel %vm1145, %v1629, %v1636
  %v1638 = vrot.slane %v1633, 4
  %v1640 = vshrl.u32 %v1138, 16
  %v1642 = vrot.slane %v1640, 7
  %v1643 = vshll.u32 %v1138, 16
  %v1645 = vor.u32 %v1642, %v1643
  %v1646 = vrot.slane %v1642, 4
  %v1648 = vshrl.u32 %v1139, 16
  %v1650 = vrot.slane %v1648, 7
  %v1651 = vshll.u32 %v1139, 16
  %v1653 = vor.u32 %v1650, %v1651
  %v1654 = vsel %vm1145, %v1646, %v1653
  %v1655 = vrot.slane %v1650, 4
  %v1657 = vshrl.u32 %v1140, 16
  %v1659 = vrot.slane %v1657, 7
  %v1660 = vshll.u32 %v1140, 16
  %v1662 = vor.u32 %v1659, %v1660
  %v1663 = vrot.slane %v1659, 4
  %v1665 = vshrl.u32 %v1141, 16
  %v1667 = vrot.slane %v1665, 7
  %v1668 = vshll.u32 %v1141, 16
  %v1670 = vor.u32 %v1667, %v1668
  %v1671 = vsel %vm1145, %v1663, %v1670
  %v1672 = vrot.slane %v1667, 4
  %v1674 = vshrl.u32 %v1142, 16
  %v1676 = vrot.slane %v1674, 7
  %v1677 = vshll.u32 %v1142, 16
  %v1679 = vor.u32 %v1676, %v1677
  %v1680 = vrot.slane %v1676, 4
  %v1682 = vshrl.u32 %v1143, 16
  %v1684 = vrot.slane %v1682, 7
  %v1685 = vshll.u32 %v1143, 16
  %v1687 = vor.u32 %v1684, %v1685
  %v1688 = vsel %vm1145, %v1680, %v1687
  %v1689 = vrot.slane %v1684, 4
  %s1786 = scalar_lea.vmem [#allocation2], 12
  %vm1787 = vcmask 27648
  %vm1788 = vmand %vm1787, %vm842
  %v1789 = vld [vmem:[%s1786] sm:$0xf]
  %v1790 = vsel %vm1788, %v1152, %v1789
  %1791 = vst [vmem:[%s1786] sm:$0xf] %v1790
  %1792 = vst.msk [vmem:[%s1786 + $0x4] sm:$0xf] %vm716, %v1161
  %v1793 = vld [vmem:[%s1786 + $0x8] sm:$0x1]
  %v1794 = vsel %vm733, %v1162, %v1793
  %1795 = vst [vmem:[%s1786 + $0x8] sm:$0x1] %v1794
  %v1796 = vld [vmem:[%s1786 + $0xc] sm:$0xf]
  %v1797 = vsel %vm1788, %v1169, %v1796
  %1798 = vst [vmem:[%s1786 + $0xc] sm:$0xf] %v1797
  %1799 = vst.msk [vmem:[%s1786 + $0x10] sm:$0xf] %vm716, %v1178
  %v1800 = vld [vmem:[%s1786 + $0x14] sm:$0x1]
  %v1801 = vsel %vm733, %v1179, %v1800
  %1802 = vst [vmem:[%s1786 + $0x14] sm:$0x1] %v1801
  %v1803 = vld [vmem:[%s1786 + $0x18] sm:$0xf]
  %v1804 = vsel %vm1788, %v1186, %v1803
  %1805 = vst [vmem:[%s1786 + $0x18] sm:$0xf] %v1804
  %1806 = vst.msk [vmem:[%s1786 + $0x1c] sm:$0xf] %vm716, %v1195
  %v1807 = vld [vmem:[%s1786 + $0x20] sm:$0x1]
  %v1808 = vsel %vm733, %v1196, %v1807
  %1809 = vst [vmem:[%s1786 + $0x20] sm:$0x1] %v1808
  %v1810 = vld [vmem:[%s1786 + $0x24] sm:$0xf]
  %v1811 = vsel %vm1788, %v1203, %v1810
  %1812 = vst [vmem:[%s1786 + $0x24] sm:$0xf] %v1811
  %1813 = vst.msk [vmem:[%s1786 + $0x28] sm:$0xf] %vm716, %v1212
  %v1814 = vld [vmem:[%s1786 + $0x2c] sm:$0x1]
  %v1815 = vsel %vm733, %v1213, %v1814
  %1816 = vst [vmem:[%s1786 + $0x2c] sm:$0x1] %v1815
  %v1817 = vld [vmem:[%s1786 + $0x30] sm:$0xf]
  %v1818 = vsel %vm1788, %v1220, %v1817
  %1819 = vst [vmem:[%s1786 + $0x30] sm:$0xf] %v1818
  %1820 = vst.msk [vmem:[%s1786 + $0x34] sm:$0xf] %vm716, %v1229
  %v1821 = vld [vmem:[%s1786 + $0x38] sm:$0x1]
  %v1822 = vsel %vm733, %v1230, %v1821
  %1823 = vst [vmem:[%s1786 + $0x38] sm:$0x1] %v1822
  %v1824 = vld [vmem:[%s1786 + $0x3c] sm:$0xf]
  %v1825 = vsel %vm1788, %v1237, %v1824
  %1826 = vst [vmem:[%s1786 + $0x3c] sm:$0xf] %v1825
  %1827 = vst.msk [vmem:[%s1786 + $0x40] sm:$0xf] %vm716, %v1246
  %v1828 = vld [vmem:[%s1786 + $0x44] sm:$0x1]
  %v1829 = vsel %vm733, %v1247, %v1828
  %1830 = vst [vmem:[%s1786 + $0x44] sm:$0x1] %v1829
  %v1831 = vld [vmem:[%s1786 + $0x48] sm:$0xf]
  %v1832 = vsel %vm1788, %v1254, %v1831
  %1833 = vst [vmem:[%s1786 + $0x48] sm:$0xf] %v1832
  %1834 = vst.msk [vmem:[%s1786 + $0x4c] sm:$0xf] %vm716, %v1263
  %v1835 = vld [vmem:[%s1786 + $0x50] sm:$0x1]
  %v1836 = vsel %vm733, %v1264, %v1835
  %1837 = vst [vmem:[%s1786 + $0x50] sm:$0x1] %v1836
  %v1838 = vld [vmem:[%s1786 + $0x54] sm:$0xf]
  %v1839 = vsel %vm1788, %v1271, %v1838
  %1840 = vst [vmem:[%s1786 + $0x54] sm:$0xf] %v1839
  %1841 = vst.msk [vmem:[%s1786 + $0x58] sm:$0xf] %vm716, %v1280
  %v1842 = vld [vmem:[%s1786 + $0x5c] sm:$0x1]
  %v1843 = vsel %vm733, %v1281, %v1842
  %1844 = vst [vmem:[%s1786 + $0x5c] sm:$0x1] %v1843
  %v1845 = vld [vmem:[%s1786 + $0x60] sm:$0xf]
  %v1846 = vsel %vm1788, %v1288, %v1845
  %1847 = vst [vmem:[%s1786 + $0x60] sm:$0xf] %v1846
  %1848 = vst.msk [vmem:[%s1786 + $0x64] sm:$0xf] %vm716, %v1297
  %v1849 = vld [vmem:[%s1786 + $0x68] sm:$0x1]
  %v1850 = vsel %vm733, %v1298, %v1849
  %1851 = vst [vmem:[%s1786 + $0x68] sm:$0x1] %v1850
  %v1852 = vld [vmem:[%s1786 + $0x6c] sm:$0xf]
  %v1853 = vsel %vm1788, %v1305, %v1852
  %1854 = vst [vmem:[%s1786 + $0x6c] sm:$0xf] %v1853
  %1855 = vst.msk [vmem:[%s1786 + $0x70] sm:$0xf] %vm716, %v1314
  %v1856 = vld [vmem:[%s1786 + $0x74] sm:$0x1]
  %v1857 = vsel %vm733, %v1315, %v1856
  %1858 = vst [vmem:[%s1786 + $0x74] sm:$0x1] %v1857
  %v1859 = vld [vmem:[%s1786 + $0x78] sm:$0xf]
  %v1860 = vsel %vm1788, %v1322, %v1859
  %1861 = vst [vmem:[%s1786 + $0x78] sm:$0xf] %v1860
  %1862 = vst.msk [vmem:[%s1786 + $0x7c] sm:$0xf] %vm716, %v1331
  %v1863 = vld [vmem:[%s1786 + $0x80] sm:$0x1]
  %v1864 = vsel %vm733, %v1332, %v1863
  %1865 = vst [vmem:[%s1786 + $0x80] sm:$0x1] %v1864
  %v1866 = vld [vmem:[%s1786 + $0x84] sm:$0xf]
  %v1867 = vsel %vm1788, %v1339, %v1866
  %1868 = vst [vmem:[%s1786 + $0x84] sm:$0xf] %v1867
  %1869 = vst.msk [vmem:[%s1786 + $0x88] sm:$0xf] %vm716, %v1348
  %v1870 = vld [vmem:[%s1786 + $0x8c] sm:$0x1]
  %v1871 = vsel %vm733, %v1349, %v1870
  %1872 = vst [vmem:[%s1786 + $0x8c] sm:$0x1] %v1871
  %v1873 = vld [vmem:[%s1786 + $0x90] sm:$0xf]
  %v1874 = vsel %vm1788, %v1356, %v1873
  %1875 = vst [vmem:[%s1786 + $0x90] sm:$0xf] %v1874
  %1876 = vst.msk [vmem:[%s1786 + $0x94] sm:$0xf] %vm716, %v1365
  %v1877 = vld [vmem:[%s1786 + $0x98] sm:$0x1]
  %v1878 = vsel %vm733, %v1366, %v1877
  %1879 = vst [vmem:[%s1786 + $0x98] sm:$0x1] %v1878
  %v1880 = vld [vmem:[%s1786 + $0x9c] sm:$0xf]
  %v1881 = vsel %vm1788, %v1373, %v1880
  %1882 = vst [vmem:[%s1786 + $0x9c] sm:$0xf] %v1881
  %1883 = vst.msk [vmem:[%s1786 + $0xa0] sm:$0xf] %vm716, %v1382
  %v1884 = vld [vmem:[%s1786 + $0xa4] sm:$0x1]
  %v1885 = vsel %vm733, %v1383, %v1884
  %1886 = vst [vmem:[%s1786 + $0xa4] sm:$0x1] %v1885
  %v1887 = vld [vmem:[%s1786 + $0xa8] sm:$0xf]
  %v1888 = vsel %vm1788, %v1390, %v1887
  %1889 = vst [vmem:[%s1786 + $0xa8] sm:$0xf] %v1888
  %1890 = vst.msk [vmem:[%s1786 + $0xac] sm:$0xf] %vm716, %v1399
  %v1891 = vld [vmem:[%s1786 + $0xb0] sm:$0x1]
  %v1892 = vsel %vm733, %v1400, %v1891
  %1893 = vst [vmem:[%s1786 + $0xb0] sm:$0x1] %v1892
  %v1894 = vld [vmem:[%s1786 + $0xb4] sm:$0xf]
  %v1895 = vsel %vm1788, %v1407, %v1894
  %1896 = vst [vmem:[%s1786 + $0xb4] sm:$0xf] %v1895
  %1897 = vst.msk [vmem:[%s1786 + $0xb8] sm:$0xf] %vm716, %v1416
  %v1898 = vld [vmem:[%s1786 + $0xbc] sm:$0x1]
  %v1899 = vsel %vm733, %v1417, %v1898
  %1900 = vst [vmem:[%s1786 + $0xbc] sm:$0x1] %v1899
  %v1901 = vld [vmem:[%s1786 + $0xd8] sm:$0xf]
  %v1902 = vsel %vm1788, %v1424, %v1901
  %1903 = vst [vmem:[%s1786 + $0xd8] sm:$0xf] %v1902
  %1904 = vst.msk [vmem:[%s1786 + $0xdc] sm:$0xf] %vm716, %v1433
  %v1905 = vld [vmem:[%s1786 + $0xe0] sm:$0x1]
  %v1906 = vsel %vm733, %v1434, %v1905
  %1907 = vst [vmem:[%s1786 + $0xe0] sm:$0x1] %v1906
  %v1908 = vld [vmem:[%s1786 + $0xe4] sm:$0xf]
  %v1909 = vsel %vm1788, %v1441, %v1908
  %1910 = vst [vmem:[%s1786 + $0xe4] sm:$0xf] %v1909
  %1911 = vst.msk [vmem:[%s1786 + $0xe8] sm:$0xf] %vm716, %v1450
  %v1912 = vld [vmem:[%s1786 + $0xec] sm:$0x1]
  %v1913 = vsel %vm733, %v1451, %v1912
  %1914 = vst [vmem:[%s1786 + $0xec] sm:$0x1] %v1913
  %v1915 = vld [vmem:[%s1786 + $0xf0] sm:$0xf]
  %v1916 = vsel %vm1788, %v1458, %v1915
  %1917 = vst [vmem:[%s1786 + $0xf0] sm:$0xf] %v1916
  %1918 = vst.msk [vmem:[%s1786 + $0xf4] sm:$0xf] %vm716, %v1467
  %v1919 = vld [vmem:[%s1786 + $0xf8] sm:$0x1]
  %v1920 = vsel %vm733, %v1468, %v1919
  %1921 = vst [vmem:[%s1786 + $0xf8] sm:$0x1] %v1920
  %v1922 = vld [vmem:[%s1786 + $0xfc] sm:$0xf]
  %v1923 = vsel %vm1788, %v1475, %v1922
  %1924 = vst [vmem:[%s1786 + $0xfc] sm:$0xf] %v1923
  %1925 = vst.msk [vmem:[%s1786 + $0x100] sm:$0xf] %vm716, %v1484
  %v1926 = vld [vmem:[%s1786 + $0x104] sm:$0x1]
  %v1927 = vsel %vm733, %v1485, %v1926
  %1928 = vst [vmem:[%s1786 + $0x104] sm:$0x1] %v1927
  %v1929 = vld [vmem:[%s1786 + $0x108] sm:$0xf]
  %v1930 = vsel %vm1788, %v1492, %v1929
  %1931 = vst [vmem:[%s1786 + $0x108] sm:$0xf] %v1930
  %1932 = vst.msk [vmem:[%s1786 + $0x10c] sm:$0xf] %vm716, %v1501
  %v1933 = vld [vmem:[%s1786 + $0x110] sm:$0x1]
  %v1934 = vsel %vm733, %v1502, %v1933
  %1935 = vst [vmem:[%s1786 + $0x110] sm:$0x1] %v1934
  %v1936 = vld [vmem:[%s1786 + $0x114] sm:$0xf]
  %v1937 = vsel %vm1788, %v1509, %v1936
  %1938 = vst [vmem:[%s1786 + $0x114] sm:$0xf] %v1937
  %1939 = vst.msk [vmem:[%s1786 + $0x118] sm:$0xf] %vm716, %v1518
  %v1940 = vld [vmem:[%s1786 + $0x11c] sm:$0x1]
  %v1941 = vsel %vm733, %v1519, %v1940
  %1942 = vst [vmem:[%s1786 + $0x11c] sm:$0x1] %v1941
  %v1943 = vld [vmem:[%s1786 + $0x120] sm:$0xf]
  %v1944 = vsel %vm1788, %v1526, %v1943
  %1945 = vst [vmem:[%s1786 + $0x120] sm:$0xf] %v1944
  %1946 = vst.msk [vmem:[%s1786 + $0x124] sm:$0xf] %vm716, %v1535
  %v1947 = vld [vmem:[%s1786 + $0x128] sm:$0x1]
  %v1948 = vsel %vm733, %v1536, %v1947
  %1949 = vst [vmem:[%s1786 + $0x128] sm:$0x1] %v1948
  %v1950 = vld [vmem:[%s1786 + $0x12c] sm:$0xf]
  %v1951 = vsel %vm1788, %v1543, %v1950
  %1952 = vst [vmem:[%s1786 + $0x12c] sm:$0xf] %v1951
  %1953 = vst.msk [vmem:[%s1786 + $0x130] sm:$0xf] %vm716, %v1552
  %v1954 = vld [vmem:[%s1786 + $0x134] sm:$0x1]
  %v1955 = vsel %vm733, %v1553, %v1954
  %1956 = vst [vmem:[%s1786 + $0x134] sm:$0x1] %v1955
  %v1957 = vld [vmem:[%s1786 + $0x138] sm:$0xf]
  %v1958 = vsel %vm1788, %v1560, %v1957
  %1959 = vst [vmem:[%s1786 + $0x138] sm:$0xf] %v1958
  %1960 = vst.msk [vmem:[%s1786 + $0x13c] sm:$0xf] %vm716, %v1569
  %v1961 = vld [vmem:[%s1786 + $0x140] sm:$0x1]
  %v1962 = vsel %vm733, %v1570, %v1961
  %1963 = vst [vmem:[%s1786 + $0x140] sm:$0x1] %v1962
  %v1964 = vld [vmem:[%s1786 + $0x144] sm:$0xf]
  %v1965 = vsel %vm1788, %v1577, %v1964
  %1966 = vst [vmem:[%s1786 + $0x144] sm:$0xf] %v1965
  %1967 = vst.msk [vmem:[%s1786 + $0x148] sm:$0xf] %vm716, %v1586
  %v1968 = vld [vmem:[%s1786 + $0x14c] sm:$0x1]
  %v1969 = vsel %vm733, %v1587, %v1968
  %1970 = vst [vmem:[%s1786 + $0x14c] sm:$0x1] %v1969
  %v1971 = vld [vmem:[%s1786 + $0x150] sm:$0xf]
  %v1972 = vsel %vm1788, %v1594, %v1971
  %1973 = vst [vmem:[%s1786 + $0x150] sm:$0xf] %v1972
  %1974 = vst.msk [vmem:[%s1786 + $0x154] sm:$0xf] %vm716, %v1603
  %v1975 = vld [vmem:[%s1786 + $0x158] sm:$0x1]
  %v1976 = vsel %vm733, %v1604, %v1975
  %1977 = vst [vmem:[%s1786 + $0x158] sm:$0x1] %v1976
  %v1978 = vld [vmem:[%s1786 + $0x15c] sm:$0xf]
  %v1979 = vsel %vm1788, %v1611, %v1978
  %1980 = vst [vmem:[%s1786 + $0x15c] sm:$0xf] %v1979
  %1981 = vst.msk [vmem:[%s1786 + $0x160] sm:$0xf] %vm716, %v1620
  %v1982 = vld [vmem:[%s1786 + $0x164] sm:$0x1]
  %v1983 = vsel %vm733, %v1621, %v1982
  %1984 = vst [vmem:[%s1786 + $0x164] sm:$0x1] %v1983
  %v1985 = vld [vmem:[%s1786 + $0x168] sm:$0xf]
  %v1986 = vsel %vm1788, %v1628, %v1985
  %1987 = vst [vmem:[%s1786 + $0x168] sm:$0xf] %v1986
  %1988 = vst.msk [vmem:[%s1786 + $0x16c] sm:$0xf] %vm716, %v1637
  %v1989 = vld [vmem:[%s1786 + $0x170] sm:$0x1]
  %v1990 = vsel %vm733, %v1638, %v1989
  %1991 = vst [vmem:[%s1786 + $0x170] sm:$0x1] %v1990
  %v1992 = vld [vmem:[%s1786 + $0x174] sm:$0xf]
  %v1993 = vsel %vm1788, %v1645, %v1992
  %1994 = vst [vmem:[%s1786 + $0x174] sm:$0xf] %v1993
  %1995 = vst.msk [vmem:[%s1786 + $0x178] sm:$0xf] %vm716, %v1654
  %v1996 = vld [vmem:[%s1786 + $0x17c] sm:$0x1]
  %v1997 = vsel %vm733, %v1655, %v1996
  %1998 = vst [vmem:[%s1786 + $0x17c] sm:$0x1] %v1997
  %v1999 = vld [vmem:[%s1786 + $0x180] sm:$0xf]
  %v2000 = vsel %vm1788, %v1662, %v1999
  %2001 = vst [vmem:[%s1786 + $0x180] sm:$0xf] %v2000
  %2002 = vst.msk [vmem:[%s1786 + $0x184] sm:$0xf] %vm716, %v1671
  %v2003 = vld [vmem:[%s1786 + $0x188] sm:$0x1]
  %v2004 = vsel %vm733, %v1672, %v2003
  %2005 = vst [vmem:[%s1786 + $0x188] sm:$0x1] %v2004
  %v2006 = vld [vmem:[%s1786 + $0x18c] sm:$0xf]
  %v2007 = vsel %vm1788, %v1679, %v2006
  %2008 = vst [vmem:[%s1786 + $0x18c] sm:$0xf] %v2007
  %2009 = vst.msk [vmem:[%s1786 + $0x190] sm:$0xf] %vm716, %v1688
  %v2010 = vld [vmem:[%s1786 + $0x194] sm:$0x1]
  %v2011 = vsel %vm733, %v1689, %v2010
  %2012 = vst [vmem:[%s1786 + $0x194] sm:$0x1] %v2011
  %v2013 = vld [vmem:[#allocation2] sm:$0xf]
  %v2014 = vld [vmem:[#allocation2 + $0x4] sm:$0xf]
  %v2015 = vld [vmem:[#allocation2 + $0xc] sm:$0xf]
  %v2016 = vld [vmem:[#allocation2 + $0x10] sm:$0xf]
  %v2017 = vld [vmem:[#allocation2 + $0x18] sm:$0xf]
  %v2018 = vld [vmem:[#allocation2 + $0x1c] sm:$0xf]
  %v2019 = vld [vmem:[#allocation2 + $0x24] sm:$0xf]
  %v2020 = vld [vmem:[#allocation2 + $0x28] sm:$0xf]
  %v2021 = vld [vmem:[#allocation2 + $0x30] sm:$0xf]
  %v2022 = vld [vmem:[#allocation2 + $0x34] sm:$0xf]
  %v2023 = vld [vmem:[#allocation2 + $0x3c] sm:$0xf]
  %v2024 = vld [vmem:[#allocation2 + $0x40] sm:$0xf]
  %v2025 = vld [vmem:[#allocation2 + $0x48] sm:$0xf]
  %v2026 = vld [vmem:[#allocation2 + $0x4c] sm:$0xf]
  %v2027 = vld [vmem:[#allocation2 + $0x54] sm:$0xf]
  %v2028 = vld [vmem:[#allocation2 + $0x58] sm:$0xf]
  %v2029 = vld [vmem:[#allocation2 + $0x60] sm:$0xf]
  %v2030 = vld [vmem:[#allocation2 + $0x64] sm:$0xf]
  %v2031 = vld [vmem:[#allocation2 + $0x6c] sm:$0xf]
  %v2032 = vld [vmem:[#allocation2 + $0x70] sm:$0xf]
  %v2033 = vld [vmem:[#allocation2 + $0x78] sm:$0xf]
  %v2034 = vld [vmem:[#allocation2 + $0x7c] sm:$0xf]
  %v2035 = vld [vmem:[#allocation2 + $0x84] sm:$0xf]
  %v2036 = vld [vmem:[#allocation2 + $0x88] sm:$0xf]
  %v2037 = vld [vmem:[#allocation2 + $0x90] sm:$0xf]
  %v2038 = vld [vmem:[#allocation2 + $0x94] sm:$0xf]
  %v2039 = vld [vmem:[#allocation2 + $0x9c] sm:$0xf]
  %v2040 = vld [vmem:[#allocation2 + $0xa0] sm:$0xf]
  %v2041 = vld [vmem:[#allocation2 + $0xa8] sm:$0xf]
  %v2042 = vld [vmem:[#allocation2 + $0xac] sm:$0xf]
  %v2043 = vld [vmem:[#allocation2 + $0xb4] sm:$0xf]
  %v2044 = vld [vmem:[#allocation2 + $0xb8] sm:$0xf]
  %v2045 = vld [vmem:[#allocation2 + $0xd8] sm:$0xf]
  %v2046 = vld [vmem:[#allocation2 + $0xdc] sm:$0xf]
  %v2047 = vld [vmem:[#allocation2 + $0xe4] sm:$0xf]
  %v2048 = vld [vmem:[#allocation2 + $0xe8] sm:$0xf]
  %v2049 = vld [vmem:[#allocation2 + $0xf0] sm:$0xf]
  %v2050 = vld [vmem:[#allocation2 + $0xf4] sm:$0xf]
  %v2051 = vld [vmem:[#allocation2 + $0xfc] sm:$0xf]
  %v2052 = vld [vmem:[#allocation2 + $0x100] sm:$0xf]
  %v2053 = vld [vmem:[#allocation2 + $0x108] sm:$0xf]
  %v2054 = vld [vmem:[#allocation2 + $0x10c] sm:$0xf]
  %v2055 = vld [vmem:[#allocation2 + $0x114] sm:$0xf]
  %v2056 = vld [vmem:[#allocation2 + $0x118] sm:$0xf]
  %v2057 = vld [vmem:[#allocation2 + $0x120] sm:$0xf]
  %v2058 = vld [vmem:[#allocation2 + $0x124] sm:$0xf]
  %v2059 = vld [vmem:[#allocation2 + $0x12c] sm:$0xf]
  %v2060 = vld [vmem:[#allocation2 + $0x130] sm:$0xf]
  %v2061 = vld [vmem:[#allocation2 + $0x138] sm:$0xf]
  %v2062 = vld [vmem:[#allocation2 + $0x13c] sm:$0xf]
  %v2063 = vld [vmem:[#allocation2 + $0x144] sm:$0xf]
  %v2064 = vld [vmem:[#allocation2 + $0x148] sm:$0xf]
  %v2065 = vld [vmem:[#allocation2 + $0x150] sm:$0xf]
  %v2066 = vld [vmem:[#allocation2 + $0x154] sm:$0xf]
  %v2067 = vld [vmem:[#allocation2 + $0x15c] sm:$0xf]
  %v2068 = vld [vmem:[#allocation2 + $0x160] sm:$0xf]
  %v2069 = vld [vmem:[#allocation2 + $0x168] sm:$0xf]
  %v2070 = vld [vmem:[#allocation2 + $0x16c] sm:$0xf]
  %v2071 = vld [vmem:[#allocation2 + $0x174] sm:$0xf]
  %v2072 = vld [vmem:[#allocation2 + $0x178] sm:$0xf]
  %v2073 = vld [vmem:[#allocation2 + $0x180] sm:$0xf]
  %v2074 = vld [vmem:[#allocation2 + $0x184] sm:$0xf]
  %v2075 = vld [vmem:[#allocation2 + $0x18c] sm:$0xf]
  %v2076 = vld [vmem:[#allocation2 + $0x190] sm:$0xf]
  %2077 = vst.msk [vmem:[#allocation3] sm:$0xf] %vm716, %v2013
  %2078 = vst.msk [vmem:[#allocation3 + $0x4] sm:$0xf] %vm716, %v2014
  %2079 = vst.msk [vmem:[#allocation3 + $0x8] sm:$0xf] %vm716, %v2015
  %2080 = vst.msk [vmem:[#allocation3 + $0xc] sm:$0xf] %vm716, %v2016
  %2081 = vst.msk [vmem:[#allocation3 + $0x10] sm:$0xf] %vm716, %v2017
  %2082 = vst.msk [vmem:[#allocation3 + $0x14] sm:$0xf] %vm716, %v2018
  %2083 = vst.msk [vmem:[#allocation3 + $0x18] sm:$0xf] %vm716, %v2019
  %2084 = vst.msk [vmem:[#allocation3 + $0x1c] sm:$0xf] %vm716, %v2020
  %2085 = vst.msk [vmem:[#allocation3 + $0x20] sm:$0xf] %vm716, %v2021
  %2086 = vst.msk [vmem:[#allocation3 + $0x24] sm:$0xf] %vm716, %v2022
  %2087 = vst.msk [vmem:[#allocation3 + $0x28] sm:$0xf] %vm716, %v2023
  %2088 = vst.msk [vmem:[#allocation3 + $0x2c] sm:$0xf] %vm716, %v2024
  %2089 = vst.msk [vmem:[#allocation3 + $0x30] sm:$0xf] %vm716, %v2025
  %2090 = vst.msk [vmem:[#allocation3 + $0x34] sm:$0xf] %vm716, %v2026
  %2091 = vst.msk [vmem:[#allocation3 + $0x38] sm:$0xf] %vm716, %v2027
  %2092 = vst.msk [vmem:[#allocation3 + $0x3c] sm:$0xf] %vm716, %v2028
  %2093 = vst.msk [vmem:[#allocation3 + $0x40] sm:$0xf] %vm716, %v2029
  %2094 = vst.msk [vmem:[#allocation3 + $0x44] sm:$0xf] %vm716, %v2030
  %2095 = vst.msk [vmem:[#allocation3 + $0x48] sm:$0xf] %vm716, %v2031
  %2096 = vst.msk [vmem:[#allocation3 + $0x4c] sm:$0xf] %vm716, %v2032
  %2097 = vst.msk [vmem:[#allocation3 + $0x50] sm:$0xf] %vm716, %v2033
  %2098 = vst.msk [vmem:[#allocation3 + $0x54] sm:$0xf] %vm716, %v2034
  %2099 = vst.msk [vmem:[#allocation3 + $0x58] sm:$0xf] %vm716, %v2035
  %2100 = vst.msk [vmem:[#allocation3 + $0x5c] sm:$0xf] %vm716, %v2036
  %2101 = vst.msk [vmem:[#allocation3 + $0x60] sm:$0xf] %vm716, %v2037
  %2102 = vst.msk [vmem:[#allocation3 + $0x64] sm:$0xf] %vm716, %v2038
  %2103 = vst.msk [vmem:[#allocation3 + $0x68] sm:$0xf] %vm716, %v2039
  %2104 = vst.msk [vmem:[#allocation3 + $0x6c] sm:$0xf] %vm716, %v2040
  %2105 = vst.msk [vmem:[#allocation3 + $0x70] sm:$0xf] %vm716, %v2041
  %2106 = vst.msk [vmem:[#allocation3 + $0x74] sm:$0xf] %vm716, %v2042
  %2107 = vst.msk [vmem:[#allocation3 + $0x78] sm:$0xf] %vm716, %v2043
  %2108 = vst.msk [vmem:[#allocation3 + $0x7c] sm:$0xf] %vm716, %v2044
  %2109 = vst.msk [vmem:[#allocation3 + $0x80] sm:$0xf] %vm716, %v2045
  %2110 = vst.msk [vmem:[#allocation3 + $0x84] sm:$0xf] %vm716, %v2046
  %2111 = vst.msk [vmem:[#allocation3 + $0x88] sm:$0xf] %vm716, %v2047
  %2112 = vst.msk [vmem:[#allocation3 + $0x8c] sm:$0xf] %vm716, %v2048
  %2113 = vst.msk [vmem:[#allocation3 + $0x90] sm:$0xf] %vm716, %v2049
  %2114 = vst.msk [vmem:[#allocation3 + $0x94] sm:$0xf] %vm716, %v2050
  %2115 = vst.msk [vmem:[#allocation3 + $0x98] sm:$0xf] %vm716, %v2051
  %2116 = vst.msk [vmem:[#allocation3 + $0x9c] sm:$0xf] %vm716, %v2052
  %2117 = vst.msk [vmem:[#allocation3 + $0xa0] sm:$0xf] %vm716, %v2053
  %2118 = vst.msk [vmem:[#allocation3 + $0xa4] sm:$0xf] %vm716, %v2054
  %2119 = vst.msk [vmem:[#allocation3 + $0xa8] sm:$0xf] %vm716, %v2055
  %2120 = vst.msk [vmem:[#allocation3 + $0xac] sm:$0xf] %vm716, %v2056
  %2121 = vst.msk [vmem:[#allocation3 + $0xb0] sm:$0xf] %vm716, %v2057
  %2122 = vst.msk [vmem:[#allocation3 + $0xb4] sm:$0xf] %vm716, %v2058
  %2123 = vst.msk [vmem:[#allocation3 + $0xb8] sm:$0xf] %vm716, %v2059
  %2124 = vst.msk [vmem:[#allocation3 + $0xbc] sm:$0xf] %vm716, %v2060
  %2125 = vst.msk [vmem:[#allocation3 + $0xc0] sm:$0xf] %vm716, %v2061
  %2126 = vst.msk [vmem:[#allocation3 + $0xc4] sm:$0xf] %vm716, %v2062
  %2127 = vst.msk [vmem:[#allocation3 + $0xc8] sm:$0xf] %vm716, %v2063
  %2128 = vst.msk [vmem:[#allocation3 + $0xcc] sm:$0xf] %vm716, %v2064
  %2129 = vst.msk [vmem:[#allocation3 + $0xd0] sm:$0xf] %vm716, %v2065
  %2130 = vst.msk [vmem:[#allocation3 + $0xd4] sm:$0xf] %vm716, %v2066
  %2131 = vst.msk [vmem:[#allocation3 + $0xd8] sm:$0xf] %vm716, %v2067
  %2132 = vst.msk [vmem:[#allocation3 + $0xdc] sm:$0xf] %vm716, %v2068
  %2133 = vst.msk [vmem:[#allocation3 + $0xe0] sm:$0xf] %vm716, %v2069
  %2134 = vst.msk [vmem:[#allocation3 + $0xe4] sm:$0xf] %vm716, %v2070
  %2135 = vst.msk [vmem:[#allocation3 + $0xe8] sm:$0xf] %vm716, %v2071
  %2136 = vst.msk [vmem:[#allocation3 + $0xec] sm:$0xf] %vm716, %v2072
  %2137 = vst.msk [vmem:[#allocation3 + $0xf0] sm:$0xf] %vm716, %v2073
  %2138 = vst.msk [vmem:[#allocation3 + $0xf4] sm:$0xf] %vm716, %v2074
  %2139 = vst.msk [vmem:[#allocation3 + $0xf8] sm:$0xf] %vm716, %v2075
  %2140 = vst.msk [vmem:[#allocation3 + $0xfc] sm:$0xf] %vm716, %v2076
  %v2141 = vld [vmem:[#allocation2] sm:$0xf]
  %v2142 = vld [vmem:[#allocation2 + $0x4] sm:$0xf]
  %v2143 = vld [vmem:[#allocation2 + $0x8] sm:$0x1]
  %v2144 = vld [vmem:[#allocation2 + $0xc] sm:$0xf]
  %v2145 = vld [vmem:[#allocation2 + $0x10] sm:$0xf]
  %v2146 = vld [vmem:[#allocation2 + $0x14] sm:$0x1]
  %v2147 = vld [vmem:[#allocation2 + $0x18] sm:$0xf]
  %v2148 = vld [vmem:[#allocation2 + $0x1c] sm:$0xf]
  %v2149 = vld [vmem:[#allocation2 + $0x20] sm:$0x1]
  %v2150 = vld [vmem:[#allocation2 + $0x24] sm:$0xf]
  %v2151 = vld [vmem:[#allocation2 + $0x28] sm:$0xf]
  %v2152 = vld [vmem:[#allocation2 + $0x2c] sm:$0x1]
  %v2153 = vld [vmem:[#allocation2 + $0x30] sm:$0xf]
  %v2154 = vld [vmem:[#allocation2 + $0x34] sm:$0xf]
  %v2155 = vld [vmem:[#allocation2 + $0x38] sm:$0x1]
  %v2156 = vld [vmem:[#allocation2 + $0x3c] sm:$0xf]
  %v2157 = vld [vmem:[#allocation2 + $0x40] sm:$0xf]
  %v2158 = vld [vmem:[#allocation2 + $0x44] sm:$0x1]
  %v2159 = vld [vmem:[#allocation2 + $0x48] sm:$0xf]
  %v2160 = vld [vmem:[#allocation2 + $0x4c] sm:$0xf]
  %v2161 = vld [vmem:[#allocation2 + $0x50] sm:$0x1]
  %v2162 = vld [vmem:[#allocation2 + $0x54] sm:$0xf]
  %v2163 = vld [vmem:[#allocation2 + $0x58] sm:$0xf]
  %v2164 = vld [vmem:[#allocation2 + $0x5c] sm:$0x1]
  %v2165 = vld [vmem:[#allocation2 + $0x60] sm:$0xf]
  %v2166 = vld [vmem:[#allocation2 + $0x64] sm:$0xf]
  %v2167 = vld [vmem:[#allocation2 + $0x68] sm:$0x1]
  %v2168 = vld [vmem:[#allocation2 + $0x6c] sm:$0xf]
  %v2169 = vld [vmem:[#allocation2 + $0x70] sm:$0xf]
  %v2170 = vld [vmem:[#allocation2 + $0x74] sm:$0x1]
  %v2171 = vld [vmem:[#allocation2 + $0x78] sm:$0xf]
  %v2172 = vld [vmem:[#allocation2 + $0x7c] sm:$0xf]
  %v2173 = vld [vmem:[#allocation2 + $0x80] sm:$0x1]
  %v2174 = vld [vmem:[#allocation2 + $0x84] sm:$0xf]
  %v2175 = vld [vmem:[#allocation2 + $0x88] sm:$0xf]
  %v2176 = vld [vmem:[#allocation2 + $0x8c] sm:$0x1]
  %v2177 = vld [vmem:[#allocation2 + $0x90] sm:$0xf]
  %v2178 = vld [vmem:[#allocation2 + $0x94] sm:$0xf]
  %v2179 = vld [vmem:[#allocation2 + $0x98] sm:$0x1]
  %v2180 = vld [vmem:[#allocation2 + $0x9c] sm:$0xf]
  %v2181 = vld [vmem:[#allocation2 + $0xa0] sm:$0xf]
  %v2182 = vld [vmem:[#allocation2 + $0xa4] sm:$0x1]
  %v2183 = vld [vmem:[#allocation2 + $0xa8] sm:$0xf]
  %v2184 = vld [vmem:[#allocation2 + $0xac] sm:$0xf]
  %v2185 = vld [vmem:[#allocation2 + $0xb0] sm:$0x1]
  %v2186 = vld [vmem:[#allocation2 + $0xb4] sm:$0xf]
  %v2187 = vld [vmem:[#allocation2 + $0xb8] sm:$0xf]
  %v2188 = vld [vmem:[#allocation2 + $0xbc] sm:$0x1]
  %v2189 = vld [vmem:[#allocation2 + $0xd8] sm:$0xf]
  %v2190 = vld [vmem:[#allocation2 + $0xdc] sm:$0xf]
  %v2191 = vld [vmem:[#allocation2 + $0xe0] sm:$0x1]
  %v2192 = vld [vmem:[#allocation2 + $0xe4] sm:$0xf]
  %v2193 = vld [vmem:[#allocation2 + $0xe8] sm:$0xf]
  %v2194 = vld [vmem:[#allocation2 + $0xec] sm:$0x1]
  %v2195 = vld [vmem:[#allocation2 + $0xf0] sm:$0xf]
  %v2196 = vld [vmem:[#allocation2 + $0xf4] sm:$0xf]
  %v2197 = vld [vmem:[#allocation2 + $0xf8] sm:$0x1]
  %v2198 = vld [vmem:[#allocation2 + $0xfc] sm:$0xf]
  %v2199 = vld [vmem:[#allocation2 + $0x100] sm:$0xf]
  %v2200 = vld [vmem:[#allocation2 + $0x104] sm:$0x1]
  %v2201 = vld [vmem:[#allocation2 + $0x108] sm:$0xf]
  %v2202 = vld [vmem:[#allocation2 + $0x10c] sm:$0xf]
  %v2203 = vld [vmem:[#allocation2 + $0x110] sm:$0x1]
  %v2204 = vld [vmem:[#allocation2 + $0x114] sm:$0xf]
  %v2205 = vld [vmem:[#allocation2 + $0x118] sm:$0xf]
  %v2206 = vld [vmem:[#allocation2 + $0x11c] sm:$0x1]
  %v2207 = vld [vmem:[#allocation2 + $0x120] sm:$0xf]
  %v2208 = vld [vmem:[#allocation2 + $0x124] sm:$0xf]
  %v2209 = vld [vmem:[#allocation2 + $0x128] sm:$0x1]
  %v2210 = vld [vmem:[#allocation2 + $0x12c] sm:$0xf]
  %v2211 = vld [vmem:[#allocation2 + $0x130] sm:$0xf]
  %v2212 = vld [vmem:[#allocation2 + $0x134] sm:$0x1]
  %v2213 = vld [vmem:[#allocation2 + $0x138] sm:$0xf]
  %v2214 = vld [vmem:[#allocation2 + $0x13c] sm:$0xf]
  %v2215 = vld [vmem:[#allocation2 + $0x140] sm:$0x1]
  %v2216 = vld [vmem:[#allocation2 + $0x144] sm:$0xf]
  %v2217 = vld [vmem:[#allocation2 + $0x148] sm:$0xf]
  %v2218 = vld [vmem:[#allocation2 + $0x14c] sm:$0x1]
  %v2219 = vld [vmem:[#allocation2 + $0x150] sm:$0xf]
  %v2220 = vld [vmem:[#allocation2 + $0x154] sm:$0xf]
  %v2221 = vld [vmem:[#allocation2 + $0x158] sm:$0x1]
  %v2222 = vld [vmem:[#allocation2 + $0x15c] sm:$0xf]
  %v2223 = vld [vmem:[#allocation2 + $0x160] sm:$0xf]
  %v2224 = vld [vmem:[#allocation2 + $0x164] sm:$0x1]
  %v2225 = vld [vmem:[#allocation2 + $0x168] sm:$0xf]
  %v2226 = vld [vmem:[#allocation2 + $0x16c] sm:$0xf]
  %v2227 = vld [vmem:[#allocation2 + $0x170] sm:$0x1]
  %v2228 = vld [vmem:[#allocation2 + $0x174] sm:$0xf]
  %v2229 = vld [vmem:[#allocation2 + $0x178] sm:$0xf]
  %v2230 = vld [vmem:[#allocation2 + $0x17c] sm:$0x1]
  %v2231 = vld [vmem:[#allocation2 + $0x180] sm:$0xf]
  %v2232 = vld [vmem:[#allocation2 + $0x184] sm:$0xf]
  %v2233 = vld [vmem:[#allocation2 + $0x188] sm:$0x1]
  %v2234 = vld [vmem:[#allocation2 + $0x18c] sm:$0xf]
  %v2235 = vld [vmem:[#allocation2 + $0x190] sm:$0xf]
  %v2236 = vld [vmem:[#allocation2 + $0x194] sm:$0x1]
  %vm2237 = vsmask.f32 3328
  %vm2238 = vsmask.f32 7440
  %vm2239 = vmor %vm2237, %vm2238
  %v2241 = vshrl.u32 %v2141, 16
  %v2243 = vrot.slane %v2241, 4
  %v2244 = vshll.u32 %v2141, 16
  %v2246 = vrot.slane %v2244, 5
  %v2247 = vor.u32 %v2243, %v2246
  %v2248 = vrot.slane %v2247, 4
  %v2250 = vshll.u32 %v2142, 16
  %v2252 = vrot.slane %v2250, 5
  %v2253 = vsel %vm2239, %v2248, %v2252
  %v2254 = vshrl.u32 %v2142, 16
  %v2256 = vrot.slane %v2254, 4
  %v2257 = vor.u32 %v2256, %v2252
  %v2258 = vrot.slane %v2257, 4
  %v2260 = vshll.u32 %v2143, 16
  %v2262 = vrot.slane %v2260, 5
  %v2263 = vsel %vm2239, %v2258, %v2262
  %v2265 = vshrl.u32 %v2144, 16
  %v2267 = vrot.slane %v2265, 4
  %v2268 = vshll.u32 %v2144, 16
  %v2270 = vrot.slane %v2268, 5
  %v2271 = vor.u32 %v2267, %v2270
  %v2272 = vrot.slane %v2271, 4
  %v2274 = vshll.u32 %v2145, 16
  %v2276 = vrot.slane %v2274, 5
  %v2277 = vsel %vm2239, %v2272, %v2276
  %v2278 = vshrl.u32 %v2145, 16
  %v2280 = vrot.slane %v2278, 4
  %v2281 = vor.u32 %v2280, %v2276
  %v2282 = vrot.slane %v2281, 4
  %v2284 = vshll.u32 %v2146, 16
  %v2286 = vrot.slane %v2284, 5
  %v2287 = vsel %vm2239, %v2282, %v2286
  %v2289 = vshrl.u32 %v2147, 16
  %v2291 = vrot.slane %v2289, 4
  %v2292 = vshll.u32 %v2147, 16
  %v2294 = vrot.slane %v2292, 5
  %v2295 = vor.u32 %v2291, %v2294
  %v2296 = vrot.slane %v2295, 4
  %v2298 = vshll.u32 %v2148, 16
  %v2300 = vrot.slane %v2298, 5
  %v2301 = vsel %vm2239, %v2296, %v2300
  %v2302 = vshrl.u32 %v2148, 16
  %v2304 = vrot.slane %v2302, 4
  %v2305 = vor.u32 %v2304, %v2300
  %v2306 = vrot.slane %v2305, 4
  %v2308 = vshll.u32 %v2149, 16
  %v2310 = vrot.slane %v2308, 5
  %v2311 = vsel %vm2239, %v2306, %v2310
  %v2313 = vshrl.u32 %v2150, 16
  %v2315 = vrot.slane %v2313, 4
  %v2316 = vshll.u32 %v2150, 16
  %v2318 = vrot.slane %v2316, 5
  %v2319 = vor.u32 %v2315, %v2318
  %v2320 = vrot.slane %v2319, 4
  %v2322 = vshll.u32 %v2151, 16
  %v2324 = vrot.slane %v2322, 5
  %v2325 = vsel %vm2239, %v2320, %v2324
  %v2326 = vshrl.u32 %v2151, 16
  %v2328 = vrot.slane %v2326, 4
  %v2329 = vor.u32 %v2328, %v2324
  %v2330 = vrot.slane %v2329, 4
  %v2332 = vshll.u32 %v2152, 16
  %v2334 = vrot.slane %v2332, 5
  %v2335 = vsel %vm2239, %v2330, %v2334
  %v2337 = vshrl.u32 %v2153, 16
  %v2339 = vrot.slane %v2337, 4
  %v2340 = vshll.u32 %v2153, 16
  %v2342 = vrot.slane %v2340, 5
  %v2343 = vor.u32 %v2339, %v2342
  %v2344 = vrot.slane %v2343, 4
  %v2346 = vshll.u32 %v2154, 16
  %v2348 = vrot.slane %v2346, 5
  %v2349 = vsel %vm2239, %v2344, %v2348
  %v2350 = vshrl.u32 %v2154, 16
  %v2352 = vrot.slane %v2350, 4
  %v2353 = vor.u32 %v2352, %v2348
  %v2354 = vrot.slane %v2353, 4
  %v2356 = vshll.u32 %v2155, 16
  %v2358 = vrot.slane %v2356, 5
  %v2359 = vsel %vm2239, %v2354, %v2358
  %v2361 = vshrl.u32 %v2156, 16
  %v2363 = vrot.slane %v2361, 4
  %v2364 = vshll.u32 %v2156, 16
  %v2366 = vrot.slane %v2364, 5
  %v2367 = vor.u32 %v2363, %v2366
  %v2368 = vrot.slane %v2367, 4
  %v2370 = vshll.u32 %v2157, 16
  %v2372 = vrot.slane %v2370, 5
  %v2373 = vsel %vm2239, %v2368, %v2372
  %v2374 = vshrl.u32 %v2157, 16
  %v2376 = vrot.slane %v2374, 4
  %v2377 = vor.u32 %v2376, %v2372
  %v2378 = vrot.slane %v2377, 4
  %v2380 = vshll.u32 %v2158, 16
  %v2382 = vrot.slane %v2380, 5
  %v2383 = vsel %vm2239, %v2378, %v2382
  %v2385 = vshrl.u32 %v2159, 16
  %v2387 = vrot.slane %v2385, 4
  %v2388 = vshll.u32 %v2159, 16
  %v2390 = vrot.slane %v2388, 5
  %v2391 = vor.u32 %v2387, %v2390
  %v2392 = vrot.slane %v2391, 4
  %v2394 = vshll.u32 %v2160, 16
  %v2396 = vrot.slane %v2394, 5
  %v2397 = vsel %vm2239, %v2392, %v2396
  %v2398 = vshrl.u32 %v2160, 16
  %v2400 = vrot.slane %v2398, 4
  %v2401 = vor.u32 %v2400, %v2396
  %v2402 = vrot.slane %v2401, 4
  %v2404 = vshll.u32 %v2161, 16
  %v2406 = vrot.slane %v2404, 5
  %v2407 = vsel %vm2239, %v2402, %v2406
  %v2409 = vshrl.u32 %v2162, 16
  %v2411 = vrot.slane %v2409, 4
  %v2412 = vshll.u32 %v2162, 16
  %v2414 = vrot.slane %v2412, 5
  %v2415 = vor.u32 %v2411, %v2414
  %v2416 = vrot.slane %v2415, 4
  %v2418 = vshll.u32 %v2163, 16
  %v2420 = vrot.slane %v2418, 5
  %v2421 = vsel %vm2239, %v2416, %v2420
  %v2422 = vshrl.u32 %v2163, 16
  %v2424 = vrot.slane %v2422, 4
  %v2425 = vor.u32 %v2424, %v2420
  %v2426 = vrot.slane %v2425, 4
  %v2428 = vshll.u32 %v2164, 16
  %v2430 = vrot.slane %v2428, 5
  %v2431 = vsel %vm2239, %v2426, %v2430
  %v2433 = vshrl.u32 %v2165, 16
  %v2435 = vrot.slane %v2433, 4
  %v2436 = vshll.u32 %v2165, 16
  %v2438 = vrot.slane %v2436, 5
  %v2439 = vor.u32 %v2435, %v2438
  %v2440 = vrot.slane %v2439, 4
  %v2442 = vshll.u32 %v2166, 16
  %v2444 = vrot.slane %v2442, 5
  %v2445 = vsel %vm2239, %v2440, %v2444
  %v2446 = vshrl.u32 %v2166, 16
  %v2448 = vrot.slane %v2446, 4
  %v2449 = vor.u32 %v2448, %v2444
  %v2450 = vrot.slane %v2449, 4
  %v2452 = vshll.u32 %v2167, 16
  %v2454 = vrot.slane %v2452, 5
  %v2455 = vsel %vm2239, %v2450, %v2454
  %v2457 = vshrl.u32 %v2168, 16
  %v2459 = vrot.slane %v2457, 4
  %v2460 = vshll.u32 %v2168, 16
  %v2462 = vrot.slane %v2460, 5
  %v2463 = vor.u32 %v2459, %v2462
  %v2464 = vrot.slane %v2463, 4
  %v2466 = vshll.u32 %v2169, 16
  %v2468 = vrot.slane %v2466, 5
  %v2469 = vsel %vm2239, %v2464, %v2468
  %v2470 = vshrl.u32 %v2169, 16
  %v2472 = vrot.slane %v2470, 4
  %v2473 = vor.u32 %v2472, %v2468
  %v2474 = vrot.slane %v2473, 4
  %v2476 = vshll.u32 %v2170, 16
  %v2478 = vrot.slane %v2476, 5
  %v2479 = vsel %vm2239, %v2474, %v2478
  %v2481 = vshrl.u32 %v2171, 16
  %v2483 = vrot.slane %v2481, 4
  %v2484 = vshll.u32 %v2171, 16
  %v2486 = vrot.slane %v2484, 5
  %v2487 = vor.u32 %v2483, %v2486
  %v2488 = vrot.slane %v2487, 4
  %v2490 = vshll.u32 %v2172, 16
  %v2492 = vrot.slane %v2490, 5
  %v2493 = vsel %vm2239, %v2488, %v2492
  %v2494 = vshrl.u32 %v2172, 16
  %v2496 = vrot.slane %v2494, 4
  %v2497 = vor.u32 %v2496, %v2492
  %v2498 = vrot.slane %v2497, 4
  %v2500 = vshll.u32 %v2173, 16
  %v2502 = vrot.slane %v2500, 5
  %v2503 = vsel %vm2239, %v2498, %v2502
  %v2505 = vshrl.u32 %v2174, 16
  %v2507 = vrot.slane %v2505, 4
  %v2508 = vshll.u32 %v2174, 16
  %v2510 = vrot.slane %v2508, 5
  %v2511 = vor.u32 %v2507, %v2510
  %v2512 = vrot.slane %v2511, 4
  %v2514 = vshll.u32 %v2175, 16
  %v2516 = vrot.slane %v2514, 5
  %v2517 = vsel %vm2239, %v2512, %v2516
  %v2518 = vshrl.u32 %v2175, 16
  %v2520 = vrot.slane %v2518, 4
  %v2521 = vor.u32 %v2520, %v2516
  %v2522 = vrot.slane %v2521, 4
  %v2524 = vshll.u32 %v2176, 16
  %v2526 = vrot.slane %v2524, 5
  %v2527 = vsel %vm2239, %v2522, %v2526
  %v2529 = vshrl.u32 %v2177, 16
  %v2531 = vrot.slane %v2529, 4
  %v2532 = vshll.u32 %v2177, 16
  %v2534 = vrot.slane %v2532, 5
  %v2535 = vor.u32 %v2531, %v2534
  %v2536 = vrot.slane %v2535, 4
  %v2538 = vshll.u32 %v2178, 16
  %v2540 = vrot.slane %v2538, 5
  %v2541 = vsel %vm2239, %v2536, %v2540
  %v2542 = vshrl.u32 %v2178, 16
  %v2544 = vrot.slane %v2542, 4
  %v2545 = vor.u32 %v2544, %v2540
  %v2546 = vrot.slane %v2545, 4
  %v2548 = vshll.u32 %v2179, 16
  %v2550 = vrot.slane %v2548, 5
  %v2551 = vsel %vm2239, %v2546, %v2550
  %v2553 = vshrl.u32 %v2180, 16
  %v2555 = vrot.slane %v2553, 4
  %v2556 = vshll.u32 %v2180, 16
  %v2558 = vrot.slane %v2556, 5
  %v2559 = vor.u32 %v2555, %v2558
  %v2560 = vrot.slane %v2559, 4
  %v2562 = vshll.u32 %v2181, 16
  %v2564 = vrot.slane %v2562, 5
  %v2565 = vsel %vm2239, %v2560, %v2564
  %v2566 = vshrl.u32 %v2181, 16
  %v2568 = vrot.slane %v2566, 4
  %v2569 = vor.u32 %v2568, %v2564
  %v2570 = vrot.slane %v2569, 4
  %v2572 = vshll.u32 %v2182, 16
  %v2574 = vrot.slane %v2572, 5
  %v2575 = vsel %vm2239, %v2570, %v2574
  %v2577 = vshrl.u32 %v2183, 16
  %v2579 = vrot.slane %v2577, 4
  %v2580 = vshll.u32 %v2183, 16
  %v2582 = vrot.slane %v2580, 5
  %v2583 = vor.u32 %v2579, %v2582
  %v2584 = vrot.slane %v2583, 4
  %v2586 = vshll.u32 %v2184, 16
  %v2588 = vrot.slane %v2586, 5
  %v2589 = vsel %vm2239, %v2584, %v2588
  %v2590 = vshrl.u32 %v2184, 16
  %v2592 = vrot.slane %v2590, 4
  %v2593 = vor.u32 %v2592, %v2588
  %v2594 = vrot.slane %v2593, 4
  %v2596 = vshll.u32 %v2185, 16
  %v2598 = vrot.slane %v2596, 5
  %v2599 = vsel %vm2239, %v2594, %v2598
  %v2601 = vshrl.u32 %v2186, 16
  %v2603 = vrot.slane %v2601, 4
  %v2604 = vshll.u32 %v2186, 16
  %v2606 = vrot.slane %v2604, 5
  %v2607 = vor.u32 %v2603, %v2606
  %v2608 = vrot.slane %v2607, 4
  %v2610 = vshll.u32 %v2187, 16
  %v2612 = vrot.slane %v2610, 5
  %v2613 = vsel %vm2239, %v2608, %v2612
  %v2614 = vshrl.u32 %v2187, 16
  %v2616 = vrot.slane %v2614, 4
  %v2617 = vor.u32 %v2616, %v2612
  %v2618 = vrot.slane %v2617, 4
  %v2620 = vshll.u32 %v2188, 16
  %v2622 = vrot.slane %v2620, 5
  %v2623 = vsel %vm2239, %v2618, %v2622
  %v2625 = vshrl.u32 %v2189, 16
  %v2627 = vrot.slane %v2625, 4
  %v2628 = vshll.u32 %v2189, 16
  %v2630 = vrot.slane %v2628, 5
  %v2631 = vor.u32 %v2627, %v2630
  %v2632 = vrot.slane %v2631, 4
  %v2634 = vshll.u32 %v2190, 16
  %v2636 = vrot.slane %v2634, 5
  %v2637 = vsel %vm2239, %v2632, %v2636
  %v2638 = vshrl.u32 %v2190, 16
  %v2640 = vrot.slane %v2638, 4
  %v2641 = vor.u32 %v2640, %v2636
  %v2642 = vrot.slane %v2641, 4
  %v2644 = vshll.u32 %v2191, 16
  %v2646 = vrot.slane %v2644, 5
  %v2647 = vsel %vm2239, %v2642, %v2646
  %v2649 = vshrl.u32 %v2192, 16
  %v2651 = vrot.slane %v2649, 4
  %v2652 = vshll.u32 %v2192, 16
  %v2654 = vrot.slane %v2652, 5
  %v2655 = vor.u32 %v2651, %v2654
  %v2656 = vrot.slane %v2655, 4
  %v2658 = vshll.u32 %v2193, 16
  %v2660 = vrot.slane %v2658, 5
  %v2661 = vsel %vm2239, %v2656, %v2660
  %v2662 = vshrl.u32 %v2193, 16
  %v2664 = vrot.slane %v2662, 4
  %v2665 = vor.u32 %v2664, %v2660
  %v2666 = vrot.slane %v2665, 4
  %v2668 = vshll.u32 %v2194, 16
  %v2670 = vrot.slane %v2668, 5
  %v2671 = vsel %vm2239, %v2666, %v2670
  %v2673 = vshrl.u32 %v2195, 16
  %v2675 = vrot.slane %v2673, 4
  %v2676 = vshll.u32 %v2195, 16
  %v2678 = vrot.slane %v2676, 5
  %v2679 = vor.u32 %v2675, %v2678
  %v2680 = vrot.slane %v2679, 4
  %v2682 = vshll.u32 %v2196, 16
  %v2684 = vrot.slane %v2682, 5
  %v2685 = vsel %vm2239, %v2680, %v2684
  %v2686 = vshrl.u32 %v2196, 16
  %v2688 = vrot.slane %v2686, 4
  %v2689 = vor.u32 %v2688, %v2684
  %v2690 = vrot.slane %v2689, 4
  %v2692 = vshll.u32 %v2197, 16
  %v2694 = vrot.slane %v2692, 5
  %v2695 = vsel %vm2239, %v2690, %v2694
  %v2697 = vshrl.u32 %v2198, 16
  %v2699 = vrot.slane %v2697, 4
  %v2700 = vshll.u32 %v2198, 16
  %v2702 = vrot.slane %v2700, 5
  %v2703 = vor.u32 %v2699, %v2702
  %v2704 = vrot.slane %v2703, 4
  %v2706 = vshll.u32 %v2199, 16
  %v2708 = vrot.slane %v2706, 5
  %v2709 = vsel %vm2239, %v2704, %v2708
  %v2710 = vshrl.u32 %v2199, 16
  %v2712 = vrot.slane %v2710, 4
  %v2713 = vor.u32 %v2712, %v2708
  %v2714 = vrot.slane %v2713, 4
  %v2716 = vshll.u32 %v2200, 16
  %v2718 = vrot.slane %v2716, 5
  %v2719 = vsel %vm2239, %v2714, %v2718
  %v2721 = vshrl.u32 %v2201, 16
  %v2723 = vrot.slane %v2721, 4
  %v2724 = vshll.u32 %v2201, 16
  %v2726 = vrot.slane %v2724, 5
  %v2727 = vor.u32 %v2723, %v2726
  %v2728 = vrot.slane %v2727, 4
  %v2730 = vshll.u32 %v2202, 16
  %v2732 = vrot.slane %v2730, 5
  %v2733 = vsel %vm2239, %v2728, %v2732
  %v2734 = vshrl.u32 %v2202, 16
  %v2736 = vrot.slane %v2734, 4
  %v2737 = vor.u32 %v2736, %v2732
  %v2738 = vrot.slane %v2737, 4
  %v2740 = vshll.u32 %v2203, 16
  %v2742 = vrot.slane %v2740, 5
  %v2743 = vsel %vm2239, %v2738, %v2742
  %v2745 = vshrl.u32 %v2204, 16
  %v2747 = vrot.slane %v2745, 4
  %v2748 = vshll.u32 %v2204, 16
  %v2750 = vrot.slane %v2748, 5
  %v2751 = vor.u32 %v2747, %v2750
  %v2752 = vrot.slane %v2751, 4
  %v2754 = vshll.u32 %v2205, 16
  %v2756 = vrot.slane %v2754, 5
  %v2757 = vsel %vm2239, %v2752, %v2756
  %v2758 = vshrl.u32 %v2205, 16
  %v2760 = vrot.slane %v2758, 4
  %v2761 = vor.u32 %v2760, %v2756
  %v2762 = vrot.slane %v2761, 4
  %v2764 = vshll.u32 %v2206, 16
  %v2766 = vrot.slane %v2764, 5
  %v2767 = vsel %vm2239, %v2762, %v2766
  %v2769 = vshrl.u32 %v2207, 16
  %v2771 = vrot.slane %v2769, 4
  %v2772 = vshll.u32 %v2207, 16
  %v2774 = vrot.slane %v2772, 5
  %v2775 = vor.u32 %v2771, %v2774
  %v2776 = vrot.slane %v2775, 4
  %v2778 = vshll.u32 %v2208, 16
  %v2780 = vrot.slane %v2778, 5
  %v2781 = vsel %vm2239, %v2776, %v2780
  %v2782 = vshrl.u32 %v2208, 16
  %v2784 = vrot.slane %v2782, 4
  %v2785 = vor.u32 %v2784, %v2780
  %v2786 = vrot.slane %v2785, 4
  %v2788 = vshll.u32 %v2209, 16
  %v2790 = vrot.slane %v2788, 5
  %v2791 = vsel %vm2239, %v2786, %v2790
  %v2793 = vshrl.u32 %v2210, 16
  %v2795 = vrot.slane %v2793, 4
  %v2796 = vshll.u32 %v2210, 16
  %v2798 = vrot.slane %v2796, 5
  %v2799 = vor.u32 %v2795, %v2798
  %v2800 = vrot.slane %v2799, 4
  %v2802 = vshll.u32 %v2211, 16
  %v2804 = vrot.slane %v2802, 5
  %v2805 = vsel %vm2239, %v2800, %v2804
  %v2806 = vshrl.u32 %v2211, 16
  %v2808 = vrot.slane %v2806, 4
  %v2809 = vor.u32 %v2808, %v2804
  %v2810 = vrot.slane %v2809, 4
  %v2812 = vshll.u32 %v2212, 16
  %v2814 = vrot.slane %v2812, 5
  %v2815 = vsel %vm2239, %v2810, %v2814
  %v2817 = vshrl.u32 %v2213, 16
  %v2819 = vrot.slane %v2817, 4
  %v2820 = vshll.u32 %v2213, 16
  %v2822 = vrot.slane %v2820, 5
  %v2823 = vor.u32 %v2819, %v2822
  %v2824 = vrot.slane %v2823, 4
  %v2826 = vshll.u32 %v2214, 16
  %v2828 = vrot.slane %v2826, 5
  %v2829 = vsel %vm2239, %v2824, %v2828
  %v2830 = vshrl.u32 %v2214, 16
  %v2832 = vrot.slane %v2830, 4
  %v2833 = vor.u32 %v2832, %v2828
  %v2834 = vrot.slane %v2833, 4
  %v2836 = vshll.u32 %v2215, 16
  %v2838 = vrot.slane %v2836, 5
  %v2839 = vsel %vm2239, %v2834, %v2838
  %v2841 = vshrl.u32 %v2216, 16
  %v2843 = vrot.slane %v2841, 4
  %v2844 = vshll.u32 %v2216, 16
  %v2846 = vrot.slane %v2844, 5
  %v2847 = vor.u32 %v2843, %v2846
  %v2848 = vrot.slane %v2847, 4
  %v2850 = vshll.u32 %v2217, 16
  %v2852 = vrot.slane %v2850, 5
  %v2853 = vsel %vm2239, %v2848, %v2852
  %v2854 = vshrl.u32 %v2217, 16
  %v2856 = vrot.slane %v2854, 4
  %v2857 = vor.u32 %v2856, %v2852
  %v2858 = vrot.slane %v2857, 4
  %v2860 = vshll.u32 %v2218, 16
  %v2862 = vrot.slane %v2860, 5
  %v2863 = vsel %vm2239, %v2858, %v2862
  %v2865 = vshrl.u32 %v2219, 16
  %v2867 = vrot.slane %v2865, 4
  %v2868 = vshll.u32 %v2219, 16
  %v2870 = vrot.slane %v2868, 5
  %v2871 = vor.u32 %v2867, %v2870
  %v2872 = vrot.slane %v2871, 4
  %v2874 = vshll.u32 %v2220, 16
  %v2876 = vrot.slane %v2874, 5
  %v2877 = vsel %vm2239, %v2872, %v2876
  %v2878 = vshrl.u32 %v2220, 16
  %v2880 = vrot.slane %v2878, 4
  %v2881 = vor.u32 %v2880, %v2876
  %v2882 = vrot.slane %v2881, 4
  %v2884 = vshll.u32 %v2221, 16
  %v2886 = vrot.slane %v2884, 5
  %v2887 = vsel %vm2239, %v2882, %v2886
  %v2889 = vshrl.u32 %v2222, 16
  %v2891 = vrot.slane %v2889, 4
  %v2892 = vshll.u32 %v2222, 16
  %v2894 = vrot.slane %v2892, 5
  %v2895 = vor.u32 %v2891, %v2894
  %v2896 = vrot.slane %v2895, 4
  %v2898 = vshll.u32 %v2223, 16
  %v2900 = vrot.slane %v2898, 5
  %v2901 = vsel %vm2239, %v2896, %v2900
  %v2902 = vshrl.u32 %v2223, 16
  %v2904 = vrot.slane %v2902, 4
  %v2905 = vor.u32 %v2904, %v2900
  %v2906 = vrot.slane %v2905, 4
  %v2908 = vshll.u32 %v2224, 16
  %v2910 = vrot.slane %v2908, 5
  %v2911 = vsel %vm2239, %v2906, %v2910
  %v2913 = vshrl.u32 %v2225, 16
  %v2915 = vrot.slane %v2913, 4
  %v2916 = vshll.u32 %v2225, 16
  %v2918 = vrot.slane %v2916, 5
  %v2919 = vor.u32 %v2915, %v2918
  %v2920 = vrot.slane %v2919, 4
  %v2922 = vshll.u32 %v2226, 16
  %v2924 = vrot.slane %v2922, 5
  %v2925 = vsel %vm2239, %v2920, %v2924
  %v2926 = vshrl.u32 %v2226, 16
  %v2928 = vrot.slane %v2926, 4
  %v2929 = vor.u32 %v2928, %v2924
  %v2930 = vrot.slane %v2929, 4
  %v2932 = vshll.u32 %v2227, 16
  %v2934 = vrot.slane %v2932, 5
  %v2935 = vsel %vm2239, %v2930, %v2934
  %v2937 = vshrl.u32 %v2228, 16
  %v2939 = vrot.slane %v2937, 4
  %v2940 = vshll.u32 %v2228, 16
  %v2942 = vrot.slane %v2940, 5
  %v2943 = vor.u32 %v2939, %v2942
  %v2944 = vrot.slane %v2943, 4
  %v2946 = vshll.u32 %v2229, 16
  %v2948 = vrot.slane %v2946, 5
  %v2949 = vsel %vm2239, %v2944, %v2948
  %v2950 = vshrl.u32 %v2229, 16
  %v2952 = vrot.slane %v2950, 4
  %v2953 = vor.u32 %v2952, %v2948
  %v2954 = vrot.slane %v2953, 4
  %v2956 = vshll.u32 %v2230, 16
  %v2958 = vrot.slane %v2956, 5
  %v2959 = vsel %vm2239, %v2954, %v2958
  %v2961 = vshrl.u32 %v2231, 16
  %v2963 = vrot.slane %v2961, 4
  %v2964 = vshll.u32 %v2231, 16
  %v2966 = vrot.slane %v2964, 5
  %v2967 = vor.u32 %v2963, %v2966
  %v2968 = vrot.slane %v2967, 4
  %v2970 = vshll.u32 %v2232, 16
  %v2972 = vrot.slane %v2970, 5
  %v2973 = vsel %vm2239, %v2968, %v2972
  %v2974 = vshrl.u32 %v2232, 16
  %v2976 = vrot.slane %v2974, 4
  %v2977 = vor.u32 %v2976, %v2972
  %v2978 = vrot.slane %v2977, 4
  %v2980 = vshll.u32 %v2233, 16
  %v2982 = vrot.slane %v2980, 5
  %v2983 = vsel %vm2239, %v2978, %v2982
  %v2985 = vshrl.u32 %v2234, 16
  %v2987 = vrot.slane %v2985, 4
  %v2988 = vshll.u32 %v2234, 16
  %v2990 = vrot.slane %v2988, 5
  %v2991 = vor.u32 %v2987, %v2990
  %v2992 = vrot.slane %v2991, 4
  %v2994 = vshll.u32 %v2235, 16
  %v2996 = vrot.slane %v2994, 5
  %v2997 = vsel %vm2239, %v2992, %v2996
  %v2998 = vshrl.u32 %v2235, 16
  %v3000 = vrot.slane %v2998, 4
  %v3001 = vor.u32 %v3000, %v2996
  %v3002 = vrot.slane %v3001, 4
  %v3004 = vshll.u32 %v2236, 16
  %v3006 = vrot.slane %v3004, 5
  %v3007 = vsel %vm2239, %v3002, %v3006
  %3008 = vrot.lane.b32.xlu0 %v2253, 4
  %v3009 = vpop.permute.xlu0 %3008
  %3010 = vrot.lane.b32.xlu0 %v2263, 4
  %v3011 = vpop.permute.xlu0 %3010
  %3012 = vrot.lane.b32.xlu0 %v2277, 4
  %v3013 = vpop.permute.xlu0 %3012
  %3014 = vrot.lane.b32.xlu0 %v2287, 4
  %v3015 = vpop.permute.xlu0 %3014
  %3016 = vrot.lane.b32.xlu0 %v2301, 4
  %v3017 = vpop.permute.xlu0 %3016
  %3018 = vrot.lane.b32.xlu0 %v2311, 4
  %v3019 = vpop.permute.xlu0 %3018
  %3020 = vrot.lane.b32.xlu0 %v2325, 4
  %v3021 = vpop.permute.xlu0 %3020
  %3022 = vrot.lane.b32.xlu0 %v2335, 4
  %v3023 = vpop.permute.xlu0 %3022
  %3024 = vrot.lane.b32.xlu0 %v2349, 4
  %v3025 = vpop.permute.xlu0 %3024
  %3026 = vrot.lane.b32.xlu0 %v2359, 4
  %v3027 = vpop.permute.xlu0 %3026
  %3028 = vrot.lane.b32.xlu0 %v2373, 4
  %v3029 = vpop.permute.xlu0 %3028
  %3030 = vrot.lane.b32.xlu0 %v2383, 4
  %v3031 = vpop.permute.xlu0 %3030
  %3032 = vrot.lane.b32.xlu0 %v2397, 4
  %v3033 = vpop.permute.xlu0 %3032
  %3034 = vrot.lane.b32.xlu0 %v2407, 4
  %v3035 = vpop.permute.xlu0 %3034
  %3036 = vrot.lane.b32.xlu0 %v2421, 4
  %v3037 = vpop.permute.xlu0 %3036
  %3038 = vrot.lane.b32.xlu0 %v2431, 4
  %v3039 = vpop.permute.xlu0 %3038
  %3040 = vrot.lane.b32.xlu0 %v2445, 4
  %v3041 = vpop.permute.xlu0 %3040
  %3042 = vrot.lane.b32.xlu0 %v2455, 4
  %v3043 = vpop.permute.xlu0 %3042
  %3044 = vrot.lane.b32.xlu0 %v2469, 4
  %v3045 = vpop.permute.xlu0 %3044
  %3046 = vrot.lane.b32.xlu0 %v2479, 4
  %v3047 = vpop.permute.xlu0 %3046
  %3048 = vrot.lane.b32.xlu0 %v2493, 4
  %v3049 = vpop.permute.xlu0 %3048
  %3050 = vrot.lane.b32.xlu0 %v2503, 4
  %v3051 = vpop.permute.xlu0 %3050
  %3052 = vrot.lane.b32.xlu0 %v2517, 4
  %v3053 = vpop.permute.xlu0 %3052
  %3054 = vrot.lane.b32.xlu0 %v2527, 4
  %v3055 = vpop.permute.xlu0 %3054
  %3056 = vrot.lane.b32.xlu0 %v2541, 4
  %v3057 = vpop.permute.xlu0 %3056
  %3058 = vrot.lane.b32.xlu0 %v2551, 4
  %v3059 = vpop.permute.xlu0 %3058
  %3060 = vrot.lane.b32.xlu0 %v2565, 4
  %v3061 = vpop.permute.xlu0 %3060
  %3062 = vrot.lane.b32.xlu0 %v2575, 4
  %v3063 = vpop.permute.xlu0 %3062
  %3064 = vrot.lane.b32.xlu0 %v2589, 4
  %v3065 = vpop.permute.xlu0 %3064
  %3066 = vrot.lane.b32.xlu0 %v2599, 4
  %v3067 = vpop.permute.xlu0 %3066
  %3068 = vrot.lane.b32.xlu0 %v2613, 4
  %v3069 = vpop.permute.xlu0 %3068
  %3070 = vrot.lane.b32.xlu0 %v2623, 4
  %v3071 = vpop.permute.xlu0 %3070
  %3072 = vrot.lane.b32.xlu0 %v2637, 4
  %v3073 = vpop.permute.xlu0 %3072
  %3074 = vrot.lane.b32.xlu0 %v2647, 4
  %v3075 = vpop.permute.xlu0 %3074
  %3076 = vrot.lane.b32.xlu0 %v2661, 4
  %v3077 = vpop.permute.xlu0 %3076
  %3078 = vrot.lane.b32.xlu0 %v2671, 4
  %v3079 = vpop.permute.xlu0 %3078
  %3080 = vrot.lane.b32.xlu0 %v2685, 4
  %v3081 = vpop.permute.xlu0 %3080
  %3082 = vrot.lane.b32.xlu0 %v2695, 4
  %v3083 = vpop.permute.xlu0 %3082
  %3084 = vrot.lane.b32.xlu0 %v2709, 4
  %v3085 = vpop.permute.xlu0 %3084
  %3086 = vrot.lane.b32.xlu0 %v2719, 4
  %v3087 = vpop.permute.xlu0 %3086
  %3088 = vrot.lane.b32.xlu0 %v2733, 4
  %v3089 = vpop.permute.xlu0 %3088
  %3090 = vrot.lane.b32.xlu0 %v2743, 4
  %v3091 = vpop.permute.xlu0 %3090
  %3092 = vrot.lane.b32.xlu0 %v2757, 4
  %v3093 = vpop.permute.xlu0 %3092
  %3094 = vrot.lane.b32.xlu0 %v2767, 4
  %v3095 = vpop.permute.xlu0 %3094
  %3096 = vrot.lane.b32.xlu0 %v2781, 4
  %v3097 = vpop.permute.xlu0 %3096
  %3098 = vrot.lane.b32.xlu0 %v2791, 4
  %v3099 = vpop.permute.xlu0 %3098
  %3100 = vrot.lane.b32.xlu0 %v2805, 4
  %v3101 = vpop.permute.xlu0 %3100
  %3102 = vrot.lane.b32.xlu0 %v2815, 4
  %v3103 = vpop.permute.xlu0 %3102
  %3104 = vrot.lane.b32.xlu0 %v2829, 4
  %v3105 = vpop.permute.xlu0 %3104
  %3106 = vrot.lane.b32.xlu0 %v2839, 4
  %v3107 = vpop.permute.xlu0 %3106
  %3108 = vrot.lane.b32.xlu0 %v2853, 4
  %v3109 = vpop.permute.xlu0 %3108
  %3110 = vrot.lane.b32.xlu0 %v2863, 4
  %v3111 = vpop.permute.xlu0 %3110
  %3112 = vrot.lane.b32.xlu0 %v2877, 4
  %v3113 = vpop.permute.xlu0 %3112
  %3114 = vrot.lane.b32.xlu0 %v2887, 4
  %v3115 = vpop.permute.xlu0 %3114
  %3116 = vrot.lane.b32.xlu0 %v2901, 4
  %v3117 = vpop.permute.xlu0 %3116
  %3118 = vrot.lane.b32.xlu0 %v2911, 4
  %v3119 = vpop.permute.xlu0 %3118
  %3120 = vrot.lane.b32.xlu0 %v2925, 4
  %v3121 = vpop.permute.xlu0 %3120
  %3122 = vrot.lane.b32.xlu0 %v2935, 4
  %v3123 = vpop.permute.xlu0 %3122
  %3124 = vrot.lane.b32.xlu0 %v2949, 4
  %v3125 = vpop.permute.xlu0 %3124
  %3126 = vrot.lane.b32.xlu0 %v2959, 4
  %v3127 = vpop.permute.xlu0 %3126
  %3128 = vrot.lane.b32.xlu0 %v2973, 4
  %v3129 = vpop.permute.xlu0 %3128
  %3130 = vrot.lane.b32.xlu0 %v2983, 4
  %v3131 = vpop.permute.xlu0 %3130
  %3132 = vrot.lane.b32.xlu0 %v2997, 4
  %v3133 = vpop.permute.xlu0 %3132
  %3134 = vrot.lane.b32.xlu0 %v3007, 4
  %v3135 = vpop.permute.xlu0 %3134
  %vm3200 = vcmask 60448
  %3201 = vst.msk [vmem:[#allocation3] sm:$0xf] %vm3200, %v3009
  %3202 = vst.msk [vmem:[#allocation3 + $0x4] sm:$0xf] %vm3200, %v3011
  %3203 = vst.msk [vmem:[#allocation3 + $0x8] sm:$0xf] %vm3200, %v3013
  %3204 = vst.msk [vmem:[#allocation3 + $0xc] sm:$0xf] %vm3200, %v3015
  %3205 = vst.msk [vmem:[#allocation3 + $0x10] sm:$0xf] %vm3200, %v3017
  %3206 = vst.msk [vmem:[#allocation3 + $0x14] sm:$0xf] %vm3200, %v3019
  %3207 = vst.msk [vmem:[#allocation3 + $0x18] sm:$0xf] %vm3200, %v3021
  %3208 = vst.msk [vmem:[#allocation3 + $0x1c] sm:$0xf] %vm3200, %v3023
  %3209 = vst.msk [vmem:[#allocation3 + $0x20] sm:$0xf] %vm3200, %v3025
  %3210 = vst.msk [vmem:[#allocation3 + $0x24] sm:$0xf] %vm3200, %v3027
  %3211 = vst.msk [vmem:[#allocation3 + $0x28] sm:$0xf] %vm3200, %v3029
  %3212 = vst.msk [vmem:[#allocation3 + $0x2c] sm:$0xf] %vm3200, %v3031
  %3213 = vst.msk [vmem:[#allocation3 + $0x30] sm:$0xf] %vm3200, %v3033
  %3214 = vst.msk [vmem:[#allocation3 + $0x34] sm:$0xf] %vm3200, %v3035
  %3215 = vst.msk [vmem:[#allocation3 + $0x38] sm:$0xf] %vm3200, %v3037
  %3216 = vst.msk [vmem:[#allocation3 + $0x3c] sm:$0xf] %vm3200, %v3039
  %3217 = vst.msk [vmem:[#allocation3 + $0x40] sm:$0xf] %vm3200, %v3041
  %3218 = vst.msk [vmem:[#allocation3 + $0x44] sm:$0xf] %vm3200, %v3043
  %3219 = vst.msk [vmem:[#allocation3 + $0x48] sm:$0xf] %vm3200, %v3045
  %3220 = vst.msk [vmem:[#allocation3 + $0x4c] sm:$0xf] %vm3200, %v3047
  %3221 = vst.msk [vmem:[#allocation3 + $0x50] sm:$0xf] %vm3200, %v3049
  %3222 = vst.msk [vmem:[#allocation3 + $0x54] sm:$0xf] %vm3200, %v3051
  %3223 = vst.msk [vmem:[#allocation3 + $0x58] sm:$0xf] %vm3200, %v3053
  %3224 = vst.msk [vmem:[#allocation3 + $0x5c] sm:$0xf] %vm3200, %v3055
  %3225 = vst.msk [vmem:[#allocation3 + $0x60] sm:$0xf] %vm3200, %v3057
  %3226 = vst.msk [vmem:[#allocation3 + $0x64] sm:$0xf] %vm3200, %v3059
  %3227 = vst.msk [vmem:[#allocation3 + $0x68] sm:$0xf] %vm3200, %v3061
  %3228 = vst.msk [vmem:[#allocation3 + $0x6c] sm:$0xf] %vm3200, %v3063
  %3229 = vst.msk [vmem:[#allocation3 + $0x70] sm:$0xf] %vm3200, %v3065
  %3230 = vst.msk [vmem:[#allocation3 + $0x74] sm:$0xf] %vm3200, %v3067
  %3231 = vst.msk [vmem:[#allocation3 + $0x78] sm:$0xf] %vm3200, %v3069
  %3232 = vst.msk [vmem:[#allocation3 + $0x7c] sm:$0xf] %vm3200, %v3071
  %3233 = vst.msk [vmem:[#allocation3 + $0x80] sm:$0xf] %vm3200, %v3073
  %3234 = vst.msk [vmem:[#allocation3 + $0x84] sm:$0xf] %vm3200, %v3075
  %3235 = vst.msk [vmem:[#allocation3 + $0x88] sm:$0xf] %vm3200, %v3077
  %3236 = vst.msk [vmem:[#allocation3 + $0x8c] sm:$0xf] %vm3200, %v3079
  %3237 = vst.msk [vmem:[#allocation3 + $0x90] sm:$0xf] %vm3200, %v3081
  %3238 = vst.msk [vmem:[#allocation3 + $0x94] sm:$0xf] %vm3200, %v3083
  %3239 = vst.msk [vmem:[#allocation3 + $0x98] sm:$0xf] %vm3200, %v3085
  %3240 = vst.msk [vmem:[#allocation3 + $0x9c] sm:$0xf] %vm3200, %v3087
  %3241 = vst.msk [vmem:[#allocation3 + $0xa0] sm:$0xf] %vm3200, %v3089
  %3242 = vst.msk [vmem:[#allocation3 + $0xa4] sm:$0xf] %vm3200, %v3091
  %3243 = vst.msk [vmem:[#allocation3 + $0xa8] sm:$0xf] %vm3200, %v3093
  %3244 = vst.msk [vmem:[#allocation3 + $0xac] sm:$0xf] %vm3200, %v3095
  %3245 = vst.msk [vmem:[#allocation3 + $0xb0] sm:$0xf] %vm3200, %v3097
  %3246 = vst.msk [vmem:[#allocation3 + $0xb4] sm:$0xf] %vm3200, %v3099
  %3247 = vst.msk [vmem:[#allocation3 + $0xb8] sm:$0xf] %vm3200, %v3101
  %3248 = vst.msk [vmem:[#allocation3 + $0xbc] sm:$0xf] %vm3200, %v3103
  %3249 = vst.msk [vmem:[#allocation3 + $0xc0] sm:$0xf] %vm3200, %v3105
  %3250 = vst.msk [vmem:[#allocation3 + $0xc4] sm:$0xf] %vm3200, %v3107
  %3251 = vst.msk [vmem:[#allocation3 + $0xc8] sm:$0xf] %vm3200, %v3109
  %3252 = vst.msk [vmem:[#allocation3 + $0xcc] sm:$0xf] %vm3200, %v3111
  %3253 = vst.msk [vmem:[#allocation3 + $0xd0] sm:$0xf] %vm3200, %v3113
  %3254 = vst.msk [vmem:[#allocation3 + $0xd4] sm:$0xf] %vm3200, %v3115
  %3255 = vst.msk [vmem:[#allocation3 + $0xd8] sm:$0xf] %vm3200, %v3117
  %3256 = vst.msk [vmem:[#allocation3 + $0xdc] sm:$0xf] %vm3200, %v3119
  %3257 = vst.msk [vmem:[#allocation3 + $0xe0] sm:$0xf] %vm3200, %v3121
  %3258 = vst.msk [vmem:[#allocation3 + $0xe4] sm:$0xf] %vm3200, %v3123
  %3259 = vst.msk [vmem:[#allocation3 + $0xe8] sm:$0xf] %vm3200, %v3125
  %3260 = vst.msk [vmem:[#allocation3 + $0xec] sm:$0xf] %vm3200, %v3127
  %3261 = vst.msk [vmem:[#allocation3 + $0xf0] sm:$0xf] %vm3200, %v3129
  %3262 = vst.msk [vmem:[#allocation3 + $0xf4] sm:$0xf] %vm3200, %v3131
  %3263 = vst.msk [vmem:[#allocation3 + $0xf8] sm:$0xf] %vm3200, %v3133
  %3264 = vst.msk [vmem:[#allocation3 + $0xfc] sm:$0xf] %vm3200, %v3135
  %v3265 = vld [vmem:[#allocation2] sm:$0xe]
  %v3266 = vld [vmem:[#allocation2 + $0x4] sm:$0xf]
  %v3267 = vld [vmem:[#allocation2 + $0x8] sm:$0x1]
  %v3268 = vld [vmem:[#allocation2 + $0xc] sm:$0xe]
  %v3269 = vld [vmem:[#allocation2 + $0x10] sm:$0xf]
  %v3270 = vld [vmem:[#allocation2 + $0x14] sm:$0x1]
  %v3271 = vld [vmem:[#allocation2 + $0x18] sm:$0xe]
  %v3272 = vld [vmem:[#allocation2 + $0x1c] sm:$0xf]
  %v3273 = vld [vmem:[#allocation2 + $0x20] sm:$0x1]
  %v3274 = vld [vmem:[#allocation2 + $0x24] sm:$0xe]
  %v3275 = vld [vmem:[#allocation2 + $0x28] sm:$0xf]
  %v3276 = vld [vmem:[#allocation2 + $0x2c] sm:$0x1]
  %v3277 = vld [vmem:[#allocation2 + $0x30] sm:$0xe]
  %v3278 = vld [vmem:[#allocation2 + $0x34] sm:$0xf]
  %v3279 = vld [vmem:[#allocation2 + $0x38] sm:$0x1]
  %v3280 = vld [vmem:[#allocation2 + $0x3c] sm:$0xe]
  %v3281 = vld [vmem:[#allocation2 + $0x40] sm:$0xf]
  %v3282 = vld [vmem:[#allocation2 + $0x44] sm:$0x1]
  %v3283 = vld [vmem:[#allocation2 + $0x48] sm:$0xe]
  %v3284 = vld [vmem:[#allocation2 + $0x4c] sm:$0xf]
  %v3285 = vld [vmem:[#allocation2 + $0x50] sm:$0x1]
  %v3286 = vld [vmem:[#allocation2 + $0x54] sm:$0xe]
  %v3287 = vld [vmem:[#allocation2 + $0x58] sm:$0xf]
  %v3288 = vld [vmem:[#allocation2 + $0x5c] sm:$0x1]
  %v3289 = vld [vmem:[#allocation2 + $0x60] sm:$0xe]
  %v3290 = vld [vmem:[#allocation2 + $0x64] sm:$0xf]
  %v3291 = vld [vmem:[#allocation2 + $0x68] sm:$0x1]
  %v3292 = vld [vmem:[#allocation2 + $0x6c] sm:$0xe]
  %v3293 = vld [vmem:[#allocation2 + $0x70] sm:$0xf]
  %v3294 = vld [vmem:[#allocation2 + $0x74] sm:$0x1]
  %v3295 = vld [vmem:[#allocation2 + $0x78] sm:$0xe]
  %v3296 = vld [vmem:[#allocation2 + $0x7c] sm:$0xf]
  %v3297 = vld [vmem:[#allocation2 + $0x80] sm:$0x1]
  %v3298 = vld [vmem:[#allocation2 + $0x84] sm:$0xe]
  %v3299 = vld [vmem:[#allocation2 + $0x88] sm:$0xf]
  %v3300 = vld [vmem:[#allocation2 + $0x8c] sm:$0x1]
  %v3301 = vld [vmem:[#allocation2 + $0x90] sm:$0xe]
  %v3302 = vld [vmem:[#allocation2 + $0x94] sm:$0xf]
  %v3303 = vld [vmem:[#allocation2 + $0x98] sm:$0x1]
  %v3304 = vld [vmem:[#allocation2 + $0x9c] sm:$0xe]
  %v3305 = vld [vmem:[#allocation2 + $0xa0] sm:$0xf]
  %v3306 = vld [vmem:[#allocation2 + $0xa4] sm:$0x1]
  %v3307 = vld [vmem:[#allocation2 + $0xa8] sm:$0xe]
  %v3308 = vld [vmem:[#allocation2 + $0xac] sm:$0xf]
  %v3309 = vld [vmem:[#allocation2 + $0xb0] sm:$0x1]
  %v3310 = vld [vmem:[#allocation2 + $0xb4] sm:$0xe]
  %v3311 = vld [vmem:[#allocation2 + $0xb8] sm:$0xf]
  %v3312 = vld [vmem:[#allocation2 + $0xbc] sm:$0x1]
  %v3313 = vld [vmem:[#allocation2 + $0xd8] sm:$0xe]
  %v3314 = vld [vmem:[#allocation2 + $0xdc] sm:$0xf]
  %v3315 = vld [vmem:[#allocation2 + $0xe0] sm:$0x1]
  %v3316 = vld [vmem:[#allocation2 + $0xe4] sm:$0xe]
  %v3317 = vld [vmem:[#allocation2 + $0xe8] sm:$0xf]
  %v3318 = vld [vmem:[#allocation2 + $0xec] sm:$0x1]
  %v3319 = vld [vmem:[#allocation2 + $0xf0] sm:$0xe]
  %v3320 = vld [vmem:[#allocation2 + $0xf4] sm:$0xf]
  %v3321 = vld [vmem:[#allocation2 + $0xf8] sm:$0x1]
  %v3322 = vld [vmem:[#allocation2 + $0xfc] sm:$0xe]
  %v3323 = vld [vmem:[#allocation2 + $0x100] sm:$0xf]
  %v3324 = vld [vmem:[#allocation2 + $0x104] sm:$0x1]
  %v3325 = vld [vmem:[#allocation2 + $0x108] sm:$0xe]
  %v3326 = vld [vmem:[#allocation2 + $0x10c] sm:$0xf]
  %v3327 = vld [vmem:[#allocation2 + $0x110] sm:$0x1]
  %v3328 = vld [vmem:[#allocation2 + $0x114] sm:$0xe]
  %v3329 = vld [vmem:[#allocation2 + $0x118] sm:$0xf]
  %v3330 = vld [vmem:[#allocation2 + $0x11c] sm:$0x1]
  %v3331 = vld [vmem:[#allocation2 + $0x120] sm:$0xe]
  %v3332 = vld [vmem:[#allocation2 + $0x124] sm:$0xf]
  %v3333 = vld [vmem:[#allocation2 + $0x128] sm:$0x1]
  %v3334 = vld [vmem:[#allocation2 + $0x12c] sm:$0xe]
  %v3335 = vld [vmem:[#allocation2 + $0x130] sm:$0xf]
  %v3336 = vld [vmem:[#allocation2 + $0x134] sm:$0x1]
  %v3337 = vld [vmem:[#allocation2 + $0x138] sm:$0xe]
  %v3338 = vld [vmem:[#allocation2 + $0x13c] sm:$0xf]
  %v3339 = vld [vmem:[#allocation2 + $0x140] sm:$0x1]
  %v3340 = vld [vmem:[#allocation2 + $0x144] sm:$0xe]
  %v3341 = vld [vmem:[#allocation2 + $0x148] sm:$0xf]
  %v3342 = vld [vmem:[#allocation2 + $0x14c] sm:$0x1]
  %v3343 = vld [vmem:[#allocation2 + $0x150] sm:$0xe]
  %v3344 = vld [vmem:[#allocation2 + $0x154] sm:$0xf]
  %v3345 = vld [vmem:[#allocation2 + $0x158] sm:$0x1]
  %v3346 = vld [vmem:[#allocation2 + $0x15c] sm:$0xe]
  %v3347 = vld [vmem:[#allocation2 + $0x160] sm:$0xf]
  %v3348 = vld [vmem:[#allocation2 + $0x164] sm:$0x1]
  %v3349 = vld [vmem:[#allocation2 + $0x168] sm:$0xe]
  %v3350 = vld [vmem:[#allocation2 + $0x16c] sm:$0xf]
  %v3351 = vld [vmem:[#allocation2 + $0x170] sm:$0x1]
  %v3352 = vld [vmem:[#allocation2 + $0x174] sm:$0xe]
  %v3353 = vld [vmem:[#allocation2 + $0x178] sm:$0xf]
  %v3354 = vld [vmem:[#allocation2 + $0x17c] sm:$0x1]
  %v3355 = vld [vmem:[#allocation2 + $0x180] sm:$0xe]
  %v3356 = vld [vmem:[#allocation2 + $0x184] sm:$0xf]
  %v3357 = vld [vmem:[#allocation2 + $0x188] sm:$0x1]
  %v3358 = vld [vmem:[#allocation2 + $0x18c] sm:$0xe]
  %v3359 = vld [vmem:[#allocation2 + $0x190] sm:$0xf]
  %v3360 = vld [vmem:[#allocation2 + $0x194] sm:$0x1]
  %vm3457 = vcmask 1042432
  %vm3458 = vcmask 1046532
  %vm3459 = vmor %vm3457, %vm3458
  %v3460 = vrot.slane %v3265, 5
  %v3461 = vrot.slane %v3460, 4
  %v3462 = vrot.slane %v3266, 5
  %v3463 = vsel %vm3459, %v3461, %v3462
  %v3464 = vrot.slane %v3462, 4
  %v3465 = vrot.slane %v3267, 5
  %v3466 = vsel %vm3459, %v3464, %v3465
  %v3467 = vrot.slane %v3268, 5
  %v3468 = vrot.slane %v3467, 4
  %v3469 = vrot.slane %v3269, 5
  %v3470 = vsel %vm3459, %v3468, %v3469
  %v3471 = vrot.slane %v3469, 4
  %v3472 = vrot.slane %v3270, 5
  %v3473 = vsel %vm3459, %v3471, %v3472
  %v3474 = vrot.slane %v3271, 5
  %v3475 = vrot.slane %v3474, 4
  %v3476 = vrot.slane %v3272, 5
  %v3477 = vsel %vm3459, %v3475, %v3476
  %v3478 = vrot.slane %v3476, 4
  %v3479 = vrot.slane %v3273, 5
  %v3480 = vsel %vm3459, %v3478, %v3479
  %v3481 = vrot.slane %v3274, 5
  %v3482 = vrot.slane %v3481, 4
  %v3483 = vrot.slane %v3275, 5
  %v3484 = vsel %vm3459, %v3482, %v3483
  %v3485 = vrot.slane %v3483, 4
  %v3486 = vrot.slane %v3276, 5
  %v3487 = vsel %vm3459, %v3485, %v3486
  %v3488 = vrot.slane %v3277, 5
  %v3489 = vrot.slane %v3488, 4
  %v3490 = vrot.slane %v3278, 5
  %v3491 = vsel %vm3459, %v3489, %v3490
  %v3492 = vrot.slane %v3490, 4
  %v3493 = vrot.slane %v3279, 5
  %v3494 = vsel %vm3459, %v3492, %v3493
  %v3495 = vrot.slane %v3280, 5
  %v3496 = vrot.slane %v3495, 4
  %v3497 = vrot.slane %v3281, 5
  %v3498 = vsel %vm3459, %v3496, %v3497
  %v3499 = vrot.slane %v3497, 4
  %v3500 = vrot.slane %v3282, 5
  %v3501 = vsel %vm3459, %v3499, %v3500
  %v3502 = vrot.slane %v3283, 5
  %v3503 = vrot.slane %v3502, 4
  %v3504 = vrot.slane %v3284, 5
  %v3505 = vsel %vm3459, %v3503, %v3504
  %v3506 = vrot.slane %v3504, 4
  %v3507 = vrot.slane %v3285, 5
  %v3508 = vsel %vm3459, %v3506, %v3507
  %v3509 = vrot.slane %v3286, 5
  %v3510 = vrot.slane %v3509, 4
  %v3511 = vrot.slane %v3287, 5
  %v3512 = vsel %vm3459, %v3510, %v3511
  %v3513 = vrot.slane %v3511, 4
  %v3514 = vrot.slane %v3288, 5
  %v3515 = vsel %vm3459, %v3513, %v3514
  %v3516 = vrot.slane %v3289, 5
  %v3517 = vrot.slane %v3516, 4
  %v3518 = vrot.slane %v3290, 5
  %v3519 = vsel %vm3459, %v3517, %v3518
  %v3520 = vrot.slane %v3518, 4
  %v3521 = vrot.slane %v3291, 5
  %v3522 = vsel %vm3459, %v3520, %v3521
  %v3523 = vrot.slane %v3292, 5
  %v3524 = vrot.slane %v3523, 4
  %v3525 = vrot.slane %v3293, 5
  %v3526 = vsel %vm3459, %v3524, %v3525
  %v3527 = vrot.slane %v3525, 4
  %v3528 = vrot.slane %v3294, 5
  %v3529 = vsel %vm3459, %v3527, %v3528
  %v3530 = vrot.slane %v3295, 5
  %v3531 = vrot.slane %v3530, 4
  %v3532 = vrot.slane %v3296, 5
  %v3533 = vsel %vm3459, %v3531, %v3532
  %v3534 = vrot.slane %v3532, 4
  %v3535 = vrot.slane %v3297, 5
  %v3536 = vsel %vm3459, %v3534, %v3535
  %v3537 = vrot.slane %v3298, 5
  %v3538 = vrot.slane %v3537, 4
  %v3539 = vrot.slane %v3299, 5
  %v3540 = vsel %vm3459, %v3538, %v3539
  %v3541 = vrot.slane %v3539, 4
  %v3542 = vrot.slane %v3300, 5
  %v3543 = vsel %vm3459, %v3541, %v3542
  %v3544 = vrot.slane %v3301, 5
  %v3545 = vrot.slane %v3544, 4
  %v3546 = vrot.slane %v3302, 5
  %v3547 = vsel %vm3459, %v3545, %v3546
  %v3548 = vrot.slane %v3546, 4
  %v3549 = vrot.slane %v3303, 5
  %v3550 = vsel %vm3459, %v3548, %v3549
  %v3551 = vrot.slane %v3304, 5
  %v3552 = vrot.slane %v3551, 4
  %v3553 = vrot.slane %v3305, 5
  %v3554 = vsel %vm3459, %v3552, %v3553
  %v3555 = vrot.slane %v3553, 4
  %v3556 = vrot.slane %v3306, 5
  %v3557 = vsel %vm3459, %v3555, %v3556
  %v3558 = vrot.slane %v3307, 5
  %v3559 = vrot.slane %v3558, 4
  %v3560 = vrot.slane %v3308, 5
  %v3561 = vsel %vm3459, %v3559, %v3560
  %v3562 = vrot.slane %v3560, 4
  %v3563 = vrot.slane %v3309, 5
  %v3564 = vsel %vm3459, %v3562, %v3563
  %v3565 = vrot.slane %v3310, 5
  %v3566 = vrot.slane %v3565, 4
  %v3567 = vrot.slane %v3311, 5
  %v3568 = vsel %vm3459, %v3566, %v3567
  %v3569 = vrot.slane %v3567, 4
  %v3570 = vrot.slane %v3312, 5
  %v3571 = vsel %vm3459, %v3569, %v3570
  %v3572 = vrot.slane %v3313, 5
  %v3573 = vrot.slane %v3572, 4
  %v3574 = vrot.slane %v3314, 5
  %v3575 = vsel %vm3459, %v3573, %v3574
  %v3576 = vrot.slane %v3574, 4
  %v3577 = vrot.slane %v3315, 5
  %v3578 = vsel %vm3459, %v3576, %v3577
  %v3579 = vrot.slane %v3316, 5
  %v3580 = vrot.slane %v3579, 4
  %v3581 = vrot.slane %v3317, 5
  %v3582 = vsel %vm3459, %v3580, %v3581
  %v3583 = vrot.slane %v3581, 4
  %v3584 = vrot.slane %v3318, 5
  %v3585 = vsel %vm3459, %v3583, %v3584
  %v3586 = vrot.slane %v3319, 5
  %v3587 = vrot.slane %v3586, 4
  %v3588 = vrot.slane %v3320, 5
  %v3589 = vsel %vm3459, %v3587, %v3588
  %v3590 = vrot.slane %v3588, 4
  %v3591 = vrot.slane %v3321, 5
  %v3592 = vsel %vm3459, %v3590, %v3591
  %v3593 = vrot.slane %v3322, 5
  %v3594 = vrot.slane %v3593, 4
  %v3595 = vrot.slane %v3323, 5
  %v3596 = vsel %vm3459, %v3594, %v3595
  %v3597 = vrot.slane %v3595, 4
  %v3598 = vrot.slane %v3324, 5
  %v3599 = vsel %vm3459, %v3597, %v3598
  %v3600 = vrot.slane %v3325, 5
  %v3601 = vrot.slane %v3600, 4
  %v3602 = vrot.slane %v3326, 5
  %v3603 = vsel %vm3459, %v3601, %v3602
  %v3604 = vrot.slane %v3602, 4
  %v3605 = vrot.slane %v3327, 5
  %v3606 = vsel %vm3459, %v3604, %v3605
  %v3607 = vrot.slane %v3328, 5
  %v3608 = vrot.slane %v3607, 4
  %v3609 = vrot.slane %v3329, 5
  %v3610 = vsel %vm3459, %v3608, %v3609
  %v3611 = vrot.slane %v3609, 4
  %v3612 = vrot.slane %v3330, 5
  %v3613 = vsel %vm3459, %v3611, %v3612
  %v3614 = vrot.slane %v3331, 5
  %v3615 = vrot.slane %v3614, 4
  %v3616 = vrot.slane %v3332, 5
  %v3617 = vsel %vm3459, %v3615, %v3616
  %v3618 = vrot.slane %v3616, 4
  %v3619 = vrot.slane %v3333, 5
  %v3620 = vsel %vm3459, %v3618, %v3619
  %v3621 = vrot.slane %v3334, 5
  %v3622 = vrot.slane %v3621, 4
  %v3623 = vrot.slane %v3335, 5
  %v3624 = vsel %vm3459, %v3622, %v3623
  %v3625 = vrot.slane %v3623, 4
  %v3626 = vrot.slane %v3336, 5
  %v3627 = vsel %vm3459, %v3625, %v3626
  %v3628 = vrot.slane %v3337, 5
  %v3629 = vrot.slane %v3628, 4
  %v3630 = vrot.slane %v3338, 5
  %v3631 = vsel %vm3459, %v3629, %v3630
  %v3632 = vrot.slane %v3630, 4
  %v3633 = vrot.slane %v3339, 5
  %v3634 = vsel %vm3459, %v3632, %v3633
  %v3635 = vrot.slane %v3340, 5
  %v3636 = vrot.slane %v3635, 4
  %v3637 = vrot.slane %v3341, 5
  %v3638 = vsel %vm3459, %v3636, %v3637
  %v3639 = vrot.slane %v3637, 4
  %v3640 = vrot.slane %v3342, 5
  %v3641 = vsel %vm3459, %v3639, %v3640
  %v3642 = vrot.slane %v3343, 5
  %v3643 = vrot.slane %v3642, 4
  %v3644 = vrot.slane %v3344, 5
  %v3645 = vsel %vm3459, %v3643, %v3644
  %v3646 = vrot.slane %v3644, 4
  %v3647 = vrot.slane %v3345, 5
  %v3648 = vsel %vm3459, %v3646, %v3647
  %v3649 = vrot.slane %v3346, 5
  %v3650 = vrot.slane %v3649, 4
  %v3651 = vrot.slane %v3347, 5
  %v3652 = vsel %vm3459, %v3650, %v3651
  %v3653 = vrot.slane %v3651, 4
  %v3654 = vrot.slane %v3348, 5
  %v3655 = vsel %vm3459, %v3653, %v3654
  %v3656 = vrot.slane %v3349, 5
  %v3657 = vrot.slane %v3656, 4
  %v3658 = vrot.slane %v3350, 5
  %v3659 = vsel %vm3459, %v3657, %v3658
  %v3660 = vrot.slane %v3658, 4
  %v3661 = vrot.slane %v3351, 5
  %v3662 = vsel %vm3459, %v3660, %v3661
  %v3663 = vrot.slane %v3352, 5
  %v3664 = vrot.slane %v3663, 4
  %v3665 = vrot.slane %v3353, 5
  %v3666 = vsel %vm3459, %v3664, %v3665
  %v3667 = vrot.slane %v3665, 4
  %v3668 = vrot.slane %v3354, 5
  %v3669 = vsel %vm3459, %v3667, %v3668
  %v3670 = vrot.slane %v3355, 5
  %v3671 = vrot.slane %v3670, 4
  %v3672 = vrot.slane %v3356, 5
  %v3673 = vsel %vm3459, %v3671, %v3672
  %v3674 = vrot.slane %v3672, 4
  %v3675 = vrot.slane %v3357, 5
  %v3676 = vsel %vm3459, %v3674, %v3675
  %v3677 = vrot.slane %v3358, 5
  %v3678 = vrot.slane %v3677, 4
  %v3679 = vrot.slane %v3359, 5
  %v3680 = vsel %vm3459, %v3678, %v3679
  %v3681 = vrot.slane %v3679, 4
  %v3682 = vrot.slane %v3360, 5
  %v3683 = vsel %vm3459, %v3681, %v3682
  %3684 = vrot.lane.b32.xlu0 %v3463, 8
  %v3685 = vpop.permute.xlu0 %3684
  %3686 = vrot.lane.b32.xlu0 %v3466, 8
  %v3687 = vpop.permute.xlu0 %3686
  %3688 = vrot.lane.b32.xlu0 %v3470, 8
  %v3689 = vpop.permute.xlu0 %3688
  %3690 = vrot.lane.b32.xlu0 %v3473, 8
  %v3691 = vpop.permute.xlu0 %3690
  %3692 = vrot.lane.b32.xlu0 %v3477, 8
  %v3693 = vpop.permute.xlu0 %3692
  %3694 = vrot.lane.b32.xlu0 %v3480, 8
  %v3695 = vpop.permute.xlu0 %3694
  %3696 = vrot.lane.b32.xlu0 %v3484, 8
  %v3697 = vpop.permute.xlu0 %3696
  %3698 = vrot.lane.b32.xlu0 %v3487, 8
  %v3699 = vpop.permute.xlu0 %3698
  %3700 = vrot.lane.b32.xlu0 %v3491, 8
  %v3701 = vpop.permute.xlu0 %3700
  %3702 = vrot.lane.b32.xlu0 %v3494, 8
  %v3703 = vpop.permute.xlu0 %3702
  %3704 = vrot.lane.b32.xlu0 %v3498, 8
  %v3705 = vpop.permute.xlu0 %3704
  %3706 = vrot.lane.b32.xlu0 %v3501, 8
  %v3707 = vpop.permute.xlu0 %3706
  %3708 = vrot.lane.b32.xlu0 %v3505, 8
  %v3709 = vpop.permute.xlu0 %3708
  %3710 = vrot.lane.b32.xlu0 %v3508, 8
  %v3711 = vpop.permute.xlu0 %3710
  %3712 = vrot.lane.b32.xlu0 %v3512, 8
  %v3713 = vpop.permute.xlu0 %3712
  %3714 = vrot.lane.b32.xlu0 %v3515, 8
  %v3715 = vpop.permute.xlu0 %3714
  %3716 = vrot.lane.b32.xlu0 %v3519, 8
  %v3717 = vpop.permute.xlu0 %3716
  %3718 = vrot.lane.b32.xlu0 %v3522, 8
  %v3719 = vpop.permute.xlu0 %3718
  %3720 = vrot.lane.b32.xlu0 %v3526, 8
  %v3721 = vpop.permute.xlu0 %3720
  %3722 = vrot.lane.b32.xlu0 %v3529, 8
  %v3723 = vpop.permute.xlu0 %3722
  %3724 = vrot.lane.b32.xlu0 %v3533, 8
  %v3725 = vpop.permute.xlu0 %3724
  %3726 = vrot.lane.b32.xlu0 %v3536, 8
  %v3727 = vpop.permute.xlu0 %3726
  %3728 = vrot.lane.b32.xlu0 %v3540, 8
  %v3729 = vpop.permute.xlu0 %3728
  %3730 = vrot.lane.b32.xlu0 %v3543, 8
  %v3731 = vpop.permute.xlu0 %3730
  %3732 = vrot.lane.b32.xlu0 %v3547, 8
  %v3733 = vpop.permute.xlu0 %3732
  %3734 = vrot.lane.b32.xlu0 %v3550, 8
  %v3735 = vpop.permute.xlu0 %3734
  %3736 = vrot.lane.b32.xlu0 %v3554, 8
  %v3737 = vpop.permute.xlu0 %3736
  %3738 = vrot.lane.b32.xlu0 %v3557, 8
  %v3739 = vpop.permute.xlu0 %3738
  %3740 = vrot.lane.b32.xlu0 %v3561, 8
  %v3741 = vpop.permute.xlu0 %3740
  %3742 = vrot.lane.b32.xlu0 %v3564, 8
  %v3743 = vpop.permute.xlu0 %3742
  %3744 = vrot.lane.b32.xlu0 %v3568, 8
  %v3745 = vpop.permute.xlu0 %3744
  %3746 = vrot.lane.b32.xlu0 %v3571, 8
  %v3747 = vpop.permute.xlu0 %3746
  %3748 = vrot.lane.b32.xlu0 %v3575, 8
  %v3749 = vpop.permute.xlu0 %3748
  %3750 = vrot.lane.b32.xlu0 %v3578, 8
  %v3751 = vpop.permute.xlu0 %3750
  %3752 = vrot.lane.b32.xlu0 %v3582, 8
  %v3753 = vpop.permute.xlu0 %3752
  %3754 = vrot.lane.b32.xlu0 %v3585, 8
  %v3755 = vpop.permute.xlu0 %3754
  %3756 = vrot.lane.b32.xlu0 %v3589, 8
  %v3757 = vpop.permute.xlu0 %3756
  %3758 = vrot.lane.b32.xlu0 %v3592, 8
  %v3759 = vpop.permute.xlu0 %3758
  %3760 = vrot.lane.b32.xlu0 %v3596, 8
  %v3761 = vpop.permute.xlu0 %3760
  %3762 = vrot.lane.b32.xlu0 %v3599, 8
  %v3763 = vpop.permute.xlu0 %3762
  %3764 = vrot.lane.b32.xlu0 %v3603, 8
  %v3765 = vpop.permute.xlu0 %3764
  %3766 = vrot.lane.b32.xlu0 %v3606, 8
  %v3767 = vpop.permute.xlu0 %3766
  %3768 = vrot.lane.b32.xlu0 %v3610, 8
  %v3769 = vpop.permute.xlu0 %3768
  %3770 = vrot.lane.b32.xlu0 %v3613, 8
  %v3771 = vpop.permute.xlu0 %3770
  %3772 = vrot.lane.b32.xlu0 %v3617, 8
  %v3773 = vpop.permute.xlu0 %3772
  %3774 = vrot.lane.b32.xlu0 %v3620, 8
  %v3775 = vpop.permute.xlu0 %3774
  %3776 = vrot.lane.b32.xlu0 %v3624, 8
  %v3777 = vpop.permute.xlu0 %3776
  %3778 = vrot.lane.b32.xlu0 %v3627, 8
  %v3779 = vpop.permute.xlu0 %3778
  %3780 = vrot.lane.b32.xlu0 %v3631, 8
  %v3781 = vpop.permute.xlu0 %3780
  %3782 = vrot.lane.b32.xlu0 %v3634, 8
  %v3783 = vpop.permute.xlu0 %3782
  %3784 = vrot.lane.b32.xlu0 %v3638, 8
  %v3785 = vpop.permute.xlu0 %3784
  %3786 = vrot.lane.b32.xlu0 %v3641, 8
  %v3787 = vpop.permute.xlu0 %3786
  %3788 = vrot.lane.b32.xlu0 %v3645, 8
  %v3789 = vpop.permute.xlu0 %3788
  %3790 = vrot.lane.b32.xlu0 %v3648, 8
  %v3791 = vpop.permute.xlu0 %3790
  %3792 = vrot.lane.b32.xlu0 %v3652, 8
  %v3793 = vpop.permute.xlu0 %3792
  %3794 = vrot.lane.b32.xlu0 %v3655, 8
  %v3795 = vpop.permute.xlu0 %3794
  %3796 = vrot.lane.b32.xlu0 %v3659, 8
  %v3797 = vpop.permute.xlu0 %3796
  %3798 = vrot.lane.b32.xlu0 %v3662, 8
  %v3799 = vpop.permute.xlu0 %3798
  %3800 = vrot.lane.b32.xlu0 %v3666, 8
  %v3801 = vpop.permute.xlu0 %3800
  %3802 = vrot.lane.b32.xlu0 %v3669, 8
  %v3803 = vpop.permute.xlu0 %3802
  %3804 = vrot.lane.b32.xlu0 %v3673, 8
  %v3805 = vpop.permute.xlu0 %3804
  %3806 = vrot.lane.b32.xlu0 %v3676, 8
  %v3807 = vpop.permute.xlu0 %3806
  %3808 = vrot.lane.b32.xlu0 %v3680, 8
  %v3809 = vpop.permute.xlu0 %3808
  %3810 = vrot.lane.b32.xlu0 %v3683, 8
  %v3811 = vpop.permute.xlu0 %3810
  %vm3876 = vcmask 93248
  %3877 = vst.msk [vmem:[#allocation3] sm:$0xf] %vm3876, %v3685
  %3878 = vst.msk [vmem:[#allocation3 + $0x4] sm:$0xf] %vm3876, %v3687
  %3879 = vst.msk [vmem:[#allocation3 + $0x8] sm:$0xf] %vm3876, %v3689
  %3880 = vst.msk [vmem:[#allocation3 + $0xc] sm:$0xf] %vm3876, %v3691
  %3881 = vst.msk [vmem:[#allocation3 + $0x10] sm:$0xf] %vm3876, %v3693
  %3882 = vst.msk [vmem:[#allocation3 + $0x14] sm:$0xf] %vm3876, %v3695
  %3883 = vst.msk [vmem:[#allocation3 + $0x18] sm:$0xf] %vm3876, %v3697
  %3884 = vst.msk [vmem:[#allocation3 + $0x1c] sm:$0xf] %vm3876, %v3699
  %3885 = vst.msk [vmem:[#allocation3 + $0x20] sm:$0xf] %vm3876, %v3701
  %3886 = vst.msk [vmem:[#allocation3 + $0x24] sm:$0xf] %vm3876, %v3703
  %3887 = vst.msk [vmem:[#allocation3 + $0x28] sm:$0xf] %vm3876, %v3705
  %3888 = vst.msk [vmem:[#allocation3 + $0x2c] sm:$0xf] %vm3876, %v3707
  %3889 = vst.msk [vmem:[#allocation3 + $0x30] sm:$0xf] %vm3876, %v3709
  %3890 = vst.msk [vmem:[#allocation3 + $0x34] sm:$0xf] %vm3876, %v3711
  %3891 = vst.msk [vmem:[#allocation3 + $0x38] sm:$0xf] %vm3876, %v3713
  %3892 = vst.msk [vmem:[#allocation3 + $0x3c] sm:$0xf] %vm3876, %v3715
  %3893 = vst.msk [vmem:[#allocation3 + $0x40] sm:$0xf] %vm3876, %v3717
  %3894 = vst.msk [vmem:[#allocation3 + $0x44] sm:$0xf] %vm3876, %v3719
  %3895 = vst.msk [vmem:[#allocation3 + $0x48] sm:$0xf] %vm3876, %v3721
  %3896 = vst.msk [vmem:[#allocation3 + $0x4c] sm:$0xf] %vm3876, %v3723
  %3897 = vst.msk [vmem:[#allocation3 + $0x50] sm:$0xf] %vm3876, %v3725
  %3898 = vst.msk [vmem:[#allocation3 + $0x54] sm:$0xf] %vm3876, %v3727
  %3899 = vst.msk [vmem:[#allocation3 + $0x58] sm:$0xf] %vm3876, %v3729
  %3900 = vst.msk [vmem:[#allocation3 + $0x5c] sm:$0xf] %vm3876, %v3731
  %3901 = vst.msk [vmem:[#allocation3 + $0x60] sm:$0xf] %vm3876, %v3733
  %3902 = vst.msk [vmem:[#allocation3 + $0x64] sm:$0xf] %vm3876, %v3735
  %3903 = vst.msk [vmem:[#allocation3 + $0x68] sm:$0xf] %vm3876, %v3737
  %3904 = vst.msk [vmem:[#allocation3 + $0x6c] sm:$0xf] %vm3876, %v3739
  %3905 = vst.msk [vmem:[#allocation3 + $0x70] sm:$0xf] %vm3876, %v3741
  %3906 = vst.msk [vmem:[#allocation3 + $0x74] sm:$0xf] %vm3876, %v3743
  %3907 = vst.msk [vmem:[#allocation3 + $0x78] sm:$0xf] %vm3876, %v3745
  %3908 = vst.msk [vmem:[#allocation3 + $0x7c] sm:$0xf] %vm3876, %v3747
  %3909 = vst.msk [vmem:[#allocation3 + $0x80] sm:$0xf] %vm3876, %v3749
  %3910 = vst.msk [vmem:[#allocation3 + $0x84] sm:$0xf] %vm3876, %v3751
  %3911 = vst.msk [vmem:[#allocation3 + $0x88] sm:$0xf] %vm3876, %v3753
  %3912 = vst.msk [vmem:[#allocation3 + $0x8c] sm:$0xf] %vm3876, %v3755
  %3913 = vst.msk [vmem:[#allocation3 + $0x90] sm:$0xf] %vm3876, %v3757
  %3914 = vst.msk [vmem:[#allocation3 + $0x94] sm:$0xf] %vm3876, %v3759
  %3915 = vst.msk [vmem:[#allocation3 + $0x98] sm:$0xf] %vm3876, %v3761
  %3916 = vst.msk [vmem:[#allocation3 + $0x9c] sm:$0xf] %vm3876, %v3763
  %3917 = vst.msk [vmem:[#allocation3 + $0xa0] sm:$0xf] %vm3876, %v3765
  %3918 = vst.msk [vmem:[#allocation3 + $0xa4] sm:$0xf] %vm3876, %v3767
  %3919 = vst.msk [vmem:[#allocation3 + $0xa8] sm:$0xf] %vm3876, %v3769
  %3920 = vst.msk [vmem:[#allocation3 + $0xac] sm:$0xf] %vm3876, %v3771
  %3921 = vst.msk [vmem:[#allocation3 + $0xb0] sm:$0xf] %vm3876, %v3773
  %3922 = vst.msk [vmem:[#allocation3 + $0xb4] sm:$0xf] %vm3876, %v3775
  %3923 = vst.msk [vmem:[#allocation3 + $0xb8] sm:$0xf] %vm3876, %v3777
  %3924 = vst.msk [vmem:[#allocation3 + $0xbc] sm:$0xf] %vm3876, %v3779
  %3925 = vst.msk [vmem:[#allocation3 + $0xc0] sm:$0xf] %vm3876, %v3781
  %3926 = vst.msk [vmem:[#allocation3 + $0xc4] sm:$0xf] %vm3876, %v3783
  %3927 = vst.msk [vmem:[#allocation3 + $0xc8] sm:$0xf] %vm3876, %v3785
  %3928 = vst.msk [vmem:[#allocation3 + $0xcc] sm:$0xf] %vm3876, %v3787
  %3929 = vst.msk [vmem:[#allocation3 + $0xd0] sm:$0xf] %vm3876, %v3789
  %3930 = vst.msk [vmem:[#allocation3 + $0xd4] sm:$0xf] %vm3876, %v3791
  %3931 = vst.msk [vmem:[#allocation3 + $0xd8] sm:$0xf] %vm3876, %v3793
  %3932 = vst.msk [vmem:[#allocation3 + $0xdc] sm:$0xf] %vm3876, %v3795
  %3933 = vst.msk [vmem:[#allocation3 + $0xe0] sm:$0xf] %vm3876, %v3797
  %3934 = vst.msk [vmem:[#allocation3 + $0xe4] sm:$0xf] %vm3876, %v3799
  %3935 = vst.msk [vmem:[#allocation3 + $0xe8] sm:$0xf] %vm3876, %v3801
  %3936 = vst.msk [vmem:[#allocation3 + $0xec] sm:$0xf] %vm3876, %v3803
  %3937 = vst.msk [vmem:[#allocation3 + $0xf0] sm:$0xf] %vm3876, %v3805
  %3938 = vst.msk [vmem:[#allocation3 + $0xf4] sm:$0xf] %vm3876, %v3807
  %3939 = vst.msk [vmem:[#allocation3 + $0xf8] sm:$0xf] %vm3876, %v3809
  %3940 = vst.msk [vmem:[#allocation3 + $0xfc] sm:$0xf] %vm3876, %v3811
  %v3941 = vld [vmem:[%s1786] sm:$0xf]
  %v3942 = vld [vmem:[%s1786 + $0x4] sm:$0xf]
  %v3943 = vld [vmem:[%s1786 + $0xc] sm:$0xf]
  %v3944 = vld [vmem:[%s1786 + $0x10] sm:$0xf]
  %v3945 = vld [vmem:[%s1786 + $0x18] sm:$0xf]
  %v3946 = vld [vmem:[%s1786 + $0x1c] sm:$0xf]
  %v3947 = vld [vmem:[%s1786 + $0x24] sm:$0xf]
  %v3948 = vld [vmem:[%s1786 + $0x28] sm:$0xf]
  %v3949 = vld [vmem:[%s1786 + $0x30] sm:$0xf]
  %v3950 = vld [vmem:[%s1786 + $0x34] sm:$0xf]
  %v3951 = vld [vmem:[%s1786 + $0x3c] sm:$0xf]
  %v3952 = vld [vmem:[%s1786 + $0x40] sm:$0xf]
  %v3953 = vld [vmem:[%s1786 + $0x48] sm:$0xf]
  %v3954 = vld [vmem:[%s1786 + $0x4c] sm:$0xf]
  %v3955 = vld [vmem:[%s1786 + $0x54] sm:$0xf]
  %v3956 = vld [vmem:[%s1786 + $0x58] sm:$0xf]
  %v3957 = vld [vmem:[%s1786 + $0x60] sm:$0xf]
  %v3958 = vld [vmem:[%s1786 + $0x64] sm:$0xf]
  %v3959 = vld [vmem:[%s1786 + $0x6c] sm:$0xf]
  %v3960 = vld [vmem:[%s1786 + $0x70] sm:$0xf]
  %v3961 = vld [vmem:[%s1786 + $0x78] sm:$0xf]
  %v3962 = vld [vmem:[%s1786 + $0x7c] sm:$0xf]
  %v3963 = vld [vmem:[%s1786 + $0x84] sm:$0xf]
  %v3964 = vld [vmem:[%s1786 + $0x88] sm:$0xf]
  %v3965 = vld [vmem:[%s1786 + $0x90] sm:$0xf]
  %v3966 = vld [vmem:[%s1786 + $0x94] sm:$0xf]
  %v3967 = vld [vmem:[%s1786 + $0x9c] sm:$0xf]
  %v3968 = vld [vmem:[%s1786 + $0xa0] sm:$0xf]
  %v3969 = vld [vmem:[%s1786 + $0xa8] sm:$0xf]
  %v3970 = vld [vmem:[%s1786 + $0xac] sm:$0xf]
  %v3971 = vld [vmem:[%s1786 + $0xb4] sm:$0xf]
  %v3972 = vld [vmem:[%s1786 + $0xb8] sm:$0xf]
  %v3973 = vld [vmem:[%s1786 + $0xd8] sm:$0xf]
  %v3974 = vld [vmem:[%s1786 + $0xdc] sm:$0xf]
  %v3975 = vld [vmem:[%s1786 + $0xe4] sm:$0xf]
  %v3976 = vld [vmem:[%s1786 + $0xe8] sm:$0xf]
  %v3977 = vld [vmem:[%s1786 + $0xf0] sm:$0xf]
  %v3978 = vld [vmem:[%s1786 + $0xf4] sm:$0xf]
  %v3979 = vld [vmem:[%s1786 + $0xfc] sm:$0xf]
  %v3980 = vld [vmem:[%s1786 + $0x100] sm:$0xf]
  %v3981 = vld [vmem:[%s1786 + $0x108] sm:$0xf]
  %v3982 = vld [vmem:[%s1786 + $0x10c] sm:$0xf]
  %v3983 = vld [vmem:[%s1786 + $0x114] sm:$0xf]
  %v3984 = vld [vmem:[%s1786 + $0x118] sm:$0xf]
  %v3985 = vld [vmem:[%s1786 + $0x120] sm:$0xf]
  %v3986 = vld [vmem:[%s1786 + $0x124] sm:$0xf]
  %v3987 = vld [vmem:[%s1786 + $0x12c] sm:$0xf]
  %v3988 = vld [vmem:[%s1786 + $0x130] sm:$0xf]
  %v3989 = vld [vmem:[%s1786 + $0x138] sm:$0xf]
  %v3990 = vld [vmem:[%s1786 + $0x13c] sm:$0xf]
  %v3991 = vld [vmem:[%s1786 + $0x144] sm:$0xf]
  %v3992 = vld [vmem:[%s1786 + $0x148] sm:$0xf]
  %v3993 = vld [vmem:[%s1786 + $0x150] sm:$0xf]
  %v3994 = vld [vmem:[%s1786 + $0x154] sm:$0xf]
  %v3995 = vld [vmem:[%s1786 + $0x15c] sm:$0xf]
  %v3996 = vld [vmem:[%s1786 + $0x160] sm:$0xf]
  %v3997 = vld [vmem:[%s1786 + $0x168] sm:$0xf]
  %v3998 = vld [vmem:[%s1786 + $0x16c] sm:$0xf]
  %v3999 = vld [vmem:[%s1786 + $0x174] sm:$0xf]
  %v4000 = vld [vmem:[%s1786 + $0x178] sm:$0xf]
  %v4001 = vld [vmem:[%s1786 + $0x180] sm:$0xf]
  %v4002 = vld [vmem:[%s1786 + $0x184] sm:$0xf]
  %v4003 = vld [vmem:[%s1786 + $0x18c] sm:$0xf]
  %v4004 = vld [vmem:[%s1786 + $0x190] sm:$0xf]
  %4069 = vrot.lane.b32.xlu0 %v3941, 12
  %v4070 = vpop.permute.xlu0 %4069
  %4071 = vrot.lane.b32.xlu0 %v3942, 12
  %v4072 = vpop.permute.xlu0 %4071
  %4073 = vrot.lane.b32.xlu0 %v3943, 12
  %v4074 = vpop.permute.xlu0 %4073
  %4075 = vrot.lane.b32.xlu0 %v3944, 12
  %v4076 = vpop.permute.xlu0 %4075
  %4077 = vrot.lane.b32.xlu0 %v3945, 12
  %v4078 = vpop.permute.xlu0 %4077
  %4079 = vrot.lane.b32.xlu0 %v3946, 12
  %v4080 = vpop.permute.xlu0 %4079
  %4081 = vrot.lane.b32.xlu0 %v3947, 12
  %v4082 = vpop.permute.xlu0 %4081
  %4083 = vrot.lane.b32.xlu0 %v3948, 12
  %v4084 = vpop.permute.xlu0 %4083
  %4085 = vrot.lane.b32.xlu0 %v3949, 12
  %v4086 = vpop.permute.xlu0 %4085
  %4087 = vrot.lane.b32.xlu0 %v3950, 12
  %v4088 = vpop.permute.xlu0 %4087
  %4089 = vrot.lane.b32.xlu0 %v3951, 12
  %v4090 = vpop.permute.xlu0 %4089
  %4091 = vrot.lane.b32.xlu0 %v3952, 12
  %v4092 = vpop.permute.xlu0 %4091
  %4093 = vrot.lane.b32.xlu0 %v3953, 12
  %v4094 = vpop.permute.xlu0 %4093
  %4095 = vrot.lane.b32.xlu0 %v3954, 12
  %v4096 = vpop.permute.xlu0 %4095
  %4097 = vrot.lane.b32.xlu0 %v3955, 12
  %v4098 = vpop.permute.xlu0 %4097
  %4099 = vrot.lane.b32.xlu0 %v3956, 12
  %v4100 = vpop.permute.xlu0 %4099
  %4101 = vrot.lane.b32.xlu0 %v3957, 12
  %v4102 = vpop.permute.xlu0 %4101
  %4103 = vrot.lane.b32.xlu0 %v3958, 12
  %v4104 = vpop.permute.xlu0 %4103
  %4105 = vrot.lane.b32.xlu0 %v3959, 12
  %v4106 = vpop.permute.xlu0 %4105
  %4107 = vrot.lane.b32.xlu0 %v3960, 12
  %v4108 = vpop.permute.xlu0 %4107
  %4109 = vrot.lane.b32.xlu0 %v3961, 12
  %v4110 = vpop.permute.xlu0 %4109
  %4111 = vrot.lane.b32.xlu0 %v3962, 12
  %v4112 = vpop.permute.xlu0 %4111
  %4113 = vrot.lane.b32.xlu0 %v3963, 12
  %v4114 = vpop.permute.xlu0 %4113
  %4115 = vrot.lane.b32.xlu0 %v3964, 12
  %v4116 = vpop.permute.xlu0 %4115
  %4117 = vrot.lane.b32.xlu0 %v3965, 12
  %v4118 = vpop.permute.xlu0 %4117
  %4119 = vrot.lane.b32.xlu0 %v3966, 12
  %v4120 = vpop.permute.xlu0 %4119
  %4121 = vrot.lane.b32.xlu0 %v3967, 12
  %v4122 = vpop.permute.xlu0 %4121
  %4123 = vrot.lane.b32.xlu0 %v3968, 12
  %v4124 = vpop.permute.xlu0 %4123
  %4125 = vrot.lane.b32.xlu0 %v3969, 12
  %v4126 = vpop.permute.xlu0 %4125
  %4127 = vrot.lane.b32.xlu0 %v3970, 12
  %v4128 = vpop.permute.xlu0 %4127
  %4129 = vrot.lane.b32.xlu0 %v3971, 12
  %v4130 = vpop.permute.xlu0 %4129
  %4131 = vrot.lane.b32.xlu0 %v3972, 12
  %v4132 = vpop.permute.xlu0 %4131
  %4133 = vrot.lane.b32.xlu0 %v3973, 12
  %v4134 = vpop.permute.xlu0 %4133
  %4135 = vrot.lane.b32.xlu0 %v3974, 12
  %v4136 = vpop.permute.xlu0 %4135
  %4137 = vrot.lane.b32.xlu0 %v3975, 12
  %v4138 = vpop.permute.xlu0 %4137
  %4139 = vrot.lane.b32.xlu0 %v3976, 12
  %v4140 = vpop.permute.xlu0 %4139
  %4141 = vrot.lane.b32.xlu0 %v3977, 12
  %v4142 = vpop.permute.xlu0 %4141
  %4143 = vrot.lane.b32.xlu0 %v3978, 12
  %v4144 = vpop.permute.xlu0 %4143
  %4145 = vrot.lane.b32.xlu0 %v3979, 12
  %v4146 = vpop.permute.xlu0 %4145
  %4147 = vrot.lane.b32.xlu0 %v3980, 12
  %v4148 = vpop.permute.xlu0 %4147
  %4149 = vrot.lane.b32.xlu0 %v3981, 12
  %v4150 = vpop.permute.xlu0 %4149
  %4151 = vrot.lane.b32.xlu0 %v3982, 12
  %v4152 = vpop.permute.xlu0 %4151
  %4153 = vrot.lane.b32.xlu0 %v3983, 12
  %v4154 = vpop.permute.xlu0 %4153
  %4155 = vrot.lane.b32.xlu0 %v3984, 12
  %v4156 = vpop.permute.xlu0 %4155
  %4157 = vrot.lane.b32.xlu0 %v3985, 12
  %v4158 = vpop.permute.xlu0 %4157
  %4159 = vrot.lane.b32.xlu0 %v3986, 12
  %v4160 = vpop.permute.xlu0 %4159
  %4161 = vrot.lane.b32.xlu0 %v3987, 12
  %v4162 = vpop.permute.xlu0 %4161
  %4163 = vrot.lane.b32.xlu0 %v3988, 12
  %v4164 = vpop.permute.xlu0 %4163
  %4165 = vrot.lane.b32.xlu0 %v3989, 12
  %v4166 = vpop.permute.xlu0 %4165
  %4167 = vrot.lane.b32.xlu0 %v3990, 12
  %v4168 = vpop.permute.xlu0 %4167
  %4169 = vrot.lane.b32.xlu0 %v3991, 12
  %v4170 = vpop.permute.xlu0 %4169
  %4171 = vrot.lane.b32.xlu0 %v3992, 12
  %v4172 = vpop.permute.xlu0 %4171
  %4173 = vrot.lane.b32.xlu0 %v3993, 12
  %v4174 = vpop.permute.xlu0 %4173
  %4175 = vrot.lane.b32.xlu0 %v3994, 12
  %v4176 = vpop.permute.xlu0 %4175
  %4177 = vrot.lane.b32.xlu0 %v3995, 12
  %v4178 = vpop.permute.xlu0 %4177
  %4179 = vrot.lane.b32.xlu0 %v3996, 12
  %v4180 = vpop.permute.xlu0 %4179
  %4181 = vrot.lane.b32.xlu0 %v3997, 12
  %v4182 = vpop.permute.xlu0 %4181
  %4183 = vrot.lane.b32.xlu0 %v3998, 12
  %v4184 = vpop.permute.xlu0 %4183
  %4185 = vrot.lane.b32.xlu0 %v3999, 12
  %v4186 = vpop.permute.xlu0 %4185
  %4187 = vrot.lane.b32.xlu0 %v4000, 12
  %v4188 = vpop.permute.xlu0 %4187
  %4189 = vrot.lane.b32.xlu0 %v4001, 12
  %v4190 = vpop.permute.xlu0 %4189
  %4191 = vrot.lane.b32.xlu0 %v4002, 12
  %v4192 = vpop.permute.xlu0 %4191
  %4193 = vrot.lane.b32.xlu0 %v4003, 12
  %v4194 = vpop.permute.xlu0 %4193
  %4195 = vrot.lane.b32.xlu0 %v4004, 12
  %v4196 = vpop.permute.xlu0 %4195
  %vm4261 = vcmask 126048
  %4262 = vst.msk [vmem:[#allocation3] sm:$0xf] %vm4261, %v4070
  %4263 = vst.msk [vmem:[#allocation3 + $0x4] sm:$0xf] %vm4261, %v4072
  %4264 = vst.msk [vmem:[#allocation3 + $0x8] sm:$0xf] %vm4261, %v4074
  %4265 = vst.msk [vmem:[#allocation3 + $0xc] sm:$0xf] %vm4261, %v4076
  %4266 = vst.msk [vmem:[#allocation3 + $0x10] sm:$0xf] %vm4261, %v4078
  %4267 = vst.msk [vmem:[#allocation3 + $0x14] sm:$0xf] %vm4261, %v4080
  %4268 = vst.msk [vmem:[#allocation3 + $0x18] sm:$0xf] %vm4261, %v4082
  %4269 = vst.msk [vmem:[#allocation3 + $0x1c] sm:$0xf] %vm4261, %v4084
  %4270 = vst.msk [vmem:[#allocation3 + $0x20] sm:$0xf] %vm4261, %v4086
  %4271 = vst.msk [vmem:[#allocation3 + $0x24] sm:$0xf] %vm4261, %v4088
  %4272 = vst.msk [vmem:[#allocation3 + $0x28] sm:$0xf] %vm4261, %v4090
  %4273 = vst.msk [vmem:[#allocation3 + $0x2c] sm:$0xf] %vm4261, %v4092
  %4274 = vst.msk [vmem:[#allocation3 + $0x30] sm:$0xf] %vm4261, %v4094
  %4275 = vst.msk [vmem:[#allocation3 + $0x34] sm:$0xf] %vm4261, %v4096
  %4276 = vst.msk [vmem:[#allocation3 + $0x38] sm:$0xf] %vm4261, %v4098
  %4277 = vst.msk [vmem:[#allocation3 + $0x3c] sm:$0xf] %vm4261, %v4100
  %4278 = vst.msk [vmem:[#allocation3 + $0x40] sm:$0xf] %vm4261, %v4102
  %4279 = vst.msk [vmem:[#allocation3 + $0x44] sm:$0xf] %vm4261, %v4104
  %4280 = vst.msk [vmem:[#allocation3 + $0x48] sm:$0xf] %vm4261, %v4106
  %4281 = vst.msk [vmem:[#allocation3 + $0x4c] sm:$0xf] %vm4261, %v4108
  %4282 = vst.msk [vmem:[#allocation3 + $0x50] sm:$0xf] %vm4261, %v4110
  %4283 = vst.msk [vmem:[#allocation3 + $0x54] sm:$0xf] %vm4261, %v4112
  %4284 = vst.msk [vmem:[#allocation3 + $0x58] sm:$0xf] %vm4261, %v4114
  %4285 = vst.msk [vmem:[#allocation3 + $0x5c] sm:$0xf] %vm4261, %v4116
  %4286 = vst.msk [vmem:[#allocation3 + $0x60] sm:$0xf] %vm4261, %v4118
  %4287 = vst.msk [vmem:[#allocation3 + $0x64] sm:$0xf] %vm4261, %v4120
  %4288 = vst.msk [vmem:[#allocation3 + $0x68] sm:$0xf] %vm4261, %v4122
  %4289 = vst.msk [vmem:[#allocation3 + $0x6c] sm:$0xf] %vm4261, %v4124
  %4290 = vst.msk [vmem:[#allocation3 + $0x70] sm:$0xf] %vm4261, %v4126
  %4291 = vst.msk [vmem:[#allocation3 + $0x74] sm:$0xf] %vm4261, %v4128
  %4292 = vst.msk [vmem:[#allocation3 + $0x78] sm:$0xf] %vm4261, %v4130
  %4293 = vst.msk [vmem:[#allocation3 + $0x7c] sm:$0xf] %vm4261, %v4132
  %4294 = vst.msk [vmem:[#allocation3 + $0x80] sm:$0xf] %vm4261, %v4134
  %4295 = vst.msk [vmem:[#allocation3 + $0x84] sm:$0xf] %vm4261, %v4136
  %4296 = vst.msk [vmem:[#allocation3 + $0x88] sm:$0xf] %vm4261, %v4138
  %4297 = vst.msk [vmem:[#allocation3 + $0x8c] sm:$0xf] %vm4261, %v4140
  %4298 = vst.msk [vmem:[#allocation3 + $0x90] sm:$0xf] %vm4261, %v4142
  %4299 = vst.msk [vmem:[#allocation3 + $0x94] sm:$0xf] %vm4261, %v4144
  %4300 = vst.msk [vmem:[#allocation3 + $0x98] sm:$0xf] %vm4261, %v4146
  %4301 = vst.msk [vmem:[#allocation3 + $0x9c] sm:$0xf] %vm4261, %v4148
  %4302 = vst.msk [vmem:[#allocation3 + $0xa0] sm:$0xf] %vm4261, %v4150
  %4303 = vst.msk [vmem:[#allocation3 + $0xa4] sm:$0xf] %vm4261, %v4152
  %4304 = vst.msk [vmem:[#allocation3 + $0xa8] sm:$0xf] %vm4261, %v4154
  %4305 = vst.msk [vmem:[#allocation3 + $0xac] sm:$0xf] %vm4261, %v4156
  %4306 = vst.msk [vmem:[#allocation3 + $0xb0] sm:$0xf] %vm4261, %v4158
  %4307 = vst.msk [vmem:[#allocation3 + $0xb4] sm:$0xf] %vm4261, %v4160
  %4308 = vst.msk [vmem:[#allocation3 + $0xb8] sm:$0xf] %vm4261, %v4162
  %4309 = vst.msk [vmem:[#allocation3 + $0xbc] sm:$0xf] %vm4261, %v4164
  %4310 = vst.msk [vmem:[#allocation3 + $0xc0] sm:$0xf] %vm4261, %v4166
  %4311 = vst.msk [vmem:[#allocation3 + $0xc4] sm:$0xf] %vm4261, %v4168
  %4312 = vst.msk [vmem:[#allocation3 + $0xc8] sm:$0xf] %vm4261, %v4170
  %4313 = vst.msk [vmem:[#allocation3 + $0xcc] sm:$0xf] %vm4261, %v4172
  %4314 = vst.msk [vmem:[#allocation3 + $0xd0] sm:$0xf] %vm4261, %v4174
  %4315 = vst.msk [vmem:[#allocation3 + $0xd4] sm:$0xf] %vm4261, %v4176
  %4316 = vst.msk [vmem:[#allocation3 + $0xd8] sm:$0xf] %vm4261, %v4178
  %4317 = vst.msk [vmem:[#allocation3 + $0xdc] sm:$0xf] %vm4261, %v4180
  %4318 = vst.msk [vmem:[#allocation3 + $0xe0] sm:$0xf] %vm4261, %v4182
  %4319 = vst.msk [vmem:[#allocation3 + $0xe4] sm:$0xf] %vm4261, %v4184
  %4320 = vst.msk [vmem:[#allocation3 + $0xe8] sm:$0xf] %vm4261, %v4186
  %4321 = vst.msk [vmem:[#allocation3 + $0xec] sm:$0xf] %vm4261, %v4188
  %4322 = vst.msk [vmem:[#allocation3 + $0xf0] sm:$0xf] %vm4261, %v4190
  %4323 = vst.msk [vmem:[#allocation3 + $0xf4] sm:$0xf] %vm4261, %v4192
  %4324 = vst.msk [vmem:[#allocation3 + $0xf8] sm:$0xf] %vm4261, %v4194
  %4325 = vst.msk [vmem:[#allocation3 + $0xfc] sm:$0xf] %vm4261, %v4196
  %v4326 = vld [vmem:[%s1786] sm:$0xf]
  %v4327 = vld [vmem:[%s1786 + $0x4] sm:$0xf]
  %v4328 = vld [vmem:[%s1786 + $0x8] sm:$0x1]
  %v4329 = vld [vmem:[%s1786 + $0xc] sm:$0xf]
  %v4330 = vld [vmem:[%s1786 + $0x10] sm:$0xf]
  %v4331 = vld [vmem:[%s1786 + $0x14] sm:$0x1]
  %v4332 = vld [vmem:[%s1786 + $0x18] sm:$0xf]
  %v4333 = vld [vmem:[%s1786 + $0x1c] sm:$0xf]
  %v4334 = vld [vmem:[%s1786 + $0x20] sm:$0x1]
  %v4335 = vld [vmem:[%s1786 + $0x24] sm:$0xf]
  %v4336 = vld [vmem:[%s1786 + $0x28] sm:$0xf]
  %v4337 = vld [vmem:[%s1786 + $0x2c] sm:$0x1]
  %v4338 = vld [vmem:[%s1786 + $0x30] sm:$0xf]
  %v4339 = vld [vmem:[%s1786 + $0x34] sm:$0xf]
  %v4340 = vld [vmem:[%s1786 + $0x38] sm:$0x1]
  %v4341 = vld [vmem:[%s1786 + $0x3c] sm:$0xf]
  %v4342 = vld [vmem:[%s1786 + $0x40] sm:$0xf]
  %v4343 = vld [vmem:[%s1786 + $0x44] sm:$0x1]
  %v4344 = vld [vmem:[%s1786 + $0x48] sm:$0xf]
  %v4345 = vld [vmem:[%s1786 + $0x4c] sm:$0xf]
  %v4346 = vld [vmem:[%s1786 + $0x50] sm:$0x1]
  %v4347 = vld [vmem:[%s1786 + $0x54] sm:$0xf]
  %v4348 = vld [vmem:[%s1786 + $0x58] sm:$0xf]
  %v4349 = vld [vmem:[%s1786 + $0x5c] sm:$0x1]
  %v4350 = vld [vmem:[%s1786 + $0x60] sm:$0xf]
  %v4351 = vld [vmem:[%s1786 + $0x64] sm:$0xf]
  %v4352 = vld [vmem:[%s1786 + $0x68] sm:$0x1]
  %v4353 = vld [vmem:[%s1786 + $0x6c] sm:$0xf]
  %v4354 = vld [vmem:[%s1786 + $0x70] sm:$0xf]
  %v4355 = vld [vmem:[%s1786 + $0x74] sm:$0x1]
  %v4356 = vld [vmem:[%s1786 + $0x78] sm:$0xf]
  %v4357 = vld [vmem:[%s1786 + $0x7c] sm:$0xf]
  %v4358 = vld [vmem:[%s1786 + $0x80] sm:$0x1]
  %v4359 = vld [vmem:[%s1786 + $0x84] sm:$0xf]
  %v4360 = vld [vmem:[%s1786 + $0x88] sm:$0xf]
  %v4361 = vld [vmem:[%s1786 + $0x8c] sm:$0x1]
  %v4362 = vld [vmem:[%s1786 + $0x90] sm:$0xf]
  %v4363 = vld [vmem:[%s1786 + $0x94] sm:$0xf]
  %v4364 = vld [vmem:[%s1786 + $0x98] sm:$0x1]
  %v4365 = vld [vmem:[%s1786 + $0x9c] sm:$0xf]
  %v4366 = vld [vmem:[%s1786 + $0xa0] sm:$0xf]
  %v4367 = vld [vmem:[%s1786 + $0xa4] sm:$0x1]
  %v4368 = vld [vmem:[%s1786 + $0xa8] sm:$0xf]
  %v4369 = vld [vmem:[%s1786 + $0xac] sm:$0xf]
  %v4370 = vld [vmem:[%s1786 + $0xb0] sm:$0x1]
  %v4371 = vld [vmem:[%s1786 + $0xb4] sm:$0xf]
  %v4372 = vld [vmem:[%s1786 + $0xb8] sm:$0xf]
  %v4373 = vld [vmem:[%s1786 + $0xbc] sm:$0x1]
  %v4374 = vld [vmem:[%s1786 + $0xd8] sm:$0xf]
  %v4375 = vld [vmem:[%s1786 + $0xdc] sm:$0xf]
  %v4376 = vld [vmem:[%s1786 + $0xe0] sm:$0x1]
  %v4377 = vld [vmem:[%s1786 + $0xe4] sm:$0xf]
  %v4378 = vld [vmem:[%s1786 + $0xe8] sm:$0xf]
  %v4379 = vld [vmem:[%s1786 + $0xec] sm:$0x1]
  %v4380 = vld [vmem:[%s1786 + $0xf0] sm:$0xf]
  %v4381 = vld [vmem:[%s1786 + $0xf4] sm:$0xf]
  %v4382 = vld [vmem:[%s1786 + $0xf8] sm:$0x1]
  %v4383 = vld [vmem:[%s1786 + $0xfc] sm:$0xf]
  %v4384 = vld [vmem:[%s1786 + $0x100] sm:$0xf]
  %v4385 = vld [vmem:[%s1786 + $0x104] sm:$0x1]
  %v4386 = vld [vmem:[%s1786 + $0x108] sm:$0xf]
  %v4387 = vld [vmem:[%s1786 + $0x10c] sm:$0xf]
  %v4388 = vld [vmem:[%s1786 + $0x110] sm:$0x1]
  %v4389 = vld [vmem:[%s1786 + $0x114] sm:$0xf]
  %v4390 = vld [vmem:[%s1786 + $0x118] sm:$0xf]
  %v4391 = vld [vmem:[%s1786 + $0x11c] sm:$0x1]
  %v4392 = vld [vmem:[%s1786 + $0x120] sm:$0xf]
  %v4393 = vld [vmem:[%s1786 + $0x124] sm:$0xf]
  %v4394 = vld [vmem:[%s1786 + $0x128] sm:$0x1]
  %v4395 = vld [vmem:[%s1786 + $0x12c] sm:$0xf]
  %v4396 = vld [vmem:[%s1786 + $0x130] sm:$0xf]
  %v4397 = vld [vmem:[%s1786 + $0x134] sm:$0x1]
  %v4398 = vld [vmem:[%s1786 + $0x138] sm:$0xf]
  %v4399 = vld [vmem:[%s1786 + $0x13c] sm:$0xf]
  %v4400 = vld [vmem:[%s1786 + $0x140] sm:$0x1]
  %v4401 = vld [vmem:[%s1786 + $0x144] sm:$0xf]
  %v4402 = vld [vmem:[%s1786 + $0x148] sm:$0xf]
  %v4403 = vld [vmem:[%s1786 + $0x14c] sm:$0x1]
  %v4404 = vld [vmem:[%s1786 + $0x150] sm:$0xf]
  %v4405 = vld [vmem:[%s1786 + $0x154] sm:$0xf]
  %v4406 = vld [vmem:[%s1786 + $0x158] sm:$0x1]
  %v4407 = vld [vmem:[%s1786 + $0x15c] sm:$0xf]
  %v4408 = vld [vmem:[%s1786 + $0x160] sm:$0xf]
  %v4409 = vld [vmem:[%s1786 + $0x164] sm:$0x1]
  %v4410 = vld [vmem:[%s1786 + $0x168] sm:$0xf]
  %v4411 = vld [vmem:[%s1786 + $0x16c] sm:$0xf]
  %v4412 = vld [vmem:[%s1786 + $0x170] sm:$0x1]
  %v4413 = vld [vmem:[%s1786 + $0x174] sm:$0xf]
  %v4414 = vld [vmem:[%s1786 + $0x178] sm:$0xf]
  %v4415 = vld [vmem:[%s1786 + $0x17c] sm:$0x1]
  %v4416 = vld [vmem:[%s1786 + $0x180] sm:$0xf]
  %v4417 = vld [vmem:[%s1786 + $0x184] sm:$0xf]
  %v4418 = vld [vmem:[%s1786 + $0x188] sm:$0x1]
  %v4419 = vld [vmem:[%s1786 + $0x18c] sm:$0xf]
  %v4420 = vld [vmem:[%s1786 + $0x190] sm:$0xf]
  %v4421 = vld [vmem:[%s1786 + $0x194] sm:$0x1]
  %v4423 = vshrl.u32 %v4326, 16
  %v4425 = vrot.slane %v4423, 4
  %v4426 = vshll.u32 %v4326, 16
  %v4428 = vrot.slane %v4426, 5
  %v4429 = vor.u32 %v4425, %v4428
  %v4430 = vrot.slane %v4429, 4
  %v4432 = vshll.u32 %v4327, 16
  %v4434 = vrot.slane %v4432, 5
  %v4435 = vsel %vm2239, %v4430, %v4434
  %v4436 = vshrl.u32 %v4327, 16
  %v4438 = vrot.slane %v4436, 4
  %v4439 = vor.u32 %v4438, %v4434
  %v4440 = vrot.slane %v4439, 4
  %v4442 = vshll.u32 %v4328, 16
  %v4444 = vrot.slane %v4442, 5
  %v4445 = vsel %vm2239, %v4440, %v4444
  %v4447 = vshrl.u32 %v4329, 16
  %v4449 = vrot.slane %v4447, 4
  %v4450 = vshll.u32 %v4329, 16
  %v4452 = vrot.slane %v4450, 5
  %v4453 = vor.u32 %v4449, %v4452
  %v4454 = vrot.slane %v4453, 4
  %v4456 = vshll.u32 %v4330, 16
  %v4458 = vrot.slane %v4456, 5
  %v4459 = vsel %vm2239, %v4454, %v4458
  %v4460 = vshrl.u32 %v4330, 16
  %v4462 = vrot.slane %v4460, 4
  %v4463 = vor.u32 %v4462, %v4458
  %v4464 = vrot.slane %v4463, 4
  %v4466 = vshll.u32 %v4331, 16
  %v4468 = vrot.slane %v4466, 5
  %v4469 = vsel %vm2239, %v4464, %v4468
  %v4471 = vshrl.u32 %v4332, 16
  %v4473 = vrot.slane %v4471, 4
  %v4474 = vshll.u32 %v4332, 16
  %v4476 = vrot.slane %v4474, 5
  %v4477 = vor.u32 %v4473, %v4476
  %v4478 = vrot.slane %v4477, 4
  %v4480 = vshll.u32 %v4333, 16
  %v4482 = vrot.slane %v4480, 5
  %v4483 = vsel %vm2239, %v4478, %v4482
  %v4484 = vshrl.u32 %v4333, 16
  %v4486 = vrot.slane %v4484, 4
  %v4487 = vor.u32 %v4486, %v4482
  %v4488 = vrot.slane %v4487, 4
  %v4490 = vshll.u32 %v4334, 16
  %v4492 = vrot.slane %v4490, 5
  %v4493 = vsel %vm2239, %v4488, %v4492
  %v4495 = vshrl.u32 %v4335, 16
  %v4497 = vrot.slane %v4495, 4
  %v4498 = vshll.u32 %v4335, 16
  %v4500 = vrot.slane %v4498, 5
  %v4501 = vor.u32 %v4497, %v4500
  %v4502 = vrot.slane %v4501, 4
  %v4504 = vshll.u32 %v4336, 16
  %v4506 = vrot.slane %v4504, 5
  %v4507 = vsel %vm2239, %v4502, %v4506
  %v4508 = vshrl.u32 %v4336, 16
  %v4510 = vrot.slane %v4508, 4
  %v4511 = vor.u32 %v4510, %v4506
  %v4512 = vrot.slane %v4511, 4
  %v4514 = vshll.u32 %v4337, 16
  %v4516 = vrot.slane %v4514, 5
  %v4517 = vsel %vm2239, %v4512, %v4516
  %v4519 = vshrl.u32 %v4338, 16
  %v4521 = vrot.slane %v4519, 4
  %v4522 = vshll.u32 %v4338, 16
  %v4524 = vrot.slane %v4522, 5
  %v4525 = vor.u32 %v4521, %v4524
  %v4526 = vrot.slane %v4525, 4
  %v4528 = vshll.u32 %v4339, 16
  %v4530 = vrot.slane %v4528, 5
  %v4531 = vsel %vm2239, %v4526, %v4530
  %v4532 = vshrl.u32 %v4339, 16
  %v4534 = vrot.slane %v4532, 4
  %v4535 = vor.u32 %v4534, %v4530
  %v4536 = vrot.slane %v4535, 4
  %v4538 = vshll.u32 %v4340, 16
  %v4540 = vrot.slane %v4538, 5
  %v4541 = vsel %vm2239, %v4536, %v4540
  %v4543 = vshrl.u32 %v4341, 16
  %v4545 = vrot.slane %v4543, 4
  %v4546 = vshll.u32 %v4341, 16
  %v4548 = vrot.slane %v4546, 5
  %v4549 = vor.u32 %v4545, %v4548
  %v4550 = vrot.slane %v4549, 4
  %v4552 = vshll.u32 %v4342, 16
  %v4554 = vrot.slane %v4552, 5
  %v4555 = vsel %vm2239, %v4550, %v4554
  %v4556 = vshrl.u32 %v4342, 16
  %v4558 = vrot.slane %v4556, 4
  %v4559 = vor.u32 %v4558, %v4554
  %v4560 = vrot.slane %v4559, 4
  %v4562 = vshll.u32 %v4343, 16
  %v4564 = vrot.slane %v4562, 5
  %v4565 = vsel %vm2239, %v4560, %v4564
  %v4567 = vshrl.u32 %v4344, 16
  %v4569 = vrot.slane %v4567, 4
  %v4570 = vshll.u32 %v4344, 16
  %v4572 = vrot.slane %v4570, 5
  %v4573 = vor.u32 %v4569, %v4572
  %v4574 = vrot.slane %v4573, 4
  %v4576 = vshll.u32 %v4345, 16
  %v4578 = vrot.slane %v4576, 5
  %v4579 = vsel %vm2239, %v4574, %v4578
  %v4580 = vshrl.u32 %v4345, 16
  %v4582 = vrot.slane %v4580, 4
  %v4583 = vor.u32 %v4582, %v4578
  %v4584 = vrot.slane %v4583, 4
  %v4586 = vshll.u32 %v4346, 16
  %v4588 = vrot.slane %v4586, 5
  %v4589 = vsel %vm2239, %v4584, %v4588
  %v4591 = vshrl.u32 %v4347, 16
  %v4593 = vrot.slane %v4591, 4
  %v4594 = vshll.u32 %v4347, 16
  %v4596 = vrot.slane %v4594, 5
  %v4597 = vor.u32 %v4593, %v4596
  %v4598 = vrot.slane %v4597, 4
  %v4600 = vshll.u32 %v4348, 16
  %v4602 = vrot.slane %v4600, 5
  %v4603 = vsel %vm2239, %v4598, %v4602
  %v4604 = vshrl.u32 %v4348, 16
  %v4606 = vrot.slane %v4604, 4
  %v4607 = vor.u32 %v4606, %v4602
  %v4608 = vrot.slane %v4607, 4
  %v4610 = vshll.u32 %v4349, 16
  %v4612 = vrot.slane %v4610, 5
  %v4613 = vsel %vm2239, %v4608, %v4612
  %v4615 = vshrl.u32 %v4350, 16
  %v4617 = vrot.slane %v4615, 4
  %v4618 = vshll.u32 %v4350, 16
  %v4620 = vrot.slane %v4618, 5
  %v4621 = vor.u32 %v4617, %v4620
  %v4622 = vrot.slane %v4621, 4
  %v4624 = vshll.u32 %v4351, 16
  %v4626 = vrot.slane %v4624, 5
  %v4627 = vsel %vm2239, %v4622, %v4626
  %v4628 = vshrl.u32 %v4351, 16
  %v4630 = vrot.slane %v4628, 4
  %v4631 = vor.u32 %v4630, %v4626
  %v4632 = vrot.slane %v4631, 4
  %v4634 = vshll.u32 %v4352, 16
  %v4636 = vrot.slane %v4634, 5
  %v4637 = vsel %vm2239, %v4632, %v4636
  %v4639 = vshrl.u32 %v4353, 16
  %v4641 = vrot.slane %v4639, 4
  %v4642 = vshll.u32 %v4353, 16
  %v4644 = vrot.slane %v4642, 5
  %v4645 = vor.u32 %v4641, %v4644
  %v4646 = vrot.slane %v4645, 4
  %v4648 = vshll.u32 %v4354, 16
  %v4650 = vrot.slane %v4648, 5
  %v4651 = vsel %vm2239, %v4646, %v4650
  %v4652 = vshrl.u32 %v4354, 16
  %v4654 = vrot.slane %v4652, 4
  %v4655 = vor.u32 %v4654, %v4650
  %v4656 = vrot.slane %v4655, 4
  %v4658 = vshll.u32 %v4355, 16
  %v4660 = vrot.slane %v4658, 5
  %v4661 = vsel %vm2239, %v4656, %v4660
  %v4663 = vshrl.u32 %v4356, 16
  %v4665 = vrot.slane %v4663, 4
  %v4666 = vshll.u32 %v4356, 16
  %v4668 = vrot.slane %v4666, 5
  %v4669 = vor.u32 %v4665, %v4668
  %v4670 = vrot.slane %v4669, 4
  %v4672 = vshll.u32 %v4357, 16
  %v4674 = vrot.slane %v4672, 5
  %v4675 = vsel %vm2239, %v4670, %v4674
  %v4676 = vshrl.u32 %v4357, 16
  %v4678 = vrot.slane %v4676, 4
  %v4679 = vor.u32 %v4678, %v4674
  %v4680 = vrot.slane %v4679, 4
  %v4682 = vshll.u32 %v4358, 16
  %v4684 = vrot.slane %v4682, 5
  %v4685 = vsel %vm2239, %v4680, %v4684
  %v4687 = vshrl.u32 %v4359, 16
  %v4689 = vrot.slane %v4687, 4
  %v4690 = vshll.u32 %v4359, 16
  %v4692 = vrot.slane %v4690, 5
  %v4693 = vor.u32 %v4689, %v4692
  %v4694 = vrot.slane %v4693, 4
  %v4696 = vshll.u32 %v4360, 16
  %v4698 = vrot.slane %v4696, 5
  %v4699 = vsel %vm2239, %v4694, %v4698
  %v4700 = vshrl.u32 %v4360, 16
  %v4702 = vrot.slane %v4700, 4
  %v4703 = vor.u32 %v4702, %v4698
  %v4704 = vrot.slane %v4703, 4
  %v4706 = vshll.u32 %v4361, 16
  %v4708 = vrot.slane %v4706, 5
  %v4709 = vsel %vm2239, %v4704, %v4708
  %v4711 = vshrl.u32 %v4362, 16
  %v4713 = vrot.slane %v4711, 4
  %v4714 = vshll.u32 %v4362, 16
  %v4716 = vrot.slane %v4714, 5
  %v4717 = vor.u32 %v4713, %v4716
  %v4718 = vrot.slane %v4717, 4
  %v4720 = vshll.u32 %v4363, 16
  %v4722 = vrot.slane %v4720, 5
  %v4723 = vsel %vm2239, %v4718, %v4722
  %v4724 = vshrl.u32 %v4363, 16
  %v4726 = vrot.slane %v4724, 4
  %v4727 = vor.u32 %v4726, %v4722
  %v4728 = vrot.slane %v4727, 4
  %v4730 = vshll.u32 %v4364, 16
  %v4732 = vrot.slane %v4730, 5
  %v4733 = vsel %vm2239, %v4728, %v4732
  %v4735 = vshrl.u32 %v4365, 16
  %v4737 = vrot.slane %v4735, 4
  %v4738 = vshll.u32 %v4365, 16
  %v4740 = vrot.slane %v4738, 5
  %v4741 = vor.u32 %v4737, %v4740
  %v4742 = vrot.slane %v4741, 4
  %v4744 = vshll.u32 %v4366, 16
  %v4746 = vrot.slane %v4744, 5
  %v4747 = vsel %vm2239, %v4742, %v4746
  %v4748 = vshrl.u32 %v4366, 16
  %v4750 = vrot.slane %v4748, 4
  %v4751 = vor.u32 %v4750, %v4746
  %v4752 = vrot.slane %v4751, 4
  %v4754 = vshll.u32 %v4367, 16
  %v4756 = vrot.slane %v4754, 5
  %v4757 = vsel %vm2239, %v4752, %v4756
  %v4759 = vshrl.u32 %v4368, 16
  %v4761 = vrot.slane %v4759, 4
  %v4762 = vshll.u32 %v4368, 16
  %v4764 = vrot.slane %v4762, 5
  %v4765 = vor.u32 %v4761, %v4764
  %v4766 = vrot.slane %v4765, 4
  %v4768 = vshll.u32 %v4369, 16
  %v4770 = vrot.slane %v4768, 5
  %v4771 = vsel %vm2239, %v4766, %v4770
  %v4772 = vshrl.u32 %v4369, 16
  %v4774 = vrot.slane %v4772, 4
  %v4775 = vor.u32 %v4774, %v4770
  %v4776 = vrot.slane %v4775, 4
  %v4778 = vshll.u32 %v4370, 16
  %v4780 = vrot.slane %v4778, 5
  %v4781 = vsel %vm2239, %v4776, %v4780
  %v4783 = vshrl.u32 %v4371, 16
  %v4785 = vrot.slane %v4783, 4
  %v4786 = vshll.u32 %v4371, 16
  %v4788 = vrot.slane %v4786, 5
  %v4789 = vor.u32 %v4785, %v4788
  %v4790 = vrot.slane %v4789, 4
  %v4792 = vshll.u32 %v4372, 16
  %v4794 = vrot.slane %v4792, 5
  %v4795 = vsel %vm2239, %v4790, %v4794
  %v4796 = vshrl.u32 %v4372, 16
  %v4798 = vrot.slane %v4796, 4
  %v4799 = vor.u32 %v4798, %v4794
  %v4800 = vrot.slane %v4799, 4
  %v4802 = vshll.u32 %v4373, 16
  %v4804 = vrot.slane %v4802, 5
  %v4805 = vsel %vm2239, %v4800, %v4804
  %v4807 = vshrl.u32 %v4374, 16
  %v4809 = vrot.slane %v4807, 4
  %v4810 = vshll.u32 %v4374, 16
  %v4812 = vrot.slane %v4810, 5
  %v4813 = vor.u32 %v4809, %v4812
  %v4814 = vrot.slane %v4813, 4
  %v4816 = vshll.u32 %v4375, 16
  %v4818 = vrot.slane %v4816, 5
  %v4819 = vsel %vm2239, %v4814, %v4818
  %v4820 = vshrl.u32 %v4375, 16
  %v4822 = vrot.slane %v4820, 4
  %v4823 = vor.u32 %v4822, %v4818
  %v4824 = vrot.slane %v4823, 4
  %v4826 = vshll.u32 %v4376, 16
  %v4828 = vrot.slane %v4826, 5
  %v4829 = vsel %vm2239, %v4824, %v4828
  %v4831 = vshrl.u32 %v4377, 16
  %v4833 = vrot.slane %v4831, 4
  %v4834 = vshll.u32 %v4377, 16
  %v4836 = vrot.slane %v4834, 5
  %v4837 = vor.u32 %v4833, %v4836
  %v4838 = vrot.slane %v4837, 4
  %v4840 = vshll.u32 %v4378, 16
  %v4842 = vrot.slane %v4840, 5
  %v4843 = vsel %vm2239, %v4838, %v4842
  %v4844 = vshrl.u32 %v4378, 16
  %v4846 = vrot.slane %v4844, 4
  %v4847 = vor.u32 %v4846, %v4842
  %v4848 = vrot.slane %v4847, 4
  %v4850 = vshll.u32 %v4379, 16
  %v4852 = vrot.slane %v4850, 5
  %v4853 = vsel %vm2239, %v4848, %v4852
  %v4855 = vshrl.u32 %v4380, 16
  %v4857 = vrot.slane %v4855, 4
  %v4858 = vshll.u32 %v4380, 16
  %v4860 = vrot.slane %v4858, 5
  %v4861 = vor.u32 %v4857, %v4860
  %v4862 = vrot.slane %v4861, 4
  %v4864 = vshll.u32 %v4381, 16
  %v4866 = vrot.slane %v4864, 5
  %v4867 = vsel %vm2239, %v4862, %v4866
  %v4868 = vshrl.u32 %v4381, 16
  %v4870 = vrot.slane %v4868, 4
  %v4871 = vor.u32 %v4870, %v4866
  %v4872 = vrot.slane %v4871, 4
  %v4874 = vshll.u32 %v4382, 16
  %v4876 = vrot.slane %v4874, 5
  %v4877 = vsel %vm2239, %v4872, %v4876
  %v4879 = vshrl.u32 %v4383, 16
  %v4881 = vrot.slane %v4879, 4
  %v4882 = vshll.u32 %v4383, 16
  %v4884 = vrot.slane %v4882, 5
  %v4885 = vor.u32 %v4881, %v4884
  %v4886 = vrot.slane %v4885, 4
  %v4888 = vshll.u32 %v4384, 16
  %v4890 = vrot.slane %v4888, 5
  %v4891 = vsel %vm2239, %v4886, %v4890
  %v4892 = vshrl.u32 %v4384, 16
  %v4894 = vrot.slane %v4892, 4
  %v4895 = vor.u32 %v4894, %v4890
  %v4896 = vrot.slane %v4895, 4
  %v4898 = vshll.u32 %v4385, 16
  %v4900 = vrot.slane %v4898, 5
  %v4901 = vsel %vm2239, %v4896, %v4900
  %v4903 = vshrl.u32 %v4386, 16
  %v4905 = vrot.slane %v4903, 4
  %v4906 = vshll.u32 %v4386, 16
  %v4908 = vrot.slane %v4906, 5
  %v4909 = vor.u32 %v4905, %v4908
  %v4910 = vrot.slane %v4909, 4
  %v4912 = vshll.u32 %v4387, 16
  %v4914 = vrot.slane %v4912, 5
  %v4915 = vsel %vm2239, %v4910, %v4914
  %v4916 = vshrl.u32 %v4387, 16
  %v4918 = vrot.slane %v4916, 4
  %v4919 = vor.u32 %v4918, %v4914
  %v4920 = vrot.slane %v4919, 4
  %v4922 = vshll.u32 %v4388, 16
  %v4924 = vrot.slane %v4922, 5
  %v4925 = vsel %vm2239, %v4920, %v4924
  %v4927 = vshrl.u32 %v4389, 16
  %v4929 = vrot.slane %v4927, 4
  %v4930 = vshll.u32 %v4389, 16
  %v4932 = vrot.slane %v4930, 5
  %v4933 = vor.u32 %v4929, %v4932
  %v4934 = vrot.slane %v4933, 4
  %v4936 = vshll.u32 %v4390, 16
  %v4938 = vrot.slane %v4936, 5
  %v4939 = vsel %vm2239, %v4934, %v4938
  %v4940 = vshrl.u32 %v4390, 16
  %v4942 = vrot.slane %v4940, 4
  %v4943 = vor.u32 %v4942, %v4938
  %v4944 = vrot.slane %v4943, 4
  %v4946 = vshll.u32 %v4391, 16
  %v4948 = vrot.slane %v4946, 5
  %v4949 = vsel %vm2239, %v4944, %v4948
  %v4951 = vshrl.u32 %v4392, 16
  %v4953 = vrot.slane %v4951, 4
  %v4954 = vshll.u32 %v4392, 16
  %v4956 = vrot.slane %v4954, 5
  %v4957 = vor.u32 %v4953, %v4956
  %v4958 = vrot.slane %v4957, 4
  %v4960 = vshll.u32 %v4393, 16
  %v4962 = vrot.slane %v4960, 5
  %v4963 = vsel %vm2239, %v4958, %v4962
  %v4964 = vshrl.u32 %v4393, 16
  %v4966 = vrot.slane %v4964, 4
  %v4967 = vor.u32 %v4966, %v4962
  %v4968 = vrot.slane %v4967, 4
  %v4970 = vshll.u32 %v4394, 16
  %v4972 = vrot.slane %v4970, 5
  %v4973 = vsel %vm2239, %v4968, %v4972
  %v4975 = vshrl.u32 %v4395, 16
  %v4977 = vrot.slane %v4975, 4
  %v4978 = vshll.u32 %v4395, 16
  %v4980 = vrot.slane %v4978, 5
  %v4981 = vor.u32 %v4977, %v4980
  %v4982 = vrot.slane %v4981, 4
  %v4984 = vshll.u32 %v4396, 16
  %v4986 = vrot.slane %v4984, 5
  %v4987 = vsel %vm2239, %v4982, %v4986
  %v4988 = vshrl.u32 %v4396, 16
  %v4990 = vrot.slane %v4988, 4
  %v4991 = vor.u32 %v4990, %v4986
  %v4992 = vrot.slane %v4991, 4
  %v4994 = vshll.u32 %v4397, 16
  %v4996 = vrot.slane %v4994, 5
  %v4997 = vsel %vm2239, %v4992, %v4996
  %v4999 = vshrl.u32 %v4398, 16
  %v5001 = vrot.slane %v4999, 4
  %v5002 = vshll.u32 %v4398, 16
  %v5004 = vrot.slane %v5002, 5
  %v5005 = vor.u32 %v5001, %v5004
  %v5006 = vrot.slane %v5005, 4
  %v5008 = vshll.u32 %v4399, 16
  %v5010 = vrot.slane %v5008, 5
  %v5011 = vsel %vm2239, %v5006, %v5010
  %v5012 = vshrl.u32 %v4399, 16
  %v5014 = vrot.slane %v5012, 4
  %v5015 = vor.u32 %v5014, %v5010
  %v5016 = vrot.slane %v5015, 4
  %v5018 = vshll.u32 %v4400, 16
  %v5020 = vrot.slane %v5018, 5
  %v5021 = vsel %vm2239, %v5016, %v5020
  %v5023 = vshrl.u32 %v4401, 16
  %v5025 = vrot.slane %v5023, 4
  %v5026 = vshll.u32 %v4401, 16
  %v5028 = vrot.slane %v5026, 5
  %v5029 = vor.u32 %v5025, %v5028
  %v5030 = vrot.slane %v5029, 4
  %v5032 = vshll.u32 %v4402, 16
  %v5034 = vrot.slane %v5032, 5
  %v5035 = vsel %vm2239, %v5030, %v5034
  %v5036 = vshrl.u32 %v4402, 16
  %v5038 = vrot.slane %v5036, 4
  %v5039 = vor.u32 %v5038, %v5034
  %v5040 = vrot.slane %v5039, 4
  %v5042 = vshll.u32 %v4403, 16
  %v5044 = vrot.slane %v5042, 5
  %v5045 = vsel %vm2239, %v5040, %v5044
  %v5047 = vshrl.u32 %v4404, 16
  %v5049 = vrot.slane %v5047, 4
  %v5050 = vshll.u32 %v4404, 16
  %v5052 = vrot.slane %v5050, 5
  %v5053 = vor.u32 %v5049, %v5052
  %v5054 = vrot.slane %v5053, 4
  %v5056 = vshll.u32 %v4405, 16
  %v5058 = vrot.slane %v5056, 5
  %v5059 = vsel %vm2239, %v5054, %v5058
  %v5060 = vshrl.u32 %v4405, 16
  %v5062 = vrot.slane %v5060, 4
  %v5063 = vor.u32 %v5062, %v5058
  %v5064 = vrot.slane %v5063, 4
  %v5066 = vshll.u32 %v4406, 16
  %v5068 = vrot.slane %v5066, 5
  %v5069 = vsel %vm2239, %v5064, %v5068
  %v5071 = vshrl.u32 %v4407, 16
  %v5073 = vrot.slane %v5071, 4
  %v5074 = vshll.u32 %v4407, 16
  %v5076 = vrot.slane %v5074, 5
  %v5077 = vor.u32 %v5073, %v5076
  %v5078 = vrot.slane %v5077, 4
  %v5080 = vshll.u32 %v4408, 16
  %v5082 = vrot.slane %v5080, 5
  %v5083 = vsel %vm2239, %v5078, %v5082
  %v5084 = vshrl.u32 %v4408, 16
  %v5086 = vrot.slane %v5084, 4
  %v5087 = vor.u32 %v5086, %v5082
  %v5088 = vrot.slane %v5087, 4
  %v5090 = vshll.u32 %v4409, 16
  %v5092 = vrot.slane %v5090, 5
  %v5093 = vsel %vm2239, %v5088, %v5092
  %v5095 = vshrl.u32 %v4410, 16
  %v5097 = vrot.slane %v5095, 4
  %v5098 = vshll.u32 %v4410, 16
  %v5100 = vrot.slane %v5098, 5
  %v5101 = vor.u32 %v5097, %v5100
  %v5102 = vrot.slane %v5101, 4
  %v5104 = vshll.u32 %v4411, 16
  %v5106 = vrot.slane %v5104, 5
  %v5107 = vsel %vm2239, %v5102, %v5106
  %v5108 = vshrl.u32 %v4411, 16
  %v5110 = vrot.slane %v5108, 4
  %v5111 = vor.u32 %v5110, %v5106
  %v5112 = vrot.slane %v5111, 4
  %v5114 = vshll.u32 %v4412, 16
  %v5116 = vrot.slane %v5114, 5
  %v5117 = vsel %vm2239, %v5112, %v5116
  %v5119 = vshrl.u32 %v4413, 16
  %v5121 = vrot.slane %v5119, 4
  %v5122 = vshll.u32 %v4413, 16
  %v5124 = vrot.slane %v5122, 5
  %v5125 = vor.u32 %v5121, %v5124
  %v5126 = vrot.slane %v5125, 4
  %v5128 = vshll.u32 %v4414, 16
  %v5130 = vrot.slane %v5128, 5
  %v5131 = vsel %vm2239, %v5126, %v5130
  %v5132 = vshrl.u32 %v4414, 16
  %v5134 = vrot.slane %v5132, 4
  %v5135 = vor.u32 %v5134, %v5130
  %v5136 = vrot.slane %v5135, 4
  %v5138 = vshll.u32 %v4415, 16
  %v5140 = vrot.slane %v5138, 5
  %v5141 = vsel %vm2239, %v5136, %v5140
  %v5143 = vshrl.u32 %v4416, 16
  %v5145 = vrot.slane %v5143, 4
  %v5146 = vshll.u32 %v4416, 16
  %v5148 = vrot.slane %v5146, 5
  %v5149 = vor.u32 %v5145, %v5148
  %v5150 = vrot.slane %v5149, 4
  %v5152 = vshll.u32 %v4417, 16
  %v5154 = vrot.slane %v5152, 5
  %v5155 = vsel %vm2239, %v5150, %v5154
  %v5156 = vshrl.u32 %v4417, 16
  %v5158 = vrot.slane %v5156, 4
  %v5159 = vor.u32 %v5158, %v5154
  %v5160 = vrot.slane %v5159, 4
  %v5162 = vshll.u32 %v4418, 16
  %v5164 = vrot.slane %v5162, 5
  %v5165 = vsel %vm2239, %v5160, %v5164
  %v5167 = vshrl.u32 %v4419, 16
  %v5169 = vrot.slane %v5167, 4
  %v5170 = vshll.u32 %v4419, 16
  %v5172 = vrot.slane %v5170, 5
  %v5173 = vor.u32 %v5169, %v5172
  %v5174 = vrot.slane %v5173, 4
  %v5176 = vshll.u32 %v4420, 16
  %v5178 = vrot.slane %v5176, 5
  %v5179 = vsel %vm2239, %v5174, %v5178
  %v5180 = vshrl.u32 %v4420, 16
  %v5182 = vrot.slane %v5180, 4
  %v5183 = vor.u32 %v5182, %v5178
  %v5184 = vrot.slane %v5183, 4
  %v5186 = vshll.u32 %v4421, 16
  %v5188 = vrot.slane %v5186, 5
  %v5189 = vsel %vm2239, %v5184, %v5188
  %5190 = vrot.lane.b32.xlu0 %v4435, 16
  %v5191 = vpop.permute.xlu0 %5190
  %5192 = vrot.lane.b32.xlu0 %v4445, 16
  %v5193 = vpop.permute.xlu0 %5192
  %5194 = vrot.lane.b32.xlu0 %v4459, 16
  %v5195 = vpop.permute.xlu0 %5194
  %5196 = vrot.lane.b32.xlu0 %v4469, 16
  %v5197 = vpop.permute.xlu0 %5196
  %5198 = vrot.lane.b32.xlu0 %v4483, 16
  %v5199 = vpop.permute.xlu0 %5198
  %5200 = vrot.lane.b32.xlu0 %v4493, 16
  %v5201 = vpop.permute.xlu0 %5200
  %5202 = vrot.lane.b32.xlu0 %v4507, 16
  %v5203 = vpop.permute.xlu0 %5202
  %5204 = vrot.lane.b32.xlu0 %v4517, 16
  %v5205 = vpop.permute.xlu0 %5204
  %5206 = vrot.lane.b32.xlu0 %v4531, 16
  %v5207 = vpop.permute.xlu0 %5206
  %5208 = vrot.lane.b32.xlu0 %v4541, 16
  %v5209 = vpop.permute.xlu0 %5208
  %5210 = vrot.lane.b32.xlu0 %v4555, 16
  %v5211 = vpop.permute.xlu0 %5210
  %5212 = vrot.lane.b32.xlu0 %v4565, 16
  %v5213 = vpop.permute.xlu0 %5212
  %5214 = vrot.lane.b32.xlu0 %v4579, 16
  %v5215 = vpop.permute.xlu0 %5214
  %5216 = vrot.lane.b32.xlu0 %v4589, 16
  %v5217 = vpop.permute.xlu0 %5216
  %5218 = vrot.lane.b32.xlu0 %v4603, 16
  %v5219 = vpop.permute.xlu0 %5218
  %5220 = vrot.lane.b32.xlu0 %v4613, 16
  %v5221 = vpop.permute.xlu0 %5220
  %5222 = vrot.lane.b32.xlu0 %v4627, 16
  %v5223 = vpop.permute.xlu0 %5222
  %5224 = vrot.lane.b32.xlu0 %v4637, 16
  %v5225 = vpop.permute.xlu0 %5224
  %5226 = vrot.lane.b32.xlu0 %v4651, 16
  %v5227 = vpop.permute.xlu0 %5226
  %5228 = vrot.lane.b32.xlu0 %v4661, 16
  %v5229 = vpop.permute.xlu0 %5228
  %5230 = vrot.lane.b32.xlu0 %v4675, 16
  %v5231 = vpop.permute.xlu0 %5230
  %5232 = vrot.lane.b32.xlu0 %v4685, 16
  %v5233 = vpop.permute.xlu0 %5232
  %5234 = vrot.lane.b32.xlu0 %v4699, 16
  %v5235 = vpop.permute.xlu0 %5234
  %5236 = vrot.lane.b32.xlu0 %v4709, 16
  %v5237 = vpop.permute.xlu0 %5236
  %5238 = vrot.lane.b32.xlu0 %v4723, 16
  %v5239 = vpop.permute.xlu0 %5238
  %5240 = vrot.lane.b32.xlu0 %v4733, 16
  %v5241 = vpop.permute.xlu0 %5240
  %5242 = vrot.lane.b32.xlu0 %v4747, 16
  %v5243 = vpop.permute.xlu0 %5242
  %5244 = vrot.lane.b32.xlu0 %v4757, 16
  %v5245 = vpop.permute.xlu0 %5244
  %5246 = vrot.lane.b32.xlu0 %v4771, 16
  %v5247 = vpop.permute.xlu0 %5246
  %5248 = vrot.lane.b32.xlu0 %v4781, 16
  %v5249 = vpop.permute.xlu0 %5248
  %5250 = vrot.lane.b32.xlu0 %v4795, 16
  %v5251 = vpop.permute.xlu0 %5250
  %5252 = vrot.lane.b32.xlu0 %v4805, 16
  %v5253 = vpop.permute.xlu0 %5252
  %5254 = vrot.lane.b32.xlu0 %v4819, 16
  %v5255 = vpop.permute.xlu0 %5254
  %5256 = vrot.lane.b32.xlu0 %v4829, 16
  %v5257 = vpop.permute.xlu0 %5256
  %5258 = vrot.lane.b32.xlu0 %v4843, 16
  %v5259 = vpop.permute.xlu0 %5258
  %5260 = vrot.lane.b32.xlu0 %v4853, 16
  %v5261 = vpop.permute.xlu0 %5260
  %5262 = vrot.lane.b32.xlu0 %v4867, 16
  %v5263 = vpop.permute.xlu0 %5262
  %5264 = vrot.lane.b32.xlu0 %v4877, 16
  %v5265 = vpop.permute.xlu0 %5264
  %5266 = vrot.lane.b32.xlu0 %v4891, 16
  %v5267 = vpop.permute.xlu0 %5266
  %5268 = vrot.lane.b32.xlu0 %v4901, 16
  %v5269 = vpop.permute.xlu0 %5268
  %5270 = vrot.lane.b32.xlu0 %v4915, 16
  %v5271 = vpop.permute.xlu0 %5270
  %5272 = vrot.lane.b32.xlu0 %v4925, 16
  %v5273 = vpop.permute.xlu0 %5272
  %5274 = vrot.lane.b32.xlu0 %v4939, 16
  %v5275 = vpop.permute.xlu0 %5274
  %5276 = vrot.lane.b32.xlu0 %v4949, 16
  %v5277 = vpop.permute.xlu0 %5276
  %5278 = vrot.lane.b32.xlu0 %v4963, 16
  %v5279 = vpop.permute.xlu0 %5278
  %5280 = vrot.lane.b32.xlu0 %v4973, 16
  %v5281 = vpop.permute.xlu0 %5280
  %5282 = vrot.lane.b32.xlu0 %v4987, 16
  %v5283 = vpop.permute.xlu0 %5282
  %5284 = vrot.lane.b32.xlu0 %v4997, 16
  %v5285 = vpop.permute.xlu0 %5284
  %5286 = vrot.lane.b32.xlu0 %v5011, 16
  %v5287 = vpop.permute.xlu0 %5286
  %5288 = vrot.lane.b32.xlu0 %v5021, 16
  %v5289 = vpop.permute.xlu0 %5288
  %5290 = vrot.lane.b32.xlu0 %v5035, 16
  %v5291 = vpop.permute.xlu0 %5290
  %5292 = vrot.lane.b32.xlu0 %v5045, 16
  %v5293 = vpop.permute.xlu0 %5292
  %5294 = vrot.lane.b32.xlu0 %v5059, 16
  %v5295 = vpop.permute.xlu0 %5294
  %5296 = vrot.lane.b32.xlu0 %v5069, 16
  %v5297 = vpop.permute.xlu0 %5296
  %5298 = vrot.lane.b32.xlu0 %v5083, 16
  %v5299 = vpop.permute.xlu0 %5298
  %5300 = vrot.lane.b32.xlu0 %v5093, 16
  %v5301 = vpop.permute.xlu0 %5300
  %5302 = vrot.lane.b32.xlu0 %v5107, 16
  %v5303 = vpop.permute.xlu0 %5302
  %5304 = vrot.lane.b32.xlu0 %v5117, 16
  %v5305 = vpop.permute.xlu0 %5304
  %5306 = vrot.lane.b32.xlu0 %v5131, 16
  %v5307 = vpop.permute.xlu0 %5306
  %5308 = vrot.lane.b32.xlu0 %v5141, 16
  %v5309 = vpop.permute.xlu0 %5308
  %5310 = vrot.lane.b32.xlu0 %v5155, 16
  %v5311 = vpop.permute.xlu0 %5310
  %5312 = vrot.lane.b32.xlu0 %v5165, 16
  %v5313 = vpop.permute.xlu0 %5312
  %5314 = vrot.lane.b32.xlu0 %v5179, 16
  %v5315 = vpop.permute.xlu0 %5314
  %5316 = vrot.lane.b32.xlu0 %v5189, 16
  %v5317 = vpop.permute.xlu0 %5316
  %vm5382 = vcmask 158848
  %5383 = vst.msk [vmem:[#allocation3] sm:$0xf] %vm5382, %v5191
  %5384 = vst.msk [vmem:[#allocation3 + $0x4] sm:$0xf] %vm5382, %v5193
  %5385 = vst.msk [vmem:[#allocation3 + $0x8] sm:$0xf] %vm5382, %v5195
  %5386 = vst.msk [vmem:[#allocation3 + $0xc] sm:$0xf] %vm5382, %v5197
  %5387 = vst.msk [vmem:[#allocation3 + $0x10] sm:$0xf] %vm5382, %v5199
  %5388 = vst.msk [vmem:[#allocation3 + $0x14] sm:$0xf] %vm5382, %v5201
  %5389 = vst.msk [vmem:[#allocation3 + $0x18] sm:$0xf] %vm5382, %v5203
  %5390 = vst.msk [vmem:[#allocation3 + $0x1c] sm:$0xf] %vm5382, %v5205
  %5391 = vst.msk [vmem:[#allocation3 + $0x20] sm:$0xf] %vm5382, %v5207
  %5392 = vst.msk [vmem:[#allocation3 + $0x24] sm:$0xf] %vm5382, %v5209
  %5393 = vst.msk [vmem:[#allocation3 + $0x28] sm:$0xf] %vm5382, %v5211
  %5394 = vst.msk [vmem:[#allocation3 + $0x2c] sm:$0xf] %vm5382, %v5213
  %5395 = vst.msk [vmem:[#allocation3 + $0x30] sm:$0xf] %vm5382, %v5215
  %5396 = vst.msk [vmem:[#allocation3 + $0x34] sm:$0xf] %vm5382, %v5217
  %5397 = vst.msk [vmem:[#allocation3 + $0x38] sm:$0xf] %vm5382, %v5219
  %5398 = vst.msk [vmem:[#allocation3 + $0x3c] sm:$0xf] %vm5382, %v5221
  %5399 = vst.msk [vmem:[#allocation3 + $0x40] sm:$0xf] %vm5382, %v5223
  %5400 = vst.msk [vmem:[#allocation3 + $0x44] sm:$0xf] %vm5382, %v5225
  %5401 = vst.msk [vmem:[#allocation3 + $0x48] sm:$0xf] %vm5382, %v5227
  %5402 = vst.msk [vmem:[#allocation3 + $0x4c] sm:$0xf] %vm5382, %v5229
  %5403 = vst.msk [vmem:[#allocation3 + $0x50] sm:$0xf] %vm5382, %v5231
  %5404 = vst.msk [vmem:[#allocation3 + $0x54] sm:$0xf] %vm5382, %v5233
  %5405 = vst.msk [vmem:[#allocation3 + $0x58] sm:$0xf] %vm5382, %v5235
  %5406 = vst.msk [vmem:[#allocation3 + $0x5c] sm:$0xf] %vm5382, %v5237
  %5407 = vst.msk [vmem:[#allocation3 + $0x60] sm:$0xf] %vm5382, %v5239
  %5408 = vst.msk [vmem:[#allocation3 + $0x64] sm:$0xf] %vm5382, %v5241
  %5409 = vst.msk [vmem:[#allocation3 + $0x68] sm:$0xf] %vm5382, %v5243
  %5410 = vst.msk [vmem:[#allocation3 + $0x6c] sm:$0xf] %vm5382, %v5245
  %5411 = vst.msk [vmem:[#allocation3 + $0x70] sm:$0xf] %vm5382, %v5247
  %5412 = vst.msk [vmem:[#allocation3 + $0x74] sm:$0xf] %vm5382, %v5249
  %5413 = vst.msk [vmem:[#allocation3 + $0x78] sm:$0xf] %vm5382, %v5251
  %5414 = vst.msk [vmem:[#allocation3 + $0x7c] sm:$0xf] %vm5382, %v5253
  %5415 = vst.msk [vmem:[#allocation3 + $0x80] sm:$0xf] %vm5382, %v5255
  %5416 = vst.msk [vmem:[#allocation3 + $0x84] sm:$0xf] %vm5382, %v5257
  %5417 = vst.msk [vmem:[#allocation3 + $0x88] sm:$0xf] %vm5382, %v5259
  %5418 = vst.msk [vmem:[#allocation3 + $0x8c] sm:$0xf] %vm5382, %v5261
  %5419 = vst.msk [vmem:[#allocation3 + $0x90] sm:$0xf] %vm5382, %v5263
  %5420 = vst.msk [vmem:[#allocation3 + $0x94] sm:$0xf] %vm5382, %v5265
  %5421 = vst.msk [vmem:[#allocation3 + $0x98] sm:$0xf] %vm5382, %v5267
  %5422 = vst.msk [vmem:[#allocation3 + $0x9c] sm:$0xf] %vm5382, %v5269
  %5423 = vst.msk [vmem:[#allocation3 + $0xa0] sm:$0xf] %vm5382, %v5271
  %5424 = vst.msk [vmem:[#allocation3 + $0xa4] sm:$0xf] %vm5382, %v5273
  %5425 = vst.msk [vmem:[#allocation3 + $0xa8] sm:$0xf] %vm5382, %v5275
  %5426 = vst.msk [vmem:[#allocation3 + $0xac] sm:$0xf] %vm5382, %v5277
  %5427 = vst.msk [vmem:[#allocation3 + $0xb0] sm:$0xf] %vm5382, %v5279
  %5428 = vst.msk [vmem:[#allocation3 + $0xb4] sm:$0xf] %vm5382, %v5281
  %5429 = vst.msk [vmem:[#allocation3 + $0xb8] sm:$0xf] %vm5382, %v5283
  %5430 = vst.msk [vmem:[#allocation3 + $0xbc] sm:$0xf] %vm5382, %v5285
  %5431 = vst.msk [vmem:[#allocation3 + $0xc0] sm:$0xf] %vm5382, %v5287
  %5432 = vst.msk [vmem:[#allocation3 + $0xc4] sm:$0xf] %vm5382, %v5289
  %5433 = vst.msk [vmem:[#allocation3 + $0xc8] sm:$0xf] %vm5382, %v5291
  %5434 = vst.msk [vmem:[#allocation3 + $0xcc] sm:$0xf] %vm5382, %v5293
  %5435 = vst.msk [vmem:[#allocation3 + $0xd0] sm:$0xf] %vm5382, %v5295
  %5436 = vst.msk [vmem:[#allocation3 + $0xd4] sm:$0xf] %vm5382, %v5297
  %5437 = vst.msk [vmem:[#allocation3 + $0xd8] sm:$0xf] %vm5382, %v5299
  %5438 = vst.msk [vmem:[#allocation3 + $0xdc] sm:$0xf] %vm5382, %v5301
  %5439 = vst.msk [vmem:[#allocation3 + $0xe0] sm:$0xf] %vm5382, %v5303
  %5440 = vst.msk [vmem:[#allocation3 + $0xe4] sm:$0xf] %vm5382, %v5305
  %5441 = vst.msk [vmem:[#allocation3 + $0xe8] sm:$0xf] %vm5382, %v5307
  %5442 = vst.msk [vmem:[#allocation3 + $0xec] sm:$0xf] %vm5382, %v5309
  %5443 = vst.msk [vmem:[#allocation3 + $0xf0] sm:$0xf] %vm5382, %v5311
  %5444 = vst.msk [vmem:[#allocation3 + $0xf4] sm:$0xf] %vm5382, %v5313
  %5445 = vst.msk [vmem:[#allocation3 + $0xf8] sm:$0xf] %vm5382, %v5315
  %5446 = vst.msk [vmem:[#allocation3 + $0xfc] sm:$0xf] %vm5382, %v5317
  %v5447 = vld [vmem:[%s1786] sm:$0xe]
  %v5448 = vld [vmem:[%s1786 + $0x4] sm:$0xf]
  %v5449 = vld [vmem:[%s1786 + $0x8] sm:$0x1]
  %v5450 = vld [vmem:[%s1786 + $0xc] sm:$0xe]
  %v5451 = vld [vmem:[%s1786 + $0x10] sm:$0xf]
  %v5452 = vld [vmem:[%s1786 + $0x14] sm:$0x1]
  %v5453 = vld [vmem:[%s1786 + $0x18] sm:$0xe]
  %v5454 = vld [vmem:[%s1786 + $0x1c] sm:$0xf]
  %v5455 = vld [vmem:[%s1786 + $0x20] sm:$0x1]
  %v5456 = vld [vmem:[%s1786 + $0x24] sm:$0xe]
  %v5457 = vld [vmem:[%s1786 + $0x28] sm:$0xf]
  %v5458 = vld [vmem:[%s1786 + $0x2c] sm:$0x1]
  %v5459 = vld [vmem:[%s1786 + $0x30] sm:$0xe]
  %v5460 = vld [vmem:[%s1786 + $0x34] sm:$0xf]
  %v5461 = vld [vmem:[%s1786 + $0x38] sm:$0x1]
  %v5462 = vld [vmem:[%s1786 + $0x3c] sm:$0xe]
  %v5463 = vld [vmem:[%s1786 + $0x40] sm:$0xf]
  %v5464 = vld [vmem:[%s1786 + $0x44] sm:$0x1]
  %v5465 = vld [vmem:[%s1786 + $0x48] sm:$0xe]
  %v5466 = vld [vmem:[%s1786 + $0x4c] sm:$0xf]
  %v5467 = vld [vmem:[%s1786 + $0x50] sm:$0x1]
  %v5468 = vld [vmem:[%s1786 + $0x54] sm:$0xe]
  %v5469 = vld [vmem:[%s1786 + $0x58] sm:$0xf]
  %v5470 = vld [vmem:[%s1786 + $0x5c] sm:$0x1]
  %v5471 = vld [vmem:[%s1786 + $0x60] sm:$0xe]
  %v5472 = vld [vmem:[%s1786 + $0x64] sm:$0xf]
  %v5473 = vld [vmem:[%s1786 + $0x68] sm:$0x1]
  %v5474 = vld [vmem:[%s1786 + $0x6c] sm:$0xe]
  %v5475 = vld [vmem:[%s1786 + $0x70] sm:$0xf]
  %v5476 = vld [vmem:[%s1786 + $0x74] sm:$0x1]
  %v5477 = vld [vmem:[%s1786 + $0x78] sm:$0xe]
  %v5478 = vld [vmem:[%s1786 + $0x7c] sm:$0xf]
  %v5479 = vld [vmem:[%s1786 + $0x80] sm:$0x1]
  %v5480 = vld [vmem:[%s1786 + $0x84] sm:$0xe]
  %v5481 = vld [vmem:[%s1786 + $0x88] sm:$0xf]
  %v5482 = vld [vmem:[%s1786 + $0x8c] sm:$0x1]
  %v5483 = vld [vmem:[%s1786 + $0x90] sm:$0xe]
  %v5484 = vld [vmem:[%s1786 + $0x94] sm:$0xf]
  %v5485 = vld [vmem:[%s1786 + $0x98] sm:$0x1]
  %v5486 = vld [vmem:[%s1786 + $0x9c] sm:$0xe]
  %v5487 = vld [vmem:[%s1786 + $0xa0] sm:$0xf]
  %v5488 = vld [vmem:[%s1786 + $0xa4] sm:$0x1]
  %v5489 = vld [vmem:[%s1786 + $0xa8] sm:$0xe]
  %v5490 = vld [vmem:[%s1786 + $0xac] sm:$0xf]
  %v5491 = vld [vmem:[%s1786 + $0xb0] sm:$0x1]
  %v5492 = vld [vmem:[%s1786 + $0xb4] sm:$0xe]
  %v5493 = vld [vmem:[%s1786 + $0xb8] sm:$0xf]
  %v5494 = vld [vmem:[%s1786 + $0xbc] sm:$0x1]
  %v5495 = vld [vmem:[%s1786 + $0xd8] sm:$0xe]
  %v5496 = vld [vmem:[%s1786 + $0xdc] sm:$0xf]
  %v5497 = vld [vmem:[%s1786 + $0xe0] sm:$0x1]
  %v5498 = vld [vmem:[%s1786 + $0xe4] sm:$0xe]
  %v5499 = vld [vmem:[%s1786 + $0xe8] sm:$0xf]
  %v5500 = vld [vmem:[%s1786 + $0xec] sm:$0x1]
  %v5501 = vld [vmem:[%s1786 + $0xf0] sm:$0xe]
  %v5502 = vld [vmem:[%s1786 + $0xf4] sm:$0xf]
  %v5503 = vld [vmem:[%s1786 + $0xf8] sm:$0x1]
  %v5504 = vld [vmem:[%s1786 + $0xfc] sm:$0xe]
  %v5505 = vld [vmem:[%s1786 + $0x100] sm:$0xf]
  %v5506 = vld [vmem:[%s1786 + $0x104] sm:$0x1]
  %v5507 = vld [vmem:[%s1786 + $0x108] sm:$0xe]
  %v5508 = vld [vmem:[%s1786 + $0x10c] sm:$0xf]
  %v5509 = vld [vmem:[%s1786 + $0x110] sm:$0x1]
  %v5510 = vld [vmem:[%s1786 + $0x114] sm:$0xe]
  %v5511 = vld [vmem:[%s1786 + $0x118] sm:$0xf]
  %v5512 = vld [vmem:[%s1786 + $0x11c] sm:$0x1]
  %v5513 = vld [vmem:[%s1786 + $0x120] sm:$0xe]
  %v5514 = vld [vmem:[%s1786 + $0x124] sm:$0xf]
  %v5515 = vld [vmem:[%s1786 + $0x128] sm:$0x1]
  %v5516 = vld [vmem:[%s1786 + $0x12c] sm:$0xe]
  %v5517 = vld [vmem:[%s1786 + $0x130] sm:$0xf]
  %v5518 = vld [vmem:[%s1786 + $0x134] sm:$0x1]
  %v5519 = vld [vmem:[%s1786 + $0x138] sm:$0xe]
  %v5520 = vld [vmem:[%s1786 + $0x13c] sm:$0xf]
  %v5521 = vld [vmem:[%s1786 + $0x140] sm:$0x1]
  %v5522 = vld [vmem:[%s1786 + $0x144] sm:$0xe]
  %v5523 = vld [vmem:[%s1786 + $0x148] sm:$0xf]
  %v5524 = vld [vmem:[%s1786 + $0x14c] sm:$0x1]
  %v5525 = vld [vmem:[%s1786 + $0x150] sm:$0xe]
  %v5526 = vld [vmem:[%s1786 + $0x154] sm:$0xf]
  %v5527 = vld [vmem:[%s1786 + $0x158] sm:$0x1]
  %v5528 = vld [vmem:[%s1786 + $0x15c] sm:$0xe]
  %v5529 = vld [vmem:[%s1786 + $0x160] sm:$0xf]
  %v5530 = vld [vmem:[%s1786 + $0x164] sm:$0x1]
  %v5531 = vld [vmem:[%s1786 + $0x168] sm:$0xe]
  %v5532 = vld [vmem:[%s1786 + $0x16c] sm:$0xf]
  %v5533 = vld [vmem:[%s1786 + $0x170] sm:$0x1]
  %v5534 = vld [vmem:[%s1786 + $0x174] sm:$0xe]
  %v5535 = vld [vmem:[%s1786 + $0x178] sm:$0xf]
  %v5536 = vld [vmem:[%s1786 + $0x17c] sm:$0x1]
  %v5537 = vld [vmem:[%s1786 + $0x180] sm:$0xe]
  %v5538 = vld [vmem:[%s1786 + $0x184] sm:$0xf]
  %v5539 = vld [vmem:[%s1786 + $0x188] sm:$0x1]
  %v5540 = vld [vmem:[%s1786 + $0x18c] sm:$0xe]
  %v5541 = vld [vmem:[%s1786 + $0x190] sm:$0xf]
  %v5542 = vld [vmem:[%s1786 + $0x194] sm:$0x1]
  %v5639 = vrot.slane %v5447, 5
  %v5640 = vrot.slane %v5639, 4
  %v5641 = vrot.slane %v5448, 5
  %v5642 = vsel %vm3459, %v5640, %v5641
  %v5643 = vrot.slane %v5641, 4
  %v5644 = vrot.slane %v5449, 5
  %v5645 = vsel %vm3459, %v5643, %v5644
  %v5646 = vrot.slane %v5450, 5
  %v5647 = vrot.slane %v5646, 4
  %v5648 = vrot.slane %v5451, 5
  %v5649 = vsel %vm3459, %v5647, %v5648
  %v5650 = vrot.slane %v5648, 4
  %v5651 = vrot.slane %v5452, 5
  %v5652 = vsel %vm3459, %v5650, %v5651
  %v5653 = vrot.slane %v5453, 5
  %v5654 = vrot.slane %v5653, 4
  %v5655 = vrot.slane %v5454, 5
  %v5656 = vsel %vm3459, %v5654, %v5655
  %v5657 = vrot.slane %v5655, 4
  %v5658 = vrot.slane %v5455, 5
  %v5659 = vsel %vm3459, %v5657, %v5658
  %v5660 = vrot.slane %v5456, 5
  %v5661 = vrot.slane %v5660, 4
  %v5662 = vrot.slane %v5457, 5
  %v5663 = vsel %vm3459, %v5661, %v5662
  %v5664 = vrot.slane %v5662, 4
  %v5665 = vrot.slane %v5458, 5
  %v5666 = vsel %vm3459, %v5664, %v5665
  %v5667 = vrot.slane %v5459, 5
  %v5668 = vrot.slane %v5667, 4
  %v5669 = vrot.slane %v5460, 5
  %v5670 = vsel %vm3459, %v5668, %v5669
  %v5671 = vrot.slane %v5669, 4
  %v5672 = vrot.slane %v5461, 5
  %v5673 = vsel %vm3459, %v5671, %v5672
  %v5674 = vrot.slane %v5462, 5
  %v5675 = vrot.slane %v5674, 4
  %v5676 = vrot.slane %v5463, 5
  %v5677 = vsel %vm3459, %v5675, %v5676
  %v5678 = vrot.slane %v5676, 4
  %v5679 = vrot.slane %v5464, 5
  %v5680 = vsel %vm3459, %v5678, %v5679
  %v5681 = vrot.slane %v5465, 5
  %v5682 = vrot.slane %v5681, 4
  %v5683 = vrot.slane %v5466, 5
  %v5684 = vsel %vm3459, %v5682, %v5683
  %v5685 = vrot.slane %v5683, 4
  %v5686 = vrot.slane %v5467, 5
  %v5687 = vsel %vm3459, %v5685, %v5686
  %v5688 = vrot.slane %v5468, 5
  %v5689 = vrot.slane %v5688, 4
  %v5690 = vrot.slane %v5469, 5
  %v5691 = vsel %vm3459, %v5689, %v5690
  %v5692 = vrot.slane %v5690, 4
  %v5693 = vrot.slane %v5470, 5
  %v5694 = vsel %vm3459, %v5692, %v5693
  %v5695 = vrot.slane %v5471, 5
  %v5696 = vrot.slane %v5695, 4
  %v5697 = vrot.slane %v5472, 5
  %v5698 = vsel %vm3459, %v5696, %v5697
  %v5699 = vrot.slane %v5697, 4
  %v5700 = vrot.slane %v5473, 5
  %v5701 = vsel %vm3459, %v5699, %v5700
  %v5702 = vrot.slane %v5474, 5
  %v5703 = vrot.slane %v5702, 4
  %v5704 = vrot.slane %v5475, 5
  %v5705 = vsel %vm3459, %v5703, %v5704
  %v5706 = vrot.slane %v5704, 4
  %v5707 = vrot.slane %v5476, 5
  %v5708 = vsel %vm3459, %v5706, %v5707
  %v5709 = vrot.slane %v5477, 5
  %v5710 = vrot.slane %v5709, 4
  %v5711 = vrot.slane %v5478, 5
  %v5712 = vsel %vm3459, %v5710, %v5711
  %v5713 = vrot.slane %v5711, 4
  %v5714 = vrot.slane %v5479, 5
  %v5715 = vsel %vm3459, %v5713, %v5714
  %v5716 = vrot.slane %v5480, 5
  %v5717 = vrot.slane %v5716, 4
  %v5718 = vrot.slane %v5481, 5
  %v5719 = vsel %vm3459, %v5717, %v5718
  %v5720 = vrot.slane %v5718, 4
  %v5721 = vrot.slane %v5482, 5
  %v5722 = vsel %vm3459, %v5720, %v5721
  %v5723 = vrot.slane %v5483, 5
  %v5724 = vrot.slane %v5723, 4
  %v5725 = vrot.slane %v5484, 5
  %v5726 = vsel %vm3459, %v5724, %v5725
  %v5727 = vrot.slane %v5725, 4
  %v5728 = vrot.slane %v5485, 5
  %v5729 = vsel %vm3459, %v5727, %v5728
  %v5730 = vrot.slane %v5486, 5
  %v5731 = vrot.slane %v5730, 4
  %v5732 = vrot.slane %v5487, 5
  %v5733 = vsel %vm3459, %v5731, %v5732
  %v5734 = vrot.slane %v5732, 4
  %v5735 = vrot.slane %v5488, 5
  %v5736 = vsel %vm3459, %v5734, %v5735
  %v5737 = vrot.slane %v5489, 5
  %v5738 = vrot.slane %v5737, 4
  %v5739 = vrot.slane %v5490, 5
  %v5740 = vsel %vm3459, %v5738, %v5739
  %v5741 = vrot.slane %v5739, 4
  %v5742 = vrot.slane %v5491, 5
  %v5743 = vsel %vm3459, %v5741, %v5742
  %v5744 = vrot.slane %v5492, 5
  %v5745 = vrot.slane %v5744, 4
  %v5746 = vrot.slane %v5493, 5
  %v5747 = vsel %vm3459, %v5745, %v5746
  %v5748 = vrot.slane %v5746, 4
  %v5749 = vrot.slane %v5494, 5
  %v5750 = vsel %vm3459, %v5748, %v5749
  %v5751 = vrot.slane %v5495, 5
  %v5752 = vrot.slane %v5751, 4
  %v5753 = vrot.slane %v5496, 5
  %v5754 = vsel %vm3459, %v5752, %v5753
  %v5755 = vrot.slane %v5753, 4
  %v5756 = vrot.slane %v5497, 5
  %v5757 = vsel %vm3459, %v5755, %v5756
  %v5758 = vrot.slane %v5498, 5
  %v5759 = vrot.slane %v5758, 4
  %v5760 = vrot.slane %v5499, 5
  %v5761 = vsel %vm3459, %v5759, %v5760
  %v5762 = vrot.slane %v5760, 4
  %v5763 = vrot.slane %v5500, 5
  %v5764 = vsel %vm3459, %v5762, %v5763
  %v5765 = vrot.slane %v5501, 5
  %v5766 = vrot.slane %v5765, 4
  %v5767 = vrot.slane %v5502, 5
  %v5768 = vsel %vm3459, %v5766, %v5767
  %v5769 = vrot.slane %v5767, 4
  %v5770 = vrot.slane %v5503, 5
  %v5771 = vsel %vm3459, %v5769, %v5770
  %v5772 = vrot.slane %v5504, 5
  %v5773 = vrot.slane %v5772, 4
  %v5774 = vrot.slane %v5505, 5
  %v5775 = vsel %vm3459, %v5773, %v5774
  %v5776 = vrot.slane %v5774, 4
  %v5777 = vrot.slane %v5506, 5
  %v5778 = vsel %vm3459, %v5776, %v5777
  %v5779 = vrot.slane %v5507, 5
  %v5780 = vrot.slane %v5779, 4
  %v5781 = vrot.slane %v5508, 5
  %v5782 = vsel %vm3459, %v5780, %v5781
  %v5783 = vrot.slane %v5781, 4
  %v5784 = vrot.slane %v5509, 5
  %v5785 = vsel %vm3459, %v5783, %v5784
  %v5786 = vrot.slane %v5510, 5
  %v5787 = vrot.slane %v5786, 4
  %v5788 = vrot.slane %v5511, 5
  %v5789 = vsel %vm3459, %v5787, %v5788
  %v5790 = vrot.slane %v5788, 4
  %v5791 = vrot.slane %v5512, 5
  %v5792 = vsel %vm3459, %v5790, %v5791
  %v5793 = vrot.slane %v5513, 5
  %v5794 = vrot.slane %v5793, 4
  %v5795 = vrot.slane %v5514, 5
  %v5796 = vsel %vm3459, %v5794, %v5795
  %v5797 = vrot.slane %v5795, 4
  %v5798 = vrot.slane %v5515, 5
  %v5799 = vsel %vm3459, %v5797, %v5798
  %v5800 = vrot.slane %v5516, 5
  %v5801 = vrot.slane %v5800, 4
  %v5802 = vrot.slane %v5517, 5
  %v5803 = vsel %vm3459, %v5801, %v5802
  %v5804 = vrot.slane %v5802, 4
  %v5805 = vrot.slane %v5518, 5
  %v5806 = vsel %vm3459, %v5804, %v5805
  %v5807 = vrot.slane %v5519, 5
  %v5808 = vrot.slane %v5807, 4
  %v5809 = vrot.slane %v5520, 5
  %v5810 = vsel %vm3459, %v5808, %v5809
  %v5811 = vrot.slane %v5809, 4
  %v5812 = vrot.slane %v5521, 5
  %v5813 = vsel %vm3459, %v5811, %v5812
  %v5814 = vrot.slane %v5522, 5
  %v5815 = vrot.slane %v5814, 4
  %v5816 = vrot.slane %v5523, 5
  %v5817 = vsel %vm3459, %v5815, %v5816
  %v5818 = vrot.slane %v5816, 4
  %v5819 = vrot.slane %v5524, 5
  %v5820 = vsel %vm3459, %v5818, %v5819
  %v5821 = vrot.slane %v5525, 5
  %v5822 = vrot.slane %v5821, 4
  %v5823 = vrot.slane %v5526, 5
  %v5824 = vsel %vm3459, %v5822, %v5823
  %v5825 = vrot.slane %v5823, 4
  %v5826 = vrot.slane %v5527, 5
  %v5827 = vsel %vm3459, %v5825, %v5826
  %v5828 = vrot.slane %v5528, 5
  %v5829 = vrot.slane %v5828, 4
  %v5830 = vrot.slane %v5529, 5
  %v5831 = vsel %vm3459, %v5829, %v5830
  %v5832 = vrot.slane %v5830, 4
  %v5833 = vrot.slane %v5530, 5
  %v5834 = vsel %vm3459, %v5832, %v5833
  %v5835 = vrot.slane %v5531, 5
  %v5836 = vrot.slane %v5835, 4
  %v5837 = vrot.slane %v5532, 5
  %v5838 = vsel %vm3459, %v5836, %v5837
  %v5839 = vrot.slane %v5837, 4
  %v5840 = vrot.slane %v5533, 5
  %v5841 = vsel %vm3459, %v5839, %v5840
  %v5842 = vrot.slane %v5534, 5
  %v5843 = vrot.slane %v5842, 4
  %v5844 = vrot.slane %v5535, 5
  %v5845 = vsel %vm3459, %v5843, %v5844
  %v5846 = vrot.slane %v5844, 4
  %v5847 = vrot.slane %v5536, 5
  %v5848 = vsel %vm3459, %v5846, %v5847
  %v5849 = vrot.slane %v5537, 5
  %v5850 = vrot.slane %v5849, 4
  %v5851 = vrot.slane %v5538, 5
  %v5852 = vsel %vm3459, %v5850, %v5851
  %v5853 = vrot.slane %v5851, 4
  %v5854 = vrot.slane %v5539, 5
  %v5855 = vsel %vm3459, %v5853, %v5854
  %v5856 = vrot.slane %v5540, 5
  %v5857 = vrot.slane %v5856, 4
  %v5858 = vrot.slane %v5541, 5
  %v5859 = vsel %vm3459, %v5857, %v5858
  %v5860 = vrot.slane %v5858, 4
  %v5861 = vrot.slane %v5542, 5
  %v5862 = vsel %vm3459, %v5860, %v5861
  %5863 = vrot.lane.b32.xlu0 %v5642, 20
  %v5864 = vpop.permute.xlu0 %5863
  %5865 = vrot.lane.b32.xlu0 %v5645, 20
  %v5866 = vpop.permute.xlu0 %5865
  %5867 = vrot.lane.b32.xlu0 %v5649, 20
  %v5868 = vpop.permute.xlu0 %5867
  %5869 = vrot.lane.b32.xlu0 %v5652, 20
  %v5870 = vpop.permute.xlu0 %5869
  %5871 = vrot.lane.b32.xlu0 %v5656, 20
  %v5872 = vpop.permute.xlu0 %5871
  %5873 = vrot.lane.b32.xlu0 %v5659, 20
  %v5874 = vpop.permute.xlu0 %5873
  %5875 = vrot.lane.b32.xlu0 %v5663, 20
  %v5876 = vpop.permute.xlu0 %5875
  %5877 = vrot.lane.b32.xlu0 %v5666, 20
  %v5878 = vpop.permute.xlu0 %5877
  %5879 = vrot.lane.b32.xlu0 %v5670, 20
  %v5880 = vpop.permute.xlu0 %5879
  %5881 = vrot.lane.b32.xlu0 %v5673, 20
  %v5882 = vpop.permute.xlu0 %5881
  %5883 = vrot.lane.b32.xlu0 %v5677, 20
  %v5884 = vpop.permute.xlu0 %5883
  %5885 = vrot.lane.b32.xlu0 %v5680, 20
  %v5886 = vpop.permute.xlu0 %5885
  %5887 = vrot.lane.b32.xlu0 %v5684, 20
  %v5888 = vpop.permute.xlu0 %5887
  %5889 = vrot.lane.b32.xlu0 %v5687, 20
  %v5890 = vpop.permute.xlu0 %5889
  %5891 = vrot.lane.b32.xlu0 %v5691, 20
  %v5892 = vpop.permute.xlu0 %5891
  %5893 = vrot.lane.b32.xlu0 %v5694, 20
  %v5894 = vpop.permute.xlu0 %5893
  %5895 = vrot.lane.b32.xlu0 %v5698, 20
  %v5896 = vpop.permute.xlu0 %5895
  %5897 = vrot.lane.b32.xlu0 %v5701, 20
  %v5898 = vpop.permute.xlu0 %5897
  %5899 = vrot.lane.b32.xlu0 %v5705, 20
  %v5900 = vpop.permute.xlu0 %5899
  %5901 = vrot.lane.b32.xlu0 %v5708, 20
  %v5902 = vpop.permute.xlu0 %5901
  %5903 = vrot.lane.b32.xlu0 %v5712, 20
  %v5904 = vpop.permute.xlu0 %5903
  %5905 = vrot.lane.b32.xlu0 %v5715, 20
  %v5906 = vpop.permute.xlu0 %5905
  %5907 = vrot.lane.b32.xlu0 %v5719, 20
  %v5908 = vpop.permute.xlu0 %5907
  %5909 = vrot.lane.b32.xlu0 %v5722, 20
  %v5910 = vpop.permute.xlu0 %5909
  %5911 = vrot.lane.b32.xlu0 %v5726, 20
  %v5912 = vpop.permute.xlu0 %5911
  %5913 = vrot.lane.b32.xlu0 %v5729, 20
  %v5914 = vpop.permute.xlu0 %5913
  %5915 = vrot.lane.b32.xlu0 %v5733, 20
  %v5916 = vpop.permute.xlu0 %5915
  %5917 = vrot.lane.b32.xlu0 %v5736, 20
  %v5918 = vpop.permute.xlu0 %5917
  %5919 = vrot.lane.b32.xlu0 %v5740, 20
  %v5920 = vpop.permute.xlu0 %5919
  %5921 = vrot.lane.b32.xlu0 %v5743, 20
  %v5922 = vpop.permute.xlu0 %5921
  %5923 = vrot.lane.b32.xlu0 %v5747, 20
  %v5924 = vpop.permute.xlu0 %5923
  %5925 = vrot.lane.b32.xlu0 %v5750, 20
  %v5926 = vpop.permute.xlu0 %5925
  %5927 = vrot.lane.b32.xlu0 %v5754, 20
  %v5928 = vpop.permute.xlu0 %5927
  %5929 = vrot.lane.b32.xlu0 %v5757, 20
  %v5930 = vpop.permute.xlu0 %5929
  %5931 = vrot.lane.b32.xlu0 %v5761, 20
  %v5932 = vpop.permute.xlu0 %5931
  %5933 = vrot.lane.b32.xlu0 %v5764, 20
  %v5934 = vpop.permute.xlu0 %5933
  %5935 = vrot.lane.b32.xlu0 %v5768, 20
  %v5936 = vpop.permute.xlu0 %5935
  %5937 = vrot.lane.b32.xlu0 %v5771, 20
  %v5938 = vpop.permute.xlu0 %5937
  %5939 = vrot.lane.b32.xlu0 %v5775, 20
  %v5940 = vpop.permute.xlu0 %5939
  %5941 = vrot.lane.b32.xlu0 %v5778, 20
  %v5942 = vpop.permute.xlu0 %5941
  %5943 = vrot.lane.b32.xlu0 %v5782, 20
  %v5944 = vpop.permute.xlu0 %5943
  %5945 = vrot.lane.b32.xlu0 %v5785, 20
  %v5946 = vpop.permute.xlu0 %5945
  %5947 = vrot.lane.b32.xlu0 %v5789, 20
  %v5948 = vpop.permute.xlu0 %5947
  %5949 = vrot.lane.b32.xlu0 %v5792, 20
  %v5950 = vpop.permute.xlu0 %5949
  %5951 = vrot.lane.b32.xlu0 %v5796, 20
  %v5952 = vpop.permute.xlu0 %5951
  %5953 = vrot.lane.b32.xlu0 %v5799, 20
  %v5954 = vpop.permute.xlu0 %5953
  %5955 = vrot.lane.b32.xlu0 %v5803, 20
  %v5956 = vpop.permute.xlu0 %5955
  %5957 = vrot.lane.b32.xlu0 %v5806, 20
  %v5958 = vpop.permute.xlu0 %5957
  %5959 = vrot.lane.b32.xlu0 %v5810, 20
  %v5960 = vpop.permute.xlu0 %5959
  %5961 = vrot.lane.b32.xlu0 %v5813, 20
  %v5962 = vpop.permute.xlu0 %5961
  %5963 = vrot.lane.b32.xlu0 %v5817, 20
  %v5964 = vpop.permute.xlu0 %5963
  %5965 = vrot.lane.b32.xlu0 %v5820, 20
  %v5966 = vpop.permute.xlu0 %5965
  %5967 = vrot.lane.b32.xlu0 %v5824, 20
  %v5968 = vpop.permute.xlu0 %5967
  %5969 = vrot.lane.b32.xlu0 %v5827, 20
  %v5970 = vpop.permute.xlu0 %5969
  %5971 = vrot.lane.b32.xlu0 %v5831, 20
  %v5972 = vpop.permute.xlu0 %5971
  %5973 = vrot.lane.b32.xlu0 %v5834, 20
  %v5974 = vpop.permute.xlu0 %5973
  %5975 = vrot.lane.b32.xlu0 %v5838, 20
  %v5976 = vpop.permute.xlu0 %5975
  %5977 = vrot.lane.b32.xlu0 %v5841, 20
  %v5978 = vpop.permute.xlu0 %5977
  %5979 = vrot.lane.b32.xlu0 %v5845, 20
  %v5980 = vpop.permute.xlu0 %5979
  %5981 = vrot.lane.b32.xlu0 %v5848, 20
  %v5982 = vpop.permute.xlu0 %5981
  %5983 = vrot.lane.b32.xlu0 %v5852, 20
  %v5984 = vpop.permute.xlu0 %5983
  %5985 = vrot.lane.b32.xlu0 %v5855, 20
  %v5986 = vpop.permute.xlu0 %5985
  %5987 = vrot.lane.b32.xlu0 %v5859, 20
  %v5988 = vpop.permute.xlu0 %5987
  %5989 = vrot.lane.b32.xlu0 %v5862, 20
  %v5990 = vpop.permute.xlu0 %5989
  %vm6055 = vcmask 191648
  %6056 = vst.msk [vmem:[#allocation3] sm:$0xf] %vm6055, %v5864
  %6057 = vst.msk [vmem:[#allocation3 + $0x4] sm:$0xf] %vm6055, %v5866
  %6058 = vst.msk [vmem:[#allocation3 + $0x8] sm:$0xf] %vm6055, %v5868
  %6059 = vst.msk [vmem:[#allocation3 + $0xc] sm:$0xf] %vm6055, %v5870
  %6060 = vst.msk [vmem:[#allocation3 + $0x10] sm:$0xf] %vm6055, %v5872
  %6061 = vst.msk [vmem:[#allocation3 + $0x14] sm:$0xf] %vm6055, %v5874
  %6062 = vst.msk [vmem:[#allocation3 + $0x18] sm:$0xf] %vm6055, %v5876
  %6063 = vst.msk [vmem:[#allocation3 + $0x1c] sm:$0xf] %vm6055, %v5878
  %6064 = vst.msk [vmem:[#allocation3 + $0x20] sm:$0xf] %vm6055, %v5880
  %6065 = vst.msk [vmem:[#allocation3 + $0x24] sm:$0xf] %vm6055, %v5882
  %6066 = vst.msk [vmem:[#allocation3 + $0x28] sm:$0xf] %vm6055, %v5884
  %6067 = vst.msk [vmem:[#allocation3 + $0x2c] sm:$0xf] %vm6055, %v5886
  %6068 = vst.msk [vmem:[#allocation3 + $0x30] sm:$0xf] %vm6055, %v5888
  %6069 = vst.msk [vmem:[#allocation3 + $0x34] sm:$0xf] %vm6055, %v5890
  %6070 = vst.msk [vmem:[#allocation3 + $0x38] sm:$0xf] %vm6055, %v5892
  %6071 = vst.msk [vmem:[#allocation3 + $0x3c] sm:$0xf] %vm6055, %v5894
  %6072 = vst.msk [vmem:[#allocation3 + $0x40] sm:$0xf] %vm6055, %v5896
  %6073 = vst.msk [vmem:[#allocation3 + $0x44] sm:$0xf] %vm6055, %v5898
  %6074 = vst.msk [vmem:[#allocation3 + $0x48] sm:$0xf] %vm6055, %v5900
  %6075 = vst.msk [vmem:[#allocation3 + $0x4c] sm:$0xf] %vm6055, %v5902
  %6076 = vst.msk [vmem:[#allocation3 + $0x50] sm:$0xf] %vm6055, %v5904
  %6077 = vst.msk [vmem:[#allocation3 + $0x54] sm:$0xf] %vm6055, %v5906
  %6078 = vst.msk [vmem:[#allocation3 + $0x58] sm:$0xf] %vm6055, %v5908
  %6079 = vst.msk [vmem:[#allocation3 + $0x5c] sm:$0xf] %vm6055, %v5910
  %6080 = vst.msk [vmem:[#allocation3 + $0x60] sm:$0xf] %vm6055, %v5912
  %6081 = vst.msk [vmem:[#allocation3 + $0x64] sm:$0xf] %vm6055, %v5914
  %6082 = vst.msk [vmem:[#allocation3 + $0x68] sm:$0xf] %vm6055, %v5916
  %6083 = vst.msk [vmem:[#allocation3 + $0x6c] sm:$0xf] %vm6055, %v5918
  %6084 = vst.msk [vmem:[#allocation3 + $0x70] sm:$0xf] %vm6055, %v5920
  %6085 = vst.msk [vmem:[#allocation3 + $0x74] sm:$0xf] %vm6055, %v5922
  %6086 = vst.msk [vmem:[#allocation3 + $0x78] sm:$0xf] %vm6055, %v5924
  %6087 = vst.msk [vmem:[#allocation3 + $0x7c] sm:$0xf] %vm6055, %v5926
  %6088 = vst.msk [vmem:[#allocation3 + $0x80] sm:$0xf] %vm6055, %v5928
  %6089 = vst.msk [vmem:[#allocation3 + $0x84] sm:$0xf] %vm6055, %v5930
  %6090 = vst.msk [vmem:[#allocation3 + $0x88] sm:$0xf] %vm6055, %v5932
  %6091 = vst.msk [vmem:[#allocation3 + $0x8c] sm:$0xf] %vm6055, %v5934
  %6092 = vst.msk [vmem:[#allocation3 + $0x90] sm:$0xf] %vm6055, %v5936
  %6093 = vst.msk [vmem:[#allocation3 + $0x94] sm:$0xf] %vm6055, %v5938
  %6094 = vst.msk [vmem:[#allocation3 + $0x98] sm:$0xf] %vm6055, %v5940
  %6095 = vst.msk [vmem:[#allocation3 + $0x9c] sm:$0xf] %vm6055, %v5942
  %6096 = vst.msk [vmem:[#allocation3 + $0xa0] sm:$0xf] %vm6055, %v5944
  %6097 = vst.msk [vmem:[#allocation3 + $0xa4] sm:$0xf] %vm6055, %v5946
  %6098 = vst.msk [vmem:[#allocation3 + $0xa8] sm:$0xf] %vm6055, %v5948
  %6099 = vst.msk [vmem:[#allocation3 + $0xac] sm:$0xf] %vm6055, %v5950
  %6100 = vst.msk [vmem:[#allocation3 + $0xb0] sm:$0xf] %vm6055, %v5952
  %6101 = vst.msk [vmem:[#allocation3 + $0xb4] sm:$0xf] %vm6055, %v5954
  %6102 = vst.msk [vmem:[#allocation3 + $0xb8] sm:$0xf] %vm6055, %v5956
  %6103 = vst.msk [vmem:[#allocation3 + $0xbc] sm:$0xf] %vm6055, %v5958
  %6104 = vst.msk [vmem:[#allocation3 + $0xc0] sm:$0xf] %vm6055, %v5960
  %6105 = vst.msk [vmem:[#allocation3 + $0xc4] sm:$0xf] %vm6055, %v5962
  %6106 = vst.msk [vmem:[#allocation3 + $0xc8] sm:$0xf] %vm6055, %v5964
  %6107 = vst.msk [vmem:[#allocation3 + $0xcc] sm:$0xf] %vm6055, %v5966
  %6108 = vst.msk [vmem:[#allocation3 + $0xd0] sm:$0xf] %vm6055, %v5968
  %6109 = vst.msk [vmem:[#allocation3 + $0xd4] sm:$0xf] %vm6055, %v5970
  %6110 = vst.msk [vmem:[#allocation3 + $0xd8] sm:$0xf] %vm6055, %v5972
  %6111 = vst.msk [vmem:[#allocation3 + $0xdc] sm:$0xf] %vm6055, %v5974
  %6112 = vst.msk [vmem:[#allocation3 + $0xe0] sm:$0xf] %vm6055, %v5976
  %6113 = vst.msk [vmem:[#allocation3 + $0xe4] sm:$0xf] %vm6055, %v5978
  %6114 = vst.msk [vmem:[#allocation3 + $0xe8] sm:$0xf] %vm6055, %v5980
  %6115 = vst.msk [vmem:[#allocation3 + $0xec] sm:$0xf] %vm6055, %v5982
  %6116 = vst.msk [vmem:[#allocation3 + $0xf0] sm:$0xf] %vm6055, %v5984
  %6117 = vst.msk [vmem:[#allocation3 + $0xf4] sm:$0xf] %vm6055, %v5986
  %6118 = vst.msk [vmem:[#allocation3 + $0xf8] sm:$0xf] %vm6055, %v5988
  %6119 = vst.msk [vmem:[#allocation3 + $0xfc] sm:$0xf] %vm6055, %v5990
  %s6120 = scalar_lea.vmem [#allocation2], 24
  %v6121 = vld [vmem:[%s6120] sm:$0xf]
  %v6122 = vld [vmem:[%s6120 + $0x4] sm:$0xf]
  %v6123 = vld [vmem:[%s6120 + $0xc] sm:$0xf]
  %v6124 = vld [vmem:[%s6120 + $0x10] sm:$0xf]
  %v6125 = vld [vmem:[%s6120 + $0x18] sm:$0xf]
  %v6126 = vld [vmem:[%s6120 + $0x1c] sm:$0xf]
  %v6127 = vld [vmem:[%s6120 + $0x24] sm:$0xf]
  %v6128 = vld [vmem:[%s6120 + $0x28] sm:$0xf]
  %v6129 = vld [vmem:[%s6120 + $0x30] sm:$0xf]
  %v6130 = vld [vmem:[%s6120 + $0x34] sm:$0xf]
  %v6131 = vld [vmem:[%s6120 + $0x3c] sm:$0xf]
  %v6132 = vld [vmem:[%s6120 + $0x40] sm:$0xf]
  %v6133 = vld [vmem:[%s6120 + $0x48] sm:$0xf]
  %v6134 = vld [vmem:[%s6120 + $0x4c] sm:$0xf]
  %v6135 = vld [vmem:[%s6120 + $0x54] sm:$0xf]
  %v6136 = vld [vmem:[%s6120 + $0x58] sm:$0xf]
  %v6137 = vld [vmem:[%s6120 + $0x60] sm:$0xf]
  %v6138 = vld [vmem:[%s6120 + $0x64] sm:$0xf]
  %v6139 = vld [vmem:[%s6120 + $0x6c] sm:$0xf]
  %v6140 = vld [vmem:[%s6120 + $0x70] sm:$0xf]
  %v6141 = vld [vmem:[%s6120 + $0x78] sm:$0xf]
  %v6142 = vld [vmem:[%s6120 + $0x7c] sm:$0xf]
  %v6143 = vld [vmem:[%s6120 + $0x84] sm:$0xf]
  %v6144 = vld [vmem:[%s6120 + $0x88] sm:$0xf]
  %v6145 = vld [vmem:[%s6120 + $0x90] sm:$0xf]
  %v6146 = vld [vmem:[%s6120 + $0x94] sm:$0xf]
  %v6147 = vld [vmem:[%s6120 + $0x9c] sm:$0xf]
  %v6148 = vld [vmem:[%s6120 + $0xa0] sm:$0xf]
  %v6149 = vld [vmem:[%s6120 + $0xa8] sm:$0xf]
  %v6150 = vld [vmem:[%s6120 + $0xac] sm:$0xf]
  %v6151 = vld [vmem:[%s6120 + $0xb4] sm:$0xf]
  %v6152 = vld [vmem:[%s6120 + $0xb8] sm:$0xf]
  %v6153 = vld [vmem:[%s6120 + $0xd8] sm:$0xf]
  %v6154 = vld [vmem:[%s6120 + $0xdc] sm:$0xf]
  %v6155 = vld [vmem:[%s6120 + $0xe4] sm:$0xf]
  %v6156 = vld [vmem:[%s6120 + $0xe8] sm:$0xf]
  %v6157 = vld [vmem:[%s6120 + $0xf0] sm:$0xf]
  %v6158 = vld [vmem:[%s6120 + $0xf4] sm:$0xf]
  %v6159 = vld [vmem:[%s6120 + $0xfc] sm:$0xf]
  %v6160 = vld [vmem:[%s6120 + $0x100] sm:$0xf]
  %v6161 = vld [vmem:[%s6120 + $0x108] sm:$0xf]
  %v6162 = vld [vmem:[%s6120 + $0x10c] sm:$0xf]
  %v6163 = vld [vmem:[%s6120 + $0x114] sm:$0xf]
  %v6164 = vld [vmem:[%s6120 + $0x118] sm:$0xf]
  %v6165 = vld [vmem:[%s6120 + $0x120] sm:$0xf]
  %v6166 = vld [vmem:[%s6120 + $0x124] sm:$0xf]
  %v6167 = vld [vmem:[%s6120 + $0x12c] sm:$0xf]
  %v6168 = vld [vmem:[%s6120 + $0x130] sm:$0xf]
  %v6169 = vld [vmem:[%s6120 + $0x138] sm:$0xf]
  %v6170 = vld [vmem:[%s6120 + $0x13c] sm:$0xf]
  %v6171 = vld [vmem:[%s6120 + $0x144] sm:$0xf]
  %v6172 = vld [vmem:[%s6120 + $0x148] sm:$0xf]
  %v6173 = vld [vmem:[%s6120 + $0x150] sm:$0xf]
  %v6174 = vld [vmem:[%s6120 + $0x154] sm:$0xf]
  %v6175 = vld [vmem:[%s6120 + $0x15c] sm:$0xf]
  %v6176 = vld [vmem:[%s6120 + $0x160] sm:$0xf]
  %v6177 = vld [vmem:[%s6120 + $0x168] sm:$0xf]
  %v6178 = vld [vmem:[%s6120 + $0x16c] sm:$0xf]
  %v6179 = vld [vmem:[%s6120 + $0x174] sm:$0xf]
  %v6180 = vld [vmem:[%s6120 + $0x178] sm:$0xf]
  %v6181 = vld [vmem:[%s6120 + $0x180] sm:$0xf]
  %v6182 = vld [vmem:[%s6120 + $0x184] sm:$0xf]
  %v6183 = vld [vmem:[%s6120 + $0x18c] sm:$0xf]
  %v6184 = vld [vmem:[%s6120 + $0x190] sm:$0xf]
  %6249 = vrot.lane.b32.xlu0 %v6121, 24
  %v6250 = vpop.permute.xlu0 %6249
  %6251 = vrot.lane.b32.xlu0 %v6122, 24
  %v6252 = vpop.permute.xlu0 %6251
  %6253 = vrot.lane.b32.xlu0 %v6123, 24
  %v6254 = vpop.permute.xlu0 %6253
  %6255 = vrot.lane.b32.xlu0 %v6124, 24
  %v6256 = vpop.permute.xlu0 %6255
  %6257 = vrot.lane.b32.xlu0 %v6125, 24
  %v6258 = vpop.permute.xlu0 %6257
  %6259 = vrot.lane.b32.xlu0 %v6126, 24
  %v6260 = vpop.permute.xlu0 %6259
  %6261 = vrot.lane.b32.xlu0 %v6127, 24
  %v6262 = vpop.permute.xlu0 %6261
  %6263 = vrot.lane.b32.xlu0 %v6128, 24
  %v6264 = vpop.permute.xlu0 %6263
  %6265 = vrot.lane.b32.xlu0 %v6129, 24
  %v6266 = vpop.permute.xlu0 %6265
  %6267 = vrot.lane.b32.xlu0 %v6130, 24
  %v6268 = vpop.permute.xlu0 %6267
  %6269 = vrot.lane.b32.xlu0 %v6131, 24
  %v6270 = vpop.permute.xlu0 %6269
  %6271 = vrot.lane.b32.xlu0 %v6132, 24
  %v6272 = vpop.permute.xlu0 %6271
  %6273 = vrot.lane.b32.xlu0 %v6133, 24
  %v6274 = vpop.permute.xlu0 %6273
  %6275 = vrot.lane.b32.xlu0 %v6134, 24
  %v6276 = vpop.permute.xlu0 %6275
  %6277 = vrot.lane.b32.xlu0 %v6135, 24
  %v6278 = vpop.permute.xlu0 %6277
  %6279 = vrot.lane.b32.xlu0 %v6136, 24
  %v6280 = vpop.permute.xlu0 %6279
  %6281 = vrot.lane.b32.xlu0 %v6137, 24
  %v6282 = vpop.permute.xlu0 %6281
  %6283 = vrot.lane.b32.xlu0 %v6138, 24
  %v6284 = vpop.permute.xlu0 %6283
  %6285 = vrot.lane.b32.xlu0 %v6139, 24
  %v6286 = vpop.permute.xlu0 %6285
  %6287 = vrot.lane.b32.xlu0 %v6140, 24
  %v6288 = vpop.permute.xlu0 %6287
  %6289 = vrot.lane.b32.xlu0 %v6141, 24
  %v6290 = vpop.permute.xlu0 %6289
  %6291 = vrot.lane.b32.xlu0 %v6142, 24
  %v6292 = vpop.permute.xlu0 %6291
  %6293 = vrot.lane.b32.xlu0 %v6143, 24
  %v6294 = vpop.permute.xlu0 %6293
  %6295 = vrot.lane.b32.xlu0 %v6144, 24
  %v6296 = vpop.permute.xlu0 %6295
  %6297 = vrot.lane.b32.xlu0 %v6145, 24
  %v6298 = vpop.permute.xlu0 %6297
  %6299 = vrot.lane.b32.xlu0 %v6146, 24
  %v6300 = vpop.permute.xlu0 %6299
  %6301 = vrot.lane.b32.xlu0 %v6147, 24
  %v6302 = vpop.permute.xlu0 %6301
  %6303 = vrot.lane.b32.xlu0 %v6148, 24
  %v6304 = vpop.permute.xlu0 %6303
  %6305 = vrot.lane.b32.xlu0 %v6149, 24
  %v6306 = vpop.permute.xlu0 %6305
  %6307 = vrot.lane.b32.xlu0 %v6150, 24
  %v6308 = vpop.permute.xlu0 %6307
  %6309 = vrot.lane.b32.xlu0 %v6151, 24
  %v6310 = vpop.permute.xlu0 %6309
  %6311 = vrot.lane.b32.xlu0 %v6152, 24
  %v6312 = vpop.permute.xlu0 %6311
  %6313 = vrot.lane.b32.xlu0 %v6153, 24
  %v6314 = vpop.permute.xlu0 %6313
  %6315 = vrot.lane.b32.xlu0 %v6154, 24
  %v6316 = vpop.permute.xlu0 %6315
  %6317 = vrot.lane.b32.xlu0 %v6155, 24
  %v6318 = vpop.permute.xlu0 %6317
  %6319 = vrot.lane.b32.xlu0 %v6156, 24
  %v6320 = vpop.permute.xlu0 %6319
  %6321 = vrot.lane.b32.xlu0 %v6157, 24
  %v6322 = vpop.permute.xlu0 %6321
  %6323 = vrot.lane.b32.xlu0 %v6158, 24
  %v6324 = vpop.permute.xlu0 %6323
  %6325 = vrot.lane.b32.xlu0 %v6159, 24
  %v6326 = vpop.permute.xlu0 %6325
  %6327 = vrot.lane.b32.xlu0 %v6160, 24
  %v6328 = vpop.permute.xlu0 %6327
  %6329 = vrot.lane.b32.xlu0 %v6161, 24
  %v6330 = vpop.permute.xlu0 %6329
  %6331 = vrot.lane.b32.xlu0 %v6162, 24
  %v6332 = vpop.permute.xlu0 %6331
  %6333 = vrot.lane.b32.xlu0 %v6163, 24
  %v6334 = vpop.permute.xlu0 %6333
  %6335 = vrot.lane.b32.xlu0 %v6164, 24
  %v6336 = vpop.permute.xlu0 %6335
  %6337 = vrot.lane.b32.xlu0 %v6165, 24
  %v6338 = vpop.permute.xlu0 %6337
  %6339 = vrot.lane.b32.xlu0 %v6166, 24
  %v6340 = vpop.permute.xlu0 %6339
  %6341 = vrot.lane.b32.xlu0 %v6167, 24
  %v6342 = vpop.permute.xlu0 %6341
  %6343 = vrot.lane.b32.xlu0 %v6168, 24
  %v6344 = vpop.permute.xlu0 %6343
  %6345 = vrot.lane.b32.xlu0 %v6169, 24
  %v6346 = vpop.permute.xlu0 %6345
  %6347 = vrot.lane.b32.xlu0 %v6170, 24
  %v6348 = vpop.permute.xlu0 %6347
  %6349 = vrot.lane.b32.xlu0 %v6171, 24
  %v6350 = vpop.permute.xlu0 %6349
  %6351 = vrot.lane.b32.xlu0 %v6172, 24
  %v6352 = vpop.permute.xlu0 %6351
  %6353 = vrot.lane.b32.xlu0 %v6173, 24
  %v6354 = vpop.permute.xlu0 %6353
  %6355 = vrot.lane.b32.xlu0 %v6174, 24
  %v6356 = vpop.permute.xlu0 %6355
  %6357 = vrot.lane.b32.xlu0 %v6175, 24
  %v6358 = vpop.permute.xlu0 %6357
  %6359 = vrot.lane.b32.xlu0 %v6176, 24
  %v6360 = vpop.permute.xlu0 %6359
  %6361 = vrot.lane.b32.xlu0 %v6177, 24
  %v6362 = vpop.permute.xlu0 %6361
  %6363 = vrot.lane.b32.xlu0 %v6178, 24
  %v6364 = vpop.permute.xlu0 %6363
  %6365 = vrot.lane.b32.xlu0 %v6179, 24
  %v6366 = vpop.permute.xlu0 %6365
  %6367 = vrot.lane.b32.xlu0 %v6180, 24
  %v6368 = vpop.permute.xlu0 %6367
  %6369 = vrot.lane.b32.xlu0 %v6181, 24
  %v6370 = vpop.permute.xlu0 %6369
  %6371 = vrot.lane.b32.xlu0 %v6182, 24
  %v6372 = vpop.permute.xlu0 %6371
  %6373 = vrot.lane.b32.xlu0 %v6183, 24
  %v6374 = vpop.permute.xlu0 %6373
  %6375 = vrot.lane.b32.xlu0 %v6184, 24
  %v6376 = vpop.permute.xlu0 %6375
  %vm6441 = vcmask 224448
  %6442 = vst.msk [vmem:[#allocation3] sm:$0xf] %vm6441, %v6250
  %6443 = vst.msk [vmem:[#allocation3 + $0x4] sm:$0xf] %vm6441, %v6252
  %6444 = vst.msk [vmem:[#allocation3 + $0x8] sm:$0xf] %vm6441, %v6254
  %6445 = vst.msk [vmem:[#allocation3 + $0xc] sm:$0xf] %vm6441, %v6256
  %6446 = vst.msk [vmem:[#allocation3 + $0x10] sm:$0xf] %vm6441, %v6258
  %6447 = vst.msk [vmem:[#allocation3 + $0x14] sm:$0xf] %vm6441, %v6260
  %6448 = vst.msk [vmem:[#allocation3 + $0x18] sm:$0xf] %vm6441, %v6262
  %6449 = vst.msk [vmem:[#allocation3 + $0x1c] sm:$0xf] %vm6441, %v6264
  %6450 = vst.msk [vmem:[#allocation3 + $0x20] sm:$0xf] %vm6441, %v6266
  %6451 = vst.msk [vmem:[#allocation3 + $0x24] sm:$0xf] %vm6441, %v6268
  %6452 = vst.msk [vmem:[#allocation3 + $0x28] sm:$0xf] %vm6441, %v6270
  %6453 = vst.msk [vmem:[#allocation3 + $0x2c] sm:$0xf] %vm6441, %v6272
  %6454 = vst.msk [vmem:[#allocation3 + $0x30] sm:$0xf] %vm6441, %v6274
  %6455 = vst.msk [vmem:[#allocation3 + $0x34] sm:$0xf] %vm6441, %v6276
  %6456 = vst.msk [vmem:[#allocation3 + $0x38] sm:$0xf] %vm6441, %v6278
  %6457 = vst.msk [vmem:[#allocation3 + $0x3c] sm:$0xf] %vm6441, %v6280
  %6458 = vst.msk [vmem:[#allocation3 + $0x40] sm:$0xf] %vm6441, %v6282
  %6459 = vst.msk [vmem:[#allocation3 + $0x44] sm:$0xf] %vm6441, %v6284
  %6460 = vst.msk [vmem:[#allocation3 + $0x48] sm:$0xf] %vm6441, %v6286
  %6461 = vst.msk [vmem:[#allocation3 + $0x4c] sm:$0xf] %vm6441, %v6288
  %6462 = vst.msk [vmem:[#allocation3 + $0x50] sm:$0xf] %vm6441, %v6290
  %6463 = vst.msk [vmem:[#allocation3 + $0x54] sm:$0xf] %vm6441, %v6292
  %6464 = vst.msk [vmem:[#allocation3 + $0x58] sm:$0xf] %vm6441, %v6294
  %6465 = vst.msk [vmem:[#allocation3 + $0x5c] sm:$0xf] %vm6441, %v6296
  %6466 = vst.msk [vmem:[#allocation3 + $0x60] sm:$0xf] %vm6441, %v6298
  %6467 = vst.msk [vmem:[#allocation3 + $0x64] sm:$0xf] %vm6441, %v6300
  %6468 = vst.msk [vmem:[#allocation3 + $0x68] sm:$0xf] %vm6441, %v6302
  %6469 = vst.msk [vmem:[#allocation3 + $0x6c] sm:$0xf] %vm6441, %v6304
  %6470 = vst.msk [vmem:[#allocation3 + $0x70] sm:$0xf] %vm6441, %v6306
  %6471 = vst.msk [vmem:[#allocation3 + $0x74] sm:$0xf] %vm6441, %v6308
  %6472 = vst.msk [vmem:[#allocation3 + $0x78] sm:$0xf] %vm6441, %v6310
  %6473 = vst.msk [vmem:[#allocation3 + $0x7c] sm:$0xf] %vm6441, %v6312
  %6474 = vst.msk [vmem:[#allocation3 + $0x80] sm:$0xf] %vm6441, %v6314
  %6475 = vst.msk [vmem:[#allocation3 + $0x84] sm:$0xf] %vm6441, %v6316
  %6476 = vst.msk [vmem:[#allocation3 + $0x88] sm:$0xf] %vm6441, %v6318
  %6477 = vst.msk [vmem:[#allocation3 + $0x8c] sm:$0xf] %vm6441, %v6320
  %6478 = vst.msk [vmem:[#allocation3 + $0x90] sm:$0xf] %vm6441, %v6322
  %6479 = vst.msk [vmem:[#allocation3 + $0x94] sm:$0xf] %vm6441, %v6324
  %6480 = vst.msk [vmem:[#allocation3 + $0x98] sm:$0xf] %vm6441, %v6326
  %6481 = vst.msk [vmem:[#allocation3 + $0x9c] sm:$0xf] %vm6441, %v6328
  %6482 = vst.msk [vmem:[#allocation3 + $0xa0] sm:$0xf] %vm6441, %v6330
  %6483 = vst.msk [vmem:[#allocation3 + $0xa4] sm:$0xf] %vm6441, %v6332
  %6484 = vst.msk [vmem:[#allocation3 + $0xa8] sm:$0xf] %vm6441, %v6334
  %6485 = vst.msk [vmem:[#allocation3 + $0xac] sm:$0xf] %vm6441, %v6336
  %6486 = vst.msk [vmem:[#allocation3 + $0xb0] sm:$0xf] %vm6441, %v6338
  %6487 = vst.msk [vmem:[#allocation3 + $0xb4] sm:$0xf] %vm6441, %v6340
  %6488 = vst.msk [vmem:[#allocation3 + $0xb8] sm:$0xf] %vm6441, %v6342
  %6489 = vst.msk [vmem:[#allocation3 + $0xbc] sm:$0xf] %vm6441, %v6344
  %6490 = vst.msk [vmem:[#allocation3 + $0xc0] sm:$0xf] %vm6441, %v6346
  %6491 = vst.msk [vmem:[#allocation3 + $0xc4] sm:$0xf] %vm6441, %v6348
  %6492 = vst.msk [vmem:[#allocation3 + $0xc8] sm:$0xf] %vm6441, %v6350
  %6493 = vst.msk [vmem:[#allocation3 + $0xcc] sm:$0xf] %vm6441, %v6352
  %6494 = vst.msk [vmem:[#allocation3 + $0xd0] sm:$0xf] %vm6441, %v6354
  %6495 = vst.msk [vmem:[#allocation3 + $0xd4] sm:$0xf] %vm6441, %v6356
  %6496 = vst.msk [vmem:[#allocation3 + $0xd8] sm:$0xf] %vm6441, %v6358
  %6497 = vst.msk [vmem:[#allocation3 + $0xdc] sm:$0xf] %vm6441, %v6360
  %6498 = vst.msk [vmem:[#allocation3 + $0xe0] sm:$0xf] %vm6441, %v6362
  %6499 = vst.msk [vmem:[#allocation3 + $0xe4] sm:$0xf] %vm6441, %v6364
  %6500 = vst.msk [vmem:[#allocation3 + $0xe8] sm:$0xf] %vm6441, %v6366
  %6501 = vst.msk [vmem:[#allocation3 + $0xec] sm:$0xf] %vm6441, %v6368
  %6502 = vst.msk [vmem:[#allocation3 + $0xf0] sm:$0xf] %vm6441, %v6370
  %6503 = vst.msk [vmem:[#allocation3 + $0xf4] sm:$0xf] %vm6441, %v6372
  %6504 = vst.msk [vmem:[#allocation3 + $0xf8] sm:$0xf] %vm6441, %v6374
  %6505 = vst.msk [vmem:[#allocation3 + $0xfc] sm:$0xf] %vm6441, %v6376
  %v6506 = vld [vmem:[%s6120] sm:$0xf]
  %v6507 = vld [vmem:[%s6120 + $0x4] sm:$0xf]
  %v6508 = vld [vmem:[%s6120 + $0x8] sm:$0x1]
  %v6509 = vld [vmem:[%s6120 + $0xc] sm:$0xf]
  %v6510 = vld [vmem:[%s6120 + $0x10] sm:$0xf]
  %v6511 = vld [vmem:[%s6120 + $0x14] sm:$0x1]
  %v6512 = vld [vmem:[%s6120 + $0x18] sm:$0xf]
  %v6513 = vld [vmem:[%s6120 + $0x1c] sm:$0xf]
  %v6514 = vld [vmem:[%s6120 + $0x20] sm:$0x1]
  %v6515 = vld [vmem:[%s6120 + $0x24] sm:$0xf]
  %v6516 = vld [vmem:[%s6120 + $0x28] sm:$0xf]
  %v6517 = vld [vmem:[%s6120 + $0x2c] sm:$0x1]
  %v6518 = vld [vmem:[%s6120 + $0x30] sm:$0xf]
  %v6519 = vld [vmem:[%s6120 + $0x34] sm:$0xf]
  %v6520 = vld [vmem:[%s6120 + $0x38] sm:$0x1]
  %v6521 = vld [vmem:[%s6120 + $0x3c] sm:$0xf]
  %v6522 = vld [vmem:[%s6120 + $0x40] sm:$0xf]
  %v6523 = vld [vmem:[%s6120 + $0x44] sm:$0x1]
  %v6524 = vld [vmem:[%s6120 + $0x48] sm:$0xf]
  %v6525 = vld [vmem:[%s6120 + $0x4c] sm:$0xf]
  %v6526 = vld [vmem:[%s6120 + $0x50] sm:$0x1]
  %v6527 = vld [vmem:[%s6120 + $0x54] sm:$0xf]
  %v6528 = vld [vmem:[%s6120 + $0x58] sm:$0xf]
  %v6529 = vld [vmem:[%s6120 + $0x5c] sm:$0x1]
  %v6530 = vld [vmem:[%s6120 + $0x60] sm:$0xf]
  %v6531 = vld [vmem:[%s6120 + $0x64] sm:$0xf]
  %v6532 = vld [vmem:[%s6120 + $0x68] sm:$0x1]
  %v6533 = vld [vmem:[%s6120 + $0x6c] sm:$0xf]
  %v6534 = vld [vmem:[%s6120 + $0x70] sm:$0xf]
  %v6535 = vld [vmem:[%s6120 + $0x74] sm:$0x1]
  %v6536 = vld [vmem:[%s6120 + $0x78] sm:$0xf]
  %v6537 = vld [vmem:[%s6120 + $0x7c] sm:$0xf]
  %v6538 = vld [vmem:[%s6120 + $0x80] sm:$0x1]
  %v6539 = vld [vmem:[%s6120 + $0x84] sm:$0xf]
  %v6540 = vld [vmem:[%s6120 + $0x88] sm:$0xf]
  %v6541 = vld [vmem:[%s6120 + $0x8c] sm:$0x1]
  %v6542 = vld [vmem:[%s6120 + $0x90] sm:$0xf]
  %v6543 = vld [vmem:[%s6120 + $0x94] sm:$0xf]
  %v6544 = vld [vmem:[%s6120 + $0x98] sm:$0x1]
  %v6545 = vld [vmem:[%s6120 + $0x9c] sm:$0xf]
  %v6546 = vld [vmem:[%s6120 + $0xa0] sm:$0xf]
  %v6547 = vld [vmem:[%s6120 + $0xa4] sm:$0x1]
  %v6548 = vld [vmem:[%s6120 + $0xa8] sm:$0xf]
  %v6549 = vld [vmem:[%s6120 + $0xac] sm:$0xf]
  %v6550 = vld [vmem:[%s6120 + $0xb0] sm:$0x1]
  %v6551 = vld [vmem:[%s6120 + $0xb4] sm:$0xf]
  %v6552 = vld [vmem:[%s6120 + $0xb8] sm:$0xf]
  %v6553 = vld [vmem:[%s6120 + $0xbc] sm:$0x1]
  %v6554 = vld [vmem:[%s6120 + $0xd8] sm:$0xf]
  %v6555 = vld [vmem:[%s6120 + $0xdc] sm:$0xf]
  %v6556 = vld [vmem:[%s6120 + $0xe0] sm:$0x1]
  %v6557 = vld [vmem:[%s6120 + $0xe4] sm:$0xf]
  %v6558 = vld [vmem:[%s6120 + $0xe8] sm:$0xf]
  %v6559 = vld [vmem:[%s6120 + $0xec] sm:$0x1]
  %v6560 = vld [vmem:[%s6120 + $0xf0] sm:$0xf]
  %v6561 = vld [vmem:[%s6120 + $0xf4] sm:$0xf]
  %v6562 = vld [vmem:[%s6120 + $0xf8] sm:$0x1]
  %v6563 = vld [vmem:[%s6120 + $0xfc] sm:$0xf]
  %v6564 = vld [vmem:[%s6120 + $0x100] sm:$0xf]
  %v6565 = vld [vmem:[%s6120 + $0x104] sm:$0x1]
  %v6566 = vld [vmem:[%s6120 + $0x108] sm:$0xf]
  %v6567 = vld [vmem:[%s6120 + $0x10c] sm:$0xf]
  %v6568 = vld [vmem:[%s6120 + $0x110] sm:$0x1]
  %v6569 = vld [vmem:[%s6120 + $0x114] sm:$0xf]
  %v6570 = vld [vmem:[%s6120 + $0x118] sm:$0xf]
  %v6571 = vld [vmem:[%s6120 + $0x11c] sm:$0x1]
  %v6572 = vld [vmem:[%s6120 + $0x120] sm:$0xf]
  %v6573 = vld [vmem:[%s6120 + $0x124] sm:$0xf]
  %v6574 = vld [vmem:[%s6120 + $0x128] sm:$0x1]
  %v6575 = vld [vmem:[%s6120 + $0x12c] sm:$0xf]
  %v6576 = vld [vmem:[%s6120 + $0x130] sm:$0xf]
  %v6577 = vld [vmem:[%s6120 + $0x134] sm:$0x1]
  %v6578 = vld [vmem:[%s6120 + $0x138] sm:$0xf]
  %v6579 = vld [vmem:[%s6120 + $0x13c] sm:$0xf]
  %v6580 = vld [vmem:[%s6120 + $0x140] sm:$0x1]
  %v6581 = vld [vmem:[%s6120 + $0x144] sm:$0xf]
  %v6582 = vld [vmem:[%s6120 + $0x148] sm:$0xf]
  %v6583 = vld [vmem:[%s6120 + $0x14c] sm:$0x1]
  %v6584 = vld [vmem:[%s6120 + $0x150] sm:$0xf]
  %v6585 = vld [vmem:[%s6120 + $0x154] sm:$0xf]
  %v6586 = vld [vmem:[%s6120 + $0x158] sm:$0x1]
  %v6587 = vld [vmem:[%s6120 + $0x15c] sm:$0xf]
  %v6588 = vld [vmem:[%s6120 + $0x160] sm:$0xf]
  %v6589 = vld [vmem:[%s6120 + $0x164] sm:$0x1]
  %v6590 = vld [vmem:[%s6120 + $0x168] sm:$0xf]
  %v6591 = vld [vmem:[%s6120 + $0x16c] sm:$0xf]
  %v6592 = vld [vmem:[%s6120 + $0x170] sm:$0x1]
  %v6593 = vld [vmem:[%s6120 + $0x174] sm:$0xf]
  %v6594 = vld [vmem:[%s6120 + $0x178] sm:$0xf]
  %v6595 = vld [vmem:[%s6120 + $0x17c] sm:$0x1]
  %v6596 = vld [vmem:[%s6120 + $0x180] sm:$0xf]
  %v6597 = vld [vmem:[%s6120 + $0x184] sm:$0xf]
  %v6598 = vld [vmem:[%s6120 + $0x188] sm:$0x1]
  %v6599 = vld [vmem:[%s6120 + $0x18c] sm:$0xf]
  %v6600 = vld [vmem:[%s6120 + $0x190] sm:$0xf]
  %v6601 = vld [vmem:[%s6120 + $0x194] sm:$0x1]
  %v6603 = vshrl.u32 %v6506, 16
  %v6605 = vrot.slane %v6603, 4
  %v6606 = vshll.u32 %v6506, 16
  %v6608 = vrot.slane %v6606, 5
  %v6609 = vor.u32 %v6605, %v6608
  %v6610 = vrot.slane %v6609, 4
  %v6612 = vshll.u32 %v6507, 16
  %v6614 = vrot.slane %v6612, 5
  %v6615 = vsel %vm2239, %v6610, %v6614
  %v6616 = vshrl.u32 %v6507, 16
  %v6618 = vrot.slane %v6616, 4
  %v6619 = vor.u32 %v6618, %v6614
  %v6620 = vrot.slane %v6619, 4
  %v6622 = vshll.u32 %v6508, 16
  %v6624 = vrot.slane %v6622, 5
  %v6625 = vsel %vm2239, %v6620, %v6624
  %v6627 = vshrl.u32 %v6509, 16
  %v6629 = vrot.slane %v6627, 4
  %v6630 = vshll.u32 %v6509, 16
  %v6632 = vrot.slane %v6630, 5
  %v6633 = vor.u32 %v6629, %v6632
  %v6634 = vrot.slane %v6633, 4
  %v6636 = vshll.u32 %v6510, 16
  %v6638 = vrot.slane %v6636, 5
  %v6639 = vsel %vm2239, %v6634, %v6638
  %v6640 = vshrl.u32 %v6510, 16
  %v6642 = vrot.slane %v6640, 4
  %v6643 = vor.u32 %v6642, %v6638
  %v6644 = vrot.slane %v6643, 4
  %v6646 = vshll.u32 %v6511, 16
  %v6648 = vrot.slane %v6646, 5
  %v6649 = vsel %vm2239, %v6644, %v6648
  %v6651 = vshrl.u32 %v6512, 16
  %v6653 = vrot.slane %v6651, 4
  %v6654 = vshll.u32 %v6512, 16
  %v6656 = vrot.slane %v6654, 5
  %v6657 = vor.u32 %v6653, %v6656
  %v6658 = vrot.slane %v6657, 4
  %v6660 = vshll.u32 %v6513, 16
  %v6662 = vrot.slane %v6660, 5
  %v6663 = vsel %vm2239, %v6658, %v6662
  %v6664 = vshrl.u32 %v6513, 16
  %v6666 = vrot.slane %v6664, 4
  %v6667 = vor.u32 %v6666, %v6662
  %v6668 = vrot.slane %v6667, 4
  %v6670 = vshll.u32 %v6514, 16
  %v6672 = vrot.slane %v6670, 5
  %v6673 = vsel %vm2239, %v6668, %v6672
  %v6675 = vshrl.u32 %v6515, 16
  %v6677 = vrot.slane %v6675, 4
  %v6678 = vshll.u32 %v6515, 16
  %v6680 = vrot.slane %v6678, 5
  %v6681 = vor.u32 %v6677, %v6680
  %v6682 = vrot.slane %v6681, 4
  %v6684 = vshll.u32 %v6516, 16
  %v6686 = vrot.slane %v6684, 5
  %v6687 = vsel %vm2239, %v6682, %v6686
  %v6688 = vshrl.u32 %v6516, 16
  %v6690 = vrot.slane %v6688, 4
  %v6691 = vor.u32 %v6690, %v6686
  %v6692 = vrot.slane %v6691, 4
  %v6694 = vshll.u32 %v6517, 16
  %v6696 = vrot.slane %v6694, 5
  %v6697 = vsel %vm2239, %v6692, %v6696
  %v6699 = vshrl.u32 %v6518, 16
  %v6701 = vrot.slane %v6699, 4
  %v6702 = vshll.u32 %v6518, 16
  %v6704 = vrot.slane %v6702, 5
  %v6705 = vor.u32 %v6701, %v6704
  %v6706 = vrot.slane %v6705, 4
  %v6708 = vshll.u32 %v6519, 16
  %v6710 = vrot.slane %v6708, 5
  %v6711 = vsel %vm2239, %v6706, %v6710
  %v6712 = vshrl.u32 %v6519, 16
  %v6714 = vrot.slane %v6712, 4
  %v6715 = vor.u32 %v6714, %v6710
  %v6716 = vrot.slane %v6715, 4
  %v6718 = vshll.u32 %v6520, 16
  %v6720 = vrot.slane %v6718, 5
  %v6721 = vsel %vm2239, %v6716, %v6720
  %v6723 = vshrl.u32 %v6521, 16
  %v6725 = vrot.slane %v6723, 4
  %v6726 = vshll.u32 %v6521, 16
  %v6728 = vrot.slane %v6726, 5
  %v6729 = vor.u32 %v6725, %v6728
  %v6730 = vrot.slane %v6729, 4
  %v6732 = vshll.u32 %v6522, 16
  %v6734 = vrot.slane %v6732, 5
  %v6735 = vsel %vm2239, %v6730, %v6734
  %v6736 = vshrl.u32 %v6522, 16
  %v6738 = vrot.slane %v6736, 4
  %v6739 = vor.u32 %v6738, %v6734
  %v6740 = vrot.slane %v6739, 4
  %v6742 = vshll.u32 %v6523, 16
  %v6744 = vrot.slane %v6742, 5
  %v6745 = vsel %vm2239, %v6740, %v6744
  %v6747 = vshrl.u32 %v6524, 16
  %v6749 = vrot.slane %v6747, 4
  %v6750 = vshll.u32 %v6524, 16
  %v6752 = vrot.slane %v6750, 5
  %v6753 = vor.u32 %v6749, %v6752
  %v6754 = vrot.slane %v6753, 4
  %v6756 = vshll.u32 %v6525, 16
  %v6758 = vrot.slane %v6756, 5
  %v6759 = vsel %vm2239, %v6754, %v6758
  %v6760 = vshrl.u32 %v6525, 16
  %v6762 = vrot.slane %v6760, 4
  %v6763 = vor.u32 %v6762, %v6758
  %v6764 = vrot.slane %v6763, 4
  %v6766 = vshll.u32 %v6526, 16
  %v6768 = vrot.slane %v6766, 5
  %v6769 = vsel %vm2239, %v6764, %v6768
  %v6771 = vshrl.u32 %v6527, 16
  %v6773 = vrot.slane %v6771, 4
  %v6774 = vshll.u32 %v6527, 16
  %v6776 = vrot.slane %v6774, 5
  %v6777 = vor.u32 %v6773, %v6776
  %v6778 = vrot.slane %v6777, 4
  %v6780 = vshll.u32 %v6528, 16
  %v6782 = vrot.slane %v6780, 5
  %v6783 = vsel %vm2239, %v6778, %v6782
  %v6784 = vshrl.u32 %v6528, 16
  %v6786 = vrot.slane %v6784, 4
  %v6787 = vor.u32 %v6786, %v6782
  %v6788 = vrot.slane %v6787, 4
  %v6790 = vshll.u32 %v6529, 16
  %v6792 = vrot.slane %v6790, 5
  %v6793 = vsel %vm2239, %v6788, %v6792
  %v6795 = vshrl.u32 %v6530, 16
  %v6797 = vrot.slane %v6795, 4
  %v6798 = vshll.u32 %v6530, 16
  %v6800 = vrot.slane %v6798, 5
  %v6801 = vor.u32 %v6797, %v6800
  %v6802 = vrot.slane %v6801, 4
  %v6804 = vshll.u32 %v6531, 16
  %v6806 = vrot.slane %v6804, 5
  %v6807 = vsel %vm2239, %v6802, %v6806
  %v6808 = vshrl.u32 %v6531, 16
  %v6810 = vrot.slane %v6808, 4
  %v6811 = vor.u32 %v6810, %v6806
  %v6812 = vrot.slane %v6811, 4
  %v6814 = vshll.u32 %v6532, 16
  %v6816 = vrot.slane %v6814, 5
  %v6817 = vsel %vm2239, %v6812, %v6816
  %v6819 = vshrl.u32 %v6533, 16
  %v6821 = vrot.slane %v6819, 4
  %v6822 = vshll.u32 %v6533, 16
  %v6824 = vrot.slane %v6822, 5
  %v6825 = vor.u32 %v6821, %v6824
  %v6826 = vrot.slane %v6825, 4
  %v6828 = vshll.u32 %v6534, 16
  %v6830 = vrot.slane %v6828, 5
  %v6831 = vsel %vm2239, %v6826, %v6830
  %v6832 = vshrl.u32 %v6534, 16
  %v6834 = vrot.slane %v6832, 4
  %v6835 = vor.u32 %v6834, %v6830
  %v6836 = vrot.slane %v6835, 4
  %v6838 = vshll.u32 %v6535, 16
  %v6840 = vrot.slane %v6838, 5
  %v6841 = vsel %vm2239, %v6836, %v6840
  %v6843 = vshrl.u32 %v6536, 16
  %v6845 = vrot.slane %v6843, 4
  %v6846 = vshll.u32 %v6536, 16
  %v6848 = vrot.slane %v6846, 5
  %v6849 = vor.u32 %v6845, %v6848
  %v6850 = vrot.slane %v6849, 4
  %v6852 = vshll.u32 %v6537, 16
  %v6854 = vrot.slane %v6852, 5
  %v6855 = vsel %vm2239, %v6850, %v6854
  %v6856 = vshrl.u32 %v6537, 16
  %v6858 = vrot.slane %v6856, 4
  %v6859 = vor.u32 %v6858, %v6854
  %v6860 = vrot.slane %v6859, 4
  %v6862 = vshll.u32 %v6538, 16
  %v6864 = vrot.slane %v6862, 5
  %v6865 = vsel %vm2239, %v6860, %v6864
  %v6867 = vshrl.u32 %v6539, 16
  %v6869 = vrot.slane %v6867, 4
  %v6870 = vshll.u32 %v6539, 16
  %v6872 = vrot.slane %v6870, 5
  %v6873 = vor.u32 %v6869, %v6872
  %v6874 = vrot.slane %v6873, 4
  %v6876 = vshll.u32 %v6540, 16
  %v6878 = vrot.slane %v6876, 5
  %v6879 = vsel %vm2239, %v6874, %v6878
  %v6880 = vshrl.u32 %v6540, 16
  %v6882 = vrot.slane %v6880, 4
  %v6883 = vor.u32 %v6882, %v6878
  %v6884 = vrot.slane %v6883, 4
  %v6886 = vshll.u32 %v6541, 16
  %v6888 = vrot.slane %v6886, 5
  %v6889 = vsel %vm2239, %v6884, %v6888
  %v6891 = vshrl.u32 %v6542, 16
  %v6893 = vrot.slane %v6891, 4
  %v6894 = vshll.u32 %v6542, 16
  %v6896 = vrot.slane %v6894, 5
  %v6897 = vor.u32 %v6893, %v6896
  %v6898 = vrot.slane %v6897, 4
  %v6900 = vshll.u32 %v6543, 16
  %v6902 = vrot.slane %v6900, 5
  %v6903 = vsel %vm2239, %v6898, %v6902
  %v6904 = vshrl.u32 %v6543, 16
  %v6906 = vrot.slane %v6904, 4
  %v6907 = vor.u32 %v6906, %v6902
  %v6908 = vrot.slane %v6907, 4
  %v6910 = vshll.u32 %v6544, 16
  %v6912 = vrot.slane %v6910, 5
  %v6913 = vsel %vm2239, %v6908, %v6912
  %v6915 = vshrl.u32 %v6545, 16
  %v6917 = vrot.slane %v6915, 4
  %v6918 = vshll.u32 %v6545, 16
  %v6920 = vrot.slane %v6918, 5
  %v6921 = vor.u32 %v6917, %v6920
  %v6922 = vrot.slane %v6921, 4
  %v6924 = vshll.u32 %v6546, 16
  %v6926 = vrot.slane %v6924, 5
  %v6927 = vsel %vm2239, %v6922, %v6926
  %v6928 = vshrl.u32 %v6546, 16
  %v6930 = vrot.slane %v6928, 4
  %v6931 = vor.u32 %v6930, %v6926
  %v6932 = vrot.slane %v6931, 4
  %v6934 = vshll.u32 %v6547, 16
  %v6936 = vrot.slane %v6934, 5
  %v6937 = vsel %vm2239, %v6932, %v6936
  %v6939 = vshrl.u32 %v6548, 16
  %v6941 = vrot.slane %v6939, 4
  %v6942 = vshll.u32 %v6548, 16
  %v6944 = vrot.slane %v6942, 5
  %v6945 = vor.u32 %v6941, %v6944
  %v6946 = vrot.slane %v6945, 4
  %v6948 = vshll.u32 %v6549, 16
  %v6950 = vrot.slane %v6948, 5
  %v6951 = vsel %vm2239, %v6946, %v6950
  %v6952 = vshrl.u32 %v6549, 16
  %v6954 = vrot.slane %v6952, 4
  %v6955 = vor.u32 %v6954, %v6950
  %v6956 = vrot.slane %v6955, 4
  %v6958 = vshll.u32 %v6550, 16
  %v6960 = vrot.slane %v6958, 5
  %v6961 = vsel %vm2239, %v6956, %v6960
  %v6963 = vshrl.u32 %v6551, 16
  %v6965 = vrot.slane %v6963, 4
  %v6966 = vshll.u32 %v6551, 16
  %v6968 = vrot.slane %v6966, 5
  %v6969 = vor.u32 %v6965, %v6968
  %v6970 = vrot.slane %v6969, 4
  %v6972 = vshll.u32 %v6552, 16
  %v6974 = vrot.slane %v6972, 5
  %v6975 = vsel %vm2239, %v6970, %v6974
  %v6976 = vshrl.u32 %v6552, 16
  %v6978 = vrot.slane %v6976, 4
  %v6979 = vor.u32 %v6978, %v6974
  %v6980 = vrot.slane %v6979, 4
  %v6982 = vshll.u32 %v6553, 16
  %v6984 = vrot.slane %v6982, 5
  %v6985 = vsel %vm2239, %v6980, %v6984
  %v6987 = vshrl.u32 %v6554, 16
  %v6989 = vrot.slane %v6987, 4
  %v6990 = vshll.u32 %v6554, 16
  %v6992 = vrot.slane %v6990, 5
  %v6993 = vor.u32 %v6989, %v6992
  %v6994 = vrot.slane %v6993, 4
  %v6996 = vshll.u32 %v6555, 16
  %v6998 = vrot.slane %v6996, 5
  %v6999 = vsel %vm2239, %v6994, %v6998
  %v7000 = vshrl.u32 %v6555, 16
  %v7002 = vrot.slane %v7000, 4
  %v7003 = vor.u32 %v7002, %v6998
  %v7004 = vrot.slane %v7003, 4
  %v7006 = vshll.u32 %v6556, 16
  %v7008 = vrot.slane %v7006, 5
  %v7009 = vsel %vm2239, %v7004, %v7008
  %v7011 = vshrl.u32 %v6557, 16
  %v7013 = vrot.slane %v7011, 4
  %v7014 = vshll.u32 %v6557, 16
  %v7016 = vrot.slane %v7014, 5
  %v7017 = vor.u32 %v7013, %v7016
  %v7018 = vrot.slane %v7017, 4
  %v7020 = vshll.u32 %v6558, 16
  %v7022 = vrot.slane %v7020, 5
  %v7023 = vsel %vm2239, %v7018, %v7022
  %v7024 = vshrl.u32 %v6558, 16
  %v7026 = vrot.slane %v7024, 4
  %v7027 = vor.u32 %v7026, %v7022
  %v7028 = vrot.slane %v7027, 4
  %v7030 = vshll.u32 %v6559, 16
  %v7032 = vrot.slane %v7030, 5
  %v7033 = vsel %vm2239, %v7028, %v7032
  %v7035 = vshrl.u32 %v6560, 16
  %v7037 = vrot.slane %v7035, 4
  %v7038 = vshll.u32 %v6560, 16
  %v7040 = vrot.slane %v7038, 5
  %v7041 = vor.u32 %v7037, %v7040
  %v7042 = vrot.slane %v7041, 4
  %v7044 = vshll.u32 %v6561, 16
  %v7046 = vrot.slane %v7044, 5
  %v7047 = vsel %vm2239, %v7042, %v7046
  %v7048 = vshrl.u32 %v6561, 16
  %v7050 = vrot.slane %v7048, 4
  %v7051 = vor.u32 %v7050, %v7046
  %v7052 = vrot.slane %v7051, 4
  %v7054 = vshll.u32 %v6562, 16
  %v7056 = vrot.slane %v7054, 5
  %v7057 = vsel %vm2239, %v7052, %v7056
  %v7059 = vshrl.u32 %v6563, 16
  %v7061 = vrot.slane %v7059, 4
  %v7062 = vshll.u32 %v6563, 16
  %v7064 = vrot.slane %v7062, 5
  %v7065 = vor.u32 %v7061, %v7064
  %v7066 = vrot.slane %v7065, 4
  %v7068 = vshll.u32 %v6564, 16
  %v7070 = vrot.slane %v7068, 5
  %v7071 = vsel %vm2239, %v7066, %v7070
  %v7072 = vshrl.u32 %v6564, 16
  %v7074 = vrot.slane %v7072, 4
  %v7075 = vor.u32 %v7074, %v7070
  %v7076 = vrot.slane %v7075, 4
  %v7078 = vshll.u32 %v6565, 16
  %v7080 = vrot.slane %v7078, 5
  %v7081 = vsel %vm2239, %v7076, %v7080
  %v7083 = vshrl.u32 %v6566, 16
  %v7085 = vrot.slane %v7083, 4
  %v7086 = vshll.u32 %v6566, 16
  %v7088 = vrot.slane %v7086, 5
  %v7089 = vor.u32 %v7085, %v7088
  %v7090 = vrot.slane %v7089, 4
  %v7092 = vshll.u32 %v6567, 16
  %v7094 = vrot.slane %v7092, 5
  %v7095 = vsel %vm2239, %v7090, %v7094
  %v7096 = vshrl.u32 %v6567, 16
  %v7098 = vrot.slane %v7096, 4
  %v7099 = vor.u32 %v7098, %v7094
  %v7100 = vrot.slane %v7099, 4
  %v7102 = vshll.u32 %v6568, 16
  %v7104 = vrot.slane %v7102, 5
  %v7105 = vsel %vm2239, %v7100, %v7104
  %v7107 = vshrl.u32 %v6569, 16
  %v7109 = vrot.slane %v7107, 4
  %v7110 = vshll.u32 %v6569, 16
  %v7112 = vrot.slane %v7110, 5
  %v7113 = vor.u32 %v7109, %v7112
  %v7114 = vrot.slane %v7113, 4
  %v7116 = vshll.u32 %v6570, 16
  %v7118 = vrot.slane %v7116, 5
  %v7119 = vsel %vm2239, %v7114, %v7118
  %v7120 = vshrl.u32 %v6570, 16
  %v7122 = vrot.slane %v7120, 4
  %v7123 = vor.u32 %v7122, %v7118
  %v7124 = vrot.slane %v7123, 4
  %v7126 = vshll.u32 %v6571, 16
  %v7128 = vrot.slane %v7126, 5
  %v7129 = vsel %vm2239, %v7124, %v7128
  %v7131 = vshrl.u32 %v6572, 16
  %v7133 = vrot.slane %v7131, 4
  %v7134 = vshll.u32 %v6572, 16
  %v7136 = vrot.slane %v7134, 5
  %v7137 = vor.u32 %v7133, %v7136
  %v7138 = vrot.slane %v7137, 4
  %v7140 = vshll.u32 %v6573, 16
  %v7142 = vrot.slane %v7140, 5
  %v7143 = vsel %vm2239, %v7138, %v7142
  %v7144 = vshrl.u32 %v6573, 16
  %v7146 = vrot.slane %v7144, 4
  %v7147 = vor.u32 %v7146, %v7142
  %v7148 = vrot.slane %v7147, 4
  %v7150 = vshll.u32 %v6574, 16
  %v7152 = vrot.slane %v7150, 5
  %v7153 = vsel %vm2239, %v7148, %v7152
  %v7155 = vshrl.u32 %v6575, 16
  %v7157 = vrot.slane %v7155, 4
  %v7158 = vshll.u32 %v6575, 16
  %v7160 = vrot.slane %v7158, 5
  %v7161 = vor.u32 %v7157, %v7160
  %v7162 = vrot.slane %v7161, 4
  %v7164 = vshll.u32 %v6576, 16
  %v7166 = vrot.slane %v7164, 5
  %v7167 = vsel %vm2239, %v7162, %v7166
  %v7168 = vshrl.u32 %v6576, 16
  %v7170 = vrot.slane %v7168, 4
  %v7171 = vor.u32 %v7170, %v7166
  %v7172 = vrot.slane %v7171, 4
  %v7174 = vshll.u32 %v6577, 16
  %v7176 = vrot.slane %v7174, 5
  %v7177 = vsel %vm2239, %v7172, %v7176
  %v7179 = vshrl.u32 %v6578, 16
  %v7181 = vrot.slane %v7179, 4
  %v7182 = vshll.u32 %v6578, 16
  %v7184 = vrot.slane %v7182, 5
  %v7185 = vor.u32 %v7181, %v7184
  %v7186 = vrot.slane %v7185, 4
  %v7188 = vshll.u32 %v6579, 16
  %v7190 = vrot.slane %v7188, 5
  %v7191 = vsel %vm2239, %v7186, %v7190
  %v7192 = vshrl.u32 %v6579, 16
  %v7194 = vrot.slane %v7192, 4
  %v7195 = vor.u32 %v7194, %v7190
  %v7196 = vrot.slane %v7195, 4
  %v7198 = vshll.u32 %v6580, 16
  %v7200 = vrot.slane %v7198, 5
  %v7201 = vsel %vm2239, %v7196, %v7200
  %v7203 = vshrl.u32 %v6581, 16
  %v7205 = vrot.slane %v7203, 4
  %v7206 = vshll.u32 %v6581, 16
  %v7208 = vrot.slane %v7206, 5
  %v7209 = vor.u32 %v7205, %v7208
  %v7210 = vrot.slane %v7209, 4
  %v7212 = vshll.u32 %v6582, 16
  %v7214 = vrot.slane %v7212, 5
  %v7215 = vsel %vm2239, %v7210, %v7214
  %v7216 = vshrl.u32 %v6582, 16
  %v7218 = vrot.slane %v7216, 4
  %v7219 = vor.u32 %v7218, %v7214
  %v7220 = vrot.slane %v7219, 4
  %v7222 = vshll.u32 %v6583, 16
  %v7224 = vrot.slane %v7222, 5
  %v7225 = vsel %vm2239, %v7220, %v7224
  %v7227 = vshrl.u32 %v6584, 16
  %v7229 = vrot.slane %v7227, 4
  %v7230 = vshll.u32 %v6584, 16
  %v7232 = vrot.slane %v7230, 5
  %v7233 = vor.u32 %v7229, %v7232
  %v7234 = vrot.slane %v7233, 4
  %v7236 = vshll.u32 %v6585, 16
  %v7238 = vrot.slane %v7236, 5
  %v7239 = vsel %vm2239, %v7234, %v7238
  %v7240 = vshrl.u32 %v6585, 16
  %v7242 = vrot.slane %v7240, 4
  %v7243 = vor.u32 %v7242, %v7238
  %v7244 = vrot.slane %v7243, 4
  %v7246 = vshll.u32 %v6586, 16
  %v7248 = vrot.slane %v7246, 5
  %v7249 = vsel %vm2239, %v7244, %v7248
  %v7251 = vshrl.u32 %v6587, 16
  %v7253 = vrot.slane %v7251, 4
  %v7254 = vshll.u32 %v6587, 16
  %v7256 = vrot.slane %v7254, 5
  %v7257 = vor.u32 %v7253, %v7256
  %v7258 = vrot.slane %v7257, 4
  %v7260 = vshll.u32 %v6588, 16
  %v7262 = vrot.slane %v7260, 5
  %v7263 = vsel %vm2239, %v7258, %v7262
  %v7264 = vshrl.u32 %v6588, 16
  %v7266 = vrot.slane %v7264, 4
  %v7267 = vor.u32 %v7266, %v7262
  %v7268 = vrot.slane %v7267, 4
  %v7270 = vshll.u32 %v6589, 16
  %v7272 = vrot.slane %v7270, 5
  %v7273 = vsel %vm2239, %v7268, %v7272
  %v7275 = vshrl.u32 %v6590, 16
  %v7277 = vrot.slane %v7275, 4
  %v7278 = vshll.u32 %v6590, 16
  %v7280 = vrot.slane %v7278, 5
  %v7281 = vor.u32 %v7277, %v7280
  %v7282 = vrot.slane %v7281, 4
  %v7284 = vshll.u32 %v6591, 16
  %v7286 = vrot.slane %v7284, 5
  %v7287 = vsel %vm2239, %v7282, %v7286
  %v7288 = vshrl.u32 %v6591, 16
  %v7290 = vrot.slane %v7288, 4
  %v7291 = vor.u32 %v7290, %v7286
  %v7292 = vrot.slane %v7291, 4
  %v7294 = vshll.u32 %v6592, 16
  %v7296 = vrot.slane %v7294, 5
  %v7297 = vsel %vm2239, %v7292, %v7296
  %v7299 = vshrl.u32 %v6593, 16
  %v7301 = vrot.slane %v7299, 4
  %v7302 = vshll.u32 %v6593, 16
  %v7304 = vrot.slane %v7302, 5
  %v7305 = vor.u32 %v7301, %v7304
  %v7306 = vrot.slane %v7305, 4
  %v7308 = vshll.u32 %v6594, 16
  %v7310 = vrot.slane %v7308, 5
  %v7311 = vsel %vm2239, %v7306, %v7310
  %v7312 = vshrl.u32 %v6594, 16
  %v7314 = vrot.slane %v7312, 4
  %v7315 = vor.u32 %v7314, %v7310
  %v7316 = vrot.slane %v7315, 4
  %v7318 = vshll.u32 %v6595, 16
  %v7320 = vrot.slane %v7318, 5
  %v7321 = vsel %vm2239, %v7316, %v7320
  %v7323 = vshrl.u32 %v6596, 16
  %v7325 = vrot.slane %v7323, 4
  %v7326 = vshll.u32 %v6596, 16
  %v7328 = vrot.slane %v7326, 5
  %v7329 = vor.u32 %v7325, %v7328
  %v7330 = vrot.slane %v7329, 4
  %v7332 = vshll.u32 %v6597, 16
  %v7334 = vrot.slane %v7332, 5
  %v7335 = vsel %vm2239, %v7330, %v7334
  %v7336 = vshrl.u32 %v6597, 16
  %v7338 = vrot.slane %v7336, 4
  %v7339 = vor.u32 %v7338, %v7334
  %v7340 = vrot.slane %v7339, 4
  %v7342 = vshll.u32 %v6598, 16
  %v7344 = vrot.slane %v7342, 5
  %v7345 = vsel %vm2239, %v7340, %v7344
  %v7347 = vshrl.u32 %v6599, 16
  %v7349 = vrot.slane %v7347, 4
  %v7350 = vshll.u32 %v6599, 16
  %v7352 = vrot.slane %v7350, 5
  %v7353 = vor.u32 %v7349, %v7352
  %v7354 = vrot.slane %v7353, 4
  %v7356 = vshll.u32 %v6600, 16
  %v7358 = vrot.slane %v7356, 5
  %v7359 = vsel %vm2239, %v7354, %v7358
  %v7360 = vshrl.u32 %v6600, 16
  %v7362 = vrot.slane %v7360, 4
  %v7363 = vor.u32 %v7362, %v7358
  %v7364 = vrot.slane %v7363, 4
  %v7366 = vshll.u32 %v6601, 16
  %v7368 = vrot.slane %v7366, 5
  %v7369 = vsel %vm2239, %v7364, %v7368
  %7370 = vrot.lane.b32.xlu0 %v6615, 28
  %v7371 = vpop.permute.xlu0 %7370
  %7372 = vrot.lane.b32.xlu0 %v6625, 28
  %v7373 = vpop.permute.xlu0 %7372
  %7374 = vrot.lane.b32.xlu0 %v6639, 28
  %v7375 = vpop.permute.xlu0 %7374
  %7376 = vrot.lane.b32.xlu0 %v6649, 28
  %v7377 = vpop.permute.xlu0 %7376
  %7378 = vrot.lane.b32.xlu0 %v6663, 28
  %v7379 = vpop.permute.xlu0 %7378
  %7380 = vrot.lane.b32.xlu0 %v6673, 28
  %v7381 = vpop.permute.xlu0 %7380
  %7382 = vrot.lane.b32.xlu0 %v6687, 28
  %v7383 = vpop.permute.xlu0 %7382
  %7384 = vrot.lane.b32.xlu0 %v6697, 28
  %v7385 = vpop.permute.xlu0 %7384
  %7386 = vrot.lane.b32.xlu0 %v6711, 28
  %v7387 = vpop.permute.xlu0 %7386
  %7388 = vrot.lane.b32.xlu0 %v6721, 28
  %v7389 = vpop.permute.xlu0 %7388
  %7390 = vrot.lane.b32.xlu0 %v6735, 28
  %v7391 = vpop.permute.xlu0 %7390
  %7392 = vrot.lane.b32.xlu0 %v6745, 28
  %v7393 = vpop.permute.xlu0 %7392
  %7394 = vrot.lane.b32.xlu0 %v6759, 28
  %v7395 = vpop.permute.xlu0 %7394
  %7396 = vrot.lane.b32.xlu0 %v6769, 28
  %v7397 = vpop.permute.xlu0 %7396
  %7398 = vrot.lane.b32.xlu0 %v6783, 28
  %v7399 = vpop.permute.xlu0 %7398
  %7400 = vrot.lane.b32.xlu0 %v6793, 28
  %v7401 = vpop.permute.xlu0 %7400
  %7402 = vrot.lane.b32.xlu0 %v6807, 28
  %v7403 = vpop.permute.xlu0 %7402
  %7404 = vrot.lane.b32.xlu0 %v6817, 28
  %v7405 = vpop.permute.xlu0 %7404
  %7406 = vrot.lane.b32.xlu0 %v6831, 28
  %v7407 = vpop.permute.xlu0 %7406
  %7408 = vrot.lane.b32.xlu0 %v6841, 28
  %v7409 = vpop.permute.xlu0 %7408
  %7410 = vrot.lane.b32.xlu0 %v6855, 28
  %v7411 = vpop.permute.xlu0 %7410
  %7412 = vrot.lane.b32.xlu0 %v6865, 28
  %v7413 = vpop.permute.xlu0 %7412
  %7414 = vrot.lane.b32.xlu0 %v6879, 28
  %v7415 = vpop.permute.xlu0 %7414
  %7416 = vrot.lane.b32.xlu0 %v6889, 28
  %v7417 = vpop.permute.xlu0 %7416
  %7418 = vrot.lane.b32.xlu0 %v6903, 28
  %v7419 = vpop.permute.xlu0 %7418
  %7420 = vrot.lane.b32.xlu0 %v6913, 28
  %v7421 = vpop.permute.xlu0 %7420
  %7422 = vrot.lane.b32.xlu0 %v6927, 28
  %v7423 = vpop.permute.xlu0 %7422
  %7424 = vrot.lane.b32.xlu0 %v6937, 28
  %v7425 = vpop.permute.xlu0 %7424
  %7426 = vrot.lane.b32.xlu0 %v6951, 28
  %v7427 = vpop.permute.xlu0 %7426
  %7428 = vrot.lane.b32.xlu0 %v6961, 28
  %v7429 = vpop.permute.xlu0 %7428
  %7430 = vrot.lane.b32.xlu0 %v6975, 28
  %v7431 = vpop.permute.xlu0 %7430
  %7432 = vrot.lane.b32.xlu0 %v6985, 28
  %v7433 = vpop.permute.xlu0 %7432
  %7434 = vrot.lane.b32.xlu0 %v6999, 28
  %v7435 = vpop.permute.xlu0 %7434
  %7436 = vrot.lane.b32.xlu0 %v7009, 28
  %v7437 = vpop.permute.xlu0 %7436
  %7438 = vrot.lane.b32.xlu0 %v7023, 28
  %v7439 = vpop.permute.xlu0 %7438
  %7440 = vrot.lane.b32.xlu0 %v7033, 28
  %v7441 = vpop.permute.xlu0 %7440
  %7442 = vrot.lane.b32.xlu0 %v7047, 28
  %v7443 = vpop.permute.xlu0 %7442
  %7444 = vrot.lane.b32.xlu0 %v7057, 28
  %v7445 = vpop.permute.xlu0 %7444
  %7446 = vrot.lane.b32.xlu0 %v7071, 28
  %v7447 = vpop.permute.xlu0 %7446
  %7448 = vrot.lane.b32.xlu0 %v7081, 28
  %v7449 = vpop.permute.xlu0 %7448
  %7450 = vrot.lane.b32.xlu0 %v7095, 28
  %v7451 = vpop.permute.xlu0 %7450
  %7452 = vrot.lane.b32.xlu0 %v7105, 28
  %v7453 = vpop.permute.xlu0 %7452
  %7454 = vrot.lane.b32.xlu0 %v7119, 28
  %v7455 = vpop.permute.xlu0 %7454
  %7456 = vrot.lane.b32.xlu0 %v7129, 28
  %v7457 = vpop.permute.xlu0 %7456
  %7458 = vrot.lane.b32.xlu0 %v7143, 28
  %v7459 = vpop.permute.xlu0 %7458
  %7460 = vrot.lane.b32.xlu0 %v7153, 28
  %v7461 = vpop.permute.xlu0 %7460
  %7462 = vrot.lane.b32.xlu0 %v7167, 28
  %v7463 = vpop.permute.xlu0 %7462
  %7464 = vrot.lane.b32.xlu0 %v7177, 28
  %v7465 = vpop.permute.xlu0 %7464
  %7466 = vrot.lane.b32.xlu0 %v7191, 28
  %v7467 = vpop.permute.xlu0 %7466
  %7468 = vrot.lane.b32.xlu0 %v7201, 28
  %v7469 = vpop.permute.xlu0 %7468
  %7470 = vrot.lane.b32.xlu0 %v7215, 28
  %v7471 = vpop.permute.xlu0 %7470
  %7472 = vrot.lane.b32.xlu0 %v7225, 28
  %v7473 = vpop.permute.xlu0 %7472
  %7474 = vrot.lane.b32.xlu0 %v7239, 28
  %v7475 = vpop.permute.xlu0 %7474
  %7476 = vrot.lane.b32.xlu0 %v7249, 28
  %v7477 = vpop.permute.xlu0 %7476
  %7478 = vrot.lane.b32.xlu0 %v7263, 28
  %v7479 = vpop.permute.xlu0 %7478
  %7480 = vrot.lane.b32.xlu0 %v7273, 28
  %v7481 = vpop.permute.xlu0 %7480
  %7482 = vrot.lane.b32.xlu0 %v7287, 28
  %v7483 = vpop.permute.xlu0 %7482
  %7484 = vrot.lane.b32.xlu0 %v7297, 28
  %v7485 = vpop.permute.xlu0 %7484
  %7486 = vrot.lane.b32.xlu0 %v7311, 28
  %v7487 = vpop.permute.xlu0 %7486
  %7488 = vrot.lane.b32.xlu0 %v7321, 28
  %v7489 = vpop.permute.xlu0 %7488
  %7490 = vrot.lane.b32.xlu0 %v7335, 28
  %v7491 = vpop.permute.xlu0 %7490
  %7492 = vrot.lane.b32.xlu0 %v7345, 28
  %v7493 = vpop.permute.xlu0 %7492
  %7494 = vrot.lane.b32.xlu0 %v7359, 28
  %v7495 = vpop.permute.xlu0 %7494
  %7496 = vrot.lane.b32.xlu0 %v7369, 28
  %v7497 = vpop.permute.xlu0 %7496
  %vm7562 = vcmask 257248
  %7563 = vst.msk [vmem:[#allocation3] sm:$0xf] %vm7562, %v7371
  %7564 = vst.msk [vmem:[#allocation3 + $0x4] sm:$0xf] %vm7562, %v7373
  %7565 = vst.msk [vmem:[#allocation3 + $0x8] sm:$0xf] %vm7562, %v7375
  %7566 = vst.msk [vmem:[#allocation3 + $0xc] sm:$0xf] %vm7562, %v7377
  %7567 = vst.msk [vmem:[#allocation3 + $0x10] sm:$0xf] %vm7562, %v7379
  %7568 = vst.msk [vmem:[#allocation3 + $0x14] sm:$0xf] %vm7562, %v7381
  %7569 = vst.msk [vmem:[#allocation3 + $0x18] sm:$0xf] %vm7562, %v7383
  %7570 = vst.msk [vmem:[#allocation3 + $0x1c] sm:$0xf] %vm7562, %v7385
  %7571 = vst.msk [vmem:[#allocation3 + $0x20] sm:$0xf] %vm7562, %v7387
  %7572 = vst.msk [vmem:[#allocation3 + $0x24] sm:$0xf] %vm7562, %v7389
  %7573 = vst.msk [vmem:[#allocation3 + $0x28] sm:$0xf] %vm7562, %v7391
  %7574 = vst.msk [vmem:[#allocation3 + $0x2c] sm:$0xf] %vm7562, %v7393
  %7575 = vst.msk [vmem:[#allocation3 + $0x30] sm:$0xf] %vm7562, %v7395
  %7576 = vst.msk [vmem:[#allocation3 + $0x34] sm:$0xf] %vm7562, %v7397
  %7577 = vst.msk [vmem:[#allocation3 + $0x38] sm:$0xf] %vm7562, %v7399
  %7578 = vst.msk [vmem:[#allocation3 + $0x3c] sm:$0xf] %vm7562, %v7401
  %7579 = vst.msk [vmem:[#allocation3 + $0x40] sm:$0xf] %vm7562, %v7403
  %7580 = vst.msk [vmem:[#allocation3 + $0x44] sm:$0xf] %vm7562, %v7405
  %7581 = vst.msk [vmem:[#allocation3 + $0x48] sm:$0xf] %vm7562, %v7407
  %7582 = vst.msk [vmem:[#allocation3 + $0x4c] sm:$0xf] %vm7562, %v7409
  %7583 = vst.msk [vmem:[#allocation3 + $0x50] sm:$0xf] %vm7562, %v7411
  %7584 = vst.msk [vmem:[#allocation3 + $0x54] sm:$0xf] %vm7562, %v7413
  %7585 = vst.msk [vmem:[#allocation3 + $0x58] sm:$0xf] %vm7562, %v7415
  %7586 = vst.msk [vmem:[#allocation3 + $0x5c] sm:$0xf] %vm7562, %v7417
  %7587 = vst.msk [vmem:[#allocation3 + $0x60] sm:$0xf] %vm7562, %v7419
  %7588 = vst.msk [vmem:[#allocation3 + $0x64] sm:$0xf] %vm7562, %v7421
  %7589 = vst.msk [vmem:[#allocation3 + $0x68] sm:$0xf] %vm7562, %v7423
  %7590 = vst.msk [vmem:[#allocation3 + $0x6c] sm:$0xf] %vm7562, %v7425
  %7591 = vst.msk [vmem:[#allocation3 + $0x70] sm:$0xf] %vm7562, %v7427
  %7592 = vst.msk [vmem:[#allocation3 + $0x74] sm:$0xf] %vm7562, %v7429
  %7593 = vst.msk [vmem:[#allocation3 + $0x78] sm:$0xf] %vm7562, %v7431
  %7594 = vst.msk [vmem:[#allocation3 + $0x7c] sm:$0xf] %vm7562, %v7433
  %7595 = vst.msk [vmem:[#allocation3 + $0x80] sm:$0xf] %vm7562, %v7435
  %7596 = vst.msk [vmem:[#allocation3 + $0x84] sm:$0xf] %vm7562, %v7437
  %7597 = vst.msk [vmem:[#allocation3 + $0x88] sm:$0xf] %vm7562, %v7439
  %7598 = vst.msk [vmem:[#allocation3 + $0x8c] sm:$0xf] %vm7562, %v7441
  %7599 = vst.msk [vmem:[#allocation3 + $0x90] sm:$0xf] %vm7562, %v7443
  %7600 = vst.msk [vmem:[#allocation3 + $0x94] sm:$0xf] %vm7562, %v7445
  %7601 = vst.msk [vmem:[#allocation3 + $0x98] sm:$0xf] %vm7562, %v7447
  %7602 = vst.msk [vmem:[#allocation3 + $0x9c] sm:$0xf] %vm7562, %v7449
  %7603 = vst.msk [vmem:[#allocation3 + $0xa0] sm:$0xf] %vm7562, %v7451
  %7604 = vst.msk [vmem:[#allocation3 + $0xa4] sm:$0xf] %vm7562, %v7453
  %7605 = vst.msk [vmem:[#allocation3 + $0xa8] sm:$0xf] %vm7562, %v7455
  %7606 = vst.msk [vmem:[#allocation3 + $0xac] sm:$0xf] %vm7562, %v7457
  %7607 = vst.msk [vmem:[#allocation3 + $0xb0] sm:$0xf] %vm7562, %v7459
  %7608 = vst.msk [vmem:[#allocation3 + $0xb4] sm:$0xf] %vm7562, %v7461
  %7609 = vst.msk [vmem:[#allocation3 + $0xb8] sm:$0xf] %vm7562, %v7463
  %7610 = vst.msk [vmem:[#allocation3 + $0xbc] sm:$0xf] %vm7562, %v7465
  %7611 = vst.msk [vmem:[#allocation3 + $0xc0] sm:$0xf] %vm7562, %v7467
  %7612 = vst.msk [vmem:[#allocation3 + $0xc4] sm:$0xf] %vm7562, %v7469
  %7613 = vst.msk [vmem:[#allocation3 + $0xc8] sm:$0xf] %vm7562, %v7471
  %7614 = vst.msk [vmem:[#allocation3 + $0xcc] sm:$0xf] %vm7562, %v7473
  %7615 = vst.msk [vmem:[#allocation3 + $0xd0] sm:$0xf] %vm7562, %v7475
  %7616 = vst.msk [vmem:[#allocation3 + $0xd4] sm:$0xf] %vm7562, %v7477
  %7617 = vst.msk [vmem:[#allocation3 + $0xd8] sm:$0xf] %vm7562, %v7479
  %7618 = vst.msk [vmem:[#allocation3 + $0xdc] sm:$0xf] %vm7562, %v7481
  %7619 = vst.msk [vmem:[#allocation3 + $0xe0] sm:$0xf] %vm7562, %v7483
  %7620 = vst.msk [vmem:[#allocation3 + $0xe4] sm:$0xf] %vm7562, %v7485
  %7621 = vst.msk [vmem:[#allocation3 + $0xe8] sm:$0xf] %vm7562, %v7487
  %7622 = vst.msk [vmem:[#allocation3 + $0xec] sm:$0xf] %vm7562, %v7489
  %7623 = vst.msk [vmem:[#allocation3 + $0xf0] sm:$0xf] %vm7562, %v7491
  %7624 = vst.msk [vmem:[#allocation3 + $0xf4] sm:$0xf] %vm7562, %v7493
  %7625 = vst.msk [vmem:[#allocation3 + $0xf8] sm:$0xf] %vm7562, %v7495
  %7626 = vst.msk [vmem:[#allocation3 + $0xfc] sm:$0xf] %vm7562, %v7497
  %v7627 = vld [vmem:[%s6120] sm:$0xe]
  %v7628 = vld [vmem:[%s6120 + $0x4] sm:$0xf]
  %v7629 = vld [vmem:[%s6120 + $0x8] sm:$0x1]
  %v7630 = vld [vmem:[%s6120 + $0xc] sm:$0xe]
  %v7631 = vld [vmem:[%s6120 + $0x10] sm:$0xf]
  %v7632 = vld [vmem:[%s6120 + $0x14] sm:$0x1]
  %v7633 = vld [vmem:[%s6120 + $0x18] sm:$0xe]
  %v7634 = vld [vmem:[%s6120 + $0x1c] sm:$0xf]
  %v7635 = vld [vmem:[%s6120 + $0x20] sm:$0x1]
  %v7636 = vld [vmem:[%s6120 + $0x24] sm:$0xe]
  %v7637 = vld [vmem:[%s6120 + $0x28] sm:$0xf]
  %v7638 = vld [vmem:[%s6120 + $0x2c] sm:$0x1]
  %v7639 = vld [vmem:[%s6120 + $0x30] sm:$0xe]
  %v7640 = vld [vmem:[%s6120 + $0x34] sm:$0xf]
  %v7641 = vld [vmem:[%s6120 + $0x38] sm:$0x1]
  %v7642 = vld [vmem:[%s6120 + $0x3c] sm:$0xe]
  %v7643 = vld [vmem:[%s6120 + $0x40] sm:$0xf]
  %v7644 = vld [vmem:[%s6120 + $0x44] sm:$0x1]
  %v7645 = vld [vmem:[%s6120 + $0x48] sm:$0xe]
  %v7646 = vld [vmem:[%s6120 + $0x4c] sm:$0xf]
  %v7647 = vld [vmem:[%s6120 + $0x50] sm:$0x1]
  %v7648 = vld [vmem:[%s6120 + $0x54] sm:$0xe]
  %v7649 = vld [vmem:[%s6120 + $0x58] sm:$0xf]
  %v7650 = vld [vmem:[%s6120 + $0x5c] sm:$0x1]
  %v7651 = vld [vmem:[%s6120 + $0x60] sm:$0xe]
  %v7652 = vld [vmem:[%s6120 + $0x64] sm:$0xf]
  %v7653 = vld [vmem:[%s6120 + $0x68] sm:$0x1]
  %v7654 = vld [vmem:[%s6120 + $0x6c] sm:$0xe]
  %v7655 = vld [vmem:[%s6120 + $0x70] sm:$0xf]
  %v7656 = vld [vmem:[%s6120 + $0x74] sm:$0x1]
  %v7657 = vld [vmem:[%s6120 + $0x78] sm:$0xe]
  %v7658 = vld [vmem:[%s6120 + $0x7c] sm:$0xf]
  %v7659 = vld [vmem:[%s6120 + $0x80] sm:$0x1]
  %v7660 = vld [vmem:[%s6120 + $0x84] sm:$0xe]
  %v7661 = vld [vmem:[%s6120 + $0x88] sm:$0xf]
  %v7662 = vld [vmem:[%s6120 + $0x8c] sm:$0x1]
  %v7663 = vld [vmem:[%s6120 + $0x90] sm:$0xe]
  %v7664 = vld [vmem:[%s6120 + $0x94] sm:$0xf]
  %v7665 = vld [vmem:[%s6120 + $0x98] sm:$0x1]
  %v7666 = vld [vmem:[%s6120 + $0x9c] sm:$0xe]
  %v7667 = vld [vmem:[%s6120 + $0xa0] sm:$0xf]
  %v7668 = vld [vmem:[%s6120 + $0xa4] sm:$0x1]
  %v7669 = vld [vmem:[%s6120 + $0xa8] sm:$0xe]
  %v7670 = vld [vmem:[%s6120 + $0xac] sm:$0xf]
  %v7671 = vld [vmem:[%s6120 + $0xb0] sm:$0x1]
  %v7672 = vld [vmem:[%s6120 + $0xb4] sm:$0xe]
  %v7673 = vld [vmem:[%s6120 + $0xb8] sm:$0xf]
  %v7674 = vld [vmem:[%s6120 + $0xbc] sm:$0x1]
  %v7675 = vld [vmem:[%s6120 + $0xd8] sm:$0xe]
  %v7676 = vld [vmem:[%s6120 + $0xdc] sm:$0xf]
  %v7677 = vld [vmem:[%s6120 + $0xe0] sm:$0x1]
  %v7678 = vld [vmem:[%s6120 + $0xe4] sm:$0xe]
  %v7679 = vld [vmem:[%s6120 + $0xe8] sm:$0xf]
  %v7680 = vld [vmem:[%s6120 + $0xec] sm:$0x1]
  %v7681 = vld [vmem:[%s6120 + $0xf0] sm:$0xe]
  %v7682 = vld [vmem:[%s6120 + $0xf4] sm:$0xf]
  %v7683 = vld [vmem:[%s6120 + $0xf8] sm:$0x1]
  %v7684 = vld [vmem:[%s6120 + $0xfc] sm:$0xe]
  %v7685 = vld [vmem:[%s6120 + $0x100] sm:$0xf]
  %v7686 = vld [vmem:[%s6120 + $0x104] sm:$0x1]
  %v7687 = vld [vmem:[%s6120 + $0x108] sm:$0xe]
  %v7688 = vld [vmem:[%s6120 + $0x10c] sm:$0xf]
  %v7689 = vld [vmem:[%s6120 + $0x110] sm:$0x1]
  %v7690 = vld [vmem:[%s6120 + $0x114] sm:$0xe]
  %v7691 = vld [vmem:[%s6120 + $0x118] sm:$0xf]
  %v7692 = vld [vmem:[%s6120 + $0x11c] sm:$0x1]
  %v7693 = vld [vmem:[%s6120 + $0x120] sm:$0xe]
  %v7694 = vld [vmem:[%s6120 + $0x124] sm:$0xf]
  %v7695 = vld [vmem:[%s6120 + $0x128] sm:$0x1]
  %v7696 = vld [vmem:[%s6120 + $0x12c] sm:$0xe]
  %v7697 = vld [vmem:[%s6120 + $0x130] sm:$0xf]
  %v7698 = vld [vmem:[%s6120 + $0x134] sm:$0x1]
  %v7699 = vld [vmem:[%s6120 + $0x138] sm:$0xe]
  %v7700 = vld [vmem:[%s6120 + $0x13c] sm:$0xf]
  %v7701 = vld [vmem:[%s6120 + $0x140] sm:$0x1]
  %v7702 = vld [vmem:[%s6120 + $0x144] sm:$0xe]
  %v7703 = vld [vmem:[%s6120 + $0x148] sm:$0xf]
  %v7704 = vld [vmem:[%s6120 + $0x14c] sm:$0x1]
  %v7705 = vld [vmem:[%s6120 + $0x150] sm:$0xe]
  %v7706 = vld [vmem:[%s6120 + $0x154] sm:$0xf]
  %v7707 = vld [vmem:[%s6120 + $0x158] sm:$0x1]
  %v7708 = vld [vmem:[%s6120 + $0x15c] sm:$0xe]
  %v7709 = vld [vmem:[%s6120 + $0x160] sm:$0xf]
  %v7710 = vld [vmem:[%s6120 + $0x164] sm:$0x1]
  %v7711 = vld [vmem:[%s6120 + $0x168] sm:$0xe]
  %v7712 = vld [vmem:[%s6120 + $0x16c] sm:$0xf]
  %v7713 = vld [vmem:[%s6120 + $0x170] sm:$0x1]
  %v7714 = vld [vmem:[%s6120 + $0x174] sm:$0xe]
  %v7715 = vld [vmem:[%s6120 + $0x178] sm:$0xf]
  %v7716 = vld [vmem:[%s6120 + $0x17c] sm:$0x1]
  %v7717 = vld [vmem:[%s6120 + $0x180] sm:$0xe]
  %v7718 = vld [vmem:[%s6120 + $0x184] sm:$0xf]
  %v7719 = vld [vmem:[%s6120 + $0x188] sm:$0x1]
  %v7720 = vld [vmem:[%s6120 + $0x18c] sm:$0xe]
  %v7721 = vld [vmem:[%s6120 + $0x190] sm:$0xf]
  %v7722 = vld [vmem:[%s6120 + $0x194] sm:$0x1]
  %v7819 = vrot.slane %v7627, 5
  %v7820 = vrot.slane %v7819, 4
  %v7821 = vrot.slane %v7628, 5
  %v7822 = vsel %vm3459, %v7820, %v7821
  %v7823 = vrot.slane %v7821, 4
  %v7824 = vrot.slane %v7629, 5
  %v7825 = vsel %vm3459, %v7823, %v7824
  %v7826 = vrot.slane %v7630, 5
  %v7827 = vrot.slane %v7826, 4
  %v7828 = vrot.slane %v7631, 5
  %v7829 = vsel %vm3459, %v7827, %v7828
  %v7830 = vrot.slane %v7828, 4
  %v7831 = vrot.slane %v7632, 5
  %v7832 = vsel %vm3459, %v7830, %v7831
  %v7833 = vrot.slane %v7633, 5
  %v7834 = vrot.slane %v7833, 4
  %v7835 = vrot.slane %v7634, 5
  %v7836 = vsel %vm3459, %v7834, %v7835
  %v7837 = vrot.slane %v7835, 4
  %v7838 = vrot.slane %v7635, 5
  %v7839 = vsel %vm3459, %v7837, %v7838
  %v7840 = vrot.slane %v7636, 5
  %v7841 = vrot.slane %v7840, 4
  %v7842 = vrot.slane %v7637, 5
  %v7843 = vsel %vm3459, %v7841, %v7842
  %v7844 = vrot.slane %v7842, 4
  %v7845 = vrot.slane %v7638, 5
  %v7846 = vsel %vm3459, %v7844, %v7845
  %v7847 = vrot.slane %v7639, 5
  %v7848 = vrot.slane %v7847, 4
  %v7849 = vrot.slane %v7640, 5
  %v7850 = vsel %vm3459, %v7848, %v7849
  %v7851 = vrot.slane %v7849, 4
  %v7852 = vrot.slane %v7641, 5
  %v7853 = vsel %vm3459, %v7851, %v7852
  %v7854 = vrot.slane %v7642, 5
  %v7855 = vrot.slane %v7854, 4
  %v7856 = vrot.slane %v7643, 5
  %v7857 = vsel %vm3459, %v7855, %v7856
  %v7858 = vrot.slane %v7856, 4
  %v7859 = vrot.slane %v7644, 5
  %v7860 = vsel %vm3459, %v7858, %v7859
  %v7861 = vrot.slane %v7645, 5
  %v7862 = vrot.slane %v7861, 4
  %v7863 = vrot.slane %v7646, 5
  %v7864 = vsel %vm3459, %v7862, %v7863
  %v7865 = vrot.slane %v7863, 4
  %v7866 = vrot.slane %v7647, 5
  %v7867 = vsel %vm3459, %v7865, %v7866
  %v7868 = vrot.slane %v7648, 5
  %v7869 = vrot.slane %v7868, 4
  %v7870 = vrot.slane %v7649, 5
  %v7871 = vsel %vm3459, %v7869, %v7870
  %v7872 = vrot.slane %v7870, 4
  %v7873 = vrot.slane %v7650, 5
  %v7874 = vsel %vm3459, %v7872, %v7873
  %v7875 = vrot.slane %v7651, 5
  %v7876 = vrot.slane %v7875, 4
  %v7877 = vrot.slane %v7652, 5
  %v7878 = vsel %vm3459, %v7876, %v7877
  %v7879 = vrot.slane %v7877, 4
  %v7880 = vrot.slane %v7653, 5
  %v7881 = vsel %vm3459, %v7879, %v7880
  %v7882 = vrot.slane %v7654, 5
  %v7883 = vrot.slane %v7882, 4
  %v7884 = vrot.slane %v7655, 5
  %v7885 = vsel %vm3459, %v7883, %v7884
  %v7886 = vrot.slane %v7884, 4
  %v7887 = vrot.slane %v7656, 5
  %v7888 = vsel %vm3459, %v7886, %v7887
  %v7889 = vrot.slane %v7657, 5
  %v7890 = vrot.slane %v7889, 4
  %v7891 = vrot.slane %v7658, 5
  %v7892 = vsel %vm3459, %v7890, %v7891
  %v7893 = vrot.slane %v7891, 4
  %v7894 = vrot.slane %v7659, 5
  %v7895 = vsel %vm3459, %v7893, %v7894
  %v7896 = vrot.slane %v7660, 5
  %v7897 = vrot.slane %v7896, 4
  %v7898 = vrot.slane %v7661, 5
  %v7899 = vsel %vm3459, %v7897, %v7898
  %v7900 = vrot.slane %v7898, 4
  %v7901 = vrot.slane %v7662, 5
  %v7902 = vsel %vm3459, %v7900, %v7901
  %v7903 = vrot.slane %v7663, 5
  %v7904 = vrot.slane %v7903, 4
  %v7905 = vrot.slane %v7664, 5
  %v7906 = vsel %vm3459, %v7904, %v7905
  %v7907 = vrot.slane %v7905, 4
  %v7908 = vrot.slane %v7665, 5
  %v7909 = vsel %vm3459, %v7907, %v7908
  %v7910 = vrot.slane %v7666, 5
  %v7911 = vrot.slane %v7910, 4
  %v7912 = vrot.slane %v7667, 5
  %v7913 = vsel %vm3459, %v7911, %v7912
  %v7914 = vrot.slane %v7912, 4
  %v7915 = vrot.slane %v7668, 5
  %v7916 = vsel %vm3459, %v7914, %v7915
  %v7917 = vrot.slane %v7669, 5
  %v7918 = vrot.slane %v7917, 4
  %v7919 = vrot.slane %v7670, 5
  %v7920 = vsel %vm3459, %v7918, %v7919
  %v7921 = vrot.slane %v7919, 4
  %v7922 = vrot.slane %v7671, 5
  %v7923 = vsel %vm3459, %v7921, %v7922
  %v7924 = vrot.slane %v7672, 5
  %v7925 = vrot.slane %v7924, 4
  %v7926 = vrot.slane %v7673, 5
  %v7927 = vsel %vm3459, %v7925, %v7926
  %v7928 = vrot.slane %v7926, 4
  %v7929 = vrot.slane %v7674, 5
  %v7930 = vsel %vm3459, %v7928, %v7929
  %v7931 = vrot.slane %v7675, 5
  %v7932 = vrot.slane %v7931, 4
  %v7933 = vrot.slane %v7676, 5
  %v7934 = vsel %vm3459, %v7932, %v7933
  %v7935 = vrot.slane %v7933, 4
  %v7936 = vrot.slane %v7677, 5
  %v7937 = vsel %vm3459, %v7935, %v7936
  %v7938 = vrot.slane %v7678, 5
  %v7939 = vrot.slane %v7938, 4
  %v7940 = vrot.slane %v7679, 5
  %v7941 = vsel %vm3459, %v7939, %v7940
  %v7942 = vrot.slane %v7940, 4
  %v7943 = vrot.slane %v7680, 5
  %v7944 = vsel %vm3459, %v7942, %v7943
  %v7945 = vrot.slane %v7681, 5
  %v7946 = vrot.slane %v7945, 4
  %v7947 = vrot.slane %v7682, 5
  %v7948 = vsel %vm3459, %v7946, %v7947
  %v7949 = vrot.slane %v7947, 4
  %v7950 = vrot.slane %v7683, 5
  %v7951 = vsel %vm3459, %v7949, %v7950
  %v7952 = vrot.slane %v7684, 5
  %v7953 = vrot.slane %v7952, 4
  %v7954 = vrot.slane %v7685, 5
  %v7955 = vsel %vm3459, %v7953, %v7954
  %v7956 = vrot.slane %v7954, 4
  %v7957 = vrot.slane %v7686, 5
  %v7958 = vsel %vm3459, %v7956, %v7957
  %v7959 = vrot.slane %v7687, 5
  %v7960 = vrot.slane %v7959, 4
  %v7961 = vrot.slane %v7688, 5
  %v7962 = vsel %vm3459, %v7960, %v7961
  %v7963 = vrot.slane %v7961, 4
  %v7964 = vrot.slane %v7689, 5
  %v7965 = vsel %vm3459, %v7963, %v7964
  %v7966 = vrot.slane %v7690, 5
  %v7967 = vrot.slane %v7966, 4
  %v7968 = vrot.slane %v7691, 5
  %v7969 = vsel %vm3459, %v7967, %v7968
  %v7970 = vrot.slane %v7968, 4
  %v7971 = vrot.slane %v7692, 5
  %v7972 = vsel %vm3459, %v7970, %v7971
  %v7973 = vrot.slane %v7693, 5
  %v7974 = vrot.slane %v7973, 4
  %v7975 = vrot.slane %v7694, 5
  %v7976 = vsel %vm3459, %v7974, %v7975
  %v7977 = vrot.slane %v7975, 4
  %v7978 = vrot.slane %v7695, 5
  %v7979 = vsel %vm3459, %v7977, %v7978
  %v7980 = vrot.slane %v7696, 5
  %v7981 = vrot.slane %v7980, 4
  %v7982 = vrot.slane %v7697, 5
  %v7983 = vsel %vm3459, %v7981, %v7982
  %v7984 = vrot.slane %v7982, 4
  %v7985 = vrot.slane %v7698, 5
  %v7986 = vsel %vm3459, %v7984, %v7985
  %v7987 = vrot.slane %v7699, 5
  %v7988 = vrot.slane %v7987, 4
  %v7989 = vrot.slane %v7700, 5
  %v7990 = vsel %vm3459, %v7988, %v7989
  %v7991 = vrot.slane %v7989, 4
  %v7992 = vrot.slane %v7701, 5
  %v7993 = vsel %vm3459, %v7991, %v7992
  %v7994 = vrot.slane %v7702, 5
  %v7995 = vrot.slane %v7994, 4
  %v7996 = vrot.slane %v7703, 5
  %v7997 = vsel %vm3459, %v7995, %v7996
  %v7998 = vrot.slane %v7996, 4
  %v7999 = vrot.slane %v7704, 5
  %v8000 = vsel %vm3459, %v7998, %v7999
  %v8001 = vrot.slane %v7705, 5
  %v8002 = vrot.slane %v8001, 4
  %v8003 = vrot.slane %v7706, 5
  %v8004 = vsel %vm3459, %v8002, %v8003
  %v8005 = vrot.slane %v8003, 4
  %v8006 = vrot.slane %v7707, 5
  %v8007 = vsel %vm3459, %v8005, %v8006
  %v8008 = vrot.slane %v7708, 5
  %v8009 = vrot.slane %v8008, 4
  %v8010 = vrot.slane %v7709, 5
  %v8011 = vsel %vm3459, %v8009, %v8010
  %v8012 = vrot.slane %v8010, 4
  %v8013 = vrot.slane %v7710, 5
  %v8014 = vsel %vm3459, %v8012, %v8013
  %v8015 = vrot.slane %v7711, 5
  %v8016 = vrot.slane %v8015, 4
  %v8017 = vrot.slane %v7712, 5
  %v8018 = vsel %vm3459, %v8016, %v8017
  %v8019 = vrot.slane %v8017, 4
  %v8020 = vrot.slane %v7713, 5
  %v8021 = vsel %vm3459, %v8019, %v8020
  %v8022 = vrot.slane %v7714, 5
  %v8023 = vrot.slane %v8022, 4
  %v8024 = vrot.slane %v7715, 5
  %v8025 = vsel %vm3459, %v8023, %v8024
  %v8026 = vrot.slane %v8024, 4
  %v8027 = vrot.slane %v7716, 5
  %v8028 = vsel %vm3459, %v8026, %v8027
  %v8029 = vrot.slane %v7717, 5
  %v8030 = vrot.slane %v8029, 4
  %v8031 = vrot.slane %v7718, 5
  %v8032 = vsel %vm3459, %v8030, %v8031
  %v8033 = vrot.slane %v8031, 4
  %v8034 = vrot.slane %v7719, 5
  %v8035 = vsel %vm3459, %v8033, %v8034
  %v8036 = vrot.slane %v7720, 5
  %v8037 = vrot.slane %v8036, 4
  %v8038 = vrot.slane %v7721, 5
  %v8039 = vsel %vm3459, %v8037, %v8038
  %v8040 = vrot.slane %v8038, 4
  %v8041 = vrot.slane %v7722, 5
  %v8042 = vsel %vm3459, %v8040, %v8041
  %8043 = vrot.lane.b32.xlu0 %v7822, 32
  %v8044 = vpop.permute.xlu0 %8043
  %8045 = vrot.lane.b32.xlu0 %v7825, 32
  %v8046 = vpop.permute.xlu0 %8045
  %8047 = vrot.lane.b32.xlu0 %v7829, 32
  %v8048 = vpop.permute.xlu0 %8047
  %8049 = vrot.lane.b32.xlu0 %v7832, 32
  %v8050 = vpop.permute.xlu0 %8049
  %8051 = vrot.lane.b32.xlu0 %v7836, 32
  %v8052 = vpop.permute.xlu0 %8051
  %8053 = vrot.lane.b32.xlu0 %v7839, 32
  %v8054 = vpop.permute.xlu0 %8053
  %8055 = vrot.lane.b32.xlu0 %v7843, 32
  %v8056 = vpop.permute.xlu0 %8055
  %8057 = vrot.lane.b32.xlu0 %v7846, 32
  %v8058 = vpop.permute.xlu0 %8057
  %8059 = vrot.lane.b32.xlu0 %v7850, 32
  %v8060 = vpop.permute.xlu0 %8059
  %8061 = vrot.lane.b32.xlu0 %v7853, 32
  %v8062 = vpop.permute.xlu0 %8061
  %8063 = vrot.lane.b32.xlu0 %v7857, 32
  %v8064 = vpop.permute.xlu0 %8063
  %8065 = vrot.lane.b32.xlu0 %v7860, 32
  %v8066 = vpop.permute.xlu0 %8065
  %8067 = vrot.lane.b32.xlu0 %v7864, 32
  %v8068 = vpop.permute.xlu0 %8067
  %8069 = vrot.lane.b32.xlu0 %v7867, 32
  %v8070 = vpop.permute.xlu0 %8069
  %8071 = vrot.lane.b32.xlu0 %v7871, 32
  %v8072 = vpop.permute.xlu0 %8071
  %8073 = vrot.lane.b32.xlu0 %v7874, 32
  %v8074 = vpop.permute.xlu0 %8073
  %8075 = vrot.lane.b32.xlu0 %v7878, 32
  %v8076 = vpop.permute.xlu0 %8075
  %8077 = vrot.lane.b32.xlu0 %v7881, 32
  %v8078 = vpop.permute.xlu0 %8077
  %8079 = vrot.lane.b32.xlu0 %v7885, 32
  %v8080 = vpop.permute.xlu0 %8079
  %8081 = vrot.lane.b32.xlu0 %v7888, 32
  %v8082 = vpop.permute.xlu0 %8081
  %8083 = vrot.lane.b32.xlu0 %v7892, 32
  %v8084 = vpop.permute.xlu0 %8083
  %8085 = vrot.lane.b32.xlu0 %v7895, 32
  %v8086 = vpop.permute.xlu0 %8085
  %8087 = vrot.lane.b32.xlu0 %v7899, 32
  %v8088 = vpop.permute.xlu0 %8087
  %8089 = vrot.lane.b32.xlu0 %v7902, 32
  %v8090 = vpop.permute.xlu0 %8089
  %8091 = vrot.lane.b32.xlu0 %v7906, 32
  %v8092 = vpop.permute.xlu0 %8091
  %8093 = vrot.lane.b32.xlu0 %v7909, 32
  %v8094 = vpop.permute.xlu0 %8093
  %8095 = vrot.lane.b32.xlu0 %v7913, 32
  %v8096 = vpop.permute.xlu0 %8095
  %8097 = vrot.lane.b32.xlu0 %v7916, 32
  %v8098 = vpop.permute.xlu0 %8097
  %8099 = vrot.lane.b32.xlu0 %v7920, 32
  %v8100 = vpop.permute.xlu0 %8099
  %8101 = vrot.lane.b32.xlu0 %v7923, 32
  %v8102 = vpop.permute.xlu0 %8101
  %8103 = vrot.lane.b32.xlu0 %v7927, 32
  %v8104 = vpop.permute.xlu0 %8103
  %8105 = vrot.lane.b32.xlu0 %v7930, 32
  %v8106 = vpop.permute.xlu0 %8105
  %8107 = vrot.lane.b32.xlu0 %v7934, 32
  %v8108 = vpop.permute.xlu0 %8107
  %8109 = vrot.lane.b32.xlu0 %v7937, 32
  %v8110 = vpop.permute.xlu0 %8109
  %8111 = vrot.lane.b32.xlu0 %v7941, 32
  %v8112 = vpop.permute.xlu0 %8111
  %8113 = vrot.lane.b32.xlu0 %v7944, 32
  %v8114 = vpop.permute.xlu0 %8113
  %8115 = vrot.lane.b32.xlu0 %v7948, 32
  %v8116 = vpop.permute.xlu0 %8115
  %8117 = vrot.lane.b32.xlu0 %v7951, 32
  %v8118 = vpop.permute.xlu0 %8117
  %8119 = vrot.lane.b32.xlu0 %v7955, 32
  %v8120 = vpop.permute.xlu0 %8119
  %8121 = vrot.lane.b32.xlu0 %v7958, 32
  %v8122 = vpop.permute.xlu0 %8121
  %8123 = vrot.lane.b32.xlu0 %v7962, 32
  %v8124 = vpop.permute.xlu0 %8123
  %8125 = vrot.lane.b32.xlu0 %v7965, 32
  %v8126 = vpop.permute.xlu0 %8125
  %8127 = vrot.lane.b32.xlu0 %v7969, 32
  %v8128 = vpop.permute.xlu0 %8127
  %8129 = vrot.lane.b32.xlu0 %v7972, 32
  %v8130 = vpop.permute.xlu0 %8129
  %8131 = vrot.lane.b32.xlu0 %v7976, 32
  %v8132 = vpop.permute.xlu0 %8131
  %8133 = vrot.lane.b32.xlu0 %v7979, 32
  %v8134 = vpop.permute.xlu0 %8133
  %8135 = vrot.lane.b32.xlu0 %v7983, 32
  %v8136 = vpop.permute.xlu0 %8135
  %8137 = vrot.lane.b32.xlu0 %v7986, 32
  %v8138 = vpop.permute.xlu0 %8137
  %8139 = vrot.lane.b32.xlu0 %v7990, 32
  %v8140 = vpop.permute.xlu0 %8139
  %8141 = vrot.lane.b32.xlu0 %v7993, 32
  %v8142 = vpop.permute.xlu0 %8141
  %8143 = vrot.lane.b32.xlu0 %v7997, 32
  %v8144 = vpop.permute.xlu0 %8143
  %8145 = vrot.lane.b32.xlu0 %v8000, 32
  %v8146 = vpop.permute.xlu0 %8145
  %8147 = vrot.lane.b32.xlu0 %v8004, 32
  %v8148 = vpop.permute.xlu0 %8147
  %8149 = vrot.lane.b32.xlu0 %v8007, 32
  %v8150 = vpop.permute.xlu0 %8149
  %8151 = vrot.lane.b32.xlu0 %v8011, 32
  %v8152 = vpop.permute.xlu0 %8151
  %8153 = vrot.lane.b32.xlu0 %v8014, 32
  %v8154 = vpop.permute.xlu0 %8153
  %8155 = vrot.lane.b32.xlu0 %v8018, 32
  %v8156 = vpop.permute.xlu0 %8155
  %8157 = vrot.lane.b32.xlu0 %v8021, 32
  %v8158 = vpop.permute.xlu0 %8157
  %8159 = vrot.lane.b32.xlu0 %v8025, 32
  %v8160 = vpop.permute.xlu0 %8159
  %8161 = vrot.lane.b32.xlu0 %v8028, 32
  %v8162 = vpop.permute.xlu0 %8161
  %8163 = vrot.lane.b32.xlu0 %v8032, 32
  %v8164 = vpop.permute.xlu0 %8163
  %8165 = vrot.lane.b32.xlu0 %v8035, 32
  %v8166 = vpop.permute.xlu0 %8165
  %8167 = vrot.lane.b32.xlu0 %v8039, 32
  %v8168 = vpop.permute.xlu0 %8167
  %8169 = vrot.lane.b32.xlu0 %v8042, 32
  %v8170 = vpop.permute.xlu0 %8169
  %vm8235 = vcmask 290048
  %8236 = vst.msk [vmem:[#allocation3] sm:$0xf] %vm8235, %v8044
  %8237 = vst.msk [vmem:[#allocation3 + $0x4] sm:$0xf] %vm8235, %v8046
  %8238 = vst.msk [vmem:[#allocation3 + $0x8] sm:$0xf] %vm8235, %v8048
  %8239 = vst.msk [vmem:[#allocation3 + $0xc] sm:$0xf] %vm8235, %v8050
  %8240 = vst.msk [vmem:[#allocation3 + $0x10] sm:$0xf] %vm8235, %v8052
  %8241 = vst.msk [vmem:[#allocation3 + $0x14] sm:$0xf] %vm8235, %v8054
  %8242 = vst.msk [vmem:[#allocation3 + $0x18] sm:$0xf] %vm8235, %v8056
  %8243 = vst.msk [vmem:[#allocation3 + $0x1c] sm:$0xf] %vm8235, %v8058
  %8244 = vst.msk [vmem:[#allocation3 + $0x20] sm:$0xf] %vm8235, %v8060
  %8245 = vst.msk [vmem:[#allocation3 + $0x24] sm:$0xf] %vm8235, %v8062
  %8246 = vst.msk [vmem:[#allocation3 + $0x28] sm:$0xf] %vm8235, %v8064
  %8247 = vst.msk [vmem:[#allocation3 + $0x2c] sm:$0xf] %vm8235, %v8066
  %8248 = vst.msk [vmem:[#allocation3 + $0x30] sm:$0xf] %vm8235, %v8068
  %8249 = vst.msk [vmem:[#allocation3 + $0x34] sm:$0xf] %vm8235, %v8070
  %8250 = vst.msk [vmem:[#allocation3 + $0x38] sm:$0xf] %vm8235, %v8072
  %8251 = vst.msk [vmem:[#allocation3 + $0x3c] sm:$0xf] %vm8235, %v8074
  %8252 = vst.msk [vmem:[#allocation3 + $0x40] sm:$0xf] %vm8235, %v8076
  %8253 = vst.msk [vmem:[#allocation3 + $0x44] sm:$0xf] %vm8235, %v8078
  %8254 = vst.msk [vmem:[#allocation3 + $0x48] sm:$0xf] %vm8235, %v8080
  %8255 = vst.msk [vmem:[#allocation3 + $0x4c] sm:$0xf] %vm8235, %v8082
  %8256 = vst.msk [vmem:[#allocation3 + $0x50] sm:$0xf] %vm8235, %v8084
  %8257 = vst.msk [vmem:[#allocation3 + $0x54] sm:$0xf] %vm8235, %v8086
  %8258 = vst.msk [vmem:[#allocation3 + $0x58] sm:$0xf] %vm8235, %v8088
  %8259 = vst.msk [vmem:[#allocation3 + $0x5c] sm:$0xf] %vm8235, %v8090
  %8260 = vst.msk [vmem:[#allocation3 + $0x60] sm:$0xf] %vm8235, %v8092
  %8261 = vst.msk [vmem:[#allocation3 + $0x64] sm:$0xf] %vm8235, %v8094
  %8262 = vst.msk [vmem:[#allocation3 + $0x68] sm:$0xf] %vm8235, %v8096
  %8263 = vst.msk [vmem:[#allocation3 + $0x6c] sm:$0xf] %vm8235, %v8098
  %8264 = vst.msk [vmem:[#allocation3 + $0x70] sm:$0xf] %vm8235, %v8100
  %8265 = vst.msk [vmem:[#allocation3 + $0x74] sm:$0xf] %vm8235, %v8102
  %8266 = vst.msk [vmem:[#allocation3 + $0x78] sm:$0xf] %vm8235, %v8104
  %8267 = vst.msk [vmem:[#allocation3 + $0x7c] sm:$0xf] %vm8235, %v8106
  %8268 = vst.msk [vmem:[#allocation3 + $0x80] sm:$0xf] %vm8235, %v8108
  %8269 = vst.msk [vmem:[#allocation3 + $0x84] sm:$0xf] %vm8235, %v8110
  %8270 = vst.msk [vmem:[#allocation3 + $0x88] sm:$0xf] %vm8235, %v8112
  %8271 = vst.msk [vmem:[#allocation3 + $0x8c] sm:$0xf] %vm8235, %v8114
  %8272 = vst.msk [vmem:[#allocation3 + $0x90] sm:$0xf] %vm8235, %v8116
  %8273 = vst.msk [vmem:[#allocation3 + $0x94] sm:$0xf] %vm8235, %v8118
  %8274 = vst.msk [vmem:[#allocation3 + $0x98] sm:$0xf] %vm8235, %v8120
  %8275 = vst.msk [vmem:[#allocation3 + $0x9c] sm:$0xf] %vm8235, %v8122
  %8276 = vst.msk [vmem:[#allocation3 + $0xa0] sm:$0xf] %vm8235, %v8124
  %8277 = vst.msk [vmem:[#allocation3 + $0xa4] sm:$0xf] %vm8235, %v8126
  %8278 = vst.msk [vmem:[#allocation3 + $0xa8] sm:$0xf] %vm8235, %v8128
  %8279 = vst.msk [vmem:[#allocation3 + $0xac] sm:$0xf] %vm8235, %v8130
  %8280 = vst.msk [vmem:[#allocation3 + $0xb0] sm:$0xf] %vm8235, %v8132
  %8281 = vst.msk [vmem:[#allocation3 + $0xb4] sm:$0xf] %vm8235, %v8134
  %8282 = vst.msk [vmem:[#allocation3 + $0xb8] sm:$0xf] %vm8235, %v8136
  %8283 = vst.msk [vmem:[#allocation3 + $0xbc] sm:$0xf] %vm8235, %v8138
  %8284 = vst.msk [vmem:[#allocation3 + $0xc0] sm:$0xf] %vm8235, %v8140
  %8285 = vst.msk [vmem:[#allocation3 + $0xc4] sm:$0xf] %vm8235, %v8142
  %8286 = vst.msk [vmem:[#allocation3 + $0xc8] sm:$0xf] %vm8235, %v8144
  %8287 = vst.msk [vmem:[#allocation3 + $0xcc] sm:$0xf] %vm8235, %v8146
  %8288 = vst.msk [vmem:[#allocation3 + $0xd0] sm:$0xf] %vm8235, %v8148
  %8289 = vst.msk [vmem:[#allocation3 + $0xd4] sm:$0xf] %vm8235, %v8150
  %8290 = vst.msk [vmem:[#allocation3 + $0xd8] sm:$0xf] %vm8235, %v8152
  %8291 = vst.msk [vmem:[#allocation3 + $0xdc] sm:$0xf] %vm8235, %v8154
  %8292 = vst.msk [vmem:[#allocation3 + $0xe0] sm:$0xf] %vm8235, %v8156
  %8293 = vst.msk [vmem:[#allocation3 + $0xe4] sm:$0xf] %vm8235, %v8158
  %8294 = vst.msk [vmem:[#allocation3 + $0xe8] sm:$0xf] %vm8235, %v8160
  %8295 = vst.msk [vmem:[#allocation3 + $0xec] sm:$0xf] %vm8235, %v8162
  %8296 = vst.msk [vmem:[#allocation3 + $0xf0] sm:$0xf] %vm8235, %v8164
  %8297 = vst.msk [vmem:[#allocation3 + $0xf4] sm:$0xf] %vm8235, %v8166
  %8298 = vst.msk [vmem:[#allocation3 + $0xf8] sm:$0xf] %vm8235, %v8168
  %8299 = vst.msk [vmem:[#allocation3 + $0xfc] sm:$0xf] %vm8235, %v8170
  %v8300 = vld [vmem:[#allocation3] sm:$0xf]
  %v8301 = vld [vmem:[#allocation3 + $0x4] sm:$0xf]
  %v8302 = vld [vmem:[#allocation3 + $0x8] sm:$0xf]
  %v8303 = vld [vmem:[#allocation3 + $0xc] sm:$0xf]
  %v8304 = vld [vmem:[#allocation3 + $0x10] sm:$0xf]
  %v8305 = vld [vmem:[#allocation3 + $0x14] sm:$0xf]
  %v8306 = vld [vmem:[#allocation3 + $0x18] sm:$0xf]
  %v8307 = vld [vmem:[#allocation3 + $0x1c] sm:$0xf]
  %v8308 = vld [vmem:[#allocation3 + $0x20] sm:$0xf]
  %v8309 = vld [vmem:[#allocation3 + $0x24] sm:$0xf]
  %v8310 = vld [vmem:[#allocation3 + $0x28] sm:$0xf]
  %v8311 = vld [vmem:[#allocation3 + $0x2c] sm:$0xf]
  %v8312 = vld [vmem:[#allocation3 + $0x30] sm:$0xf]
  %v8313 = vld [vmem:[#allocation3 + $0x34] sm:$0xf]
  %v8314 = vld [vmem:[#allocation3 + $0x38] sm:$0xf]
  %v8315 = vld [vmem:[#allocation3 + $0x3c] sm:$0xf]
  %v8316 = vld [vmem:[#allocation3 + $0x40] sm:$0xf]
  %v8317 = vld [vmem:[#allocation3 + $0x44] sm:$0xf]
  %v8318 = vld [vmem:[#allocation3 + $0x48] sm:$0xf]
  %v8319 = vld [vmem:[#allocation3 + $0x4c] sm:$0xf]
  %v8320 = vld [vmem:[#allocation3 + $0x50] sm:$0xf]
  %v8321 = vld [vmem:[#allocation3 + $0x54] sm:$0xf]
  %v8322 = vld [vmem:[#allocation3 + $0x58] sm:$0xf]
  %v8323 = vld [vmem:[#allocation3 + $0x5c] sm:$0xf]
  %v8324 = vld [vmem:[#allocation3 + $0x60] sm:$0xf]
  %v8325 = vld [vmem:[#allocation3 + $0x64] sm:$0xf]
  %v8326 = vld [vmem:[#allocation3 + $0x68] sm:$0xf]
  %v8327 = vld [vmem:[#allocation3 + $0x6c] sm:$0xf]
  %v8328 = vld [vmem:[#allocation3 + $0x70] sm:$0xf]
  %v8329 = vld [vmem:[#allocation3 + $0x74] sm:$0xf]
  %v8330 = vld [vmem:[#allocation3 + $0x78] sm:$0xf]
  %v8331 = vld [vmem:[#allocation3 + $0x7c] sm:$0xf]
  %v8332 = vld [vmem:[#allocation3 + $0x80] sm:$0xf]
  %v8333 = vld [vmem:[#allocation3 + $0x84] sm:$0xf]
  %v8334 = vld [vmem:[#allocation3 + $0x88] sm:$0xf]
  %v8335 = vld [vmem:[#allocation3 + $0x8c] sm:$0xf]
  %v8336 = vld [vmem:[#allocation3 + $0x90] sm:$0xf]
  %v8337 = vld [vmem:[#allocation3 + $0x94] sm:$0xf]
  %v8338 = vld [vmem:[#allocation3 + $0x98] sm:$0xf]
  %v8339 = vld [vmem:[#allocation3 + $0x9c] sm:$0xf]
  %v8340 = vld [vmem:[#allocation3 + $0xa0] sm:$0xf]
  %v8341 = vld [vmem:[#allocation3 + $0xa4] sm:$0xf]
  %v8342 = vld [vmem:[#allocation3 + $0xa8] sm:$0xf]
  %v8343 = vld [vmem:[#allocation3 + $0xac] sm:$0xf]
  %v8344 = vld [vmem:[#allocation3 + $0xb0] sm:$0xf]
  %v8345 = vld [vmem:[#allocation3 + $0xb4] sm:$0xf]
  %v8346 = vld [vmem:[#allocation3 + $0xb8] sm:$0xf]
  %v8347 = vld [vmem:[#allocation3 + $0xbc] sm:$0xf]
  %v8348 = vld [vmem:[#allocation3 + $0xc0] sm:$0xf]
  %v8349 = vld [vmem:[#allocation3 + $0xc4] sm:$0xf]
  %v8350 = vld [vmem:[#allocation3 + $0xc8] sm:$0xf]
  %v8351 = vld [vmem:[#allocation3 + $0xcc] sm:$0xf]
  %v8352 = vld [vmem:[#allocation3 + $0xd0] sm:$0xf]
  %v8353 = vld [vmem:[#allocation3 + $0xd4] sm:$0xf]
  %v8354 = vld [vmem:[#allocation3 + $0xd8] sm:$0xf]
  %v8355 = vld [vmem:[#allocation3 + $0xdc] sm:$0xf]
  %v8356 = vld [vmem:[#allocation3 + $0xe0] sm:$0xf]
  %v8357 = vld [vmem:[#allocation3 + $0xe4] sm:$0xf]
  %v8358 = vld [vmem:[#allocation3 + $0xe8] sm:$0xf]
  %v8359 = vld [vmem:[#allocation3 + $0xec] sm:$0xf]
  %v8360 = vld [vmem:[#allocation3 + $0xf0] sm:$0xf]
  %v8361 = vld [vmem:[#allocation3 + $0xf4] sm:$0xf]
  %v8362 = vld [vmem:[#allocation3 + $0xf8] sm:$0xf]
  %v8363 = vld [vmem:[#allocation3 + $0xfc] sm:$0xf]
  %v8364 = vld [vmem:[%s3] sm:$0xf]
  %v8365 = vld [vmem:[%s3 + $0x4] sm:$0xf]
  %v8366 = vld [vmem:[%s3 + $0x8] sm:$0xf]
  %v8367 = vld [vmem:[%s3 + $0xc] sm:$0xf]
  %v8368 = vld [vmem:[%s3 + $0x10] sm:$0x3]
  %v8369 = vld [vmem:[%s4] sm:$0x1]
  %v8371 = vlaneseq
  %v8372 = vshrl.u32 %v8371, 7
  %v8373 = vsub.s32 0, %v8372
  %v8374 = vrot.slane %v8369, %v8373
  %v8440 = vunpack.c.l.b16 %v8300
  %v8441 = vunpack.c.l.b16 %v8301
  %v8442 = vunpack.c.l.b16 %v8302
  %v8443 = vunpack.c.l.b16 %v8303
  %v8444 = vunpack.c.l.b16 %v8304
  %v8445 = vunpack.c.l.b16 %v8305
  %v8446 = vunpack.c.l.b16 %v8306
  %v8447 = vunpack.c.l.b16 %v8307
  %v8448 = vunpack.c.l.b16 %v8308
  %v8449 = vunpack.c.l.b16 %v8309
  %v8450 = vunpack.c.l.b16 %v8310
  %v8451 = vunpack.c.l.b16 %v8311
  %v8452 = vunpack.c.l.b16 %v8312
  %v8453 = vunpack.c.l.b16 %v8313
  %v8454 = vunpack.c.l.b16 %v8314
  %v8455 = vunpack.c.l.b16 %v8315
  %v8456 = vunpack.c.l.b16 %v8316
  %v8457 = vunpack.c.l.b16 %v8317
  %v8458 = vunpack.c.l.b16 %v8318
  %v8459 = vunpack.c.l.b16 %v8319
  %v8460 = vunpack.c.l.b16 %v8320
  %v8461 = vunpack.c.l.b16 %v8321
  %v8462 = vunpack.c.l.b16 %v8322
  %v8463 = vunpack.c.l.b16 %v8323
  %v8464 = vunpack.c.l.b16 %v8324
  %v8465 = vunpack.c.l.b16 %v8325
  %v8466 = vunpack.c.l.b16 %v8326
  %v8467 = vunpack.c.l.b16 %v8327
  %v8468 = vunpack.c.l.b16 %v8328
  %v8469 = vunpack.c.l.b16 %v8329
  %v8470 = vunpack.c.l.b16 %v8330
  %v8471 = vunpack.c.l.b16 %v8331
  %v8472 = vunpack.c.l.b16 %v8332
  %v8473 = vunpack.c.l.b16 %v8333
  %v8474 = vunpack.c.l.b16 %v8334
  %v8475 = vunpack.c.l.b16 %v8335
  %v8476 = vunpack.c.l.b16 %v8336
  %v8477 = vunpack.c.l.b16 %v8337
  %v8478 = vunpack.c.l.b16 %v8338
  %v8479 = vunpack.c.l.b16 %v8339
  %v8480 = vunpack.c.l.b16 %v8340
  %v8481 = vunpack.c.l.b16 %v8341
  %v8482 = vunpack.c.l.b16 %v8342
  %v8483 = vunpack.c.l.b16 %v8343
  %v8484 = vunpack.c.l.b16 %v8344
  %v8485 = vunpack.c.l.b16 %v8345
  %v8486 = vunpack.c.l.b16 %v8346
  %v8487 = vunpack.c.l.b16 %v8347
  %v8488 = vunpack.c.l.b16 %v8348
  %v8489 = vunpack.c.l.b16 %v8349
  %v8490 = vunpack.c.l.b16 %v8350
  %v8491 = vunpack.c.l.b16 %v8351
  %v8492 = vunpack.c.l.b16 %v8352
  %v8493 = vunpack.c.l.b16 %v8353
  %v8494 = vunpack.c.l.b16 %v8354
  %v8495 = vunpack.c.l.b16 %v8355
  %v8496 = vunpack.c.l.b16 %v8356
  %v8497 = vunpack.c.l.b16 %v8357
  %v8498 = vunpack.c.l.b16 %v8358
  %v8499 = vunpack.c.l.b16 %v8359
  %v8500 = vunpack.c.l.b16 %v8360
  %v8501 = vunpack.c.l.b16 %v8361
  %v8502 = vunpack.c.l.b16 %v8362
  %v8503 = vunpack.c.l.b16 %v8363
  %v8504 = vpack.c.b16 %v8441, %v8440
  %v8505 = vpack.c.b16 %v8443, %v8442
  %v8506 = vpack.c.b16 %v8445, %v8444
  %v8507 = vpack.c.b16 %v8447, %v8446
  %v8508 = vpack.c.b16 %v8449, %v8448
  %v8509 = vpack.c.b16 %v8451, %v8450
  %v8510 = vpack.c.b16 %v8453, %v8452
  %v8511 = vpack.c.b16 %v8455, %v8454
  %v8512 = vpack.c.b16 %v8457, %v8456
  %v8513 = vpack.c.b16 %v8459, %v8458
  %v8514 = vpack.c.b16 %v8461, %v8460
  %v8515 = vpack.c.b16 %v8463, %v8462
  %v8516 = vpack.c.b16 %v8465, %v8464
  %v8517 = vpack.c.b16 %v8467, %v8466
  %v8518 = vpack.c.b16 %v8469, %v8468
  %v8519 = vpack.c.b16 %v8471, %v8470
  %v8520 = vpack.c.b16 %v8473, %v8472
  %v8521 = vpack.c.b16 %v8475, %v8474
  %v8522 = vpack.c.b16 %v8477, %v8476
  %v8523 = vpack.c.b16 %v8479, %v8478
  %v8524 = vpack.c.b16 %v8481, %v8480
  %v8525 = vpack.c.b16 %v8483, %v8482
  %v8526 = vpack.c.b16 %v8485, %v8484
  %v8527 = vpack.c.b16 %v8487, %v8486
  %v8528 = vpack.c.b16 %v8489, %v8488
  %v8529 = vpack.c.b16 %v8491, %v8490
  %v8530 = vpack.c.b16 %v8493, %v8492
  %v8531 = vpack.c.b16 %v8495, %v8494
  %v8532 = vpack.c.b16 %v8497, %v8496
  %v8533 = vpack.c.b16 %v8499, %v8498
  %v8534 = vpack.c.b16 %v8501, %v8500
  %v8535 = vpack.c.b16 %v8503, %v8502
  %v8541 = vunpack.c.l.b16 %v8364
  %v8542 = vunpack.c.l.b16 %v8365
  %v8543 = vunpack.c.l.b16 %v8366
  %v8544 = vunpack.c.l.b16 %v8367
  %v8545 = vunpack.c.l.b16 %v8368
  %v8546 = vpack.c.b16 %v8542, %v8541
  %v8547 = vpack.c.b16 %v8544, %v8543
  %v8548 = vpack.c.b16 %v8545, %v8545
  %vm8551 = vcmask 293888
  %v8553 = vsel %vm8551, %v8504, 0
  %v8556 = vsel %vm8551, %v8505, 0
  %v8559 = vsel %vm8551, %v8506, 0
  %v8562 = vsel %vm8551, %v8507, 0
  %v8565 = vsel %vm8551, %v8508, 0
  %v8568 = vsel %vm8551, %v8509, 0
  %v8571 = vsel %vm8551, %v8510, 0
  %v8574 = vsel %vm8551, %v8511, 0
  %v8577 = vsel %vm8551, %v8512, 0
  %v8580 = vsel %vm8551, %v8513, 0
  %v8583 = vsel %vm8551, %v8514, 0
  %v8586 = vsel %vm8551, %v8515, 0
  %v8589 = vsel %vm8551, %v8516, 0
  %v8592 = vsel %vm8551, %v8517, 0
  %v8595 = vsel %vm8551, %v8518, 0
  %v8598 = vsel %vm8551, %v8519, 0
  %v8601 = vsel %vm8551, %v8520, 0
  %v8604 = vsel %vm8551, %v8521, 0
  %v8607 = vsel %vm8551, %v8522, 0
  %v8610 = vsel %vm8551, %v8523, 0
  %v8613 = vsel %vm8551, %v8524, 0
  %v8616 = vsel %vm8551, %v8525, 0
  %v8619 = vsel %vm8551, %v8526, 0
  %v8622 = vsel %vm8551, %v8527, 0
  %v8625 = vsel %vm8551, %v8528, 0
  %v8628 = vsel %vm8551, %v8529, 0
  %v8631 = vsel %vm8551, %v8530, 0
  %v8634 = vsel %vm8551, %v8531, 0
  %v8637 = vsel %vm8551, %v8532, 0
  %v8640 = vsel %vm8551, %v8533, 0
  %v8643 = vsel %vm8551, %v8534, 0
  %v8646 = vsel %vm8551, %v8535, 0
  %vm8648 = vcmask 1041408
  %v8650 = vsel %vm8648, %v8548, 0
  %8652 = vmatprep.subr.bf16.mxu0 0
  %8653 = vmatpush1.bf16.msra.mxu0 0
  %8654 = vmatprep.subr.bf16.mxu0 0
  %8655 = vmatpush1.bf16.msra.mxu0 0
  %8656 = vmatprep.subr.bf16.mxu0 0
  %8657 = vmatpush1.bf16.msra.mxu0 0
  %8658 = vmatprep.subr.bf16.mxu0 0
  %8659 = vmatpush1.bf16.msra.mxu0 0
  %8660 = vmatprep.subr.bf16.mxu0 0
  %8661 = vmatpush1.bf16.msra.mxu0 0
  %8662 = vmatprep.subr.bf16.mxu0 0
  %8663 = vmatpush1.bf16.msra.mxu0 %v8650
  %8664 = vmatprep.subr.bf16.mxu0 0
  %8665 = vmatpush1.bf16.msra.mxu0 %v8547
  %8666 = vmatprep.subr.bf16.mxu0 0
  %8667 = vmatpush1.bf16.msra.mxu0 %v8546
  %8668 = vmatprep.subr.bf16.mxu0 0
  %8669 = vmatpush2.bf16.msra.mxu0 0
  %8670 = vmatprep.subr.bf16.mxu0 0
  %8671 = vmatpush2.bf16.msra.mxu0 0
  %8672 = vmatprep.subr.bf16.mxu0 0
  %8673 = vmatpush2.bf16.msra.mxu0 0
  %8674 = vmatprep.subr.bf16.mxu0 0
  %8675 = vmatpush2.bf16.msra.mxu0 0
  %8676 = vmatprep.subr.bf16.mxu0 0
  %8677 = vmatpush2.bf16.msra.mxu0 0
  %8678 = vmatprep.subr.bf16.mxu0 0
  %8679 = vmatpush2.bf16.msra.mxu0 0
  %8680 = vmatprep.subr.bf16.mxu0 0
  %8681 = vmatpush2.bf16.msra.mxu0 0
  %8682 = vmatprep.subr.bf16.mxu0 0
  %8683 = vmatpush2.bf16.msra.mxu0 0
  %8684 = vmatprep.mubr.bf16.mxu0 0
  %8685 = vmatmul.mubr.bf16.gmra.mxu0 %v8553
  %v8686 = vpop.f32.mrf.mxu0
  %v8687 = vadd.f32 %v8374, %v8686
  %v8688 = vpop.f32.mrf.mxu0
  %v8689 = vpop.f32.mrf.mxu0
  %v8690 = vadd.f32 %v8374, %v8689
  %v8691 = vpop.f32.mrf.mxu0
  %8692 = vmatprep.mubr.bf16.mxu0 0
  %8693 = vmatmul.mubr.bf16.gmra.mxu0 %v8556
  %v8694 = vpop.f32.mrf.mxu0
  %v8695 = vadd.f32 %v8374, %v8694
  %v8696 = vpop.f32.mrf.mxu0
  %v8697 = vpop.f32.mrf.mxu0
  %v8698 = vadd.f32 %v8374, %v8697
  %v8699 = vpop.f32.mrf.mxu0
  %8700 = vmatprep.mubr.bf16.mxu0 0
  %8701 = vmatmul.mubr.bf16.gmra.mxu0 %v8559
  %v8702 = vpop.f32.mrf.mxu0
  %v8703 = vadd.f32 %v8374, %v8702
  %v8704 = vpop.f32.mrf.mxu0
  %v8705 = vpop.f32.mrf.mxu0
  %v8706 = vadd.f32 %v8374, %v8705
  %v8707 = vpop.f32.mrf.mxu0
  %8708 = vmatprep.mubr.bf16.mxu0 0
  %8709 = vmatmul.mubr.bf16.gmra.mxu0 %v8562
  %v8710 = vpop.f32.mrf.mxu0
  %v8711 = vadd.f32 %v8374, %v8710
  %v8712 = vpop.f32.mrf.mxu0
  %v8713 = vpop.f32.mrf.mxu0
  %v8714 = vadd.f32 %v8374, %v8713
  %v8715 = vpop.f32.mrf.mxu0
  %8716 = vmatprep.mubr.bf16.mxu0 0
  %8717 = vmatmul.mubr.bf16.gmra.mxu0 %v8565
  %v8718 = vpop.f32.mrf.mxu0
  %v8719 = vadd.f32 %v8374, %v8718
  %v8720 = vpop.f32.mrf.mxu0
  %v8721 = vpop.f32.mrf.mxu0
  %v8722 = vadd.f32 %v8374, %v8721
  %v8723 = vpop.f32.mrf.mxu0
  %8724 = vmatprep.mubr.bf16.mxu0 0
  %8725 = vmatmul.mubr.bf16.gmra.mxu0 %v8568
  %v8726 = vpop.f32.mrf.mxu0
  %v8727 = vadd.f32 %v8374, %v8726
  %v8728 = vpop.f32.mrf.mxu0
  %v8729 = vpop.f32.mrf.mxu0
  %v8730 = vadd.f32 %v8374, %v8729
  %v8731 = vpop.f32.mrf.mxu0
  %8732 = vmatprep.mubr.bf16.mxu0 0
  %8733 = vmatmul.mubr.bf16.gmra.mxu0 %v8571
  %v8734 = vpop.f32.mrf.mxu0
  %v8735 = vadd.f32 %v8374, %v8734
  %v8736 = vpop.f32.mrf.mxu0
  %v8737 = vpop.f32.mrf.mxu0
  %v8738 = vadd.f32 %v8374, %v8737
  %v8739 = vpop.f32.mrf.mxu0
  %8740 = vmatprep.mubr.bf16.mxu0 0
  %8741 = vmatmul.mubr.bf16.gmra.mxu0 %v8574
  %v8742 = vpop.f32.mrf.mxu0
  %v8743 = vadd.f32 %v8374, %v8742
  %v8744 = vpop.f32.mrf.mxu0
  %v8745 = vpop.f32.mrf.mxu0
  %v8746 = vadd.f32 %v8374, %v8745
  %v8747 = vpop.f32.mrf.mxu0
  %8748 = vmatprep.mubr.bf16.mxu0 0
  %8749 = vmatmul.mubr.bf16.gmra.mxu0 %v8577
  %v8750 = vpop.f32.mrf.mxu0
  %v8751 = vadd.f32 %v8374, %v8750
  %v8752 = vpop.f32.mrf.mxu0
  %v8753 = vpop.f32.mrf.mxu0
  %v8754 = vadd.f32 %v8374, %v8753
  %v8755 = vpop.f32.mrf.mxu0
  %8756 = vmatprep.mubr.bf16.mxu0 0
  %8757 = vmatmul.mubr.bf16.gmra.mxu0 %v8580
  %v8758 = vpop.f32.mrf.mxu0
  %v8759 = vadd.f32 %v8374, %v8758
  %v8760 = vpop.f32.mrf.mxu0
  %v8761 = vpop.f32.mrf.mxu0
  %v8762 = vadd.f32 %v8374, %v8761
  %v8763 = vpop.f32.mrf.mxu0
  %8764 = vmatprep.mubr.bf16.mxu0 0
  %8765 = vmatmul.mubr.bf16.gmra.mxu0 %v8583
  %v8766 = vpop.f32.mrf.mxu0
  %v8767 = vadd.f32 %v8374, %v8766
  %v8768 = vpop.f32.mrf.mxu0
  %v8769 = vpop.f32.mrf.mxu0
  %v8770 = vadd.f32 %v8374, %v8769
  %v8771 = vpop.f32.mrf.mxu0
  %8772 = vmatprep.mubr.bf16.mxu0 0
  %8773 = vmatmul.mubr.bf16.gmra.mxu0 %v8586
  %v8774 = vpop.f32.mrf.mxu0
  %v8775 = vadd.f32 %v8374, %v8774
  %v8776 = vpop.f32.mrf.mxu0
  %v8777 = vpop.f32.mrf.mxu0
  %v8778 = vadd.f32 %v8374, %v8777
  %v8779 = vpop.f32.mrf.mxu0
  %8780 = vmatprep.mubr.bf16.mxu0 0
  %8781 = vmatmul.mubr.bf16.gmra.mxu0 %v8589
  %v8782 = vpop.f32.mrf.mxu0
  %v8783 = vadd.f32 %v8374, %v8782
  %v8784 = vpop.f32.mrf.mxu0
  %v8785 = vpop.f32.mrf.mxu0
  %v8786 = vadd.f32 %v8374, %v8785
  %v8787 = vpop.f32.mrf.mxu0
  %8788 = vmatprep.mubr.bf16.mxu0 0
  %8789 = vmatmul.mubr.bf16.gmra.mxu0 %v8592
  %v8790 = vpop.f32.mrf.mxu0
  %v8791 = vadd.f32 %v8374, %v8790
  %v8792 = vpop.f32.mrf.mxu0
  %v8793 = vpop.f32.mrf.mxu0
  %v8794 = vadd.f32 %v8374, %v8793
  %v8795 = vpop.f32.mrf.mxu0
  %8796 = vmatprep.mubr.bf16.mxu0 0
  %8797 = vmatmul.mubr.bf16.gmra.mxu0 %v8595
  %v8798 = vpop.f32.mrf.mxu0
  %v8799 = vadd.f32 %v8374, %v8798
  %v8800 = vpop.f32.mrf.mxu0
  %v8801 = vpop.f32.mrf.mxu0
  %v8802 = vadd.f32 %v8374, %v8801
  %v8803 = vpop.f32.mrf.mxu0
  %8804 = vmatprep.mubr.bf16.mxu0 0
  %8805 = vmatmul.mubr.bf16.gmra.mxu0 %v8598
  %v8806 = vpop.f32.mrf.mxu0
  %v8807 = vadd.f32 %v8374, %v8806
  %v8808 = vpop.f32.mrf.mxu0
  %v8809 = vpop.f32.mrf.mxu0
  %v8810 = vadd.f32 %v8374, %v8809
  %v8811 = vpop.f32.mrf.mxu0
  %8812 = vmatprep.mubr.bf16.mxu0 0
  %8813 = vmatmul.mubr.bf16.gmra.mxu0 %v8601
  %v8814 = vpop.f32.mrf.mxu0
  %v8815 = vadd.f32 %v8374, %v8814
  %v8816 = vpop.f32.mrf.mxu0
  %v8817 = vpop.f32.mrf.mxu0
  %v8818 = vadd.f32 %v8374, %v8817
  %v8819 = vpop.f32.mrf.mxu0
  %8820 = vmatprep.mubr.bf16.mxu0 0
  %8821 = vmatmul.mubr.bf16.gmra.mxu0 %v8604
  %v8822 = vpop.f32.mrf.mxu0
  %v8823 = vadd.f32 %v8374, %v8822
  %v8824 = vpop.f32.mrf.mxu0
  %v8825 = vpop.f32.mrf.mxu0
  %v8826 = vadd.f32 %v8374, %v8825
  %v8827 = vpop.f32.mrf.mxu0
  %8828 = vmatprep.mubr.bf16.mxu0 0
  %8829 = vmatmul.mubr.bf16.gmra.mxu0 %v8607
  %v8830 = vpop.f32.mrf.mxu0
  %v8831 = vadd.f32 %v8374, %v8830
  %v8832 = vpop.f32.mrf.mxu0
  %v8833 = vpop.f32.mrf.mxu0
  %v8834 = vadd.f32 %v8374, %v8833
  %v8835 = vpop.f32.mrf.mxu0
  %8836 = vmatprep.mubr.bf16.mxu0 0
  %8837 = vmatmul.mubr.bf16.gmra.mxu0 %v8610
  %v8838 = vpop.f32.mrf.mxu0
  %v8839 = vadd.f32 %v8374, %v8838
  %v8840 = vpop.f32.mrf.mxu0
  %v8841 = vpop.f32.mrf.mxu0
  %v8842 = vadd.f32 %v8374, %v8841
  %v8843 = vpop.f32.mrf.mxu0
  %8844 = vmatprep.mubr.bf16.mxu0 0
  %8845 = vmatmul.mubr.bf16.gmra.mxu0 %v8613
  %v8846 = vpop.f32.mrf.mxu0
  %v8847 = vadd.f32 %v8374, %v8846
  %v8848 = vpop.f32.mrf.mxu0
  %v8849 = vpop.f32.mrf.mxu0
  %v8850 = vadd.f32 %v8374, %v8849
  %v8851 = vpop.f32.mrf.mxu0
  %8852 = vmatprep.mubr.bf16.mxu0 0
  %8853 = vmatmul.mubr.bf16.gmra.mxu0 %v8616
  %v8854 = vpop.f32.mrf.mxu0
  %v8855 = vadd.f32 %v8374, %v8854
  %v8856 = vpop.f32.mrf.mxu0
  %v8857 = vpop.f32.mrf.mxu0
  %v8858 = vadd.f32 %v8374, %v8857
  %v8859 = vpop.f32.mrf.mxu0
  %8860 = vmatprep.mubr.bf16.mxu0 0
  %8861 = vmatmul.mubr.bf16.gmra.mxu0 %v8619
  %v8862 = vpop.f32.mrf.mxu0
  %v8863 = vadd.f32 %v8374, %v8862
  %v8864 = vpop.f32.mrf.mxu0
  %v8865 = vpop.f32.mrf.mxu0
  %v8866 = vadd.f32 %v8374, %v8865
  %v8867 = vpop.f32.mrf.mxu0
  %8868 = vmatprep.mubr.bf16.mxu0 0
  %8869 = vmatmul.mubr.bf16.gmra.mxu0 %v8622
  %v8870 = vpop.f32.mrf.mxu0
  %v8871 = vadd.f32 %v8374, %v8870
  %v8872 = vpop.f32.mrf.mxu0
  %v8873 = vpop.f32.mrf.mxu0
  %v8874 = vadd.f32 %v8374, %v8873
  %v8875 = vpop.f32.mrf.mxu0
  %8876 = vmatprep.mubr.bf16.mxu0 0
  %8877 = vmatmul.mubr.bf16.gmra.mxu0 %v8625
  %v8878 = vpop.f32.mrf.mxu0
  %v8879 = vadd.f32 %v8374, %v8878
  %v8880 = vpop.f32.mrf.mxu0
  %v8881 = vpop.f32.mrf.mxu0
  %v8882 = vadd.f32 %v8374, %v8881
  %v8883 = vpop.f32.mrf.mxu0
  %8884 = vmatprep.mubr.bf16.mxu0 0
  %8885 = vmatmul.mubr.bf16.gmra.mxu0 %v8628
  %v8886 = vpop.f32.mrf.mxu0
  %v8887 = vadd.f32 %v8374, %v8886
  %v8888 = vpop.f32.mrf.mxu0
  %v8889 = vpop.f32.mrf.mxu0
  %v8890 = vadd.f32 %v8374, %v8889
  %v8891 = vpop.f32.mrf.mxu0
  %8892 = vmatprep.mubr.bf16.mxu0 0
  %8893 = vmatmul.mubr.bf16.gmra.mxu0 %v8631
  %v8894 = vpop.f32.mrf.mxu0
  %v8895 = vadd.f32 %v8374, %v8894
  %v8896 = vpop.f32.mrf.mxu0
  %v8897 = vpop.f32.mrf.mxu0
  %v8898 = vadd.f32 %v8374, %v8897
  %v8899 = vpop.f32.mrf.mxu0
  %8900 = vmatprep.mubr.bf16.mxu0 0
  %8901 = vmatmul.mubr.bf16.gmra.mxu0 %v8634
  %v8902 = vpop.f32.mrf.mxu0
  %v8903 = vadd.f32 %v8374, %v8902
  %v8904 = vpop.f32.mrf.mxu0
  %v8905 = vpop.f32.mrf.mxu0
  %v8906 = vadd.f32 %v8374, %v8905
  %v8907 = vpop.f32.mrf.mxu0
  %8908 = vmatprep.mubr.bf16.mxu0 0
  %8909 = vmatmul.mubr.bf16.gmra.mxu0 %v8637
  %v8910 = vpop.f32.mrf.mxu0
  %v8911 = vadd.f32 %v8374, %v8910
  %v8912 = vpop.f32.mrf.mxu0
  %v8913 = vpop.f32.mrf.mxu0
  %v8914 = vadd.f32 %v8374, %v8913
  %v8915 = vpop.f32.mrf.mxu0
  %8916 = vmatprep.mubr.bf16.mxu0 0
  %8917 = vmatmul.mubr.bf16.gmra.mxu0 %v8640
  %v8918 = vpop.f32.mrf.mxu0
  %v8919 = vadd.f32 %v8374, %v8918
  %v8920 = vpop.f32.mrf.mxu0
  %v8921 = vpop.f32.mrf.mxu0
  %v8922 = vadd.f32 %v8374, %v8921
  %v8923 = vpop.f32.mrf.mxu0
  %8924 = vmatprep.mubr.bf16.mxu0 0
  %8925 = vmatmul.mubr.bf16.gmra.mxu0 %v8643
  %v8926 = vpop.f32.mrf.mxu0
  %v8927 = vadd.f32 %v8374, %v8926
  %v8928 = vpop.f32.mrf.mxu0
  %v8929 = vpop.f32.mrf.mxu0
  %v8930 = vadd.f32 %v8374, %v8929
  %v8931 = vpop.f32.mrf.mxu0
  %8932 = vmatprep.mubr.bf16.mxu0 0
  %8933 = vmatmul.mubr.bf16.gmra.mxu0 %v8646
  %v8934 = vpop.f32.mrf.mxu0
  %v8935 = vadd.f32 %v8374, %v8934
  %v8936 = vpop.f32.mrf.mxu0
  %v8937 = vpop.f32.mrf.mxu0
  %v8938 = vadd.f32 %v8374, %v8937
  %v8939 = vpop.f32.mrf.mxu0
  %8940 = vdwg.mxu0
  %v8941 = vmax.f32 %v8687, 0.0
  %v8942 = vmax.f32 %v8690, 0.0
  %v8943 = vmax.f32 %v8695, 0.0
  %v8944 = vmax.f32 %v8698, 0.0
  %v8945 = vmax.f32 %v8703, 0.0
  %v8946 = vmax.f32 %v8706, 0.0
  %v8947 = vmax.f32 %v8711, 0.0
  %v8948 = vmax.f32 %v8714, 0.0
  %v8949 = vmax.f32 %v8719, 0.0
  %v8950 = vmax.f32 %v8722, 0.0
  %v8951 = vmax.f32 %v8727, 0.0
  %v8952 = vmax.f32 %v8730, 0.0
  %v8953 = vmax.f32 %v8735, 0.0
  %v8954 = vmax.f32 %v8738, 0.0
  %v8955 = vmax.f32 %v8743, 0.0
  %v8956 = vmax.f32 %v8746, 0.0
  %v8957 = vmax.f32 %v8751, 0.0
  %v8958 = vmax.f32 %v8754, 0.0
  %v8959 = vmax.f32 %v8759, 0.0
  %v8960 = vmax.f32 %v8762, 0.0
  %v8961 = vmax.f32 %v8767, 0.0
  %v8962 = vmax.f32 %v8770, 0.0
  %v8963 = vmax.f32 %v8775, 0.0
  %v8964 = vmax.f32 %v8778, 0.0
  %v8965 = vmax.f32 %v8783, 0.0
  %v8966 = vmax.f32 %v8786, 0.0
  %v8967 = vmax.f32 %v8791, 0.0
  %v8968 = vmax.f32 %v8794, 0.0
  %v8969 = vmax.f32 %v8799, 0.0
  %v8970 = vmax.f32 %v8802, 0.0
  %v8971 = vmax.f32 %v8807, 0.0
  %v8972 = vmax.f32 %v8810, 0.0
  %v8973 = vmax.f32 %v8815, 0.0
  %v8974 = vmax.f32 %v8818, 0.0
  %v8975 = vmax.f32 %v8823, 0.0
  %v8976 = vmax.f32 %v8826, 0.0
  %v8977 = vmax.f32 %v8831, 0.0
  %v8978 = vmax.f32 %v8834, 0.0
  %v8979 = vmax.f32 %v8839, 0.0
  %v8980 = vmax.f32 %v8842, 0.0
  %v8981 = vmax.f32 %v8847, 0.0
  %v8982 = vmax.f32 %v8850, 0.0
  %v8983 = vmax.f32 %v8855, 0.0
  %v8984 = vmax.f32 %v8858, 0.0
  %v8985 = vmax.f32 %v8863, 0.0
  %v8986 = vmax.f32 %v8866, 0.0
  %v8987 = vmax.f32 %v8871, 0.0
  %v8988 = vmax.f32 %v8874, 0.0
  %v8989 = vmax.f32 %v8879, 0.0
  %v8990 = vmax.f32 %v8882, 0.0
  %v8991 = vmax.f32 %v8887, 0.0
  %v8992 = vmax.f32 %v8890, 0.0
  %v8993 = vmax.f32 %v8895, 0.0
  %v8994 = vmax.f32 %v8898, 0.0
  %v8995 = vmax.f32 %v8903, 0.0
  %v8996 = vmax.f32 %v8906, 0.0
  %v8997 = vmax.f32 %v8911, 0.0
  %v8998 = vmax.f32 %v8914, 0.0
  %v8999 = vmax.f32 %v8919, 0.0
  %v9000 = vmax.f32 %v8922, 0.0
  %v9001 = vmax.f32 %v8927, 0.0
  %v9002 = vmax.f32 %v8930, 0.0
  %v9003 = vmax.f32 %v8935, 0.0
  %v9004 = vmax.f32 %v8938, 0.0
  %v9005 = vpack.c.bf16 %v8942, %v8941
  %v9006 = vpack.c.bf16 %v8944, %v8943
  %v9007 = vpack.c.bf16 %v8946, %v8945
  %v9008 = vpack.c.bf16 %v8948, %v8947
  %v9009 = vpack.c.bf16 %v8950, %v8949
  %v9010 = vpack.c.bf16 %v8952, %v8951
  %v9011 = vpack.c.bf16 %v8954, %v8953
  %v9012 = vpack.c.bf16 %v8956, %v8955
  %v9013 = vpack.c.bf16 %v8958, %v8957
  %v9014 = vpack.c.bf16 %v8960, %v8959
  %v9015 = vpack.c.bf16 %v8962, %v8961
  %v9016 = vpack.c.bf16 %v8964, %v8963
  %v9017 = vpack.c.bf16 %v8966, %v8965
  %v9018 = vpack.c.bf16 %v8968, %v8967
  %v9019 = vpack.c.bf16 %v8970, %v8969
  %v9020 = vpack.c.bf16 %v8972, %v8971
  %v9021 = vpack.c.bf16 %v8974, %v8973
  %v9022 = vpack.c.bf16 %v8976, %v8975
  %v9023 = vpack.c.bf16 %v8978, %v8977
  %v9024 = vpack.c.bf16 %v8980, %v8979
  %v9025 = vpack.c.bf16 %v8982, %v8981
  %v9026 = vpack.c.bf16 %v8984, %v8983
  %v9027 = vpack.c.bf16 %v8986, %v8985
  %v9028 = vpack.c.bf16 %v8988, %v8987
  %v9029 = vpack.c.bf16 %v8990, %v8989
  %v9030 = vpack.c.bf16 %v8992, %v8991
  %v9031 = vpack.c.bf16 %v8994, %v8993
  %v9032 = vpack.c.bf16 %v8996, %v8995
  %v9033 = vpack.c.bf16 %v8998, %v8997
  %v9034 = vpack.c.bf16 %v9000, %v8999
  %v9035 = vpack.c.bf16 %v9002, %v9001
  %v9036 = vpack.c.bf16 %v9004, %v9003
  %v9037 = vld [vmem:[%s5] sm:$0x3]
  %v9038 = vld [vmem:[%s6] sm:$0x1]
  %v9040 = vlaneseq
  %v9041 = vshrl.u32 %v9040, 7
  %v9042 = vsub.s32 0, %v9041
  %v9043 = vrot.slane %v9038, %v9042
  %vm9045 = vcmask 31744
  %v9047 = vsel %vm9045, %v9005, 0
  %v9050 = vsel %vm9045, %v9006, 0
  %v9053 = vsel %vm9045, %v9007, 0
  %v9056 = vsel %vm9045, %v9008, 0
  %v9059 = vsel %vm9045, %v9009, 0
  %v9062 = vsel %vm9045, %v9010, 0
  %v9065 = vsel %vm9045, %v9011, 0
  %v9068 = vsel %vm9045, %v9012, 0
  %v9071 = vsel %vm9045, %v9013, 0
  %v9074 = vsel %vm9045, %v9014, 0
  %v9077 = vsel %vm9045, %v9015, 0
  %v9080 = vsel %vm9045, %v9016, 0
  %v9083 = vsel %vm9045, %v9017, 0
  %v9086 = vsel %vm9045, %v9018, 0
  %v9089 = vsel %vm9045, %v9019, 0
  %v9092 = vsel %vm9045, %v9020, 0
  %v9095 = vsel %vm9045, %v9021, 0
  %v9098 = vsel %vm9045, %v9022, 0
  %v9101 = vsel %vm9045, %v9023, 0
  %v9104 = vsel %vm9045, %v9024, 0
  %v9107 = vsel %vm9045, %v9025, 0
  %v9110 = vsel %vm9045, %v9026, 0
  %v9113 = vsel %vm9045, %v9027, 0
  %v9116 = vsel %vm9045, %v9028, 0
  %v9119 = vsel %vm9045, %v9029, 0
  %v9122 = vsel %vm9045, %v9030, 0
  %v9125 = vsel %vm9045, %v9031, 0
  %v9128 = vsel %vm9045, %v9032, 0
  %v9131 = vsel %vm9045, %v9033, 0
  %v9134 = vsel %vm9045, %v9034, 0
  %v9137 = vsel %vm9045, %v9035, 0
  %v9140 = vsel %vm9045, %v9036, 0
  %v9143 = vsel %vm8648, %v9037, 0
  %9145 = vmatprep.subr.bf16.mxu0 0
  %9146 = vmatpush1.bf16.msra.mxu0 0
  %9147 = vmatprep.subr.bf16.mxu0 0
  %9148 = vmatpush1.bf16.msra.mxu0 0
  %9149 = vmatprep.subr.bf16.mxu0 0
  %9150 = vmatpush1.bf16.msra.mxu0 0
  %9151 = vmatprep.subr.bf16.mxu0 0
  %9152 = vmatpush1.bf16.msra.mxu0 0
  %9153 = vmatprep.subr.bf16.mxu0 0
  %9154 = vmatpush1.bf16.msra.mxu0 0
  %9155 = vmatprep.subr.bf16.mxu0 0
  %9156 = vmatpush1.bf16.msra.mxu0 0
  %9157 = vmatprep.subr.bf16.mxu0 0
  %9158 = vmatpush1.bf16.msra.mxu0 0
  %9159 = vmatprep.subr.bf16.mxu0 0
  %9160 = vmatpush1.bf16.msra.mxu0 %v9143
  %9161 = vmatprep.subr.bf16.mxu0 0
  %9162 = vmatpush2.bf16.msra.mxu0 0
  %9163 = vmatprep.subr.bf16.mxu0 0
  %9164 = vmatpush2.bf16.msra.mxu0 0
  %9165 = vmatprep.subr.bf16.mxu0 0
  %9166 = vmatpush2.bf16.msra.mxu0 0
  %9167 = vmatprep.subr.bf16.mxu0 0
  %9168 = vmatpush2.bf16.msra.mxu0 0
  %9169 = vmatprep.subr.bf16.mxu0 0
  %9170 = vmatpush2.bf16.msra.mxu0 0
  %9171 = vmatprep.subr.bf16.mxu0 0
  %9172 = vmatpush2.bf16.msra.mxu0 0
  %9173 = vmatprep.subr.bf16.mxu0 0
  %9174 = vmatpush2.bf16.msra.mxu0 0
  %9175 = vmatprep.subr.bf16.mxu0 0
  %9176 = vmatpush2.bf16.msra.mxu0 0
  %9177 = vmatprep.mubr.bf16.mxu0 0
  %9178 = vmatmul.mubr.bf16.gmra.mxu0 %v9047
  %v9179 = vpop.f32.mrf.mxu0
  %v9180 = vadd.f32 %v9043, %v9179
  %v9181 = vpop.f32.mrf.mxu0
  %v9182 = vpop.f32.mrf.mxu0
  %v9183 = vadd.f32 %v9043, %v9182
  %v9184 = vpop.f32.mrf.mxu0
  %9185 = vmatprep.mubr.bf16.mxu0 0
  %9186 = vmatmul.mubr.bf16.gmra.mxu0 %v9050
  %v9187 = vpop.f32.mrf.mxu0
  %v9188 = vadd.f32 %v9043, %v9187
  %v9189 = vpop.f32.mrf.mxu0
  %v9190 = vpop.f32.mrf.mxu0
  %v9191 = vadd.f32 %v9043, %v9190
  %v9192 = vpop.f32.mrf.mxu0
  %9193 = vmatprep.mubr.bf16.mxu0 0
  %9194 = vmatmul.mubr.bf16.gmra.mxu0 %v9053
  %v9195 = vpop.f32.mrf.mxu0
  %v9196 = vadd.f32 %v9043, %v9195
  %v9197 = vpop.f32.mrf.mxu0
  %v9198 = vpop.f32.mrf.mxu0
  %v9199 = vadd.f32 %v9043, %v9198
  %v9200 = vpop.f32.mrf.mxu0
  %9201 = vmatprep.mubr.bf16.mxu0 0
  %9202 = vmatmul.mubr.bf16.gmra.mxu0 %v9056
  %v9203 = vpop.f32.mrf.mxu0
  %v9204 = vadd.f32 %v9043, %v9203
  %v9205 = vpop.f32.mrf.mxu0
  %v9206 = vpop.f32.mrf.mxu0
  %v9207 = vadd.f32 %v9043, %v9206
  %v9208 = vpop.f32.mrf.mxu0
  %9209 = vmatprep.mubr.bf16.mxu0 0
  %9210 = vmatmul.mubr.bf16.gmra.mxu0 %v9059
  %v9211 = vpop.f32.mrf.mxu0
  %v9212 = vadd.f32 %v9043, %v9211
  %v9213 = vpop.f32.mrf.mxu0
  %v9214 = vpop.f32.mrf.mxu0
  %v9215 = vadd.f32 %v9043, %v9214
  %v9216 = vpop.f32.mrf.mxu0
  %9217 = vmatprep.mubr.bf16.mxu0 0
  %9218 = vmatmul.mubr.bf16.gmra.mxu0 %v9062
  %v9219 = vpop.f32.mrf.mxu0
  %v9220 = vadd.f32 %v9043, %v9219
  %v9221 = vpop.f32.mrf.mxu0
  %v9222 = vpop.f32.mrf.mxu0
  %v9223 = vadd.f32 %v9043, %v9222
  %v9224 = vpop.f32.mrf.mxu0
  %9225 = vmatprep.mubr.bf16.mxu0 0
  %9226 = vmatmul.mubr.bf16.gmra.mxu0 %v9065
  %v9227 = vpop.f32.mrf.mxu0
  %v9228 = vadd.f32 %v9043, %v9227
  %v9229 = vpop.f32.mrf.mxu0
  %v9230 = vpop.f32.mrf.mxu0
  %v9231 = vadd.f32 %v9043, %v9230
  %v9232 = vpop.f32.mrf.mxu0
  %9233 = vmatprep.mubr.bf16.mxu0 0
  %9234 = vmatmul.mubr.bf16.gmra.mxu0 %v9068
  %v9235 = vpop.f32.mrf.mxu0
  %v9236 = vadd.f32 %v9043, %v9235
  %v9237 = vpop.f32.mrf.mxu0
  %v9238 = vpop.f32.mrf.mxu0
  %v9239 = vadd.f32 %v9043, %v9238
  %v9240 = vpop.f32.mrf.mxu0
  %9241 = vmatprep.mubr.bf16.mxu0 0
  %9242 = vmatmul.mubr.bf16.gmra.mxu0 %v9071
  %v9243 = vpop.f32.mrf.mxu0
  %v9244 = vadd.f32 %v9043, %v9243
  %v9245 = vpop.f32.mrf.mxu0
  %v9246 = vpop.f32.mrf.mxu0
  %v9247 = vadd.f32 %v9043, %v9246
  %v9248 = vpop.f32.mrf.mxu0
  %9249 = vmatprep.mubr.bf16.mxu0 0
  %9250 = vmatmul.mubr.bf16.gmra.mxu0 %v9074
  %v9251 = vpop.f32.mrf.mxu0
  %v9252 = vadd.f32 %v9043, %v9251
  %v9253 = vpop.f32.mrf.mxu0
  %v9254 = vpop.f32.mrf.mxu0
  %v9255 = vadd.f32 %v9043, %v9254
  %v9256 = vpop.f32.mrf.mxu0
  %9257 = vmatprep.mubr.bf16.mxu0 0
  %9258 = vmatmul.mubr.bf16.gmra.mxu0 %v9077
  %v9259 = vpop.f32.mrf.mxu0
  %v9260 = vadd.f32 %v9043, %v9259
  %v9261 = vpop.f32.mrf.mxu0
  %v9262 = vpop.f32.mrf.mxu0
  %v9263 = vadd.f32 %v9043, %v9262
  %v9264 = vpop.f32.mrf.mxu0
  %9265 = vmatprep.mubr.bf16.mxu0 0
  %9266 = vmatmul.mubr.bf16.gmra.mxu0 %v9080
  %v9267 = vpop.f32.mrf.mxu0
  %v9268 = vadd.f32 %v9043, %v9267
  %v9269 = vpop.f32.mrf.mxu0
  %v9270 = vpop.f32.mrf.mxu0
  %v9271 = vadd.f32 %v9043, %v9270
  %v9272 = vpop.f32.mrf.mxu0
  %9273 = vmatprep.mubr.bf16.mxu0 0
  %9274 = vmatmul.mubr.bf16.gmra.mxu0 %v9083
  %v9275 = vpop.f32.mrf.mxu0
  %v9276 = vadd.f32 %v9043, %v9275
  %v9277 = vpop.f32.mrf.mxu0
  %v9278 = vpop.f32.mrf.mxu0
  %v9279 = vadd.f32 %v9043, %v9278
  %v9280 = vpop.f32.mrf.mxu0
  %9281 = vmatprep.mubr.bf16.mxu0 0
  %9282 = vmatmul.mubr.bf16.gmra.mxu0 %v9086
  %v9283 = vpop.f32.mrf.mxu0
  %v9284 = vadd.f32 %v9043, %v9283
  %v9285 = vpop.f32.mrf.mxu0
  %v9286 = vpop.f32.mrf.mxu0
  %v9287 = vadd.f32 %v9043, %v9286
  %v9288 = vpop.f32.mrf.mxu0
  %9289 = vmatprep.mubr.bf16.mxu0 0
  %9290 = vmatmul.mubr.bf16.gmra.mxu0 %v9089
  %v9291 = vpop.f32.mrf.mxu0
  %v9292 = vadd.f32 %v9043, %v9291
  %v9293 = vpop.f32.mrf.mxu0
  %v9294 = vpop.f32.mrf.mxu0
  %v9295 = vadd.f32 %v9043, %v9294
  %v9296 = vpop.f32.mrf.mxu0
  %9297 = vmatprep.mubr.bf16.mxu0 0
  %9298 = vmatmul.mubr.bf16.gmra.mxu0 %v9092
  %v9299 = vpop.f32.mrf.mxu0
  %v9300 = vadd.f32 %v9043, %v9299
  %v9301 = vpop.f32.mrf.mxu0
  %v9302 = vpop.f32.mrf.mxu0
  %v9303 = vadd.f32 %v9043, %v9302
  %v9304 = vpop.f32.mrf.mxu0
  %9305 = vmatprep.mubr.bf16.mxu0 0
  %9306 = vmatmul.mubr.bf16.gmra.mxu0 %v9095
  %v9307 = vpop.f32.mrf.mxu0
  %v9308 = vadd.f32 %v9043, %v9307
  %v9309 = vpop.f32.mrf.mxu0
  %v9310 = vpop.f32.mrf.mxu0
  %v9311 = vadd.f32 %v9043, %v9310
  %v9312 = vpop.f32.mrf.mxu0
  %9313 = vmatprep.mubr.bf16.mxu0 0
  %9314 = vmatmul.mubr.bf16.gmra.mxu0 %v9098
  %v9315 = vpop.f32.mrf.mxu0
  %v9316 = vadd.f32 %v9043, %v9315
  %v9317 = vpop.f32.mrf.mxu0
  %v9318 = vpop.f32.mrf.mxu0
  %v9319 = vadd.f32 %v9043, %v9318
  %v9320 = vpop.f32.mrf.mxu0
  %9321 = vmatprep.mubr.bf16.mxu0 0
  %9322 = vmatmul.mubr.bf16.gmra.mxu0 %v9101
  %v9323 = vpop.f32.mrf.mxu0
  %v9324 = vadd.f32 %v9043, %v9323
  %v9325 = vpop.f32.mrf.mxu0
  %v9326 = vpop.f32.mrf.mxu0
  %v9327 = vadd.f32 %v9043, %v9326
  %v9328 = vpop.f32.mrf.mxu0
  %9329 = vmatprep.mubr.bf16.mxu0 0
  %9330 = vmatmul.mubr.bf16.gmra.mxu0 %v9104
  %v9331 = vpop.f32.mrf.mxu0
  %v9332 = vadd.f32 %v9043, %v9331
  %v9333 = vpop.f32.mrf.mxu0
  %v9334 = vpop.f32.mrf.mxu0
  %v9335 = vadd.f32 %v9043, %v9334
  %v9336 = vpop.f32.mrf.mxu0
  %9337 = vmatprep.mubr.bf16.mxu0 0
  %9338 = vmatmul.mubr.bf16.gmra.mxu0 %v9107
  %v9339 = vpop.f32.mrf.mxu0
  %v9340 = vadd.f32 %v9043, %v9339
  %v9341 = vpop.f32.mrf.mxu0
  %v9342 = vpop.f32.mrf.mxu0
  %v9343 = vadd.f32 %v9043, %v9342
  %v9344 = vpop.f32.mrf.mxu0
  %9345 = vmatprep.mubr.bf16.mxu0 0
  %9346 = vmatmul.mubr.bf16.gmra.mxu0 %v9110
  %v9347 = vpop.f32.mrf.mxu0
  %v9348 = vadd.f32 %v9043, %v9347
  %v9349 = vpop.f32.mrf.mxu0
  %v9350 = vpop.f32.mrf.mxu0
  %v9351 = vadd.f32 %v9043, %v9350
  %v9352 = vpop.f32.mrf.mxu0
  %9353 = vmatprep.mubr.bf16.mxu0 0
  %9354 = vmatmul.mubr.bf16.gmra.mxu0 %v9113
  %v9355 = vpop.f32.mrf.mxu0
  %v9356 = vadd.f32 %v9043, %v9355
  %v9357 = vpop.f32.mrf.mxu0
  %v9358 = vpop.f32.mrf.mxu0
  %v9359 = vadd.f32 %v9043, %v9358
  %v9360 = vpop.f32.mrf.mxu0
  %9361 = vmatprep.mubr.bf16.mxu0 0
  %9362 = vmatmul.mubr.bf16.gmra.mxu0 %v9116
  %v9363 = vpop.f32.mrf.mxu0
  %v9364 = vadd.f32 %v9043, %v9363
  %v9365 = vpop.f32.mrf.mxu0
  %v9366 = vpop.f32.mrf.mxu0
  %v9367 = vadd.f32 %v9043, %v9366
  %v9368 = vpop.f32.mrf.mxu0
  %9369 = vmatprep.mubr.bf16.mxu0 0
  %9370 = vmatmul.mubr.bf16.gmra.mxu0 %v9119
  %v9371 = vpop.f32.mrf.mxu0
  %v9372 = vadd.f32 %v9043, %v9371
  %v9373 = vpop.f32.mrf.mxu0
  %v9374 = vpop.f32.mrf.mxu0
  %v9375 = vadd.f32 %v9043, %v9374
  %v9376 = vpop.f32.mrf.mxu0
  %9377 = vmatprep.mubr.bf16.mxu0 0
  %9378 = vmatmul.mubr.bf16.gmra.mxu0 %v9122
  %v9379 = vpop.f32.mrf.mxu0
  %v9380 = vadd.f32 %v9043, %v9379
  %v9381 = vpop.f32.mrf.mxu0
  %v9382 = vpop.f32.mrf.mxu0
  %v9383 = vadd.f32 %v9043, %v9382
  %v9384 = vpop.f32.mrf.mxu0
  %9385 = vmatprep.mubr.bf16.mxu0 0
  %9386 = vmatmul.mubr.bf16.gmra.mxu0 %v9125
  %v9387 = vpop.f32.mrf.mxu0
  %v9388 = vadd.f32 %v9043, %v9387
  %v9389 = vpop.f32.mrf.mxu0
  %v9390 = vpop.f32.mrf.mxu0
  %v9391 = vadd.f32 %v9043, %v9390
  %v9392 = vpop.f32.mrf.mxu0
  %9393 = vmatprep.mubr.bf16.mxu0 0
  %9394 = vmatmul.mubr.bf16.gmra.mxu0 %v9128
  %v9395 = vpop.f32.mrf.mxu0
  %v9396 = vadd.f32 %v9043, %v9395
  %v9397 = vpop.f32.mrf.mxu0
  %v9398 = vpop.f32.mrf.mxu0
  %v9399 = vadd.f32 %v9043, %v9398
  %v9400 = vpop.f32.mrf.mxu0
  %9401 = vmatprep.mubr.bf16.mxu0 0
  %9402 = vmatmul.mubr.bf16.gmra.mxu0 %v9131
  %v9403 = vpop.f32.mrf.mxu0
  %v9404 = vadd.f32 %v9043, %v9403
  %v9405 = vpop.f32.mrf.mxu0
  %v9406 = vpop.f32.mrf.mxu0
  %v9407 = vadd.f32 %v9043, %v9406
  %v9408 = vpop.f32.mrf.mxu0
  %9409 = vmatprep.mubr.bf16.mxu0 0
  %9410 = vmatmul.mubr.bf16.gmra.mxu0 %v9134
  %v9411 = vpop.f32.mrf.mxu0
  %v9412 = vadd.f32 %v9043, %v9411
  %v9413 = vpop.f32.mrf.mxu0
  %v9414 = vpop.f32.mrf.mxu0
  %v9415 = vadd.f32 %v9043, %v9414
  %v9416 = vpop.f32.mrf.mxu0
  %9417 = vmatprep.mubr.bf16.mxu0 0
  %9418 = vmatmul.mubr.bf16.gmra.mxu0 %v9137
  %v9419 = vpop.f32.mrf.mxu0
  %v9420 = vadd.f32 %v9043, %v9419
  %v9421 = vpop.f32.mrf.mxu0
  %v9422 = vpop.f32.mrf.mxu0
  %v9423 = vadd.f32 %v9043, %v9422
  %v9424 = vpop.f32.mrf.mxu0
  %9425 = vmatprep.mubr.bf16.mxu0 0
  %9426 = vmatmul.mubr.bf16.gmra.mxu0 %v9140
  %v9427 = vpop.f32.mrf.mxu0
  %v9428 = vadd.f32 %v9043, %v9427
  %v9429 = vpop.f32.mrf.mxu0
  %v9430 = vpop.f32.mrf.mxu0
  %v9431 = vadd.f32 %v9043, %v9430
  %v9432 = vpop.f32.mrf.mxu0
  %9433 = vdwg.mxu0
  %v9434 = vunpack.c.l.bf16 %v27
  %v9435 = vunpack.c.l.bf16 %v28
  %v9436 = vunpack.c.l.bf16 %v29
  %v9437 = vunpack.c.l.bf16 %v30
  %v9438 = vunpack.c.l.bf16 %v31
  %v9439 = vunpack.c.l.bf16 %v32
  %v9440 = vunpack.c.l.bf16 %v33
  %v9441 = vunpack.c.l.bf16 %v34
  %v9442 = vunpack.c.l.bf16 %v35
  %v9443 = vunpack.c.l.bf16 %v36
  %v9444 = vunpack.c.l.bf16 %v37
  %v9445 = vunpack.c.l.bf16 %v38
  %v9446 = vunpack.c.l.bf16 %v39
  %v9447 = vunpack.c.l.bf16 %v40
  %v9448 = vunpack.c.l.bf16 %v41
  %v9449 = vunpack.c.l.bf16 %v42
  %v9450 = vunpack.c.l.bf16 %v43
  %v9451 = vunpack.c.l.bf16 %v44
  %v9452 = vunpack.c.l.bf16 %v45
  %v9453 = vunpack.c.l.bf16 %v46
  %v9454 = vunpack.c.l.bf16 %v47
  %v9455 = vunpack.c.l.bf16 %v48
  %v9456 = vunpack.c.l.bf16 %v49
  %v9457 = vunpack.c.l.bf16 %v50
  %v9458 = vunpack.c.l.bf16 %v51
  %v9459 = vunpack.c.l.bf16 %v52
  %v9460 = vunpack.c.l.bf16 %v53
  %v9461 = vunpack.c.l.bf16 %v54
  %v9462 = vunpack.c.l.bf16 %v55
  %v9463 = vunpack.c.l.bf16 %v56
  %v9464 = vunpack.c.l.bf16 %v57
  %v9465 = vunpack.c.l.bf16 %v58
  %v9466 = vunpack.c.l.bf16 %v59
  %v9467 = vunpack.c.l.bf16 %v60
  %v9468 = vunpack.c.l.bf16 %v61
  %v9469 = vunpack.c.l.bf16 %v62
  %v9470 = vunpack.c.l.bf16 %v63
  %v9471 = vunpack.c.l.bf16 %v64
  %v9472 = vunpack.c.l.bf16 %v65
  %v9473 = vunpack.c.l.bf16 %v66
  %v9474 = vunpack.c.l.bf16 %v67
  %v9475 = vunpack.c.l.bf16 %v68
  %v9476 = vunpack.c.l.bf16 %v69
  %v9477 = vunpack.c.l.bf16 %v70
  %v9478 = vunpack.c.l.bf16 %v71
  %v9479 = vunpack.c.l.bf16 %v72
  %v9480 = vunpack.c.l.bf16 %v73
  %v9481 = vunpack.c.l.bf16 %v74
  %v9482 = vunpack.c.l.bf16 %v75
  %v9483 = vunpack.c.l.bf16 %v76
  %v9484 = vunpack.c.l.bf16 %v77
  %v9485 = vunpack.c.l.bf16 %v78
  %v9486 = vunpack.c.l.bf16 %v79
  %v9487 = vunpack.c.l.bf16 %v80
  %v9488 = vunpack.c.l.bf16 %v81
  %v9489 = vunpack.c.l.bf16 %v82
  %v9490 = vunpack.c.l.bf16 %v83
  %v9491 = vunpack.c.l.bf16 %v84
  %v9492 = vunpack.c.l.bf16 %v85
  %v9493 = vunpack.c.l.bf16 %v86
  %v9494 = vunpack.c.l.bf16 %v87
  %v9495 = vunpack.c.l.bf16 %v88
  %v9496 = vunpack.c.l.bf16 %v89
  %v9497 = vunpack.c.l.bf16 %v90
  %v9498 = vadd.f32 %v9180, %v9434
  %v9499 = vadd.f32 %v9183, %v9435
  %v9500 = vadd.f32 %v9188, %v9436
  %v9501 = vadd.f32 %v9191, %v9437
  %v9502 = vadd.f32 %v9196, %v9438
  %v9503 = vadd.f32 %v9199, %v9439
  %v9504 = vadd.f32 %v9204, %v9440
  %v9505 = vadd.f32 %v9207, %v9441
  %v9506 = vadd.f32 %v9212, %v9442
  %v9507 = vadd.f32 %v9215, %v9443
  %v9508 = vadd.f32 %v9220, %v9444
  %v9509 = vadd.f32 %v9223, %v9445
  %v9510 = vadd.f32 %v9228, %v9446
  %v9511 = vadd.f32 %v9231, %v9447
  %v9512 = vadd.f32 %v9236, %v9448
  %v9513 = vadd.f32 %v9239, %v9449
  %v9514 = vadd.f32 %v9244, %v9450
  %v9515 = vadd.f32 %v9247, %v9451
  %v9516 = vadd.f32 %v9252, %v9452
  %v9517 = vadd.f32 %v9255, %v9453
  %v9518 = vadd.f32 %v9260, %v9454
  %v9519 = vadd.f32 %v9263, %v9455
  %v9520 = vadd.f32 %v9268, %v9456
  %v9521 = vadd.f32 %v9271, %v9457
  %v9522 = vadd.f32 %v9276, %v9458
  %v9523 = vadd.f32 %v9279, %v9459
  %v9524 = vadd.f32 %v9284, %v9460
  %v9525 = vadd.f32 %v9287, %v9461
  %v9526 = vadd.f32 %v9292, %v9462
  %v9527 = vadd.f32 %v9295, %v9463
  %v9528 = vadd.f32 %v9300, %v9464
  %v9529 = vadd.f32 %v9303, %v9465
  %v9530 = vadd.f32 %v9308, %v9466
  %v9531 = vadd.f32 %v9311, %v9467
  %v9532 = vadd.f32 %v9316, %v9468
  %v9533 = vadd.f32 %v9319, %v9469
  %v9534 = vadd.f32 %v9324, %v9470
  %v9535 = vadd.f32 %v9327, %v9471
  %v9536 = vadd.f32 %v9332, %v9472
  %v9537 = vadd.f32 %v9335, %v9473
  %v9538 = vadd.f32 %v9340, %v9474
  %v9539 = vadd.f32 %v9343, %v9475
  %v9540 = vadd.f32 %v9348, %v9476
  %v9541 = vadd.f32 %v9351, %v9477
  %v9542 = vadd.f32 %v9356, %v9478
  %v9543 = vadd.f32 %v9359, %v9479
  %v9544 = vadd.f32 %v9364, %v9480
  %v9545 = vadd.f32 %v9367, %v9481
  %v9546 = vadd.f32 %v9372, %v9482
  %v9547 = vadd.f32 %v9375, %v9483
  %v9548 = vadd.f32 %v9380, %v9484
  %v9549 = vadd.f32 %v9383, %v9485
  %v9550 = vadd.f32 %v9388, %v9486
  %v9551 = vadd.f32 %v9391, %v9487
  %v9552 = vadd.f32 %v9396, %v9488
  %v9553 = vadd.f32 %v9399, %v9489
  %v9554 = vadd.f32 %v9404, %v9490
  %v9555 = vadd.f32 %v9407, %v9491
  %v9556 = vadd.f32 %v9412, %v9492
  %v9557 = vadd.f32 %v9415, %v9493
  %v9558 = vadd.f32 %v9420, %v9494
  %v9559 = vadd.f32 %v9423, %v9495
  %v9560 = vadd.f32 %v9428, %v9496
  %v9561 = vadd.f32 %v9431, %v9497
  %v9562 = vmax.f32 %v9498, 0.0
  %v9563 = vmax.f32 %v9499, 0.0
  %v9564 = vmax.f32 %v9500, 0.0
  %v9565 = vmax.f32 %v9501, 0.0
  %v9566 = vmax.f32 %v9502, 0.0
  %v9567 = vmax.f32 %v9503, 0.0
  %v9568 = vmax.f32 %v9504, 0.0
  %v9569 = vmax.f32 %v9505, 0.0
  %v9570 = vmax.f32 %v9506, 0.0
  %v9571 = vmax.f32 %v9507, 0.0
  %v9572 = vmax.f32 %v9508, 0.0
  %v9573 = vmax.f32 %v9509, 0.0
  %v9574 = vmax.f32 %v9510, 0.0
  %v9575 = vmax.f32 %v9511, 0.0
  %v9576 = vmax.f32 %v9512, 0.0
  %v9577 = vmax.f32 %v9513, 0.0
  %v9578 = vmax.f32 %v9514, 0.0
  %v9579 = vmax.f32 %v9515, 0.0
  %v9580 = vmax.f32 %v9516, 0.0
  %v9581 = vmax.f32 %v9517, 0.0
  %v9582 = vmax.f32 %v9518, 0.0
  %v9583 = vmax.f32 %v9519, 0.0
  %v9584 = vmax.f32 %v9520, 0.0
  %v9585 = vmax.f32 %v9521, 0.0
  %v9586 = vmax.f32 %v9522, 0.0
  %v9587 = vmax.f32 %v9523, 0.0
  %v9588 = vmax.f32 %v9524, 0.0
  %v9589 = vmax.f32 %v9525, 0.0
  %v9590 = vmax.f32 %v9526, 0.0
  %v9591 = vmax.f32 %v9527, 0.0
  %v9592 = vmax.f32 %v9528, 0.0
  %v9593 = vmax.f32 %v9529, 0.0
  %v9594 = vmax.f32 %v9530, 0.0
  %v9595 = vmax.f32 %v9531, 0.0
  %v9596 = vmax.f32 %v9532, 0.0
  %v9597 = vmax.f32 %v9533, 0.0
  %v9598 = vmax.f32 %v9534, 0.0
  %v9599 = vmax.f32 %v9535, 0.0
  %v9600 = vmax.f32 %v9536, 0.0
  %v9601 = vmax.f32 %v9537, 0.0
  %v9602 = vmax.f32 %v9538, 0.0
  %v9603 = vmax.f32 %v9539, 0.0
  %v9604 = vmax.f32 %v9540, 0.0
  %v9605 = vmax.f32 %v9541, 0.0
  %v9606 = vmax.f32 %v9542, 0.0
  %v9607 = vmax.f32 %v9543, 0.0
  %v9608 = vmax.f32 %v9544, 0.0
  %v9609 = vmax.f32 %v9545, 0.0
  %v9610 = vmax.f32 %v9546, 0.0
  %v9611 = vmax.f32 %v9547, 0.0
  %v9612 = vmax.f32 %v9548, 0.0
  %v9613 = vmax.f32 %v9549, 0.0
  %v9614 = vmax.f32 %v9550, 0.0
  %v9615 = vmax.f32 %v9551, 0.0
  %v9616 = vmax.f32 %v9552, 0.0
  %v9617 = vmax.f32 %v9553, 0.0
  %v9618 = vmax.f32 %v9554, 0.0
  %v9619 = vmax.f32 %v9555, 0.0
  %v9620 = vmax.f32 %v9556, 0.0
  %v9621 = vmax.f32 %v9557, 0.0
  %v9622 = vmax.f32 %v9558, 0.0
  %v9623 = vmax.f32 %v9559, 0.0
  %v9624 = vmax.f32 %v9560, 0.0
  %v9625 = vmax.f32 %v9561, 0.0
  %v9626 = vpack.c.bf16 %v9563, %v9562
  %v9627 = vpack.c.bf16 %v9565, %v9564
  %v9628 = vpack.c.bf16 %v9567, %v9566
  %v9629 = vpack.c.bf16 %v9569, %v9568
  %v9630 = vpack.c.bf16 %v9571, %v9570
  %v9631 = vpack.c.bf16 %v9573, %v9572
  %v9632 = vpack.c.bf16 %v9575, %v9574
  %v9633 = vpack.c.bf16 %v9577, %v9576
  %v9634 = vpack.c.bf16 %v9579, %v9578
  %v9635 = vpack.c.bf16 %v9581, %v9580
  %v9636 = vpack.c.bf16 %v9583, %v9582
  %v9637 = vpack.c.bf16 %v9585, %v9584
  %v9638 = vpack.c.bf16 %v9587, %v9586
  %v9639 = vpack.c.bf16 %v9589, %v9588
  %v9640 = vpack.c.bf16 %v9591, %v9590
  %v9641 = vpack.c.bf16 %v9593, %v9592
  %v9642 = vpack.c.bf16 %v9595, %v9594
  %v9643 = vpack.c.bf16 %v9597, %v9596
  %v9644 = vpack.c.bf16 %v9599, %v9598
  %v9645 = vpack.c.bf16 %v9601, %v9600
  %v9646 = vpack.c.bf16 %v9603, %v9602
  %v9647 = vpack.c.bf16 %v9605, %v9604
  %v9648 = vpack.c.bf16 %v9607, %v9606
  %v9649 = vpack.c.bf16 %v9609, %v9608
  %v9650 = vpack.c.bf16 %v9611, %v9610
  %v9651 = vpack.c.bf16 %v9613, %v9612
  %v9652 = vpack.c.bf16 %v9615, %v9614
  %v9653 = vpack.c.bf16 %v9617, %v9616
  %v9654 = vpack.c.bf16 %v9619, %v9618
  %v9655 = vpack.c.bf16 %v9621, %v9620
  %v9656 = vpack.c.bf16 %v9623, %v9622
  %v9657 = vpack.c.bf16 %v9625, %v9624
  %v9690 = vunpack.c.l.b16 %v9626
  %v9691 = vunpack.c.h.b16 %v9626
  %v9692 = vunpack.c.l.b16 %v9627
  %v9693 = vunpack.c.h.b16 %v9627
  %v9694 = vunpack.c.l.b16 %v9628
  %v9695 = vunpack.c.h.b16 %v9628
  %v9696 = vunpack.c.l.b16 %v9629
  %v9697 = vunpack.c.h.b16 %v9629
  %v9698 = vunpack.c.l.b16 %v9630
  %v9699 = vunpack.c.h.b16 %v9630
  %v9700 = vunpack.c.l.b16 %v9631
  %v9701 = vunpack.c.h.b16 %v9631
  %v9702 = vunpack.c.l.b16 %v9632
  %v9703 = vunpack.c.h.b16 %v9632
  %v9704 = vunpack.c.l.b16 %v9633
  %v9705 = vunpack.c.h.b16 %v9633
  %v9706 = vunpack.c.l.b16 %v9634
  %v9707 = vunpack.c.h.b16 %v9634
  %v9708 = vunpack.c.l.b16 %v9635
  %v9709 = vunpack.c.h.b16 %v9635
  %v9710 = vunpack.c.l.b16 %v9636
  %v9711 = vunpack.c.h.b16 %v9636
  %v9712 = vunpack.c.l.b16 %v9637
  %v9713 = vunpack.c.h.b16 %v9637
  %v9714 = vunpack.c.l.b16 %v9638
  %v9715 = vunpack.c.h.b16 %v9638
  %v9716 = vunpack.c.l.b16 %v9639
  %v9717 = vunpack.c.h.b16 %v9639
  %v9718 = vunpack.c.l.b16 %v9640
  %v9719 = vunpack.c.h.b16 %v9640
  %v9720 = vunpack.c.l.b16 %v9641
  %v9721 = vunpack.c.h.b16 %v9641
  %v9722 = vunpack.c.l.b16 %v9642
  %v9723 = vunpack.c.h.b16 %v9642
  %v9724 = vunpack.c.l.b16 %v9643
  %v9725 = vunpack.c.h.b16 %v9643
  %v9726 = vunpack.c.l.b16 %v9644
  %v9727 = vunpack.c.h.b16 %v9644
  %v9728 = vunpack.c.l.b16 %v9645
  %v9729 = vunpack.c.h.b16 %v9645
  %v9730 = vunpack.c.l.b16 %v9646
  %v9731 = vunpack.c.h.b16 %v9646
  %v9732 = vunpack.c.l.b16 %v9647
  %v9733 = vunpack.c.h.b16 %v9647
  %v9734 = vunpack.c.l.b16 %v9648
  %v9735 = vunpack.c.h.b16 %v9648
  %v9736 = vunpack.c.l.b16 %v9649
  %v9737 = vunpack.c.h.b16 %v9649
  %v9738 = vunpack.c.l.b16 %v9650
  %v9739 = vunpack.c.h.b16 %v9650
  %v9740 = vunpack.c.l.b16 %v9651
  %v9741 = vunpack.c.h.b16 %v9651
  %v9742 = vunpack.c.l.b16 %v9652
  %v9743 = vunpack.c.h.b16 %v9652
  %v9744 = vunpack.c.l.b16 %v9653
  %v9745 = vunpack.c.h.b16 %v9653
  %v9746 = vunpack.c.l.b16 %v9654
  %v9747 = vunpack.c.h.b16 %v9654
  %v9748 = vunpack.c.l.b16 %v9655
  %v9749 = vunpack.c.h.b16 %v9655
  %v9750 = vunpack.c.l.b16 %v9656
  %v9751 = vunpack.c.h.b16 %v9656
  %v9752 = vunpack.c.l.b16 %v9657
  %v9753 = vunpack.c.h.b16 %v9657
  %v9754 = vpack.c.b16 %v9690, %v9690
  %v9755 = vpack.c.b16 %v9691, %v9691
  %v9756 = vpack.c.b16 %v9692, %v9692
  %v9757 = vpack.c.b16 %v9693, %v9693
  %v9758 = vpack.c.b16 %v9694, %v9694
  %v9759 = vpack.c.b16 %v9695, %v9695
  %v9760 = vpack.c.b16 %v9696, %v9696
  %v9761 = vpack.c.b16 %v9697, %v9697
  %v9762 = vpack.c.b16 %v9698, %v9698
  %v9763 = vpack.c.b16 %v9699, %v9699
  %v9764 = vpack.c.b16 %v9700, %v9700
  %v9765 = vpack.c.b16 %v9701, %v9701
  %v9766 = vpack.c.b16 %v9702, %v9702
  %v9767 = vpack.c.b16 %v9703, %v9703
  %v9768 = vpack.c.b16 %v9704, %v9704
  %v9769 = vpack.c.b16 %v9705, %v9705
  %v9770 = vpack.c.b16 %v9706, %v9706
  %v9771 = vpack.c.b16 %v9707, %v9707
  %v9772 = vpack.c.b16 %v9708, %v9708
  %v9773 = vpack.c.b16 %v9709, %v9709
  %v9774 = vpack.c.b16 %v9710, %v9710
  %v9775 = vpack.c.b16 %v9711, %v9711
  %v9776 = vpack.c.b16 %v9712, %v9712
  %v9777 = vpack.c.b16 %v9713, %v9713
  %v9778 = vpack.c.b16 %v9714, %v9714
  %v9779 = vpack.c.b16 %v9715, %v9715
  %v9780 = vpack.c.b16 %v9716, %v9716
  %v9781 = vpack.c.b16 %v9717, %v9717
  %v9782 = vpack.c.b16 %v9718, %v9718
  %v9783 = vpack.c.b16 %v9719, %v9719
  %v9784 = vpack.c.b16 %v9720, %v9720
  %v9785 = vpack.c.b16 %v9721, %v9721
  %v9786 = vpack.c.b16 %v9722, %v9722
  %v9787 = vpack.c.b16 %v9723, %v9723
  %v9788 = vpack.c.b16 %v9724, %v9724
  %v9789 = vpack.c.b16 %v9725, %v9725
  %v9790 = vpack.c.b16 %v9726, %v9726
  %v9791 = vpack.c.b16 %v9727, %v9727
  %v9792 = vpack.c.b16 %v9728, %v9728
  %v9793 = vpack.c.b16 %v9729, %v9729
  %v9794 = vpack.c.b16 %v9730, %v9730
  %v9795 = vpack.c.b16 %v9731, %v9731
  %v9796 = vpack.c.b16 %v9732, %v9732
  %v9797 = vpack.c.b16 %v9733, %v9733
  %v9798 = vpack.c.b16 %v9734, %v9734
  %v9799 = vpack.c.b16 %v9735, %v9735
  %v9800 = vpack.c.b16 %v9736, %v9736
  %v9801 = vpack.c.b16 %v9737, %v9737
  %v9802 = vpack.c.b16 %v9738, %v9738
  %v9803 = vpack.c.b16 %v9739, %v9739
  %v9804 = vpack.c.b16 %v9740, %v9740
  %v9805 = vpack.c.b16 %v9741, %v9741
  %v9806 = vpack.c.b16 %v9742, %v9742
  %v9807 = vpack.c.b16 %v9743, %v9743
  %v9808 = vpack.c.b16 %v9744, %v9744
  %v9809 = vpack.c.b16 %v9745, %v9745
  %v9810 = vpack.c.b16 %v9746, %v9746
  %v9811 = vpack.c.b16 %v9747, %v9747
  %v9812 = vpack.c.b16 %v9748, %v9748
  %v9813 = vpack.c.b16 %v9749, %v9749
  %v9814 = vpack.c.b16 %v9750, %v9750
  %v9815 = vpack.c.b16 %v9751, %v9751
  %v9816 = vpack.c.b16 %v9752, %v9752
  %v9817 = vpack.c.b16 %v9753, %v9753
  %vm9882 = vcmask 125952
  %9883 = vst.msk [vmem:[%s7] sm:$0xf] %vm9882, %v9754
  %9884 = vst.msk [vmem:[%s7 + $0x4] sm:$0xf] %vm9882, %v9755
  %9885 = vst.msk [vmem:[%s7 + $0x8] sm:$0xf] %vm9882, %v9756
  %9886 = vst.msk [vmem:[%s7 + $0xc] sm:$0xf] %vm9882, %v9757
  %9887 = vst.msk [vmem:[%s7 + $0x10] sm:$0xf] %vm9882, %v9758
  %9888 = vst.msk [vmem:[%s7 + $0x14] sm:$0xf] %vm9882, %v9759
  %9889 = vst.msk [vmem:[%s7 + $0x18] sm:$0xf] %vm9882, %v9760
  %9890 = vst.msk [vmem:[%s7 + $0x1c] sm:$0xf] %vm9882, %v9761
  %9891 = vst.msk [vmem:[%s7 + $0x20] sm:$0xf] %vm9882, %v9762
  %9892 = vst.msk [vmem:[%s7 + $0x24] sm:$0xf] %vm9882, %v9763
  %9893 = vst.msk [vmem:[%s7 + $0x28] sm:$0xf] %vm9882, %v9764
  %9894 = vst.msk [vmem:[%s7 + $0x2c] sm:$0xf] %vm9882, %v9765
  %9895 = vst.msk [vmem:[%s7 + $0x30] sm:$0xf] %vm9882, %v9766
  %9896 = vst.msk [vmem:[%s7 + $0x34] sm:$0xf] %vm9882, %v9767
  %9897 = vst.msk [vmem:[%s7 + $0x38] sm:$0xf] %vm9882, %v9768
  %9898 = vst.msk [vmem:[%s7 + $0x3c] sm:$0xf] %vm9882, %v9769
  %9899 = vst.msk [vmem:[%s7 + $0x40] sm:$0xf] %vm9882, %v9770
  %9900 = vst.msk [vmem:[%s7 + $0x44] sm:$0xf] %vm9882, %v9771
  %9901 = vst.msk [vmem:[%s7 + $0x48] sm:$0xf] %vm9882, %v9772
  %9902 = vst.msk [vmem:[%s7 + $0x4c] sm:$0xf] %vm9882, %v9773
  %9903 = vst.msk [vmem:[%s7 + $0x50] sm:$0xf] %vm9882, %v9774
  %9904 = vst.msk [vmem:[%s7 + $0x54] sm:$0xf] %vm9882, %v9775
  %9905 = vst.msk [vmem:[%s7 + $0x58] sm:$0xf] %vm9882, %v9776
  %9906 = vst.msk [vmem:[%s7 + $0x5c] sm:$0xf] %vm9882, %v9777
  %9907 = vst.msk [vmem:[%s7 + $0x60] sm:$0xf] %vm9882, %v9778
  %9908 = vst.msk [vmem:[%s7 + $0x64] sm:$0xf] %vm9882, %v9779
  %9909 = vst.msk [vmem:[%s7 + $0x68] sm:$0xf] %vm9882, %v9780
  %9910 = vst.msk [vmem:[%s7 + $0x6c] sm:$0xf] %vm9882, %v9781
  %9911 = vst.msk [vmem:[%s7 + $0x70] sm:$0xf] %vm9882, %v9782
  %9912 = vst.msk [vmem:[%s7 + $0x74] sm:$0xf] %vm9882, %v9783
  %9913 = vst.msk [vmem:[%s7 + $0x78] sm:$0xf] %vm9882, %v9784
  %9914 = vst.msk [vmem:[%s7 + $0x7c] sm:$0xf] %vm9882, %v9785
  %9915 = vst.msk [vmem:[%s7 + $0x80] sm:$0xf] %vm9882, %v9786
  %9916 = vst.msk [vmem:[%s7 + $0x84] sm:$0xf] %vm9882, %v9787
  %9917 = vst.msk [vmem:[%s7 + $0x88] sm:$0xf] %vm9882, %v9788
  %9918 = vst.msk [vmem:[%s7 + $0x8c] sm:$0xf] %vm9882, %v9789
  %9919 = vst.msk [vmem:[%s7 + $0x90] sm:$0xf] %vm9882, %v9790
  %9920 = vst.msk [vmem:[%s7 + $0x94] sm:$0xf] %vm9882, %v9791
  %9921 = vst.msk [vmem:[%s7 + $0x98] sm:$0xf] %vm9882, %v9792
  %9922 = vst.msk [vmem:[%s7 + $0x9c] sm:$0xf] %vm9882, %v9793
  %9923 = vst.msk [vmem:[%s7 + $0xa0] sm:$0xf] %vm9882, %v9794
  %9924 = vst.msk [vmem:[%s7 + $0xa4] sm:$0xf] %vm9882, %v9795
  %9925 = vst.msk [vmem:[%s7 + $0xa8] sm:$0xf] %vm9882, %v9796
  %9926 = vst.msk [vmem:[%s7 + $0xac] sm:$0xf] %vm9882, %v9797
  %9927 = vst.msk [vmem:[%s7 + $0xb0] sm:$0xf] %vm9882, %v9798
  %9928 = vst.msk [vmem:[%s7 + $0xb4] sm:$0xf] %vm9882, %v9799
  %9929 = vst.msk [vmem:[%s7 + $0xb8] sm:$0xf] %vm9882, %v9800
  %9930 = vst.msk [vmem:[%s7 + $0xbc] sm:$0xf] %vm9882, %v9801
  %9931 = vst.msk [vmem:[%s7 + $0xc0] sm:$0xf] %vm9882, %v9802
  %9932 = vst.msk [vmem:[%s7 + $0xc4] sm:$0xf] %vm9882, %v9803
  %9933 = vst.msk [vmem:[%s7 + $0xc8] sm:$0xf] %vm9882, %v9804
  %9934 = vst.msk [vmem:[%s7 + $0xcc] sm:$0xf] %vm9882, %v9805
  %9935 = vst.msk [vmem:[%s7 + $0xd0] sm:$0xf] %vm9882, %v9806
  %9936 = vst.msk [vmem:[%s7 + $0xd4] sm:$0xf] %vm9882, %v9807
  %9937 = vst.msk [vmem:[%s7 + $0xd8] sm:$0xf] %vm9882, %v9808
  %9938 = vst.msk [vmem:[%s7 + $0xdc] sm:$0xf] %vm9882, %v9809
  %9939 = vst.msk [vmem:[%s7 + $0xe0] sm:$0xf] %vm9882, %v9810
  %9940 = vst.msk [vmem:[%s7 + $0xe4] sm:$0xf] %vm9882, %v9811
  %9941 = vst.msk [vmem:[%s7 + $0xe8] sm:$0xf] %vm9882, %v9812
  %9942 = vst.msk [vmem:[%s7 + $0xec] sm:$0xf] %vm9882, %v9813
  %9943 = vst.msk [vmem:[%s7 + $0xf0] sm:$0xf] %vm9882, %v9814
  %9944 = vst.msk [vmem:[%s7 + $0xf4] sm:$0xf] %vm9882, %v9815
  %9945 = vst.msk [vmem:[%s7 + $0xf8] sm:$0xf] %vm9882, %v9816
  %9946 = vst.msk [vmem:[%s7 + $0xfc] sm:$0xf] %vm9882, %v9817
  // Predicated region
  $region30: #{tpu_custom_call.1} parent=0 // pred_check
    _
  $region31: #{tpu_custom_call.1} parent=0 // pred_check_branch
    %9948 = sbr.rel (0) target = $region33
  $region32: #{tpu_custom_call.1} parent=0 // pred_region
    _
  $region33: #{tpu_custom_call.1} parent=0 // pred_fallthru
    _
  // Predicated region
  $region34: #{tpu_custom_call.1} parent=0 // pred_check
    _
  $region35: #{tpu_custom_call.1} parent=0 // pred_check_branch
    %9950 = sbr.rel (0) target = $region37
  $region36: #{tpu_custom_call.1} parent=0 // pred_region
    _
  $region37: #{tpu_custom_call.1} parent=0 // pred_fallthru
    _

</llo_original>
